<compile_context>
chip_gen: v7x
topology: tpu7x:2x2x1
jax: 0.10.0
libtpu: 0.0.40
codegen_flags: <defaults>
</compile_context>

<pallas_src>
import functools
import math

import jax
import jax.numpy as jnp
from jax.experimental import pallas as pl
from jax.experimental.pallas import tpu as pltpu


# ----------------------------------------------------------------------------
# Pallas kernel: one batch row per grid step
# ----------------------------------------------------------------------------
def attention_kernel(
    x_ref, wqkv_ref, wo_ref, cos_ref, sin_ref,
    out_ref, kout_ref, vout_ref,
    *, n_heads, head_dim, dim,
):
    D = dim
    S = x_ref.shape[1]

    # Load x once, cast straight to bf16 for the MXU (no f32 staging copy).
    xb = x_ref[0].astype(jnp.bfloat16)                            # (S, D)

    # ---- ONE fused projection: [q*scale | k | v | swap(q*scale) | swap(k)] --
    # bf16 MXU inputs, f32 accumulation.
    xall = jnp.dot(xb, wqkv_ref[...],
                   preferred_element_type=jnp.float32)            # (S, 5D)
    xq    = xall[:, 0 * D:1 * D]
    xk    = xall[:, 1 * D:2 * D]
    xv    = xall[:, 2 * D:3 * D]
    xq_sw = xall[:, 3 * D:4 * D]       # pair-swapped q (from permuted weight cols)
    xk_sw = xall[:, 4 * D:5 * D]       # pair-swapped k

    # ---- RoPE: two VPU FMAs in f32 (cos tiled per head, sin carries signs) --
    cos = cos_ref[...]                                            # (S, D)
    sin = sin_ref[...]                                            # (S, D) [-s,+s,...]
    xq_r = xq * cos + xq_sw * sin
    xk_r = xk * cos + xk_sw * sin

    # Cast once for the MXU score / PV matmuls.
    qb = xq_r.astype(jnp.bfloat16)
    kb = xk_r.astype(jnp.bfloat16)
    vb = xv.astype(jnp.bfloat16)

    # ---- causal additive bias (start_pos == 0), computed once with iota -----
    rows = jax.lax.broadcasted_iota(jnp.int32, (S, S), 0)
    cols = jax.lax.broadcasted_iota(jnp.int32, (S, S), 1)
    neg_bias = jnp.where(cols > rows, -1e30, 0.0).astype(jnp.float32)

    # ---- per-head attention on lane-dense 128-wide slices --------------------
    # TODO(synk): for large n_heads make the head a grid axis (or a batched
    # dot_general) and switch to flash-style KV blocking before scaling S.
    head_outs = []
    for h in range(n_heads):
        sl = slice(h * head_dim, (h + 1) * head_dim)
        # scores: (S, hd) x (S, hd)^T -> (S, S); scale already folded into Wq.
        s = jax.lax.dot_general(qb[:, sl], kb[:, sl],
                                (((1,), (1,)), ((), ())),
                                preferred_element_type=jnp.float32)
        s = s + neg_bias
        s = s - jnp.max(s, axis=-1, keepdims=True)
        p = jnp.exp(s)                                            # f32
        denom = jnp.sum(p, axis=-1, keepdims=True)                # lane reduce
        probs = p * pl.reciprocal(denom, approx=True)
        head_outs.append(
            jnp.dot(probs.astype(jnp.bfloat16), vb[:, sl],
                    preferred_element_type=jnp.float32))          # (S, hd)

    attn = jnp.concatenate(head_outs, axis=-1)                     # (S, D)

    # ---- single fused output projection --------------------------------------
    out = jnp.dot(attn.astype(jnp.bfloat16), wo_ref[...],
                  preferred_element_type=jnp.float32)              # (S, D)

    out_ref[0] = out.astype(out_ref.dtype)                         # bf16 writeback
    kout_ref[0] = xk_r.astype(kout_ref.dtype)                      # cache_k (roped)
    vout_ref[0] = xv.astype(vout_ref.dtype)                        # cache_v


# ----------------------------------------------------------------------------
# Wrapper
# ----------------------------------------------------------------------------
def attention_forward(x, wqkv_fused, wo_bf, cos_t, sin_t, *, n_heads, head_dim):
    B, S, D = x.shape
    kernel = functools.partial(attention_kernel,
                               n_heads=n_heads, head_dim=head_dim, dim=D)

    io_spec = pl.BlockSpec((1, S, D), lambda b: (b, 0, 0))
    # Constants use a fixed block index -> not re-DMA'd across grid steps.
    # NOTE: at real sizes, single-buffer these (pipeline_mode=pl.Buffered(1)),
    # tile the K/N axes, and set vmem_limit_bytes explicitly for v7x (64 MiB).
    const = lambda shape: pl.BlockSpec(shape, lambda b: (0, 0))

    return pl.pallas_call(
        kernel,
        out_shape=(jax.ShapeDtypeStruct((B, S, D), jnp.bfloat16),   # wo(output)
                   jax.ShapeDtypeStruct((B, S, D), jnp.bfloat16),   # cache_k
                   jax.ShapeDtypeStruct((B, S, D), jnp.bfloat16)),  # cache_v
        grid=(B,),
        in_specs=[
            io_spec,                 # x
            const((D, 5 * D)),       # fused [q*scale | k | v | swap(q) | swap(k)] bf16
            const((D, D)),           # wo (bf16)
            const((S, D)),           # cos (tiled per head, f32)
            const((S, D)),           # sin with interleaved signs (f32)
        ],
        out_specs=[io_spec, io_spec, io_spec],
        compiler_params=pltpu.CompilerParams(dimension_semantics=("parallel",)),
    )(x, wqkv_fused, wo_bf, cos_t, sin_t)


# ----------------------------------------------------------------------------
# Offline glue: RoPE tables and fused / permuted weights
# ----------------------------------------------------------------------------
def precompute_rope_tables(head_dim, n_heads, seqlen, theta=10000.0):
    freqs = 1.0 / theta ** (jnp.arange(0, head_dim, 2).astype(jnp.float32) / head_dim)
    t = jnp.arange(seqlen, dtype=jnp.float32)
    angles = jnp.outer(t, freqs)                                    # (S, hd//2)
    cos = jnp.repeat(jnp.cos(angles), 2, axis=-1)                   # [c0,c0,c1,c1,...]
    sin = jnp.stack([-jnp.sin(angles), jnp.sin(angles)],
                    axis=-1).reshape(seqlen, head_dim)              # [-s0,+s0,...]
    cos_t = jnp.tile(cos, (1, n_heads))                             # (S, D)
    sin_t = jnp.tile(sin, (1, n_heads))                             # (S, D)
    return cos_t, sin_t, angles


def build_fused_qkv(wq_t, wk_t, wv_t, head_dim):
    """(D, 5D) bf16: [Wq*scale | Wk | Wv | pairswap(Wq*scale) | pairswap(Wk)]."""
    D = wq_t.shape[0]
    scale = 1.0 / math.sqrt(head_dim)
    swap_cols = jnp.arange(D) ^ 1                     # 0<->1, 2<->3, ...
    wq_s = (wq_t * scale).astype(jnp.bfloat16)        # scale folded offline
    wk_b = wk_t.astype(jnp.bfloat16)
    wv_b = wv_t.astype(jnp.bfloat16)
    wq_sw = wq_s[:, swap_cols]
    wk_sw = wk_b[:, swap_cols]
    return jnp.concatenate([wq_s, wk_b, wv_b, wq_sw, wk_sw], axis=1)


def causal_mask_2d(seqlen, start_pos):
    i = jnp.arange(seqlen)[:, None]
    j = jnp.arange(seqlen)[None, :]
    return jnp.where(j > i + start_pos, -1e30, 0.0).astype(jnp.float32)


# ----------------------------------------------------------------------------
# Pure-JAX reference (canonical complex-pair RoPE, per-head attention)
# ----------------------------------------------------------------------------
def _ref_rope(x, angles):
    xr, xi = x[..., 0::2], x[..., 1::2]
    cos = jnp.cos(angles)[None, :, None, :]
    sin = jnp.sin(angles)[None, :, None, :]
    out_r = xr * cos - xi * sin
    out_i = xr * sin + xi * cos
    return jnp.stack([out_r, out_i], axis=-1).reshape(x.shape)


def ref_attention(x, wq_t, wk_t, wv_t, wo_t, angles, mask2d, n_heads, head_dim):
    B, S, D = x.shape
    xq = (x @ wq_t).reshape(B, S, n_heads, head_dim)
    xk = (x @ wk_t).reshape(B, S, n_heads, head_dim)
    xv = (x @ wv_t).reshape(B, S, n_heads, head_dim)
    xq, xk = _ref_rope(xq, angles), _ref_rope(xk, angles)
    q, k, v = (t.transpose(0, 2, 1, 3) for t in (xq, xk, xv))
    scores = jnp.einsum("bhqd,bhkd->bhqk", q, k) / math.sqrt(head_dim) + mask2d
    probs = jax.nn.softmax(scores, axis=-1)
    o = jnp.einsum("bhqk,bhkd->bhqd", probs, v).transpose(0, 2, 1, 3).reshape(B, S, D)
    return o @ wo_t, xk.reshape(B, S, D), xv.reshape(B, S, D)


# ----------------------------------------------------------------------------
if __name__ == "__main__":
    # Small config, lane-dense per head (head_dim = 128) per the perf review.
    dim, n_heads = 512, 4
    head_dim = dim // n_heads            # 128
    B, S, start_pos = 2, 64, 0

    key = jax.random.PRNGKey(0)
    kx, kq, kk, kv, ko = jax.random.split(key, 5)
    wstd = 1.0 / math.sqrt(dim)
    x = jax.random.normal(kx, (B, S, dim), jnp.float32)
    wq_t = wstd * jax.random.normal(kq, (dim, dim), jnp.float32)   # (in, out) = W.T
    wk_t = wstd * jax.random.normal(kk, (dim, dim), jnp.float32)
    wv_t = wstd * jax.random.normal(kv, (dim, dim), jnp.float32)
    wo_t = wstd * jax.random.normal(ko, (dim, dim), jnp.float32)

    wqkv_fused = build_fused_qkv(wq_t, wk_t, wv_t, head_dim)        # (D, 5D) bf16
    wo_bf = wo_t.astype(jnp.bfloat16)
    cos_t, sin_t, angles = precompute_rope_tables(head_dim, n_heads, S)

    # ---------------- Pallas forward ----------------
    out, k_cache, v_cache = attention_forward(
        x, wqkv_fused, wo_bf, cos_t, sin_t, n_heads=n_heads, head_dim=head_dim)
    out = jax.block_until_ready(out)

    # ---------------- reference (same bf16-rounded weights, f32 math) ----------
    scale = 1.0 / math.sqrt(head_dim)
    wq_r = wqkv_fused[:, 0:dim].astype(jnp.float32) / scale      # undo folded scale
    wk_r = wqkv_fused[:, dim:2 * dim].astype(jnp.float32)
    wv_r = wqkv_fused[:, 2 * dim:3 * dim].astype(jnp.float32)
    wo_r = wo_bf.astype(jnp.float32)
    out_ref, kc_ref, vc_ref = ref_attention(
        x, wq_r, wk_r, wv_r, wo_r, angles, causal_mask_2d(S, start_pos),
        n_heads, head_dim)

    out_f = out.astype(jnp.float32)
    assert out.shape == (B, S, dim)
    assert bool(jnp.all(jnp.isfinite(out_f)))
    assert bool(jnp.allclose(out_f, out_ref, rtol=3e-2, atol=3e-2)), \
        float(jnp.max(jnp.abs(out_f - out_ref)))
    assert bool(jnp.allclose(k_cache.astype(jnp.float32), kc_ref, rtol=3e-2, atol=3e-2))
    assert bool(jnp.allclose(v_cache.astype(jnp.float32), vc_ref, rtol=3e-2, atol=3e-2))

    print("KERNEL_OK")
</pallas_src>

<mosaic_0001>
module attributes {stable_mosaic.version = 11 : i64} {
  func.func @attention_kernel(%arg0: i32, %arg1: memref<1x64x512xf32, #tpu.memory_space<vmem>>, %arg2: memref<512x2560xbf16, #tpu.memory_space<vmem>>, %arg3: memref<512x512xbf16, #tpu.memory_space<vmem>>, %arg4: memref<64x512xf32, #tpu.memory_space<vmem>>, %arg5: memref<64x512xf32, #tpu.memory_space<vmem>>, %arg6: memref<1x64x512xbf16, #tpu.memory_space<vmem>>, %arg7: memref<1x64x512xbf16, #tpu.memory_space<vmem>>, %arg8: memref<1x64x512xbf16, #tpu.memory_space<vmem>>) attributes {dimension_semantics = [#tpu.dimension_semantics<parallel>], iteration_bounds = array<i64: 2>, scalar_prefetch = 0 : i64, scratch_operands = 0 : i64, tpu.core_type = #tpu.core_type<tc>, window_params = [{transform_indices = @transform_0, window_bounds = array<i64: 1, 64, 512>}, {pipeline_mode = #tpu.pipeline_mode<synchronous>, transform_indices = @transform_1, window_bounds = array<i64: 512, 2560>}, {pipeline_mode = #tpu.pipeline_mode<synchronous>, transform_indices = @transform_2, window_bounds = array<i64: 512, 512>}, {pipeline_mode = #tpu.pipeline_mode<synchronous>, transform_indices = @transform_3, window_bounds = array<i64: 64, 512>}, {pipeline_mode = #tpu.pipeline_mode<synchronous>, transform_indices = @transform_4, window_bounds = array<i64: 64, 512>}, {transform_indices = @transform_5, window_bounds = array<i64: 1, 64, 512>}, {transform_indices = @transform_6, window_bounds = array<i64: 1, 64, 512>}, {transform_indices = @transform_7, window_bounds = array<i64: 1, 64, 512>}]} {
    %c0 = arith.constant 0 : index
    %c0_0 = arith.constant 0 : index
    %c0_1 = arith.constant 0 : index
    %0 = vector.load %arg1[%c0, %c0_0, %c0_1] : memref<1x64x512xf32, #tpu.memory_space<vmem>>, vector<1x64x512xf32>
    %1 = vector.shape_cast %0 : vector<1x64x512xf32> to vector<64x512xf32>
    %2 = arith.truncf %1 : vector<64x512xf32> to vector<64x512xbf16>
    %c0_2 = arith.constant 0 : index
    %c0_3 = arith.constant 0 : index
    %3 = vector.load %arg2[%c0_2, %c0_3] : memref<512x2560xbf16, #tpu.memory_space<vmem>>, vector<512x2560xbf16>
    %cst = arith.constant dense<0.000000e+00> : vector<64x2560xf32>
    %4 = tpu.matmul %2, %3, %cst {dimension_numbers = #tpu.dot_dimension_numbers<[1], [0], [0], [1], [0, 0, 1, 1], [], []>} : vector<64x512xbf16>, vector<512x2560xbf16>, vector<64x2560xf32> -> vector<64x2560xf32>
    %5 = vector.extract_strided_slice %4 {offsets = [0, 0], sizes = [64, 512], strides = [1, 1]} : vector<64x2560xf32> to vector<64x512xf32>
    %6 = vector.extract_strided_slice %4 {offsets = [0, 512], sizes = [64, 512], strides = [1, 1]} : vector<64x2560xf32> to vector<64x512xf32>
    %7 = vector.extract_strided_slice %4 {offsets = [0, 1024], sizes = [64, 512], strides = [1, 1]} : vector<64x2560xf32> to vector<64x512xf32>
    %8 = vector.extract_strided_slice %4 {offsets = [0, 1536], sizes = [64, 512], strides = [1, 1]} : vector<64x2560xf32> to vector<64x512xf32>
    %9 = vector.extract_strided_slice %4 {offsets = [0, 2048], sizes = [64, 512], strides = [1, 1]} : vector<64x2560xf32> to vector<64x512xf32>
    %c0_4 = arith.constant 0 : index
    %c0_5 = arith.constant 0 : index
    %10 = vector.load %arg4[%c0_4, %c0_5] : memref<64x512xf32, #tpu.memory_space<vmem>>, vector<64x512xf32>
    %c0_6 = arith.constant 0 : index
    %c0_7 = arith.constant 0 : index
    %11 = vector.load %arg5[%c0_6, %c0_7] : memref<64x512xf32, #tpu.memory_space<vmem>>, vector<64x512xf32>
    %12 = arith.mulf %5, %10 : vector<64x512xf32>
    %13 = arith.mulf %8, %11 : vector<64x512xf32>
    %14 = arith.addf %12, %13 : vector<64x512xf32>
    %15 = arith.mulf %6, %10 : vector<64x512xf32>
    %16 = arith.mulf %9, %11 : vector<64x512xf32>
    %17 = arith.addf %15, %16 : vector<64x512xf32>
    %18 = arith.truncf %14 : vector<64x512xf32> to vector<64x512xbf16>
    %19 = arith.truncf %17 : vector<64x512xf32> to vector<64x512xbf16>
    %20 = arith.truncf %7 : vector<64x512xf32> to vector<64x512xbf16>
    %21 = tpu.iota {dimensions = array<i32: 0>} : vector<64x64xi32>
    %22 = tpu.iota {dimensions = array<i32: 1>} : vector<64x64xi32>
    %23 = arith.cmpi sgt, %22, %21 : vector<64x64xi32>
    %cst_8 = arith.constant -1.000000e+30 : f32
    %cst_9 = arith.constant 0.000000e+00 : f32
    %24 = vector.broadcast %cst_8 : f32 to vector<64x64xf32>
    %25 = vector.broadcast %cst_9 : f32 to vector<64x64xf32>
    %26 = arith.select %23, %24, %25 : vector<64x64xi1>, vector<64x64xf32>
    %27 = vector.extract_strided_slice %18 {offsets = [0, 0], sizes = [64, 128], strides = [1, 1]} : vector<64x512xbf16> to vector<64x128xbf16>
    %28 = vector.extract_strided_slice %19 {offsets = [0, 0], sizes = [64, 128], strides = [1, 1]} : vector<64x512xbf16> to vector<64x128xbf16>
    %cst_10 = arith.constant dense<0.000000e+00> : vector<64x64xf32>
    %29 = tpu.matmul %27, %28, %cst_10 {dimension_numbers = #tpu.dot_dimension_numbers<[1], [1], [0], [0], [0, 0, 1, 0], [], []>} : vector<64x128xbf16>, vector<64x128xbf16>, vector<64x64xf32> -> vector<64x64xf32>
    %30 = arith.addf %29, %26 : vector<64x64xf32>
    %cst_11 = arith.constant dense<0xFF800000> : vector<64xf32>
    %31 = vector.multi_reduction <maximumf>, %30, %cst_11 [1] : vector<64x64xf32> to vector<64xf32>
    %32 = vector.shape_cast %31 : vector<64xf32> to vector<64x1xf32>
    %33 = vector.broadcast %32 : vector<64x1xf32> to vector<64x64xf32>
    %34 = arith.subf %30, %33 : vector<64x64xf32>
    %35 = math.exp %34 : vector<64x64xf32>
    %cst_12 = arith.constant dense<0.000000e+00> : vector<64xf32>
    %36 = vector.multi_reduction <add>, %35, %cst_12 [1] : vector<64x64xf32> to vector<64xf32>
    %37 = vector.shape_cast %36 : vector<64xf32> to vector<64x1xf32>
    %38 = tpu.reciprocal %37 {approx = true} : vector<64x1xf32> -> vector<64x1xf32>
    %39 = vector.broadcast %38 : vector<64x1xf32> to vector<64x64xf32>
    %40 = arith.mulf %35, %39 : vector<64x64xf32>
    %41 = arith.truncf %40 : vector<64x64xf32> to vector<64x64xbf16>
    %42 = vector.extract_strided_slice %20 {offsets = [0, 0], sizes = [64, 128], strides = [1, 1]} : vector<64x512xbf16> to vector<64x128xbf16>
    %cst_13 = arith.constant dense<0.000000e+00> : vector<64x128xf32>
    %43 = tpu.matmul %41, %42, %cst_13 {dimension_numbers = #tpu.dot_dimension_numbers<[1], [0], [0], [1], [0, 0, 1, 1], [], []>} : vector<64x64xbf16>, vector<64x128xbf16>, vector<64x128xf32> -> vector<64x128xf32>
    %44 = vector.extract_strided_slice %18 {offsets = [0, 128], sizes = [64, 128], strides = [1, 1]} : vector<64x512xbf16> to vector<64x128xbf16>
    %45 = vector.extract_strided_slice %19 {offsets = [0, 128], sizes = [64, 128], strides = [1, 1]} : vector<64x512xbf16> to vector<64x128xbf16>
    %cst_14 = arith.constant dense<0.000000e+00> : vector<64x64xf32>
    %46 = tpu.matmul %44, %45, %cst_14 {dimension_numbers = #tpu.dot_dimension_numbers<[1], [1], [0], [0], [0, 0, 1, 0], [], []>} : vector<64x128xbf16>, vector<64x128xbf16>, vector<64x64xf32> -> vector<64x64xf32>
    %47 = arith.addf %46, %26 : vector<64x64xf32>
    %cst_15 = arith.constant dense<0xFF800000> : vector<64xf32>
    %48 = vector.multi_reduction <maximumf>, %47, %cst_15 [1] : vector<64x64xf32> to vector<64xf32>
    %49 = vector.shape_cast %48 : vector<64xf32> to vector<64x1xf32>
    %50 = vector.broadcast %49 : vector<64x1xf32> to vector<64x64xf32>
    %51 = arith.subf %47, %50 : vector<64x64xf32>
    %52 = math.exp %51 : vector<64x64xf32>
    %cst_16 = arith.constant dense<0.000000e+00> : vector<64xf32>
    %53 = vector.multi_reduction <add>, %52, %cst_16 [1] : vector<64x64xf32> to vector<64xf32>
    %54 = vector.shape_cast %53 : vector<64xf32> to vector<64x1xf32>
    %55 = tpu.reciprocal %54 {approx = true} : vector<64x1xf32> -> vector<64x1xf32>
    %56 = vector.broadcast %55 : vector<64x1xf32> to vector<64x64xf32>
    %57 = arith.mulf %52, %56 : vector<64x64xf32>
    %58 = arith.truncf %57 : vector<64x64xf32> to vector<64x64xbf16>
    %59 = vector.extract_strided_slice %20 {offsets = [0, 128], sizes = [64, 128], strides = [1, 1]} : vector<64x512xbf16> to vector<64x128xbf16>
    %cst_17 = arith.constant dense<0.000000e+00> : vector<64x128xf32>
    %60 = tpu.matmul %58, %59, %cst_17 {dimension_numbers = #tpu.dot_dimension_numbers<[1], [0], [0], [1], [0, 0, 1, 1], [], []>} : vector<64x64xbf16>, vector<64x128xbf16>, vector<64x128xf32> -> vector<64x128xf32>
    %61 = vector.extract_strided_slice %18 {offsets = [0, 256], sizes = [64, 128], strides = [1, 1]} : vector<64x512xbf16> to vector<64x128xbf16>
    %62 = vector.extract_strided_slice %19 {offsets = [0, 256], sizes = [64, 128], strides = [1, 1]} : vector<64x512xbf16> to vector<64x128xbf16>
    %cst_18 = arith.constant dense<0.000000e+00> : vector<64x64xf32>
    %63 = tpu.matmul %61, %62, %cst_18 {dimension_numbers = #tpu.dot_dimension_numbers<[1], [1], [0], [0], [0, 0, 1, 0], [], []>} : vector<64x128xbf16>, vector<64x128xbf16>, vector<64x64xf32> -> vector<64x64xf32>
    %64 = arith.addf %63, %26 : vector<64x64xf32>
    %cst_19 = arith.constant dense<0xFF800000> : vector<64xf32>
    %65 = vector.multi_reduction <maximumf>, %64, %cst_19 [1] : vector<64x64xf32> to vector<64xf32>
    %66 = vector.shape_cast %65 : vector<64xf32> to vector<64x1xf32>
    %67 = vector.broadcast %66 : vector<64x1xf32> to vector<64x64xf32>
    %68 = arith.subf %64, %67 : vector<64x64xf32>
    %69 = math.exp %68 : vector<64x64xf32>
    %cst_20 = arith.constant dense<0.000000e+00> : vector<64xf32>
    %70 = vector.multi_reduction <add>, %69, %cst_20 [1] : vector<64x64xf32> to vector<64xf32>
    %71 = vector.shape_cast %70 : vector<64xf32> to vector<64x1xf32>
    %72 = tpu.reciprocal %71 {approx = true} : vector<64x1xf32> -> vector<64x1xf32>
    %73 = vector.broadcast %72 : vector<64x1xf32> to vector<64x64xf32>
    %74 = arith.mulf %69, %73 : vector<64x64xf32>
    %75 = arith.truncf %74 : vector<64x64xf32> to vector<64x64xbf16>
    %76 = vector.extract_strided_slice %20 {offsets = [0, 256], sizes = [64, 128], strides = [1, 1]} : vector<64x512xbf16> to vector<64x128xbf16>
    %cst_21 = arith.constant dense<0.000000e+00> : vector<64x128xf32>
    %77 = tpu.matmul %75, %76, %cst_21 {dimension_numbers = #tpu.dot_dimension_numbers<[1], [0], [0], [1], [0, 0, 1, 1], [], []>} : vector<64x64xbf16>, vector<64x128xbf16>, vector<64x128xf32> -> vector<64x128xf32>
    %78 = vector.extract_strided_slice %18 {offsets = [0, 384], sizes = [64, 128], strides = [1, 1]} : vector<64x512xbf16> to vector<64x128xbf16>
    %79 = vector.extract_strided_slice %19 {offsets = [0, 384], sizes = [64, 128], strides = [1, 1]} : vector<64x512xbf16> to vector<64x128xbf16>
    %cst_22 = arith.constant dense<0.000000e+00> : vector<64x64xf32>
    %80 = tpu.matmul %78, %79, %cst_22 {dimension_numbers = #tpu.dot_dimension_numbers<[1], [1], [0], [0], [0, 0, 1, 0], [], []>} : vector<64x128xbf16>, vector<64x128xbf16>, vector<64x64xf32> -> vector<64x64xf32>
    %81 = arith.addf %80, %26 : vector<64x64xf32>
    %cst_23 = arith.constant dense<0xFF800000> : vector<64xf32>
    %82 = vector.multi_reduction <maximumf>, %81, %cst_23 [1] : vector<64x64xf32> to vector<64xf32>
    %83 = vector.shape_cast %82 : vector<64xf32> to vector<64x1xf32>
    %84 = vector.broadcast %83 : vector<64x1xf32> to vector<64x64xf32>
    %85 = arith.subf %81, %84 : vector<64x64xf32>
    %86 = math.exp %85 : vector<64x64xf32>
    %cst_24 = arith.constant dense<0.000000e+00> : vector<64xf32>
    %87 = vector.multi_reduction <add>, %86, %cst_24 [1] : vector<64x64xf32> to vector<64xf32>
    %88 = vector.shape_cast %87 : vector<64xf32> to vector<64x1xf32>
    %89 = tpu.reciprocal %88 {approx = true} : vector<64x1xf32> -> vector<64x1xf32>
    %90 = vector.broadcast %89 : vector<64x1xf32> to vector<64x64xf32>
    %91 = arith.mulf %86, %90 : vector<64x64xf32>
    %92 = arith.truncf %91 : vector<64x64xf32> to vector<64x64xbf16>
    %93 = vector.extract_strided_slice %20 {offsets = [0, 384], sizes = [64, 128], strides = [1, 1]} : vector<64x512xbf16> to vector<64x128xbf16>
    %cst_25 = arith.constant dense<0.000000e+00> : vector<64x128xf32>
    %94 = tpu.matmul %92, %93, %cst_25 {dimension_numbers = #tpu.dot_dimension_numbers<[1], [0], [0], [1], [0, 0, 1, 1], [], []>} : vector<64x64xbf16>, vector<64x128xbf16>, vector<64x128xf32> -> vector<64x128xf32>
    %95 = tpu.concatenate %43, %60, %77, %94 in 1 : vector<64x128xf32>, vector<64x128xf32>, vector<64x128xf32>, vector<64x128xf32> -> vector<64x512xf32>
    %96 = arith.truncf %95 : vector<64x512xf32> to vector<64x512xbf16>
    %c0_26 = arith.constant 0 : index
    %c0_27 = arith.constant 0 : index
    %97 = vector.load %arg3[%c0_26, %c0_27] : memref<512x512xbf16, #tpu.memory_space<vmem>>, vector<512x512xbf16>
    %cst_28 = arith.constant dense<0.000000e+00> : vector<64x512xf32>
    %98 = tpu.matmul %96, %97, %cst_28 {dimension_numbers = #tpu.dot_dimension_numbers<[1], [0], [0], [1], [0, 0, 1, 1], [], []>} : vector<64x512xbf16>, vector<512x512xbf16>, vector<64x512xf32> -> vector<64x512xf32>
    %99 = arith.truncf %98 : vector<64x512xf32> to vector<64x512xbf16>
    %c0_29 = arith.constant 0 : index
    %c0_30 = arith.constant 0 : index
    %c0_31 = arith.constant 0 : index
    %100 = vector.load %arg6[%c0_29, %c0_30, %c0_31] : memref<1x64x512xbf16, #tpu.memory_space<vmem>>, vector<1x64x512xbf16>
    %101 = vector.shape_cast %100 : vector<1x64x512xbf16> to vector<64x512xbf16>
    %102 = vector.shape_cast %99 : vector<64x512xbf16> to vector<1x64x512xbf16>
    tpu.vector_store %arg6[%c0_29, %c0_30, %c0_31], %102 {strides = array<i32>} : memref<1x64x512xbf16, #tpu.memory_space<vmem>>, vector<1x64x512xbf16>,
    %103 = arith.truncf %17 : vector<64x512xf32> to vector<64x512xbf16>
    %c0_32 = arith.constant 0 : index
    %c0_33 = arith.constant 0 : index
    %c0_34 = arith.constant 0 : index
    %104 = vector.load %arg7[%c0_32, %c0_33, %c0_34] : memref<1x64x512xbf16, #tpu.memory_space<vmem>>, vector<1x64x512xbf16>
    %105 = vector.shape_cast %104 : vector<1x64x512xbf16> to vector<64x512xbf16>
    %106 = vector.shape_cast %103 : vector<64x512xbf16> to vector<1x64x512xbf16>
    tpu.vector_store %arg7[%c0_32, %c0_33, %c0_34], %106 {strides = array<i32>} : memref<1x64x512xbf16, #tpu.memory_space<vmem>>, vector<1x64x512xbf16>,
    %107 = arith.truncf %7 : vector<64x512xf32> to vector<64x512xbf16>
    %c0_35 = arith.constant 0 : index
    %c0_36 = arith.constant 0 : index
    %c0_37 = arith.constant 0 : index
    %108 = vector.load %arg8[%c0_35, %c0_36, %c0_37] : memref<1x64x512xbf16, #tpu.memory_space<vmem>>, vector<1x64x512xbf16>
    %109 = vector.shape_cast %108 : vector<1x64x512xbf16> to vector<64x512xbf16>
    %110 = vector.shape_cast %107 : vector<64x512xbf16> to vector<1x64x512xbf16>
    tpu.vector_store %arg8[%c0_35, %c0_36, %c0_37], %110 {strides = array<i32>} : memref<1x64x512xbf16, #tpu.memory_space<vmem>>, vector<1x64x512xbf16>,
    return
  }
  func.func @transform_0(%arg0: i32) -> (i32, i32, i32) {
    %c0_i32 = arith.constant 0 : i32
    %c0_i32_0 = arith.constant 0 : i32
    %c0_i32_1 = arith.constant 0 : i32
    return %arg0, %c0_i32, %c0_i32_0 : i32, i32, i32
  }
  func.func @transform_1(%arg0: i32) -> (i32, i32) {
    %c0_i32 = arith.constant 0 : i32
    %c0_i32_0 = arith.constant 0 : i32
    %c0_i32_1 = arith.constant 0 : i32
    return %c0_i32, %c0_i32_0 : i32, i32
  }
  func.func @transform_2(%arg0: i32) -> (i32, i32) {
    %c0_i32 = arith.constant 0 : i32
    %c0_i32_0 = arith.constant 0 : i32
    %c0_i32_1 = arith.constant 0 : i32
    return %c0_i32, %c0_i32_0 : i32, i32
  }
  func.func @transform_3(%arg0: i32) -> (i32, i32) {
    %c0_i32 = arith.constant 0 : i32
    %c0_i32_0 = arith.constant 0 : i32
    %c0_i32_1 = arith.constant 0 : i32
    return %c0_i32, %c0_i32_0 : i32, i32
  }
  func.func @transform_4(%arg0: i32) -> (i32, i32) {
    %c0_i32 = arith.constant 0 : i32
    %c0_i32_0 = arith.constant 0 : i32
    %c0_i32_1 = arith.constant 0 : i32
    return %c0_i32, %c0_i32_0 : i32, i32
  }
  func.func @transform_5(%arg0: i32) -> (i32, i32, i32) {
    %c0_i32 = arith.constant 0 : i32
    %c0_i32_0 = arith.constant 0 : i32
    %c0_i32_1 = arith.constant 0 : i32
    return %arg0, %c0_i32, %c0_i32_0 : i32, i32, i32
  }
  func.func @transform_6(%arg0: i32) -> (i32, i32, i32) {
    %c0_i32 = arith.constant 0 : i32
    %c0_i32_0 = arith.constant 0 : i32
    %c0_i32_1 = arith.constant 0 : i32
    return %arg0, %c0_i32, %c0_i32_0 : i32, i32, i32
  }
  func.func @transform_7(%arg0: i32) -> (i32, i32, i32) {
    %c0_i32 = arith.constant 0 : i32
    %c0_i32_0 = arith.constant 0 : i32
    %c0_i32_1 = arith.constant 0 : i32
    return %arg0, %c0_i32, %c0_i32_0 : i32, i32, i32
  }
}

</mosaic_0001>

<llo_original>
// kernel: tpu_custom_call.1
$region0: #{tpu_custom_call.1}
  #allocation0 [shape = 'u32[]', space=smem, size = 0x4, offset = 0x4, fixed_abs, tag = 'smem constant byte address 0x4 - core index']
  #allocation1 [shape = 'u32[144,128]{1,0:T(1,128)}', space=vmem, size = 0x12000, scoped, tag = 'internal scratch']
  %s0 = inlined_call_operand.hbm [shape: f32[2,64,512], index: 0, kind: input, shape index: {}]
  %s1 = inlined_call_operand.hbm [shape: bf16[512,2560], index: 1, kind: input, shape index: {}]
  %s2 = inlined_call_operand.hbm [shape: bf16[512,512], index: 2, kind: input, shape index: {}]
  %s3 = inlined_call_operand.hbm [shape: f32[64,512], index: 3, kind: input, shape index: {}]
  %s4 = inlined_call_operand.hbm [shape: f32[64,512], index: 4, kind: input, shape index: {}]
  %s5 = inlined_call_operand.hbm [shape: bf16[2,64,512], index: 5, kind: output, shape index: {0}]
  %s6 = inlined_call_operand.hbm [shape: bf16[2,64,512], index: 6, kind: output, shape index: {1}]
  %s7 = inlined_call_operand.hbm [shape: bf16[2,64,512], index: 7, kind: output, shape index: {2}]
  %8 = xla_tuple %s5, %s6, %s7
  %s9 = sld [smem:[#allocation0]]
  $region89: #{tpu_custom_call.1} parent=0
    _
  %s11 = ssub.s32 1, %s9
  %s12 = scalar_select 0, %s11, %s9
  $region1: #{tpu_custom_call.1} parent=0
    #allocation2 [shape = 'u8[262144]{0}', space=vmem, size = 0x40000, scoped, tag = 'input window, operand 0']
    #allocation3 [shape = 's32[2]{0}', space=sflag, size = 0x8, scoped, tag = 'scoped memory for tpu_custom_call.1']
    #allocation4 [shape = 's32[2]{0}', space=sflag, size = 0x8, scoped, tag = 'scoped memory for tpu_custom_call.1']
    #allocation5 [shape = 'u8[2621440]{0}', space=vmem, size = 0x280000, scoped, tag = 'input window, operand 1, single buffered']
    #allocation6 [shape = 's32[1]{0}', space=sflag, size = 0x4, scoped, tag = 'scoped memory for tpu_custom_call.1']
    #allocation7 [shape = 'u8[524288]{0}', space=vmem, size = 0x80000, scoped, tag = 'input window, operand 2, single buffered']
    #allocation8 [shape = 'u8[131072]{0}', space=vmem, size = 0x20000, scoped, tag = 'input window, operand 3, single buffered']
    #allocation9 [shape = 's32[1]{0}', space=sflag, size = 0x4, scoped, tag = 'scoped memory for tpu_custom_call.1']
    #allocation10 [shape = 'u8[131072]{0}', space=vmem, size = 0x20000, scoped, tag = 'input window, operand 4, single buffered']
    #allocation11 [shape = 'u8[131072]{0}', space=vmem, size = 0x20000, scoped, tag = 'output window, operand 0']
    #allocation12 [shape = 'u8[131072]{0}', space=vmem, size = 0x20000, scoped, tag = 'output window, operand 1']
    #allocation13 [shape = 's32[2]{0}', space=sflag, size = 0x8, scoped, tag = 'scoped memory for tpu_custom_call.1']
    #allocation14 [shape = 'u8[131072]{0}', space=vmem, size = 0x20000, scoped, tag = 'output window, operand 2']
    %13 = vsyncpa [#allocation3], 0
    %s14 = scalar_lea.sflag [#allocation3], 1
    %15 = vsyncpa %s14, 0
    %16 = vsyncpa [#allocation6], 0
    %17 = vsyncpa [#allocation9], 0
    %18 = vsyncpa [#allocation4], 0
    %s19 = scalar_lea.sflag [#allocation4], 1
    %20 = vsyncpa %s19, 0
    %21 = vsyncpa [#allocation13], 0
    %s22 = scalar_lea.sflag [#allocation13], 1
    %23 = vsyncpa %s22, 0
    loop: start=0, step=1, limit=4
    $region2: #{tpu_custom_call.1} parent=1 // loop_pre_header
      _
    $region3: #{tpu_custom_call.1} parent=1 // loop_header
      %s25 = sphi 0, %s29
      %p26 = scmp.ge.s32.totalorder %s25, 4
      %s35 = sphi 0, %s37
      %s38 = sphi 0, %s35
      %s39 = sphi 0, %s38
      %s55 = sphi 0, %s39
      %s59 = sphi 0, %s59
      %s61 = sphi 0, %s59
      %s62 = sphi 0, %s61
      %s76 = sphi 0, %s62
      %s80 = sphi 0, %s80
      %s82 = sphi 0, %s80
      %s83 = sphi 0, %s82
      %s97 = sphi 0, %s83
      %s101 = sphi 0, %s101
      %s103 = sphi 0, %s101
      %s104 = sphi 0, %s103
      %s118 = sphi 0, %s104
      %s122 = sphi 0, %s122
      %s124 = sphi 0, %s122
      %s125 = sphi 0, %s124
      %s139 = sphi 0, %s125
      %s145 = sphi 0, %s147
      %s148 = sphi 0, %s145
      %s149 = sphi 0, %s148
      %s165 = sphi 0, %s149
      %s171 = sphi 0, %s173
      %s174 = sphi 0, %s171
      %s175 = sphi 0, %s174
      %s191 = sphi 0, %s175
      %s197 = sphi 0, %s199
      %s200 = sphi 0, %s197
      %s201 = sphi 0, %s200
      %s217 = sphi 0, %s201
    $region4: #{tpu_custom_call.1} parent=1 // loop_header_branch
      %28 = sbr.rel (%p26) target = $region8
    $region5: #{tpu_custom_call.1} parent=1 // loop_body
      %s30 = ssub.s32 %s25, 1
      %s31 = ssub.s32 %s25, 2
      %s32 = sadd.s32 %s25, 1
      %s33 = ssub.s32 %s25, %s32
      %p34 = scmp.eq.s32.totalorder %s33, 0
      %s36 = sadd.s32 %s35, 1
      %s37 = scalar_select %p34, %s35, %s36
      %p40 = pneg %p34
      %p41 = scmp.eq.s32.totalorder %s25, 1
      %p42 = por %p40, %p41
      %p43 = scmp.ne.s32.totalorder %s35, %s38
      %p44 = scmp.eq.s32.totalorder %s25, 0
      %p45 = por %p43, %p44
      %p46 = scmp.ne.s32.totalorder %s35, %s38
      %p47 = scmp.eq.s32.totalorder %s30, 1
      %p48 = por %p46, %p47
      %p49 = scmp.ne.s32.totalorder %s38, %s39
      %p50 = scmp.eq.s32.totalorder %s30, 0
      %p51 = por %p49, %p50
      %p52 = scmp.ne.s32.totalorder %s38, %s39
      %p53 = scmp.eq.s32.totalorder %s31, 1
      %p54 = por %p52, %p53
      %p56 = scmp.ne.s32.totalorder %s39, %s55
      %p57 = scmp.eq.s32.totalorder %s31, 0
      %p58 = por %p56, %p57
      %s60 = sadd.s32 %s59, 1
      %p63 = scmp.eq.s32.totalorder %s25, 1
      %p64 = scmp.ne.s32.totalorder %s59, %s61
      %p65 = scmp.eq.s32.totalorder %s25, 0
      %p66 = por %p64, %p65
      %p67 = scmp.ne.s32.totalorder %s59, %s61
      %p68 = scmp.eq.s32.totalorder %s30, 1
      %p69 = por %p67, %p68
      %p70 = scmp.ne.s32.totalorder %s61, %s62
      %p71 = scmp.eq.s32.totalorder %s30, 0
      %p72 = por %p70, %p71
      %p73 = scmp.ne.s32.totalorder %s61, %s62
      %p74 = scmp.eq.s32.totalorder %s31, 1
      %p75 = por %p73, %p74
      %p77 = scmp.ne.s32.totalorder %s62, %s76
      %p78 = scmp.eq.s32.totalorder %s31, 0
      %p79 = por %p77, %p78
      %s81 = sadd.s32 %s80, 1
      %p84 = scmp.eq.s32.totalorder %s25, 1
      %p85 = scmp.ne.s32.totalorder %s80, %s82
      %p86 = scmp.eq.s32.totalorder %s25, 0
      %p87 = por %p85, %p86
      %p88 = scmp.ne.s32.totalorder %s80, %s82
      %p89 = scmp.eq.s32.totalorder %s30, 1
      %p90 = por %p88, %p89
      %p91 = scmp.ne.s32.totalorder %s82, %s83
      %p92 = scmp.eq.s32.totalorder %s30, 0
      %p93 = por %p91, %p92
      %p94 = scmp.ne.s32.totalorder %s82, %s83
      %p95 = scmp.eq.s32.totalorder %s31, 1
      %p96 = por %p94, %p95
      %p98 = scmp.ne.s32.totalorder %s83, %s97
      %p99 = scmp.eq.s32.totalorder %s31, 0
      %p100 = por %p98, %p99
      %s102 = sadd.s32 %s101, 1
      %p105 = scmp.eq.s32.totalorder %s25, 1
      %p106 = scmp.ne.s32.totalorder %s101, %s103
      %p107 = scmp.eq.s32.totalorder %s25, 0
      %p108 = por %p106, %p107
      %p109 = scmp.ne.s32.totalorder %s101, %s103
      %p110 = scmp.eq.s32.totalorder %s30, 1
      %p111 = por %p109, %p110
      %p112 = scmp.ne.s32.totalorder %s103, %s104
      %p113 = scmp.eq.s32.totalorder %s30, 0
      %p114 = por %p112, %p113
      %p115 = scmp.ne.s32.totalorder %s103, %s104
      %p116 = scmp.eq.s32.totalorder %s31, 1
      %p117 = por %p115, %p116
      %p119 = scmp.ne.s32.totalorder %s104, %s118
      %p120 = scmp.eq.s32.totalorder %s31, 0
      %p121 = por %p119, %p120
      %s123 = sadd.s32 %s122, 1
      %p126 = scmp.eq.s32.totalorder %s25, 1
      %p127 = scmp.ne.s32.totalorder %s122, %s124
      %p128 = scmp.eq.s32.totalorder %s25, 0
      %p129 = por %p127, %p128
      %p130 = scmp.ne.s32.totalorder %s122, %s124
      %p131 = scmp.eq.s32.totalorder %s30, 1
      %p132 = por %p130, %p131
      %p133 = scmp.ne.s32.totalorder %s124, %s125
      %p134 = scmp.eq.s32.totalorder %s30, 0
      %p135 = por %p133, %p134
      %p136 = scmp.ne.s32.totalorder %s124, %s125
      %p137 = scmp.eq.s32.totalorder %s31, 1
      %p138 = por %p136, %p137
      %p140 = scmp.ne.s32.totalorder %s125, %s139
      %p141 = scmp.eq.s32.totalorder %s31, 0
      %p142 = por %p140, %p141
      %s143 = ssub.s32 %s25, %s32
      %p144 = scmp.eq.s32.totalorder %s143, 0
      %s146 = sadd.s32 %s145, 1
      %s147 = scalar_select %p144, %s145, %s146
      %p150 = pneg %p144
      %p151 = scmp.eq.s32.totalorder %s25, 1
      %p152 = por %p150, %p151
      %p153 = scmp.ne.s32.totalorder %s145, %s148
      %p154 = scmp.eq.s32.totalorder %s25, 0
      %p155 = por %p153, %p154
      %p156 = scmp.ne.s32.totalorder %s145, %s148
      %p157 = scmp.eq.s32.totalorder %s30, 1
      %p158 = por %p156, %p157
      %p159 = scmp.ne.s32.totalorder %s148, %s149
      %p160 = scmp.eq.s32.totalorder %s30, 0
      %p161 = por %p159, %p160
      %p162 = scmp.ne.s32.totalorder %s148, %s149
      %p163 = scmp.eq.s32.totalorder %s31, 1
      %p164 = por %p162, %p163
      %p166 = scmp.ne.s32.totalorder %s149, %s165
      %p167 = scmp.eq.s32.totalorder %s31, 0
      %p168 = por %p166, %p167
      %s169 = ssub.s32 %s25, %s32
      %p170 = scmp.eq.s32.totalorder %s169, 0
      %s172 = sadd.s32 %s171, 1
      %s173 = scalar_select %p170, %s171, %s172
      %p176 = pneg %p170
      %p177 = scmp.eq.s32.totalorder %s25, 1
      %p178 = por %p176, %p177
      %p179 = scmp.ne.s32.totalorder %s171, %s174
      %p180 = scmp.eq.s32.totalorder %s25, 0
      %p181 = por %p179, %p180
      %p182 = scmp.ne.s32.totalorder %s171, %s174
      %p183 = scmp.eq.s32.totalorder %s30, 1
      %p184 = por %p182, %p183
      %p185 = scmp.ne.s32.totalorder %s174, %s175
      %p186 = scmp.eq.s32.totalorder %s30, 0
      %p187 = por %p185, %p186
      %p188 = scmp.ne.s32.totalorder %s174, %s175
      %p189 = scmp.eq.s32.totalorder %s31, 1
      %p190 = por %p188, %p189
      %p192 = scmp.ne.s32.totalorder %s175, %s191
      %p193 = scmp.eq.s32.totalorder %s31, 0
      %p194 = por %p192, %p193
      %s195 = ssub.s32 %s25, %s32
      %p196 = scmp.eq.s32.totalorder %s195, 0
      %s198 = sadd.s32 %s197, 1
      %s199 = scalar_select %p196, %s197, %s198
      %p202 = pneg %p196
      %p203 = scmp.eq.s32.totalorder %s25, 1
      %p204 = por %p202, %p203
      %p205 = scmp.ne.s32.totalorder %s197, %s200
      %p206 = scmp.eq.s32.totalorder %s25, 0
      %p207 = por %p205, %p206
      %p208 = scmp.ne.s32.totalorder %s197, %s200
      %p209 = scmp.eq.s32.totalorder %s30, 1
      %p210 = por %p208, %p209
      %p211 = scmp.ne.s32.totalorder %s200, %s201
      %p212 = scmp.eq.s32.totalorder %s30, 0
      %p213 = por %p211, %p212
      %p214 = scmp.ne.s32.totalorder %s200, %s201
      %p215 = scmp.eq.s32.totalorder %s31, 1
      %p216 = por %p214, %p215
      %p218 = scmp.ne.s32.totalorder %s201, %s217
      %p219 = scmp.eq.s32.totalorder %s31, 0
      %p220 = por %p218, %p219
      %p221 = scmp.le.s32.totalorder 1, %s25
      %p222 = scmp.lt.s32.totalorder %s25, 3
      %p223 = pnand %p221, %p222
      %p224 = pneg %p223
      // Predicated region
      $region9: #{tpu_custom_call.1} parent=5 // pred_check
        _
      $region10: #{tpu_custom_call.1} parent=5 // pred_check_branch
        %226 = sbr.rel (%p223) target = $region12
      $region11: #{tpu_custom_call.1} parent=5 // pred_region
        %s227 = ssub.s32 %s25, 1
        // Predicated region
        $region13: #{tpu_custom_call.1} parent=11 // pred_check
          %p228 = pneg %p72
        $region14: #{tpu_custom_call.1} parent=11 // pred_check_branch
          %230 = sbr.rel (%p228) target = $region16
        $region15: #{tpu_custom_call.1} parent=11 // pred_region
          %s232 = ssub.s32 81920, 81920
          %233 = vsyncadd [#allocation6], %s232
          %s234 = sshll.u32 [#allocation5], 4
          %s235 = int_to_ptr.vmem [resolvable:$true] %s234
          %240 = dma.hbm_to_vmem [thread:$0]  %s1, 81920, %s235, [#allocation6], 1280, 1280, 80
        $region16: #{tpu_custom_call.1} parent=11 // pred_fallthru
          _
        // Predicated region
        $region17: #{tpu_custom_call.1} parent=11 // pred_check
          %p241 = pneg %p93
        $region18: #{tpu_custom_call.1} parent=11 // pred_check_branch
          %243 = sbr.rel (%p241) target = $region20
        $region19: #{tpu_custom_call.1} parent=11 // pred_region
          %s245 = ssub.s32 16384, 16384
          %246 = vsyncadd [#allocation6], %s245
          %s247 = sshll.u32 [#allocation7], 4
          %s248 = int_to_ptr.vmem [resolvable:$true] %s247
          %253 = dma.hbm_to_vmem [thread:$0]  %s2, 16384, %s248, [#allocation6], 256, 256, 16
        $region20: #{tpu_custom_call.1} parent=11 // pred_fallthru
          _
        // Predicated region
        $region21: #{tpu_custom_call.1} parent=11 // pred_check
          %p254 = pneg %p114
        $region22: #{tpu_custom_call.1} parent=11 // pred_check_branch
          %256 = sbr.rel (%p254) target = $region24
        $region23: #{tpu_custom_call.1} parent=11 // pred_region
          %s258 = ssub.s32 4096, 4096
          %259 = vsyncadd [#allocation9], %s258
          %s260 = sshll.u32 [#allocation8], 4
          %s261 = int_to_ptr.vmem [resolvable:$true] %s260
          %266 = dma.hbm_to_vmem [thread:$0]  %s3, 4096, %s261, [#allocation9], 512, 512, 32
        $region24: #{tpu_custom_call.1} parent=11 // pred_fallthru
          _
        // Predicated region
        $region25: #{tpu_custom_call.1} parent=11 // pred_check
          %p267 = pneg %p135
        $region26: #{tpu_custom_call.1} parent=11 // pred_check_branch
          %269 = sbr.rel (%p267) target = $region28
        $region27: #{tpu_custom_call.1} parent=11 // pred_region
          %s271 = ssub.s32 4096, 4096
          %272 = vsyncadd [#allocation9], %s271
          %s273 = sshll.u32 [#allocation10], 4
          %s274 = int_to_ptr.vmem [resolvable:$true] %s273
          %279 = dma.hbm_to_vmem [thread:$0]  %s4, 4096, %s274, [#allocation9], 512, 512, 32
        $region28: #{tpu_custom_call.1} parent=11 // pred_fallthru
          _
      $region12: #{tpu_custom_call.1} parent=5 // pred_fallthru
        _
      %p280 = scmp.lt.s32.totalorder %s25, 2
      // Predicated region
      $region29: #{tpu_custom_call.1} parent=5 // pred_check
        %p281 = pneg %p280
      $region30: #{tpu_custom_call.1} parent=5 // pred_check_branch
        %283 = sbr.rel (%p281) target = $region32
      $region31: #{tpu_custom_call.1} parent=5 // pred_region
        // Predicated region
        $region33: #{tpu_custom_call.1} parent=31 // pred_check
          %p284 = pneg %p45
        $region34: #{tpu_custom_call.1} parent=31 // pred_check_branch
          %286 = sbr.rel (%p284) target = $region36
        $region35: #{tpu_custom_call.1} parent=31 // pred_region
          %s287 = sand.u32 %s35, 1
          %s288 = scalar_lea.sflag [#allocation3], %s287
          %s289 = sand.u32 %s35, 1
          %s290 = smul.addr %s289, 256
          %s291 = scalar_lea.vmem [#allocation2], %s290
          %s293 = ssub.s32 4096, 4096
          %294 = vsyncadd %s288, %s293
          %s295 = smul.addr %s25, 32
          %s296 = smul.addr %s295, 128
          %s297 = scalar_lea.hbm %s0, %s296
          %s298 = sshll.u32 %s291, 4
          %s299 = int_to_ptr.vmem [resolvable:$true] %s298
          %304 = dma.hbm_to_vmem [thread:$0]  %s297, 4096, %s299, %s288, 512, 512, 32
        $region36: #{tpu_custom_call.1} parent=31 // pred_fallthru
          _
      $region32: #{tpu_custom_call.1} parent=5 // pred_fallthru
        _
      %p305 = scmp.le.s32.totalorder 1, %s25
      %p306 = scmp.lt.s32.totalorder %s25, 3
      %p307 = pnand %p305, %p306
      %p308 = pneg %p307
      // Predicated region
      $region37: #{tpu_custom_call.1} parent=5 // pred_check
        _
      $region38: #{tpu_custom_call.1} parent=5 // pred_check_branch
        %310 = sbr.rel (%p307) target = $region40
      $region39: #{tpu_custom_call.1} parent=5 // pred_region
        %s311 = ssub.s32 %s25, 1
        %s312 = sand.u32 %s38, 1
        %s313 = scalar_lea.sflag [#allocation3], %s312
        %s314 = sand.u32 %s38, 1
        %s315 = smul.addr %s314, 256
        %s316 = scalar_lea.vmem [#allocation2], %s315
        // Predicated region
        $region41: #{tpu_custom_call.1} parent=39 // pred_check
          %p317 = pneg %p51
        $region42: #{tpu_custom_call.1} parent=39 // pred_check_branch
          %319 = sbr.rel (%p317) target = $region44
        $region43: #{tpu_custom_call.1} parent=39 // pred_region
          %320 = dma.done %s313, 4096
        $region44: #{tpu_custom_call.1} parent=39 // pred_fallthru
          _
        // Predicated region
        $region45: #{tpu_custom_call.1} parent=39 // pred_check
          %p321 = pneg %p72
        $region46: #{tpu_custom_call.1} parent=39 // pred_check_branch
          %323 = sbr.rel (%p321) target = $region48
        $region47: #{tpu_custom_call.1} parent=39 // pred_region
          %324 = dma.done [#allocation6], 81920
        $region48: #{tpu_custom_call.1} parent=39 // pred_fallthru
          _
        // Predicated region
        $region49: #{tpu_custom_call.1} parent=39 // pred_check
          %p325 = pneg %p93
        $region50: #{tpu_custom_call.1} parent=39 // pred_check_branch
          %327 = sbr.rel (%p325) target = $region52
        $region51: #{tpu_custom_call.1} parent=39 // pred_region
          %328 = dma.done [#allocation6], 16384
        $region52: #{tpu_custom_call.1} parent=39 // pred_fallthru
          _
        // Predicated region
        $region53: #{tpu_custom_call.1} parent=39 // pred_check
          %p329 = pneg %p114
        $region54: #{tpu_custom_call.1} parent=39 // pred_check_branch
          %331 = sbr.rel (%p329) target = $region56
        $region55: #{tpu_custom_call.1} parent=39 // pred_region
          %332 = dma.done [#allocation9], 4096
        $region56: #{tpu_custom_call.1} parent=39 // pred_fallthru
          _
        // Predicated region
        $region57: #{tpu_custom_call.1} parent=39 // pred_check
          %p333 = pneg %p135
        $region58: #{tpu_custom_call.1} parent=39 // pred_check_branch
          %335 = sbr.rel (%p333) target = $region60
        $region59: #{tpu_custom_call.1} parent=39 // pred_region
          %336 = dma.done [#allocation9], 4096
        $region60: #{tpu_custom_call.1} parent=39 // pred_fallthru
          _
        %s337 = sand.u32 %s38, 1
        %s338 = scalar_lea.sflag [#allocation3], %s337
        %s339 = sand.u32 %s38, 1
        %s340 = smul.addr %s339, 256
        %s341 = scalar_lea.vmem [#allocation2], %s340
        %p342 = pneg %p51
        %p343 = pneg %p48
        %p344 = pneg %p72
        %p345 = pneg %p69
        %p346 = pneg %p93
        %p347 = pneg %p90
        %p348 = pneg %p114
        %p349 = pneg %p111
        %p350 = pneg %p135
        %p351 = pneg %p132
        %p352 = pneg %p161
        %p353 = pneg %p158
        %s354 = sand.u32 %s148, 1
        %s355 = scalar_lea.sflag [#allocation4], %s354
        %s356 = sand.u32 %s148, 1
        %s357 = smul.addr %s356, 128
        %s358 = scalar_lea.vmem [#allocation11], %s357
        %p359 = pneg %p187
        %p360 = pneg %p184
        %s361 = sand.u32 %s30, 1
        %s362 = scalar_lea.sflag [#allocation13], %s361
        %s363 = sand.u32 %s174, 1
        %s364 = smul.addr %s363, 128
        %s365 = scalar_lea.vmem [#allocation12], %s364
        %p366 = pneg %p213
        %p367 = pneg %p210
        %s368 = sand.u32 %s30, 1
        %s369 = scalar_lea.sflag [#allocation13], %s368
        %s370 = sand.u32 %s200, 1
        %s371 = smul.addr %s370, 128
        %s372 = scalar_lea.vmem [#allocation14], %s371
        %v374 = vld [vmem:[%s316] sm:$0xff]
        %v375 = vld [vmem:[%s316 + $0x8] sm:$0xff]
        %v376 = vld [vmem:[%s316 + $0x10] sm:$0xff]
        %v377 = vld [vmem:[%s316 + $0x18] sm:$0xff]
        %v378 = vld [vmem:[%s316 + $0x20] sm:$0xff]
        %v379 = vld [vmem:[%s316 + $0x28] sm:$0xff]
        %v380 = vld [vmem:[%s316 + $0x30] sm:$0xff]
        %v381 = vld [vmem:[%s316 + $0x38] sm:$0xff]
        %v382 = vld [vmem:[%s316 + $0x40] sm:$0xff]
        %v383 = vld [vmem:[%s316 + $0x48] sm:$0xff]
        %v384 = vld [vmem:[%s316 + $0x50] sm:$0xff]
        %v385 = vld [vmem:[%s316 + $0x58] sm:$0xff]
        %v386 = vld [vmem:[%s316 + $0x60] sm:$0xff]
        %v387 = vld [vmem:[%s316 + $0x68] sm:$0xff]
        %v388 = vld [vmem:[%s316 + $0x70] sm:$0xff]
        %v389 = vld [vmem:[%s316 + $0x78] sm:$0xff]
        %v390 = vld [vmem:[%s316 + $0x80] sm:$0xff]
        %v391 = vld [vmem:[%s316 + $0x88] sm:$0xff]
        %v392 = vld [vmem:[%s316 + $0x90] sm:$0xff]
        %v393 = vld [vmem:[%s316 + $0x98] sm:$0xff]
        %v394 = vld [vmem:[%s316 + $0xa0] sm:$0xff]
        %v395 = vld [vmem:[%s316 + $0xa8] sm:$0xff]
        %v396 = vld [vmem:[%s316 + $0xb0] sm:$0xff]
        %v397 = vld [vmem:[%s316 + $0xb8] sm:$0xff]
        %v398 = vld [vmem:[%s316 + $0xc0] sm:$0xff]
        %v399 = vld [vmem:[%s316 + $0xc8] sm:$0xff]
        %v400 = vld [vmem:[%s316 + $0xd0] sm:$0xff]
        %v401 = vld [vmem:[%s316 + $0xd8] sm:$0xff]
        %v402 = vld [vmem:[%s316 + $0xe0] sm:$0xff]
        %v403 = vld [vmem:[%s316 + $0xe8] sm:$0xff]
        %v404 = vld [vmem:[%s316 + $0xf0] sm:$0xff]
        %v405 = vld [vmem:[%s316 + $0xf8] sm:$0xff]
        %v406 = vpack.c.bf16 %v378, %v374
        %v407 = vpack.c.bf16 %v379, %v375
        %v408 = vpack.c.bf16 %v380, %v376
        %v409 = vpack.c.bf16 %v381, %v377
        %v410 = vpack.c.bf16 %v386, %v382
        %v411 = vpack.c.bf16 %v387, %v383
        %v412 = vpack.c.bf16 %v388, %v384
        %v413 = vpack.c.bf16 %v389, %v385
        %v414 = vpack.c.bf16 %v394, %v390
        %v415 = vpack.c.bf16 %v395, %v391
        %v416 = vpack.c.bf16 %v396, %v392
        %v417 = vpack.c.bf16 %v397, %v393
        %v418 = vpack.c.bf16 %v402, %v398
        %v419 = vpack.c.bf16 %v403, %v399
        %v420 = vpack.c.bf16 %v404, %v400
        %v421 = vpack.c.bf16 %v405, %v401
        %v422 = vld [vmem:[#allocation5] sm:$0xff]
        %v423 = vld [vmem:[#allocation5 + $0x8] sm:$0xff]
        %v424 = vld [vmem:[#allocation5 + $0x10] sm:$0xff]
        %v425 = vld [vmem:[#allocation5 + $0x18] sm:$0xff]
        %v426 = vld [vmem:[#allocation5 + $0x20] sm:$0xff]
        %v427 = vld [vmem:[#allocation5 + $0x28] sm:$0xff]
        %v428 = vld [vmem:[#allocation5 + $0x30] sm:$0xff]
        %v429 = vld [vmem:[#allocation5 + $0x38] sm:$0xff]
        %v430 = vld [vmem:[#allocation5 + $0x40] sm:$0xff]
        %v431 = vld [vmem:[#allocation5 + $0x48] sm:$0xff]
        %v432 = vld [vmem:[#allocation5 + $0x50] sm:$0xff]
        %v433 = vld [vmem:[#allocation5 + $0x58] sm:$0xff]
        %v434 = vld [vmem:[#allocation5 + $0x60] sm:$0xff]
        %v435 = vld [vmem:[#allocation5 + $0x68] sm:$0xff]
        %v436 = vld [vmem:[#allocation5 + $0x70] sm:$0xff]
        %v437 = vld [vmem:[#allocation5 + $0x78] sm:$0xff]
        %v438 = vld [vmem:[#allocation5 + $0x80] sm:$0xff]
        %v439 = vld [vmem:[#allocation5 + $0x88] sm:$0xff]
        %v440 = vld [vmem:[#allocation5 + $0x90] sm:$0xff]
        %v441 = vld [vmem:[#allocation5 + $0x98] sm:$0xff]
        %v442 = vld [vmem:[#allocation5 + $0xa0] sm:$0xff]
        %v443 = vld [vmem:[#allocation5 + $0xa8] sm:$0xff]
        %v444 = vld [vmem:[#allocation5 + $0xb0] sm:$0xff]
        %v445 = vld [vmem:[#allocation5 + $0xb8] sm:$0xff]
        %v446 = vld [vmem:[#allocation5 + $0xc0] sm:$0xff]
        %v447 = vld [vmem:[#allocation5 + $0xc8] sm:$0xff]
        %v448 = vld [vmem:[#allocation5 + $0xd0] sm:$0xff]
        %v449 = vld [vmem:[#allocation5 + $0xd8] sm:$0xff]
        %v450 = vld [vmem:[#allocation5 + $0xe0] sm:$0xff]
        %v451 = vld [vmem:[#allocation5 + $0xe8] sm:$0xff]
        %v452 = vld [vmem:[#allocation5 + $0xf0] sm:$0xff]
        %v453 = vld [vmem:[#allocation5 + $0xf8] sm:$0xff]
        %v454 = vld [vmem:[#allocation5 + $0x100] sm:$0xff]
        %v455 = vld [vmem:[#allocation5 + $0x108] sm:$0xff]
        %v456 = vld [vmem:[#allocation5 + $0x110] sm:$0xff]
        %v457 = vld [vmem:[#allocation5 + $0x118] sm:$0xff]
        %v458 = vld [vmem:[#allocation5 + $0x120] sm:$0xff]
        %v459 = vld [vmem:[#allocation5 + $0x128] sm:$0xff]
        %v460 = vld [vmem:[#allocation5 + $0x130] sm:$0xff]
        %v461 = vld [vmem:[#allocation5 + $0x138] sm:$0xff]
        %v462 = vld [vmem:[#allocation5 + $0x140] sm:$0xff]
        %v463 = vld [vmem:[#allocation5 + $0x148] sm:$0xff]
        %v464 = vld [vmem:[#allocation5 + $0x150] sm:$0xff]
        %v465 = vld [vmem:[#allocation5 + $0x158] sm:$0xff]
        %v466 = vld [vmem:[#allocation5 + $0x160] sm:$0xff]
        %v467 = vld [vmem:[#allocation5 + $0x168] sm:$0xff]
        %v468 = vld [vmem:[#allocation5 + $0x170] sm:$0xff]
        %v469 = vld [vmem:[#allocation5 + $0x178] sm:$0xff]
        %v470 = vld [vmem:[#allocation5 + $0x180] sm:$0xff]
        %v471 = vld [vmem:[#allocation5 + $0x188] sm:$0xff]
        %v472 = vld [vmem:[#allocation5 + $0x190] sm:$0xff]
        %v473 = vld [vmem:[#allocation5 + $0x198] sm:$0xff]
        %v474 = vld [vmem:[#allocation5 + $0x1a0] sm:$0xff]
        %v475 = vld [vmem:[#allocation5 + $0x1a8] sm:$0xff]
        %v476 = vld [vmem:[#allocation5 + $0x1b0] sm:$0xff]
        %v477 = vld [vmem:[#allocation5 + $0x1b8] sm:$0xff]
        %v478 = vld [vmem:[#allocation5 + $0x1c0] sm:$0xff]
        %v479 = vld [vmem:[#allocation5 + $0x1c8] sm:$0xff]
        %v480 = vld [vmem:[#allocation5 + $0x1d0] sm:$0xff]
        %v481 = vld [vmem:[#allocation5 + $0x1d8] sm:$0xff]
        %v482 = vld [vmem:[#allocation5 + $0x1e0] sm:$0xff]
        %v483 = vld [vmem:[#allocation5 + $0x1e8] sm:$0xff]
        %v484 = vld [vmem:[#allocation5 + $0x1f0] sm:$0xff]
        %v485 = vld [vmem:[#allocation5 + $0x1f8] sm:$0xff]
        %v486 = vld [vmem:[#allocation5 + $0x200] sm:$0xff]
        %v487 = vld [vmem:[#allocation5 + $0x208] sm:$0xff]
        %v488 = vld [vmem:[#allocation5 + $0x210] sm:$0xff]
        %v489 = vld [vmem:[#allocation5 + $0x218] sm:$0xff]
        %v490 = vld [vmem:[#allocation5 + $0x220] sm:$0xff]
        %v491 = vld [vmem:[#allocation5 + $0x228] sm:$0xff]
        %v492 = vld [vmem:[#allocation5 + $0x230] sm:$0xff]
        %v493 = vld [vmem:[#allocation5 + $0x238] sm:$0xff]
        %v494 = vld [vmem:[#allocation5 + $0x240] sm:$0xff]
        %v495 = vld [vmem:[#allocation5 + $0x248] sm:$0xff]
        %v496 = vld [vmem:[#allocation5 + $0x250] sm:$0xff]
        %v497 = vld [vmem:[#allocation5 + $0x258] sm:$0xff]
        %v498 = vld [vmem:[#allocation5 + $0x260] sm:$0xff]
        %v499 = vld [vmem:[#allocation5 + $0x268] sm:$0xff]
        %v500 = vld [vmem:[#allocation5 + $0x270] sm:$0xff]
        %v501 = vld [vmem:[#allocation5 + $0x278] sm:$0xff]
        %v502 = vld [vmem:[#allocation5 + $0x280] sm:$0xff]
        %v503 = vld [vmem:[#allocation5 + $0x288] sm:$0xff]
        %v504 = vld [vmem:[#allocation5 + $0x290] sm:$0xff]
        %v505 = vld [vmem:[#allocation5 + $0x298] sm:$0xff]
        %v506 = vld [vmem:[#allocation5 + $0x2a0] sm:$0xff]
        %v507 = vld [vmem:[#allocation5 + $0x2a8] sm:$0xff]
        %v508 = vld [vmem:[#allocation5 + $0x2b0] sm:$0xff]
        %v509 = vld [vmem:[#allocation5 + $0x2b8] sm:$0xff]
        %v510 = vld [vmem:[#allocation5 + $0x2c0] sm:$0xff]
        %v511 = vld [vmem:[#allocation5 + $0x2c8] sm:$0xff]
        %v512 = vld [vmem:[#allocation5 + $0x2d0] sm:$0xff]
        %v513 = vld [vmem:[#allocation5 + $0x2d8] sm:$0xff]
        %v514 = vld [vmem:[#allocation5 + $0x2e0] sm:$0xff]
        %v515 = vld [vmem:[#allocation5 + $0x2e8] sm:$0xff]
        %v516 = vld [vmem:[#allocation5 + $0x2f0] sm:$0xff]
        %v517 = vld [vmem:[#allocation5 + $0x2f8] sm:$0xff]
        %v518 = vld [vmem:[#allocation5 + $0x300] sm:$0xff]
        %v519 = vld [vmem:[#allocation5 + $0x308] sm:$0xff]
        %v520 = vld [vmem:[#allocation5 + $0x310] sm:$0xff]
        %v521 = vld [vmem:[#allocation5 + $0x318] sm:$0xff]
        %v522 = vld [vmem:[#allocation5 + $0x320] sm:$0xff]
        %v523 = vld [vmem:[#allocation5 + $0x328] sm:$0xff]
        %v524 = vld [vmem:[#allocation5 + $0x330] sm:$0xff]
        %v525 = vld [vmem:[#allocation5 + $0x338] sm:$0xff]
        %v526 = vld [vmem:[#allocation5 + $0x340] sm:$0xff]
        %v527 = vld [vmem:[#allocation5 + $0x348] sm:$0xff]
        %v528 = vld [vmem:[#allocation5 + $0x350] sm:$0xff]
        %v529 = vld [vmem:[#allocation5 + $0x358] sm:$0xff]
        %v530 = vld [vmem:[#allocation5 + $0x360] sm:$0xff]
        %v531 = vld [vmem:[#allocation5 + $0x368] sm:$0xff]
        %v532 = vld [vmem:[#allocation5 + $0x370] sm:$0xff]
        %v533 = vld [vmem:[#allocation5 + $0x378] sm:$0xff]
        %v534 = vld [vmem:[#allocation5 + $0x380] sm:$0xff]
        %v535 = vld [vmem:[#allocation5 + $0x388] sm:$0xff]
        %v536 = vld [vmem:[#allocation5 + $0x390] sm:$0xff]
        %v537 = vld [vmem:[#allocation5 + $0x398] sm:$0xff]
        %v538 = vld [vmem:[#allocation5 + $0x3a0] sm:$0xff]
        %v539 = vld [vmem:[#allocation5 + $0x3a8] sm:$0xff]
        %v540 = vld [vmem:[#allocation5 + $0x3b0] sm:$0xff]
        %v541 = vld [vmem:[#allocation5 + $0x3b8] sm:$0xff]
        %v542 = vld [vmem:[#allocation5 + $0x3c0] sm:$0xff]
        %v543 = vld [vmem:[#allocation5 + $0x3c8] sm:$0xff]
        %v544 = vld [vmem:[#allocation5 + $0x3d0] sm:$0xff]
        %v545 = vld [vmem:[#allocation5 + $0x3d8] sm:$0xff]
        %v546 = vld [vmem:[#allocation5 + $0x3e0] sm:$0xff]
        %v547 = vld [vmem:[#allocation5 + $0x3e8] sm:$0xff]
        %v548 = vld [vmem:[#allocation5 + $0x3f0] sm:$0xff]
        %v549 = vld [vmem:[#allocation5 + $0x3f8] sm:$0xff]
        %v550 = vld [vmem:[#allocation5 + $0x400] sm:$0xff]
        %v551 = vld [vmem:[#allocation5 + $0x408] sm:$0xff]
        %v552 = vld [vmem:[#allocation5 + $0x410] sm:$0xff]
        %v553 = vld [vmem:[#allocation5 + $0x418] sm:$0xff]
        %v554 = vld [vmem:[#allocation5 + $0x420] sm:$0xff]
        %v555 = vld [vmem:[#allocation5 + $0x428] sm:$0xff]
        %v556 = vld [vmem:[#allocation5 + $0x430] sm:$0xff]
        %v557 = vld [vmem:[#allocation5 + $0x438] sm:$0xff]
        %v558 = vld [vmem:[#allocation5 + $0x440] sm:$0xff]
        %v559 = vld [vmem:[#allocation5 + $0x448] sm:$0xff]
        %v560 = vld [vmem:[#allocation5 + $0x450] sm:$0xff]
        %v561 = vld [vmem:[#allocation5 + $0x458] sm:$0xff]
        %v562 = vld [vmem:[#allocation5 + $0x460] sm:$0xff]
        %v563 = vld [vmem:[#allocation5 + $0x468] sm:$0xff]
        %v564 = vld [vmem:[#allocation5 + $0x470] sm:$0xff]
        %v565 = vld [vmem:[#allocation5 + $0x478] sm:$0xff]
        %v566 = vld [vmem:[#allocation5 + $0x480] sm:$0xff]
        %v567 = vld [vmem:[#allocation5 + $0x488] sm:$0xff]
        %v568 = vld [vmem:[#allocation5 + $0x490] sm:$0xff]
        %v569 = vld [vmem:[#allocation5 + $0x498] sm:$0xff]
        %v570 = vld [vmem:[#allocation5 + $0x4a0] sm:$0xff]
        %v571 = vld [vmem:[#allocation5 + $0x4a8] sm:$0xff]
        %v572 = vld [vmem:[#allocation5 + $0x4b0] sm:$0xff]
        %v573 = vld [vmem:[#allocation5 + $0x4b8] sm:$0xff]
        %v574 = vld [vmem:[#allocation5 + $0x4c0] sm:$0xff]
        %v575 = vld [vmem:[#allocation5 + $0x4c8] sm:$0xff]
        %v576 = vld [vmem:[#allocation5 + $0x4d0] sm:$0xff]
        %v577 = vld [vmem:[#allocation5 + $0x4d8] sm:$0xff]
        %v578 = vld [vmem:[#allocation5 + $0x4e0] sm:$0xff]
        %v579 = vld [vmem:[#allocation5 + $0x4e8] sm:$0xff]
        %v580 = vld [vmem:[#allocation5 + $0x4f0] sm:$0xff]
        %v581 = vld [vmem:[#allocation5 + $0x4f8] sm:$0xff]
        %v582 = vld [vmem:[#allocation5 + $0x500] sm:$0xff]
        %v583 = vld [vmem:[#allocation5 + $0x508] sm:$0xff]
        %v584 = vld [vmem:[#allocation5 + $0x510] sm:$0xff]
        %v585 = vld [vmem:[#allocation5 + $0x518] sm:$0xff]
        %v586 = vld [vmem:[#allocation5 + $0x520] sm:$0xff]
        %v587 = vld [vmem:[#allocation5 + $0x528] sm:$0xff]
        %v588 = vld [vmem:[#allocation5 + $0x530] sm:$0xff]
        %v589 = vld [vmem:[#allocation5 + $0x538] sm:$0xff]
        %v590 = vld [vmem:[#allocation5 + $0x540] sm:$0xff]
        %v591 = vld [vmem:[#allocation5 + $0x548] sm:$0xff]
        %v592 = vld [vmem:[#allocation5 + $0x550] sm:$0xff]
        %v593 = vld [vmem:[#allocation5 + $0x558] sm:$0xff]
        %v594 = vld [vmem:[#allocation5 + $0x560] sm:$0xff]
        %v595 = vld [vmem:[#allocation5 + $0x568] sm:$0xff]
        %v596 = vld [vmem:[#allocation5 + $0x570] sm:$0xff]
        %v597 = vld [vmem:[#allocation5 + $0x578] sm:$0xff]
        %v598 = vld [vmem:[#allocation5 + $0x580] sm:$0xff]
        %v599 = vld [vmem:[#allocation5 + $0x588] sm:$0xff]
        %v600 = vld [vmem:[#allocation5 + $0x590] sm:$0xff]
        %v601 = vld [vmem:[#allocation5 + $0x598] sm:$0xff]
        %v602 = vld [vmem:[#allocation5 + $0x5a0] sm:$0xff]
        %v603 = vld [vmem:[#allocation5 + $0x5a8] sm:$0xff]
        %v604 = vld [vmem:[#allocation5 + $0x5b0] sm:$0xff]
        %v605 = vld [vmem:[#allocation5 + $0x5b8] sm:$0xff]
        %v606 = vld [vmem:[#allocation5 + $0x5c0] sm:$0xff]
        %v607 = vld [vmem:[#allocation5 + $0x5c8] sm:$0xff]
        %v608 = vld [vmem:[#allocation5 + $0x5d0] sm:$0xff]
        %v609 = vld [vmem:[#allocation5 + $0x5d8] sm:$0xff]
        %v610 = vld [vmem:[#allocation5 + $0x5e0] sm:$0xff]
        %v611 = vld [vmem:[#allocation5 + $0x5e8] sm:$0xff]
        %v612 = vld [vmem:[#allocation5 + $0x5f0] sm:$0xff]
        %v613 = vld [vmem:[#allocation5 + $0x5f8] sm:$0xff]
        %v614 = vld [vmem:[#allocation5 + $0x600] sm:$0xff]
        %v615 = vld [vmem:[#allocation5 + $0x608] sm:$0xff]
        %v616 = vld [vmem:[#allocation5 + $0x610] sm:$0xff]
        %v617 = vld [vmem:[#allocation5 + $0x618] sm:$0xff]
        %v618 = vld [vmem:[#allocation5 + $0x620] sm:$0xff]
        %v619 = vld [vmem:[#allocation5 + $0x628] sm:$0xff]
        %v620 = vld [vmem:[#allocation5 + $0x630] sm:$0xff]
        %v621 = vld [vmem:[#allocation5 + $0x638] sm:$0xff]
        %v622 = vld [vmem:[#allocation5 + $0x640] sm:$0xff]
        %v623 = vld [vmem:[#allocation5 + $0x648] sm:$0xff]
        %v624 = vld [vmem:[#allocation5 + $0x650] sm:$0xff]
        %v625 = vld [vmem:[#allocation5 + $0x658] sm:$0xff]
        %v626 = vld [vmem:[#allocation5 + $0x660] sm:$0xff]
        %v627 = vld [vmem:[#allocation5 + $0x668] sm:$0xff]
        %v628 = vld [vmem:[#allocation5 + $0x670] sm:$0xff]
        %v629 = vld [vmem:[#allocation5 + $0x678] sm:$0xff]
        %v630 = vld [vmem:[#allocation5 + $0x680] sm:$0xff]
        %v631 = vld [vmem:[#allocation5 + $0x688] sm:$0xff]
        %v632 = vld [vmem:[#allocation5 + $0x690] sm:$0xff]
        %v633 = vld [vmem:[#allocation5 + $0x698] sm:$0xff]
        %v634 = vld [vmem:[#allocation5 + $0x6a0] sm:$0xff]
        %v635 = vld [vmem:[#allocation5 + $0x6a8] sm:$0xff]
        %v636 = vld [vmem:[#allocation5 + $0x6b0] sm:$0xff]
        %v637 = vld [vmem:[#allocation5 + $0x6b8] sm:$0xff]
        %v638 = vld [vmem:[#allocation5 + $0x6c0] sm:$0xff]
        %v639 = vld [vmem:[#allocation5 + $0x6c8] sm:$0xff]
        %v640 = vld [vmem:[#allocation5 + $0x6d0] sm:$0xff]
        %v641 = vld [vmem:[#allocation5 + $0x6d8] sm:$0xff]
        %v642 = vld [vmem:[#allocation5 + $0x6e0] sm:$0xff]
        %v643 = vld [vmem:[#allocation5 + $0x6e8] sm:$0xff]
        %v644 = vld [vmem:[#allocation5 + $0x6f0] sm:$0xff]
        %v645 = vld [vmem:[#allocation5 + $0x6f8] sm:$0xff]
        %v646 = vld [vmem:[#allocation5 + $0x700] sm:$0xff]
        %v647 = vld [vmem:[#allocation5 + $0x708] sm:$0xff]
        %v648 = vld [vmem:[#allocation5 + $0x710] sm:$0xff]
        %v649 = vld [vmem:[#allocation5 + $0x718] sm:$0xff]
        %v650 = vld [vmem:[#allocation5 + $0x720] sm:$0xff]
        %v651 = vld [vmem:[#allocation5 + $0x728] sm:$0xff]
        %v652 = vld [vmem:[#allocation5 + $0x730] sm:$0xff]
        %v653 = vld [vmem:[#allocation5 + $0x738] sm:$0xff]
        %v654 = vld [vmem:[#allocation5 + $0x740] sm:$0xff]
        %v655 = vld [vmem:[#allocation5 + $0x748] sm:$0xff]
        %v656 = vld [vmem:[#allocation5 + $0x750] sm:$0xff]
        %v657 = vld [vmem:[#allocation5 + $0x758] sm:$0xff]
        %v658 = vld [vmem:[#allocation5 + $0x760] sm:$0xff]
        %v659 = vld [vmem:[#allocation5 + $0x768] sm:$0xff]
        %v660 = vld [vmem:[#allocation5 + $0x770] sm:$0xff]
        %v661 = vld [vmem:[#allocation5 + $0x778] sm:$0xff]
        %v662 = vld [vmem:[#allocation5 + $0x780] sm:$0xff]
        %v663 = vld [vmem:[#allocation5 + $0x788] sm:$0xff]
        %v664 = vld [vmem:[#allocation5 + $0x790] sm:$0xff]
        %v665 = vld [vmem:[#allocation5 + $0x798] sm:$0xff]
        %v666 = vld [vmem:[#allocation5 + $0x7a0] sm:$0xff]
        %v667 = vld [vmem:[#allocation5 + $0x7a8] sm:$0xff]
        %v668 = vld [vmem:[#allocation5 + $0x7b0] sm:$0xff]
        %v669 = vld [vmem:[#allocation5 + $0x7b8] sm:$0xff]
        %v670 = vld [vmem:[#allocation5 + $0x7c0] sm:$0xff]
        %v671 = vld [vmem:[#allocation5 + $0x7c8] sm:$0xff]
        %v672 = vld [vmem:[#allocation5 + $0x7d0] sm:$0xff]
        %v673 = vld [vmem:[#allocation5 + $0x7d8] sm:$0xff]
        %v674 = vld [vmem:[#allocation5 + $0x7e0] sm:$0xff]
        %v675 = vld [vmem:[#allocation5 + $0x7e8] sm:$0xff]
        %v676 = vld [vmem:[#allocation5 + $0x7f0] sm:$0xff]
        %v677 = vld [vmem:[#allocation5 + $0x7f8] sm:$0xff]
        %v678 = vld [vmem:[#allocation5 + $0x800] sm:$0xff]
        %v679 = vld [vmem:[#allocation5 + $0x808] sm:$0xff]
        %v680 = vld [vmem:[#allocation5 + $0x810] sm:$0xff]
        %v681 = vld [vmem:[#allocation5 + $0x818] sm:$0xff]
        %v682 = vld [vmem:[#allocation5 + $0x820] sm:$0xff]
        %v683 = vld [vmem:[#allocation5 + $0x828] sm:$0xff]
        %v684 = vld [vmem:[#allocation5 + $0x830] sm:$0xff]
        %v685 = vld [vmem:[#allocation5 + $0x838] sm:$0xff]
        %v686 = vld [vmem:[#allocation5 + $0x840] sm:$0xff]
        %v687 = vld [vmem:[#allocation5 + $0x848] sm:$0xff]
        %v688 = vld [vmem:[#allocation5 + $0x850] sm:$0xff]
        %v689 = vld [vmem:[#allocation5 + $0x858] sm:$0xff]
        %v690 = vld [vmem:[#allocation5 + $0x860] sm:$0xff]
        %v691 = vld [vmem:[#allocation5 + $0x868] sm:$0xff]
        %v692 = vld [vmem:[#allocation5 + $0x870] sm:$0xff]
        %v693 = vld [vmem:[#allocation5 + $0x878] sm:$0xff]
        %v694 = vld [vmem:[#allocation5 + $0x880] sm:$0xff]
        %v695 = vld [vmem:[#allocation5 + $0x888] sm:$0xff]
        %v696 = vld [vmem:[#allocation5 + $0x890] sm:$0xff]
        %v697 = vld [vmem:[#allocation5 + $0x898] sm:$0xff]
        %v698 = vld [vmem:[#allocation5 + $0x8a0] sm:$0xff]
        %v699 = vld [vmem:[#allocation5 + $0x8a8] sm:$0xff]
        %v700 = vld [vmem:[#allocation5 + $0x8b0] sm:$0xff]
        %v701 = vld [vmem:[#allocation5 + $0x8b8] sm:$0xff]
        %v702 = vld [vmem:[#allocation5 + $0x8c0] sm:$0xff]
        %v703 = vld [vmem:[#allocation5 + $0x8c8] sm:$0xff]
        %v704 = vld [vmem:[#allocation5 + $0x8d0] sm:$0xff]
        %v705 = vld [vmem:[#allocation5 + $0x8d8] sm:$0xff]
        %v706 = vld [vmem:[#allocation5 + $0x8e0] sm:$0xff]
        %v707 = vld [vmem:[#allocation5 + $0x8e8] sm:$0xff]
        %v708 = vld [vmem:[#allocation5 + $0x8f0] sm:$0xff]
        %v709 = vld [vmem:[#allocation5 + $0x8f8] sm:$0xff]
        %v710 = vld [vmem:[#allocation5 + $0x900] sm:$0xff]
        %v711 = vld [vmem:[#allocation5 + $0x908] sm:$0xff]
        %v712 = vld [vmem:[#allocation5 + $0x910] sm:$0xff]
        %v713 = vld [vmem:[#allocation5 + $0x918] sm:$0xff]
        %v714 = vld [vmem:[#allocation5 + $0x920] sm:$0xff]
        %v715 = vld [vmem:[#allocation5 + $0x928] sm:$0xff]
        %v716 = vld [vmem:[#allocation5 + $0x930] sm:$0xff]
        %v717 = vld [vmem:[#allocation5 + $0x938] sm:$0xff]
        %v718 = vld [vmem:[#allocation5 + $0x940] sm:$0xff]
        %v719 = vld [vmem:[#allocation5 + $0x948] sm:$0xff]
        %v720 = vld [vmem:[#allocation5 + $0x950] sm:$0xff]
        %v721 = vld [vmem:[#allocation5 + $0x958] sm:$0xff]
        %v722 = vld [vmem:[#allocation5 + $0x960] sm:$0xff]
        %v723 = vld [vmem:[#allocation5 + $0x968] sm:$0xff]
        %v724 = vld [vmem:[#allocation5 + $0x970] sm:$0xff]
        %v725 = vld [vmem:[#allocation5 + $0x978] sm:$0xff]
        %v726 = vld [vmem:[#allocation5 + $0x980] sm:$0xff]
        %v727 = vld [vmem:[#allocation5 + $0x988] sm:$0xff]
        %v728 = vld [vmem:[#allocation5 + $0x990] sm:$0xff]
        %v729 = vld [vmem:[#allocation5 + $0x998] sm:$0xff]
        %v730 = vld [vmem:[#allocation5 + $0x9a0] sm:$0xff]
        %v731 = vld [vmem:[#allocation5 + $0x9a8] sm:$0xff]
        %v732 = vld [vmem:[#allocation5 + $0x9b0] sm:$0xff]
        %v733 = vld [vmem:[#allocation5 + $0x9b8] sm:$0xff]
        %v734 = vld [vmem:[#allocation5 + $0x9c0] sm:$0xff]
        %v735 = vld [vmem:[#allocation5 + $0x9c8] sm:$0xff]
        %v736 = vld [vmem:[#allocation5 + $0x9d0] sm:$0xff]
        %v737 = vld [vmem:[#allocation5 + $0x9d8] sm:$0xff]
        %v738 = vld [vmem:[#allocation5 + $0x9e0] sm:$0xff]
        %v739 = vld [vmem:[#allocation5 + $0x9e8] sm:$0xff]
        %v740 = vld [vmem:[#allocation5 + $0x9f0] sm:$0xff]
        %v741 = vld [vmem:[#allocation5 + $0x9f8] sm:$0xff]
        %v742 = vld [vmem:[#allocation5 + $0xa00] sm:$0xff]
        %v743 = vld [vmem:[#allocation5 + $0xa08] sm:$0xff]
        %v744 = vld [vmem:[#allocation5 + $0xa10] sm:$0xff]
        %v745 = vld [vmem:[#allocation5 + $0xa18] sm:$0xff]
        %v746 = vld [vmem:[#allocation5 + $0xa20] sm:$0xff]
        %v747 = vld [vmem:[#allocation5 + $0xa28] sm:$0xff]
        %v748 = vld [vmem:[#allocation5 + $0xa30] sm:$0xff]
        %v749 = vld [vmem:[#allocation5 + $0xa38] sm:$0xff]
        %v750 = vld [vmem:[#allocation5 + $0xa40] sm:$0xff]
        %v751 = vld [vmem:[#allocation5 + $0xa48] sm:$0xff]
        %v752 = vld [vmem:[#allocation5 + $0xa50] sm:$0xff]
        %v753 = vld [vmem:[#allocation5 + $0xa58] sm:$0xff]
        %v754 = vld [vmem:[#allocation5 + $0xa60] sm:$0xff]
        %v755 = vld [vmem:[#allocation5 + $0xa68] sm:$0xff]
        %v756 = vld [vmem:[#allocation5 + $0xa70] sm:$0xff]
        %v757 = vld [vmem:[#allocation5 + $0xa78] sm:$0xff]
        %v758 = vld [vmem:[#allocation5 + $0xa80] sm:$0xff]
        %v759 = vld [vmem:[#allocation5 + $0xa88] sm:$0xff]
        %v760 = vld [vmem:[#allocation5 + $0xa90] sm:$0xff]
        %v761 = vld [vmem:[#allocation5 + $0xa98] sm:$0xff]
        %v762 = vld [vmem:[#allocation5 + $0xaa0] sm:$0xff]
        %v763 = vld [vmem:[#allocation5 + $0xaa8] sm:$0xff]
        %v764 = vld [vmem:[#allocation5 + $0xab0] sm:$0xff]
        %v765 = vld [vmem:[#allocation5 + $0xab8] sm:$0xff]
        %v766 = vld [vmem:[#allocation5 + $0xac0] sm:$0xff]
        %v767 = vld [vmem:[#allocation5 + $0xac8] sm:$0xff]
        %v768 = vld [vmem:[#allocation5 + $0xad0] sm:$0xff]
        %v769 = vld [vmem:[#allocation5 + $0xad8] sm:$0xff]
        %v770 = vld [vmem:[#allocation5 + $0xae0] sm:$0xff]
        %v771 = vld [vmem:[#allocation5 + $0xae8] sm:$0xff]
        %v772 = vld [vmem:[#allocation5 + $0xaf0] sm:$0xff]
        %v773 = vld [vmem:[#allocation5 + $0xaf8] sm:$0xff]
        %v774 = vld [vmem:[#allocation5 + $0xb00] sm:$0xff]
        %v775 = vld [vmem:[#allocation5 + $0xb08] sm:$0xff]
        %v776 = vld [vmem:[#allocation5 + $0xb10] sm:$0xff]
        %v777 = vld [vmem:[#allocation5 + $0xb18] sm:$0xff]
        %v778 = vld [vmem:[#allocation5 + $0xb20] sm:$0xff]
        %v779 = vld [vmem:[#allocation5 + $0xb28] sm:$0xff]
        %v780 = vld [vmem:[#allocation5 + $0xb30] sm:$0xff]
        %v781 = vld [vmem:[#allocation5 + $0xb38] sm:$0xff]
        %v782 = vld [vmem:[#allocation5 + $0xb40] sm:$0xff]
        %v783 = vld [vmem:[#allocation5 + $0xb48] sm:$0xff]
        %v784 = vld [vmem:[#allocation5 + $0xb50] sm:$0xff]
        %v785 = vld [vmem:[#allocation5 + $0xb58] sm:$0xff]
        %v786 = vld [vmem:[#allocation5 + $0xb60] sm:$0xff]
        %v787 = vld [vmem:[#allocation5 + $0xb68] sm:$0xff]
        %v788 = vld [vmem:[#allocation5 + $0xb70] sm:$0xff]
        %v789 = vld [vmem:[#allocation5 + $0xb78] sm:$0xff]
        %v790 = vld [vmem:[#allocation5 + $0xb80] sm:$0xff]
        %v791 = vld [vmem:[#allocation5 + $0xb88] sm:$0xff]
        %v792 = vld [vmem:[#allocation5 + $0xb90] sm:$0xff]
        %v793 = vld [vmem:[#allocation5 + $0xb98] sm:$0xff]
        %v794 = vld [vmem:[#allocation5 + $0xba0] sm:$0xff]
        %v795 = vld [vmem:[#allocation5 + $0xba8] sm:$0xff]
        %v796 = vld [vmem:[#allocation5 + $0xbb0] sm:$0xff]
        %v797 = vld [vmem:[#allocation5 + $0xbb8] sm:$0xff]
        %v798 = vld [vmem:[#allocation5 + $0xbc0] sm:$0xff]
        %v799 = vld [vmem:[#allocation5 + $0xbc8] sm:$0xff]
        %v800 = vld [vmem:[#allocation5 + $0xbd0] sm:$0xff]
        %v801 = vld [vmem:[#allocation5 + $0xbd8] sm:$0xff]
        %v802 = vld [vmem:[#allocation5 + $0xbe0] sm:$0xff]
        %v803 = vld [vmem:[#allocation5 + $0xbe8] sm:$0xff]
        %v804 = vld [vmem:[#allocation5 + $0xbf0] sm:$0xff]
        %v805 = vld [vmem:[#allocation5 + $0xbf8] sm:$0xff]
        %v806 = vld [vmem:[#allocation5 + $0xc00] sm:$0xff]
        %v807 = vld [vmem:[#allocation5 + $0xc08] sm:$0xff]
        %v808 = vld [vmem:[#allocation5 + $0xc10] sm:$0xff]
        %v809 = vld [vmem:[#allocation5 + $0xc18] sm:$0xff]
        %v810 = vld [vmem:[#allocation5 + $0xc20] sm:$0xff]
        %v811 = vld [vmem:[#allocation5 + $0xc28] sm:$0xff]
        %v812 = vld [vmem:[#allocation5 + $0xc30] sm:$0xff]
        %v813 = vld [vmem:[#allocation5 + $0xc38] sm:$0xff]
        %v814 = vld [vmem:[#allocation5 + $0xc40] sm:$0xff]
        %v815 = vld [vmem:[#allocation5 + $0xc48] sm:$0xff]
        %v816 = vld [vmem:[#allocation5 + $0xc50] sm:$0xff]
        %v817 = vld [vmem:[#allocation5 + $0xc58] sm:$0xff]
        %v818 = vld [vmem:[#allocation5 + $0xc60] sm:$0xff]
        %v819 = vld [vmem:[#allocation5 + $0xc68] sm:$0xff]
        %v820 = vld [vmem:[#allocation5 + $0xc70] sm:$0xff]
        %v821 = vld [vmem:[#allocation5 + $0xc78] sm:$0xff]
        %v822 = vld [vmem:[#allocation5 + $0xc80] sm:$0xff]
        %v823 = vld [vmem:[#allocation5 + $0xc88] sm:$0xff]
        %v824 = vld [vmem:[#allocation5 + $0xc90] sm:$0xff]
        %v825 = vld [vmem:[#allocation5 + $0xc98] sm:$0xff]
        %v826 = vld [vmem:[#allocation5 + $0xca0] sm:$0xff]
        %v827 = vld [vmem:[#allocation5 + $0xca8] sm:$0xff]
        %v828 = vld [vmem:[#allocation5 + $0xcb0] sm:$0xff]
        %v829 = vld [vmem:[#allocation5 + $0xcb8] sm:$0xff]
        %v830 = vld [vmem:[#allocation5 + $0xcc0] sm:$0xff]
        %v831 = vld [vmem:[#allocation5 + $0xcc8] sm:$0xff]
        %v832 = vld [vmem:[#allocation5 + $0xcd0] sm:$0xff]
        %v833 = vld [vmem:[#allocation5 + $0xcd8] sm:$0xff]
        %v834 = vld [vmem:[#allocation5 + $0xce0] sm:$0xff]
        %v835 = vld [vmem:[#allocation5 + $0xce8] sm:$0xff]
        %v836 = vld [vmem:[#allocation5 + $0xcf0] sm:$0xff]
        %v837 = vld [vmem:[#allocation5 + $0xcf8] sm:$0xff]
        %v838 = vld [vmem:[#allocation5 + $0xd00] sm:$0xff]
        %v839 = vld [vmem:[#allocation5 + $0xd08] sm:$0xff]
        %v840 = vld [vmem:[#allocation5 + $0xd10] sm:$0xff]
        %v841 = vld [vmem:[#allocation5 + $0xd18] sm:$0xff]
        %v842 = vld [vmem:[#allocation5 + $0xd20] sm:$0xff]
        %v843 = vld [vmem:[#allocation5 + $0xd28] sm:$0xff]
        %v844 = vld [vmem:[#allocation5 + $0xd30] sm:$0xff]
        %v845 = vld [vmem:[#allocation5 + $0xd38] sm:$0xff]
        %v846 = vld [vmem:[#allocation5 + $0xd40] sm:$0xff]
        %v847 = vld [vmem:[#allocation5 + $0xd48] sm:$0xff]
        %v848 = vld [vmem:[#allocation5 + $0xd50] sm:$0xff]
        %v849 = vld [vmem:[#allocation5 + $0xd58] sm:$0xff]
        %v850 = vld [vmem:[#allocation5 + $0xd60] sm:$0xff]
        %v851 = vld [vmem:[#allocation5 + $0xd68] sm:$0xff]
        %v852 = vld [vmem:[#allocation5 + $0xd70] sm:$0xff]
        %v853 = vld [vmem:[#allocation5 + $0xd78] sm:$0xff]
        %v854 = vld [vmem:[#allocation5 + $0xd80] sm:$0xff]
        %v855 = vld [vmem:[#allocation5 + $0xd88] sm:$0xff]
        %v856 = vld [vmem:[#allocation5 + $0xd90] sm:$0xff]
        %v857 = vld [vmem:[#allocation5 + $0xd98] sm:$0xff]
        %v858 = vld [vmem:[#allocation5 + $0xda0] sm:$0xff]
        %v859 = vld [vmem:[#allocation5 + $0xda8] sm:$0xff]
        %v860 = vld [vmem:[#allocation5 + $0xdb0] sm:$0xff]
        %v861 = vld [vmem:[#allocation5 + $0xdb8] sm:$0xff]
        %v862 = vld [vmem:[#allocation5 + $0xdc0] sm:$0xff]
        %v863 = vld [vmem:[#allocation5 + $0xdc8] sm:$0xff]
        %v864 = vld [vmem:[#allocation5 + $0xdd0] sm:$0xff]
        %v865 = vld [vmem:[#allocation5 + $0xdd8] sm:$0xff]
        %v866 = vld [vmem:[#allocation5 + $0xde0] sm:$0xff]
        %v867 = vld [vmem:[#allocation5 + $0xde8] sm:$0xff]
        %v868 = vld [vmem:[#allocation5 + $0xdf0] sm:$0xff]
        %v869 = vld [vmem:[#allocation5 + $0xdf8] sm:$0xff]
        %v870 = vld [vmem:[#allocation5 + $0xe00] sm:$0xff]
        %v871 = vld [vmem:[#allocation5 + $0xe08] sm:$0xff]
        %v872 = vld [vmem:[#allocation5 + $0xe10] sm:$0xff]
        %v873 = vld [vmem:[#allocation5 + $0xe18] sm:$0xff]
        %v874 = vld [vmem:[#allocation5 + $0xe20] sm:$0xff]
        %v875 = vld [vmem:[#allocation5 + $0xe28] sm:$0xff]
        %v876 = vld [vmem:[#allocation5 + $0xe30] sm:$0xff]
        %v877 = vld [vmem:[#allocation5 + $0xe38] sm:$0xff]
        %v878 = vld [vmem:[#allocation5 + $0xe40] sm:$0xff]
        %v879 = vld [vmem:[#allocation5 + $0xe48] sm:$0xff]
        %v880 = vld [vmem:[#allocation5 + $0xe50] sm:$0xff]
        %v881 = vld [vmem:[#allocation5 + $0xe58] sm:$0xff]
        %v882 = vld [vmem:[#allocation5 + $0xe60] sm:$0xff]
        %v883 = vld [vmem:[#allocation5 + $0xe68] sm:$0xff]
        %v884 = vld [vmem:[#allocation5 + $0xe70] sm:$0xff]
        %v885 = vld [vmem:[#allocation5 + $0xe78] sm:$0xff]
        %v886 = vld [vmem:[#allocation5 + $0xe80] sm:$0xff]
        %v887 = vld [vmem:[#allocation5 + $0xe88] sm:$0xff]
        %v888 = vld [vmem:[#allocation5 + $0xe90] sm:$0xff]
        %v889 = vld [vmem:[#allocation5 + $0xe98] sm:$0xff]
        %v890 = vld [vmem:[#allocation5 + $0xea0] sm:$0xff]
        %v891 = vld [vmem:[#allocation5 + $0xea8] sm:$0xff]
        %v892 = vld [vmem:[#allocation5 + $0xeb0] sm:$0xff]
        %v893 = vld [vmem:[#allocation5 + $0xeb8] sm:$0xff]
        %v894 = vld [vmem:[#allocation5 + $0xec0] sm:$0xff]
        %v895 = vld [vmem:[#allocation5 + $0xec8] sm:$0xff]
        %v896 = vld [vmem:[#allocation5 + $0xed0] sm:$0xff]
        %v897 = vld [vmem:[#allocation5 + $0xed8] sm:$0xff]
        %v898 = vld [vmem:[#allocation5 + $0xee0] sm:$0xff]
        %v899 = vld [vmem:[#allocation5 + $0xee8] sm:$0xff]
        %v900 = vld [vmem:[#allocation5 + $0xef0] sm:$0xff]
        %v901 = vld [vmem:[#allocation5 + $0xef8] sm:$0xff]
        %v902 = vld [vmem:[#allocation5 + $0xf00] sm:$0xff]
        %v903 = vld [vmem:[#allocation5 + $0xf08] sm:$0xff]
        %v904 = vld [vmem:[#allocation5 + $0xf10] sm:$0xff]
        %v905 = vld [vmem:[#allocation5 + $0xf18] sm:$0xff]
        %v906 = vld [vmem:[#allocation5 + $0xf20] sm:$0xff]
        %v907 = vld [vmem:[#allocation5 + $0xf28] sm:$0xff]
        %v908 = vld [vmem:[#allocation5 + $0xf30] sm:$0xff]
        %v909 = vld [vmem:[#allocation5 + $0xf38] sm:$0xff]
        %v910 = vld [vmem:[#allocation5 + $0xf40] sm:$0xff]
        %v911 = vld [vmem:[#allocation5 + $0xf48] sm:$0xff]
        %v912 = vld [vmem:[#allocation5 + $0xf50] sm:$0xff]
        %v913 = vld [vmem:[#allocation5 + $0xf58] sm:$0xff]
        %v914 = vld [vmem:[#allocation5 + $0xf60] sm:$0xff]
        %v915 = vld [vmem:[#allocation5 + $0xf68] sm:$0xff]
        %v916 = vld [vmem:[#allocation5 + $0xf70] sm:$0xff]
        %v917 = vld [vmem:[#allocation5 + $0xf78] sm:$0xff]
        %v918 = vld [vmem:[#allocation5 + $0xf80] sm:$0xff]
        %v919 = vld [vmem:[#allocation5 + $0xf88] sm:$0xff]
        %v920 = vld [vmem:[#allocation5 + $0xf90] sm:$0xff]
        %v921 = vld [vmem:[#allocation5 + $0xf98] sm:$0xff]
        %v922 = vld [vmem:[#allocation5 + $0xfa0] sm:$0xff]
        %v923 = vld [vmem:[#allocation5 + $0xfa8] sm:$0xff]
        %v924 = vld [vmem:[#allocation5 + $0xfb0] sm:$0xff]
        %v925 = vld [vmem:[#allocation5 + $0xfb8] sm:$0xff]
        %v926 = vld [vmem:[#allocation5 + $0xfc0] sm:$0xff]
        %v927 = vld [vmem:[#allocation5 + $0xfc8] sm:$0xff]
        %v928 = vld [vmem:[#allocation5 + $0xfd0] sm:$0xff]
        %v929 = vld [vmem:[#allocation5 + $0xfd8] sm:$0xff]
        %v930 = vld [vmem:[#allocation5 + $0xfe0] sm:$0xff]
        %v931 = vld [vmem:[#allocation5 + $0xfe8] sm:$0xff]
        %v932 = vld [vmem:[#allocation5 + $0xff0] sm:$0xff]
        %v933 = vld [vmem:[#allocation5 + $0xff8] sm:$0xff]
        %v934 = vld [vmem:[#allocation5 + $0x1000] sm:$0xff]
        %v935 = vld [vmem:[#allocation5 + $0x1008] sm:$0xff]
        %v936 = vld [vmem:[#allocation5 + $0x1010] sm:$0xff]
        %v937 = vld [vmem:[#allocation5 + $0x1018] sm:$0xff]
        %v938 = vld [vmem:[#allocation5 + $0x1020] sm:$0xff]
        %v939 = vld [vmem:[#allocation5 + $0x1028] sm:$0xff]
        %v940 = vld [vmem:[#allocation5 + $0x1030] sm:$0xff]
        %v941 = vld [vmem:[#allocation5 + $0x1038] sm:$0xff]
        %v942 = vld [vmem:[#allocation5 + $0x1040] sm:$0xff]
        %v943 = vld [vmem:[#allocation5 + $0x1048] sm:$0xff]
        %v944 = vld [vmem:[#allocation5 + $0x1050] sm:$0xff]
        %v945 = vld [vmem:[#allocation5 + $0x1058] sm:$0xff]
        %v946 = vld [vmem:[#allocation5 + $0x1060] sm:$0xff]
        %v947 = vld [vmem:[#allocation5 + $0x1068] sm:$0xff]
        %v948 = vld [vmem:[#allocation5 + $0x1070] sm:$0xff]
        %v949 = vld [vmem:[#allocation5 + $0x1078] sm:$0xff]
        %v950 = vld [vmem:[#allocation5 + $0x1080] sm:$0xff]
        %v951 = vld [vmem:[#allocation5 + $0x1088] sm:$0xff]
        %v952 = vld [vmem:[#allocation5 + $0x1090] sm:$0xff]
        %v953 = vld [vmem:[#allocation5 + $0x1098] sm:$0xff]
        %v954 = vld [vmem:[#allocation5 + $0x10a0] sm:$0xff]
        %v955 = vld [vmem:[#allocation5 + $0x10a8] sm:$0xff]
        %v956 = vld [vmem:[#allocation5 + $0x10b0] sm:$0xff]
        %v957 = vld [vmem:[#allocation5 + $0x10b8] sm:$0xff]
        %v958 = vld [vmem:[#allocation5 + $0x10c0] sm:$0xff]
        %v959 = vld [vmem:[#allocation5 + $0x10c8] sm:$0xff]
        %v960 = vld [vmem:[#allocation5 + $0x10d0] sm:$0xff]
        %v961 = vld [vmem:[#allocation5 + $0x10d8] sm:$0xff]
        %v962 = vld [vmem:[#allocation5 + $0x10e0] sm:$0xff]
        %v963 = vld [vmem:[#allocation5 + $0x10e8] sm:$0xff]
        %v964 = vld [vmem:[#allocation5 + $0x10f0] sm:$0xff]
        %v965 = vld [vmem:[#allocation5 + $0x10f8] sm:$0xff]
        %v966 = vld [vmem:[#allocation5 + $0x1100] sm:$0xff]
        %v967 = vld [vmem:[#allocation5 + $0x1108] sm:$0xff]
        %v968 = vld [vmem:[#allocation5 + $0x1110] sm:$0xff]
        %v969 = vld [vmem:[#allocation5 + $0x1118] sm:$0xff]
        %v970 = vld [vmem:[#allocation5 + $0x1120] sm:$0xff]
        %v971 = vld [vmem:[#allocation5 + $0x1128] sm:$0xff]
        %v972 = vld [vmem:[#allocation5 + $0x1130] sm:$0xff]
        %v973 = vld [vmem:[#allocation5 + $0x1138] sm:$0xff]
        %v974 = vld [vmem:[#allocation5 + $0x1140] sm:$0xff]
        %v975 = vld [vmem:[#allocation5 + $0x1148] sm:$0xff]
        %v976 = vld [vmem:[#allocation5 + $0x1150] sm:$0xff]
        %v977 = vld [vmem:[#allocation5 + $0x1158] sm:$0xff]
        %v978 = vld [vmem:[#allocation5 + $0x1160] sm:$0xff]
        %v979 = vld [vmem:[#allocation5 + $0x1168] sm:$0xff]
        %v980 = vld [vmem:[#allocation5 + $0x1170] sm:$0xff]
        %v981 = vld [vmem:[#allocation5 + $0x1178] sm:$0xff]
        %v982 = vld [vmem:[#allocation5 + $0x1180] sm:$0xff]
        %v983 = vld [vmem:[#allocation5 + $0x1188] sm:$0xff]
        %v984 = vld [vmem:[#allocation5 + $0x1190] sm:$0xff]
        %v985 = vld [vmem:[#allocation5 + $0x1198] sm:$0xff]
        %v986 = vld [vmem:[#allocation5 + $0x11a0] sm:$0xff]
        %v987 = vld [vmem:[#allocation5 + $0x11a8] sm:$0xff]
        %v988 = vld [vmem:[#allocation5 + $0x11b0] sm:$0xff]
        %v989 = vld [vmem:[#allocation5 + $0x11b8] sm:$0xff]
        %v990 = vld [vmem:[#allocation5 + $0x11c0] sm:$0xff]
        %v991 = vld [vmem:[#allocation5 + $0x11c8] sm:$0xff]
        %v992 = vld [vmem:[#allocation5 + $0x11d0] sm:$0xff]
        %v993 = vld [vmem:[#allocation5 + $0x11d8] sm:$0xff]
        %v994 = vld [vmem:[#allocation5 + $0x11e0] sm:$0xff]
        %v995 = vld [vmem:[#allocation5 + $0x11e8] sm:$0xff]
        %v996 = vld [vmem:[#allocation5 + $0x11f0] sm:$0xff]
        %v997 = vld [vmem:[#allocation5 + $0x11f8] sm:$0xff]
        %v998 = vld [vmem:[#allocation5 + $0x1200] sm:$0xff]
        %v999 = vld [vmem:[#allocation5 + $0x1208] sm:$0xff]
        %v1000 = vld [vmem:[#allocation5 + $0x1210] sm:$0xff]
        %v1001 = vld [vmem:[#allocation5 + $0x1218] sm:$0xff]
        %v1002 = vld [vmem:[#allocation5 + $0x1220] sm:$0xff]
        %v1003 = vld [vmem:[#allocation5 + $0x1228] sm:$0xff]
        %v1004 = vld [vmem:[#allocation5 + $0x1230] sm:$0xff]
        %v1005 = vld [vmem:[#allocation5 + $0x1238] sm:$0xff]
        %v1006 = vld [vmem:[#allocation5 + $0x1240] sm:$0xff]
        %v1007 = vld [vmem:[#allocation5 + $0x1248] sm:$0xff]
        %v1008 = vld [vmem:[#allocation5 + $0x1250] sm:$0xff]
        %v1009 = vld [vmem:[#allocation5 + $0x1258] sm:$0xff]
        %v1010 = vld [vmem:[#allocation5 + $0x1260] sm:$0xff]
        %v1011 = vld [vmem:[#allocation5 + $0x1268] sm:$0xff]
        %v1012 = vld [vmem:[#allocation5 + $0x1270] sm:$0xff]
        %v1013 = vld [vmem:[#allocation5 + $0x1278] sm:$0xff]
        %v1014 = vld [vmem:[#allocation5 + $0x1280] sm:$0xff]
        %v1015 = vld [vmem:[#allocation5 + $0x1288] sm:$0xff]
        %v1016 = vld [vmem:[#allocation5 + $0x1290] sm:$0xff]
        %v1017 = vld [vmem:[#allocation5 + $0x1298] sm:$0xff]
        %v1018 = vld [vmem:[#allocation5 + $0x12a0] sm:$0xff]
        %v1019 = vld [vmem:[#allocation5 + $0x12a8] sm:$0xff]
        %v1020 = vld [vmem:[#allocation5 + $0x12b0] sm:$0xff]
        %v1021 = vld [vmem:[#allocation5 + $0x12b8] sm:$0xff]
        %v1022 = vld [vmem:[#allocation5 + $0x12c0] sm:$0xff]
        %v1023 = vld [vmem:[#allocation5 + $0x12c8] sm:$0xff]
        %v1024 = vld [vmem:[#allocation5 + $0x12d0] sm:$0xff]
        %v1025 = vld [vmem:[#allocation5 + $0x12d8] sm:$0xff]
        %v1026 = vld [vmem:[#allocation5 + $0x12e0] sm:$0xff]
        %v1027 = vld [vmem:[#allocation5 + $0x12e8] sm:$0xff]
        %v1028 = vld [vmem:[#allocation5 + $0x12f0] sm:$0xff]
        %v1029 = vld [vmem:[#allocation5 + $0x12f8] sm:$0xff]
        %v1030 = vld [vmem:[#allocation5 + $0x1300] sm:$0xff]
        %v1031 = vld [vmem:[#allocation5 + $0x1308] sm:$0xff]
        %v1032 = vld [vmem:[#allocation5 + $0x1310] sm:$0xff]
        %v1033 = vld [vmem:[#allocation5 + $0x1318] sm:$0xff]
        %v1034 = vld [vmem:[#allocation5 + $0x1320] sm:$0xff]
        %v1035 = vld [vmem:[#allocation5 + $0x1328] sm:$0xff]
        %v1036 = vld [vmem:[#allocation5 + $0x1330] sm:$0xff]
        %v1037 = vld [vmem:[#allocation5 + $0x1338] sm:$0xff]
        %v1038 = vld [vmem:[#allocation5 + $0x1340] sm:$0xff]
        %v1039 = vld [vmem:[#allocation5 + $0x1348] sm:$0xff]
        %v1040 = vld [vmem:[#allocation5 + $0x1350] sm:$0xff]
        %v1041 = vld [vmem:[#allocation5 + $0x1358] sm:$0xff]
        %v1042 = vld [vmem:[#allocation5 + $0x1360] sm:$0xff]
        %v1043 = vld [vmem:[#allocation5 + $0x1368] sm:$0xff]
        %v1044 = vld [vmem:[#allocation5 + $0x1370] sm:$0xff]
        %v1045 = vld [vmem:[#allocation5 + $0x1378] sm:$0xff]
        %v1046 = vld [vmem:[#allocation5 + $0x1380] sm:$0xff]
        %v1047 = vld [vmem:[#allocation5 + $0x1388] sm:$0xff]
        %v1048 = vld [vmem:[#allocation5 + $0x1390] sm:$0xff]
        %v1049 = vld [vmem:[#allocation5 + $0x1398] sm:$0xff]
        %v1050 = vld [vmem:[#allocation5 + $0x13a0] sm:$0xff]
        %v1051 = vld [vmem:[#allocation5 + $0x13a8] sm:$0xff]
        %v1052 = vld [vmem:[#allocation5 + $0x13b0] sm:$0xff]
        %v1053 = vld [vmem:[#allocation5 + $0x13b8] sm:$0xff]
        %v1054 = vld [vmem:[#allocation5 + $0x13c0] sm:$0xff]
        %v1055 = vld [vmem:[#allocation5 + $0x13c8] sm:$0xff]
        %v1056 = vld [vmem:[#allocation5 + $0x13d0] sm:$0xff]
        %v1057 = vld [vmem:[#allocation5 + $0x13d8] sm:$0xff]
        %v1058 = vld [vmem:[#allocation5 + $0x13e0] sm:$0xff]
        %v1059 = vld [vmem:[#allocation5 + $0x13e8] sm:$0xff]
        %v1060 = vld [vmem:[#allocation5 + $0x13f0] sm:$0xff]
        %v1061 = vld [vmem:[#allocation5 + $0x13f8] sm:$0xff]
        %v1702 = vunpack.c.l.b16 %v422
        %v1703 = vunpack.c.h.b16 %v422
        %v1704 = vunpack.c.l.b16 %v423
        %v1705 = vunpack.c.h.b16 %v423
        %v1706 = vunpack.c.l.b16 %v424
        %v1707 = vunpack.c.h.b16 %v424
        %v1708 = vunpack.c.l.b16 %v425
        %v1709 = vunpack.c.h.b16 %v425
        %v1710 = vunpack.c.l.b16 %v426
        %v1711 = vunpack.c.h.b16 %v426
        %v1712 = vunpack.c.l.b16 %v427
        %v1713 = vunpack.c.h.b16 %v427
        %v1714 = vunpack.c.l.b16 %v428
        %v1715 = vunpack.c.h.b16 %v428
        %v1716 = vunpack.c.l.b16 %v429
        %v1717 = vunpack.c.h.b16 %v429
        %v1718 = vunpack.c.l.b16 %v430
        %v1719 = vunpack.c.h.b16 %v430
        %v1720 = vunpack.c.l.b16 %v431
        %v1721 = vunpack.c.h.b16 %v431
        %v1722 = vunpack.c.l.b16 %v432
        %v1723 = vunpack.c.h.b16 %v432
        %v1724 = vunpack.c.l.b16 %v433
        %v1725 = vunpack.c.h.b16 %v433
        %v1726 = vunpack.c.l.b16 %v434
        %v1727 = vunpack.c.h.b16 %v434
        %v1728 = vunpack.c.l.b16 %v435
        %v1729 = vunpack.c.h.b16 %v435
        %v1730 = vunpack.c.l.b16 %v436
        %v1731 = vunpack.c.h.b16 %v436
        %v1732 = vunpack.c.l.b16 %v437
        %v1733 = vunpack.c.h.b16 %v437
        %v1734 = vunpack.c.l.b16 %v438
        %v1735 = vunpack.c.h.b16 %v438
        %v1736 = vunpack.c.l.b16 %v439
        %v1737 = vunpack.c.h.b16 %v439
        %v1738 = vunpack.c.l.b16 %v440
        %v1739 = vunpack.c.h.b16 %v440
        %v1740 = vunpack.c.l.b16 %v441
        %v1741 = vunpack.c.h.b16 %v441
        %v1742 = vunpack.c.l.b16 %v442
        %v1743 = vunpack.c.h.b16 %v442
        %v1744 = vunpack.c.l.b16 %v443
        %v1745 = vunpack.c.h.b16 %v443
        %v1746 = vunpack.c.l.b16 %v444
        %v1747 = vunpack.c.h.b16 %v444
        %v1748 = vunpack.c.l.b16 %v445
        %v1749 = vunpack.c.h.b16 %v445
        %v1750 = vunpack.c.l.b16 %v446
        %v1751 = vunpack.c.h.b16 %v446
        %v1752 = vunpack.c.l.b16 %v447
        %v1753 = vunpack.c.h.b16 %v447
        %v1754 = vunpack.c.l.b16 %v448
        %v1755 = vunpack.c.h.b16 %v448
        %v1756 = vunpack.c.l.b16 %v449
        %v1757 = vunpack.c.h.b16 %v449
        %v1758 = vunpack.c.l.b16 %v450
        %v1759 = vunpack.c.h.b16 %v450
        %v1760 = vunpack.c.l.b16 %v451
        %v1761 = vunpack.c.h.b16 %v451
        %v1762 = vunpack.c.l.b16 %v452
        %v1763 = vunpack.c.h.b16 %v452
        %v1764 = vunpack.c.l.b16 %v453
        %v1765 = vunpack.c.h.b16 %v453
        %v1766 = vunpack.c.l.b16 %v454
        %v1767 = vunpack.c.h.b16 %v454
        %v1768 = vunpack.c.l.b16 %v455
        %v1769 = vunpack.c.h.b16 %v455
        %v1770 = vunpack.c.l.b16 %v456
        %v1771 = vunpack.c.h.b16 %v456
        %v1772 = vunpack.c.l.b16 %v457
        %v1773 = vunpack.c.h.b16 %v457
        %v1774 = vunpack.c.l.b16 %v458
        %v1775 = vunpack.c.h.b16 %v458
        %v1776 = vunpack.c.l.b16 %v459
        %v1777 = vunpack.c.h.b16 %v459
        %v1778 = vunpack.c.l.b16 %v460
        %v1779 = vunpack.c.h.b16 %v460
        %v1780 = vunpack.c.l.b16 %v461
        %v1781 = vunpack.c.h.b16 %v461
        %v1782 = vunpack.c.l.b16 %v462
        %v1783 = vunpack.c.h.b16 %v462
        %v1784 = vunpack.c.l.b16 %v463
        %v1785 = vunpack.c.h.b16 %v463
        %v1786 = vunpack.c.l.b16 %v464
        %v1787 = vunpack.c.h.b16 %v464
        %v1788 = vunpack.c.l.b16 %v465
        %v1789 = vunpack.c.h.b16 %v465
        %v1790 = vunpack.c.l.b16 %v466
        %v1791 = vunpack.c.h.b16 %v466
        %v1792 = vunpack.c.l.b16 %v467
        %v1793 = vunpack.c.h.b16 %v467
        %v1794 = vunpack.c.l.b16 %v468
        %v1795 = vunpack.c.h.b16 %v468
        %v1796 = vunpack.c.l.b16 %v469
        %v1797 = vunpack.c.h.b16 %v469
        %v1798 = vunpack.c.l.b16 %v470
        %v1799 = vunpack.c.h.b16 %v470
        %v1800 = vunpack.c.l.b16 %v471
        %v1801 = vunpack.c.h.b16 %v471
        %v1802 = vunpack.c.l.b16 %v472
        %v1803 = vunpack.c.h.b16 %v472
        %v1804 = vunpack.c.l.b16 %v473
        %v1805 = vunpack.c.h.b16 %v473
        %v1806 = vunpack.c.l.b16 %v474
        %v1807 = vunpack.c.h.b16 %v474
        %v1808 = vunpack.c.l.b16 %v475
        %v1809 = vunpack.c.h.b16 %v475
        %v1810 = vunpack.c.l.b16 %v476
        %v1811 = vunpack.c.h.b16 %v476
        %v1812 = vunpack.c.l.b16 %v477
        %v1813 = vunpack.c.h.b16 %v477
        %v1814 = vunpack.c.l.b16 %v478
        %v1815 = vunpack.c.h.b16 %v478
        %v1816 = vunpack.c.l.b16 %v479
        %v1817 = vunpack.c.h.b16 %v479
        %v1818 = vunpack.c.l.b16 %v480
        %v1819 = vunpack.c.h.b16 %v480
        %v1820 = vunpack.c.l.b16 %v481
        %v1821 = vunpack.c.h.b16 %v481
        %v1822 = vunpack.c.l.b16 %v482
        %v1823 = vunpack.c.h.b16 %v482
        %v1824 = vunpack.c.l.b16 %v483
        %v1825 = vunpack.c.h.b16 %v483
        %v1826 = vunpack.c.l.b16 %v484
        %v1827 = vunpack.c.h.b16 %v484
        %v1828 = vunpack.c.l.b16 %v485
        %v1829 = vunpack.c.h.b16 %v485
        %v1830 = vunpack.c.l.b16 %v486
        %v1831 = vunpack.c.h.b16 %v486
        %v1832 = vunpack.c.l.b16 %v487
        %v1833 = vunpack.c.h.b16 %v487
        %v1834 = vunpack.c.l.b16 %v488
        %v1835 = vunpack.c.h.b16 %v488
        %v1836 = vunpack.c.l.b16 %v489
        %v1837 = vunpack.c.h.b16 %v489
        %v1838 = vunpack.c.l.b16 %v490
        %v1839 = vunpack.c.h.b16 %v490
        %v1840 = vunpack.c.l.b16 %v491
        %v1841 = vunpack.c.h.b16 %v491
        %v1842 = vunpack.c.l.b16 %v492
        %v1843 = vunpack.c.h.b16 %v492
        %v1844 = vunpack.c.l.b16 %v493
        %v1845 = vunpack.c.h.b16 %v493
        %v1846 = vunpack.c.l.b16 %v494
        %v1847 = vunpack.c.h.b16 %v494
        %v1848 = vunpack.c.l.b16 %v495
        %v1849 = vunpack.c.h.b16 %v495
        %v1850 = vunpack.c.l.b16 %v496
        %v1851 = vunpack.c.h.b16 %v496
        %v1852 = vunpack.c.l.b16 %v497
        %v1853 = vunpack.c.h.b16 %v497
        %v1854 = vunpack.c.l.b16 %v498
        %v1855 = vunpack.c.h.b16 %v498
        %v1856 = vunpack.c.l.b16 %v499
        %v1857 = vunpack.c.h.b16 %v499
        %v1858 = vunpack.c.l.b16 %v500
        %v1859 = vunpack.c.h.b16 %v500
        %v1860 = vunpack.c.l.b16 %v501
        %v1861 = vunpack.c.h.b16 %v501
        %v1862 = vunpack.c.l.b16 %v502
        %v1863 = vunpack.c.h.b16 %v502
        %v1864 = vunpack.c.l.b16 %v503
        %v1865 = vunpack.c.h.b16 %v503
        %v1866 = vunpack.c.l.b16 %v504
        %v1867 = vunpack.c.h.b16 %v504
        %v1868 = vunpack.c.l.b16 %v505
        %v1869 = vunpack.c.h.b16 %v505
        %v1870 = vunpack.c.l.b16 %v506
        %v1871 = vunpack.c.h.b16 %v506
        %v1872 = vunpack.c.l.b16 %v507
        %v1873 = vunpack.c.h.b16 %v507
        %v1874 = vunpack.c.l.b16 %v508
        %v1875 = vunpack.c.h.b16 %v508
        %v1876 = vunpack.c.l.b16 %v509
        %v1877 = vunpack.c.h.b16 %v509
        %v1878 = vunpack.c.l.b16 %v510
        %v1879 = vunpack.c.h.b16 %v510
        %v1880 = vunpack.c.l.b16 %v511
        %v1881 = vunpack.c.h.b16 %v511
        %v1882 = vunpack.c.l.b16 %v512
        %v1883 = vunpack.c.h.b16 %v512
        %v1884 = vunpack.c.l.b16 %v513
        %v1885 = vunpack.c.h.b16 %v513
        %v1886 = vunpack.c.l.b16 %v514
        %v1887 = vunpack.c.h.b16 %v514
        %v1888 = vunpack.c.l.b16 %v515
        %v1889 = vunpack.c.h.b16 %v515
        %v1890 = vunpack.c.l.b16 %v516
        %v1891 = vunpack.c.h.b16 %v516
        %v1892 = vunpack.c.l.b16 %v517
        %v1893 = vunpack.c.h.b16 %v517
        %v1894 = vunpack.c.l.b16 %v518
        %v1895 = vunpack.c.h.b16 %v518
        %v1896 = vunpack.c.l.b16 %v519
        %v1897 = vunpack.c.h.b16 %v519
        %v1898 = vunpack.c.l.b16 %v520
        %v1899 = vunpack.c.h.b16 %v520
        %v1900 = vunpack.c.l.b16 %v521
        %v1901 = vunpack.c.h.b16 %v521
        %v1902 = vunpack.c.l.b16 %v522
        %v1903 = vunpack.c.h.b16 %v522
        %v1904 = vunpack.c.l.b16 %v523
        %v1905 = vunpack.c.h.b16 %v523
        %v1906 = vunpack.c.l.b16 %v524
        %v1907 = vunpack.c.h.b16 %v524
        %v1908 = vunpack.c.l.b16 %v525
        %v1909 = vunpack.c.h.b16 %v525
        %v1910 = vunpack.c.l.b16 %v526
        %v1911 = vunpack.c.h.b16 %v526
        %v1912 = vunpack.c.l.b16 %v527
        %v1913 = vunpack.c.h.b16 %v527
        %v1914 = vunpack.c.l.b16 %v528
        %v1915 = vunpack.c.h.b16 %v528
        %v1916 = vunpack.c.l.b16 %v529
        %v1917 = vunpack.c.h.b16 %v529
        %v1918 = vunpack.c.l.b16 %v530
        %v1919 = vunpack.c.h.b16 %v530
        %v1920 = vunpack.c.l.b16 %v531
        %v1921 = vunpack.c.h.b16 %v531
        %v1922 = vunpack.c.l.b16 %v532
        %v1923 = vunpack.c.h.b16 %v532
        %v1924 = vunpack.c.l.b16 %v533
        %v1925 = vunpack.c.h.b16 %v533
        %v1926 = vunpack.c.l.b16 %v534
        %v1927 = vunpack.c.h.b16 %v534
        %v1928 = vunpack.c.l.b16 %v535
        %v1929 = vunpack.c.h.b16 %v535
        %v1930 = vunpack.c.l.b16 %v536
        %v1931 = vunpack.c.h.b16 %v536
        %v1932 = vunpack.c.l.b16 %v537
        %v1933 = vunpack.c.h.b16 %v537
        %v1934 = vunpack.c.l.b16 %v538
        %v1935 = vunpack.c.h.b16 %v538
        %v1936 = vunpack.c.l.b16 %v539
        %v1937 = vunpack.c.h.b16 %v539
        %v1938 = vunpack.c.l.b16 %v540
        %v1939 = vunpack.c.h.b16 %v540
        %v1940 = vunpack.c.l.b16 %v541
        %v1941 = vunpack.c.h.b16 %v541
        %v1942 = vunpack.c.l.b16 %v542
        %v1943 = vunpack.c.h.b16 %v542
        %v1944 = vunpack.c.l.b16 %v543
        %v1945 = vunpack.c.h.b16 %v543
        %v1946 = vunpack.c.l.b16 %v544
        %v1947 = vunpack.c.h.b16 %v544
        %v1948 = vunpack.c.l.b16 %v545
        %v1949 = vunpack.c.h.b16 %v545
        %v1950 = vunpack.c.l.b16 %v546
        %v1951 = vunpack.c.h.b16 %v546
        %v1952 = vunpack.c.l.b16 %v547
        %v1953 = vunpack.c.h.b16 %v547
        %v1954 = vunpack.c.l.b16 %v548
        %v1955 = vunpack.c.h.b16 %v548
        %v1956 = vunpack.c.l.b16 %v549
        %v1957 = vunpack.c.h.b16 %v549
        %v1958 = vunpack.c.l.b16 %v550
        %v1959 = vunpack.c.h.b16 %v550
        %v1960 = vunpack.c.l.b16 %v551
        %v1961 = vunpack.c.h.b16 %v551
        %v1962 = vunpack.c.l.b16 %v552
        %v1963 = vunpack.c.h.b16 %v552
        %v1964 = vunpack.c.l.b16 %v553
        %v1965 = vunpack.c.h.b16 %v553
        %v1966 = vunpack.c.l.b16 %v554
        %v1967 = vunpack.c.h.b16 %v554
        %v1968 = vunpack.c.l.b16 %v555
        %v1969 = vunpack.c.h.b16 %v555
        %v1970 = vunpack.c.l.b16 %v556
        %v1971 = vunpack.c.h.b16 %v556
        %v1972 = vunpack.c.l.b16 %v557
        %v1973 = vunpack.c.h.b16 %v557
        %v1974 = vunpack.c.l.b16 %v558
        %v1975 = vunpack.c.h.b16 %v558
        %v1976 = vunpack.c.l.b16 %v559
        %v1977 = vunpack.c.h.b16 %v559
        %v1978 = vunpack.c.l.b16 %v560
        %v1979 = vunpack.c.h.b16 %v560
        %v1980 = vunpack.c.l.b16 %v561
        %v1981 = vunpack.c.h.b16 %v561
        %v1982 = vunpack.c.l.b16 %v562
        %v1983 = vunpack.c.h.b16 %v562
        %v1984 = vunpack.c.l.b16 %v563
        %v1985 = vunpack.c.h.b16 %v563
        %v1986 = vunpack.c.l.b16 %v564
        %v1987 = vunpack.c.h.b16 %v564
        %v1988 = vunpack.c.l.b16 %v565
        %v1989 = vunpack.c.h.b16 %v565
        %v1990 = vunpack.c.l.b16 %v566
        %v1991 = vunpack.c.h.b16 %v566
        %v1992 = vunpack.c.l.b16 %v567
        %v1993 = vunpack.c.h.b16 %v567
        %v1994 = vunpack.c.l.b16 %v568
        %v1995 = vunpack.c.h.b16 %v568
        %v1996 = vunpack.c.l.b16 %v569
        %v1997 = vunpack.c.h.b16 %v569
        %v1998 = vunpack.c.l.b16 %v570
        %v1999 = vunpack.c.h.b16 %v570
        %v2000 = vunpack.c.l.b16 %v571
        %v2001 = vunpack.c.h.b16 %v571
        %v2002 = vunpack.c.l.b16 %v572
        %v2003 = vunpack.c.h.b16 %v572
        %v2004 = vunpack.c.l.b16 %v573
        %v2005 = vunpack.c.h.b16 %v573
        %v2006 = vunpack.c.l.b16 %v574
        %v2007 = vunpack.c.h.b16 %v574
        %v2008 = vunpack.c.l.b16 %v575
        %v2009 = vunpack.c.h.b16 %v575
        %v2010 = vunpack.c.l.b16 %v576
        %v2011 = vunpack.c.h.b16 %v576
        %v2012 = vunpack.c.l.b16 %v577
        %v2013 = vunpack.c.h.b16 %v577
        %v2014 = vunpack.c.l.b16 %v578
        %v2015 = vunpack.c.h.b16 %v578
        %v2016 = vunpack.c.l.b16 %v579
        %v2017 = vunpack.c.h.b16 %v579
        %v2018 = vunpack.c.l.b16 %v580
        %v2019 = vunpack.c.h.b16 %v580
        %v2020 = vunpack.c.l.b16 %v581
        %v2021 = vunpack.c.h.b16 %v581
        %v2022 = vunpack.c.l.b16 %v582
        %v2023 = vunpack.c.h.b16 %v582
        %v2024 = vunpack.c.l.b16 %v583
        %v2025 = vunpack.c.h.b16 %v583
        %v2026 = vunpack.c.l.b16 %v584
        %v2027 = vunpack.c.h.b16 %v584
        %v2028 = vunpack.c.l.b16 %v585
        %v2029 = vunpack.c.h.b16 %v585
        %v2030 = vunpack.c.l.b16 %v586
        %v2031 = vunpack.c.h.b16 %v586
        %v2032 = vunpack.c.l.b16 %v587
        %v2033 = vunpack.c.h.b16 %v587
        %v2034 = vunpack.c.l.b16 %v588
        %v2035 = vunpack.c.h.b16 %v588
        %v2036 = vunpack.c.l.b16 %v589
        %v2037 = vunpack.c.h.b16 %v589
        %v2038 = vunpack.c.l.b16 %v590
        %v2039 = vunpack.c.h.b16 %v590
        %v2040 = vunpack.c.l.b16 %v591
        %v2041 = vunpack.c.h.b16 %v591
        %v2042 = vunpack.c.l.b16 %v592
        %v2043 = vunpack.c.h.b16 %v592
        %v2044 = vunpack.c.l.b16 %v593
        %v2045 = vunpack.c.h.b16 %v593
        %v2046 = vunpack.c.l.b16 %v594
        %v2047 = vunpack.c.h.b16 %v594
        %v2048 = vunpack.c.l.b16 %v595
        %v2049 = vunpack.c.h.b16 %v595
        %v2050 = vunpack.c.l.b16 %v596
        %v2051 = vunpack.c.h.b16 %v596
        %v2052 = vunpack.c.l.b16 %v597
        %v2053 = vunpack.c.h.b16 %v597
        %v2054 = vunpack.c.l.b16 %v598
        %v2055 = vunpack.c.h.b16 %v598
        %v2056 = vunpack.c.l.b16 %v599
        %v2057 = vunpack.c.h.b16 %v599
        %v2058 = vunpack.c.l.b16 %v600
        %v2059 = vunpack.c.h.b16 %v600
        %v2060 = vunpack.c.l.b16 %v601
        %v2061 = vunpack.c.h.b16 %v601
        %v2062 = vunpack.c.l.b16 %v602
        %v2063 = vunpack.c.h.b16 %v602
        %v2064 = vunpack.c.l.b16 %v603
        %v2065 = vunpack.c.h.b16 %v603
        %v2066 = vunpack.c.l.b16 %v604
        %v2067 = vunpack.c.h.b16 %v604
        %v2068 = vunpack.c.l.b16 %v605
        %v2069 = vunpack.c.h.b16 %v605
        %v2070 = vunpack.c.l.b16 %v606
        %v2071 = vunpack.c.h.b16 %v606
        %v2072 = vunpack.c.l.b16 %v607
        %v2073 = vunpack.c.h.b16 %v607
        %v2074 = vunpack.c.l.b16 %v608
        %v2075 = vunpack.c.h.b16 %v608
        %v2076 = vunpack.c.l.b16 %v609
        %v2077 = vunpack.c.h.b16 %v609
        %v2078 = vunpack.c.l.b16 %v610
        %v2079 = vunpack.c.h.b16 %v610
        %v2080 = vunpack.c.l.b16 %v611
        %v2081 = vunpack.c.h.b16 %v611
        %v2082 = vunpack.c.l.b16 %v612
        %v2083 = vunpack.c.h.b16 %v612
        %v2084 = vunpack.c.l.b16 %v613
        %v2085 = vunpack.c.h.b16 %v613
        %v2086 = vunpack.c.l.b16 %v614
        %v2087 = vunpack.c.h.b16 %v614
        %v2088 = vunpack.c.l.b16 %v615
        %v2089 = vunpack.c.h.b16 %v615
        %v2090 = vunpack.c.l.b16 %v616
        %v2091 = vunpack.c.h.b16 %v616
        %v2092 = vunpack.c.l.b16 %v617
        %v2093 = vunpack.c.h.b16 %v617
        %v2094 = vunpack.c.l.b16 %v618
        %v2095 = vunpack.c.h.b16 %v618
        %v2096 = vunpack.c.l.b16 %v619
        %v2097 = vunpack.c.h.b16 %v619
        %v2098 = vunpack.c.l.b16 %v620
        %v2099 = vunpack.c.h.b16 %v620
        %v2100 = vunpack.c.l.b16 %v621
        %v2101 = vunpack.c.h.b16 %v621
        %v2102 = vunpack.c.l.b16 %v622
        %v2103 = vunpack.c.h.b16 %v622
        %v2104 = vunpack.c.l.b16 %v623
        %v2105 = vunpack.c.h.b16 %v623
        %v2106 = vunpack.c.l.b16 %v624
        %v2107 = vunpack.c.h.b16 %v624
        %v2108 = vunpack.c.l.b16 %v625
        %v2109 = vunpack.c.h.b16 %v625
        %v2110 = vunpack.c.l.b16 %v626
        %v2111 = vunpack.c.h.b16 %v626
        %v2112 = vunpack.c.l.b16 %v627
        %v2113 = vunpack.c.h.b16 %v627
        %v2114 = vunpack.c.l.b16 %v628
        %v2115 = vunpack.c.h.b16 %v628
        %v2116 = vunpack.c.l.b16 %v629
        %v2117 = vunpack.c.h.b16 %v629
        %v2118 = vunpack.c.l.b16 %v630
        %v2119 = vunpack.c.h.b16 %v630
        %v2120 = vunpack.c.l.b16 %v631
        %v2121 = vunpack.c.h.b16 %v631
        %v2122 = vunpack.c.l.b16 %v632
        %v2123 = vunpack.c.h.b16 %v632
        %v2124 = vunpack.c.l.b16 %v633
        %v2125 = vunpack.c.h.b16 %v633
        %v2126 = vunpack.c.l.b16 %v634
        %v2127 = vunpack.c.h.b16 %v634
        %v2128 = vunpack.c.l.b16 %v635
        %v2129 = vunpack.c.h.b16 %v635
        %v2130 = vunpack.c.l.b16 %v636
        %v2131 = vunpack.c.h.b16 %v636
        %v2132 = vunpack.c.l.b16 %v637
        %v2133 = vunpack.c.h.b16 %v637
        %v2134 = vunpack.c.l.b16 %v638
        %v2135 = vunpack.c.h.b16 %v638
        %v2136 = vunpack.c.l.b16 %v639
        %v2137 = vunpack.c.h.b16 %v639
        %v2138 = vunpack.c.l.b16 %v640
        %v2139 = vunpack.c.h.b16 %v640
        %v2140 = vunpack.c.l.b16 %v641
        %v2141 = vunpack.c.h.b16 %v641
        %v2142 = vunpack.c.l.b16 %v642
        %v2143 = vunpack.c.h.b16 %v642
        %v2144 = vunpack.c.l.b16 %v643
        %v2145 = vunpack.c.h.b16 %v643
        %v2146 = vunpack.c.l.b16 %v644
        %v2147 = vunpack.c.h.b16 %v644
        %v2148 = vunpack.c.l.b16 %v645
        %v2149 = vunpack.c.h.b16 %v645
        %v2150 = vunpack.c.l.b16 %v646
        %v2151 = vunpack.c.h.b16 %v646
        %v2152 = vunpack.c.l.b16 %v647
        %v2153 = vunpack.c.h.b16 %v647
        %v2154 = vunpack.c.l.b16 %v648
        %v2155 = vunpack.c.h.b16 %v648
        %v2156 = vunpack.c.l.b16 %v649
        %v2157 = vunpack.c.h.b16 %v649
        %v2158 = vunpack.c.l.b16 %v650
        %v2159 = vunpack.c.h.b16 %v650
        %v2160 = vunpack.c.l.b16 %v651
        %v2161 = vunpack.c.h.b16 %v651
        %v2162 = vunpack.c.l.b16 %v652
        %v2163 = vunpack.c.h.b16 %v652
        %v2164 = vunpack.c.l.b16 %v653
        %v2165 = vunpack.c.h.b16 %v653
        %v2166 = vunpack.c.l.b16 %v654
        %v2167 = vunpack.c.h.b16 %v654
        %v2168 = vunpack.c.l.b16 %v655
        %v2169 = vunpack.c.h.b16 %v655
        %v2170 = vunpack.c.l.b16 %v656
        %v2171 = vunpack.c.h.b16 %v656
        %v2172 = vunpack.c.l.b16 %v657
        %v2173 = vunpack.c.h.b16 %v657
        %v2174 = vunpack.c.l.b16 %v658
        %v2175 = vunpack.c.h.b16 %v658
        %v2176 = vunpack.c.l.b16 %v659
        %v2177 = vunpack.c.h.b16 %v659
        %v2178 = vunpack.c.l.b16 %v660
        %v2179 = vunpack.c.h.b16 %v660
        %v2180 = vunpack.c.l.b16 %v661
        %v2181 = vunpack.c.h.b16 %v661
        %v2182 = vunpack.c.l.b16 %v662
        %v2183 = vunpack.c.h.b16 %v662
        %v2184 = vunpack.c.l.b16 %v663
        %v2185 = vunpack.c.h.b16 %v663
        %v2186 = vunpack.c.l.b16 %v664
        %v2187 = vunpack.c.h.b16 %v664
        %v2188 = vunpack.c.l.b16 %v665
        %v2189 = vunpack.c.h.b16 %v665
        %v2190 = vunpack.c.l.b16 %v666
        %v2191 = vunpack.c.h.b16 %v666
        %v2192 = vunpack.c.l.b16 %v667
        %v2193 = vunpack.c.h.b16 %v667
        %v2194 = vunpack.c.l.b16 %v668
        %v2195 = vunpack.c.h.b16 %v668
        %v2196 = vunpack.c.l.b16 %v669
        %v2197 = vunpack.c.h.b16 %v669
        %v2198 = vunpack.c.l.b16 %v670
        %v2199 = vunpack.c.h.b16 %v670
        %v2200 = vunpack.c.l.b16 %v671
        %v2201 = vunpack.c.h.b16 %v671
        %v2202 = vunpack.c.l.b16 %v672
        %v2203 = vunpack.c.h.b16 %v672
        %v2204 = vunpack.c.l.b16 %v673
        %v2205 = vunpack.c.h.b16 %v673
        %v2206 = vunpack.c.l.b16 %v674
        %v2207 = vunpack.c.h.b16 %v674
        %v2208 = vunpack.c.l.b16 %v675
        %v2209 = vunpack.c.h.b16 %v675
        %v2210 = vunpack.c.l.b16 %v676
        %v2211 = vunpack.c.h.b16 %v676
        %v2212 = vunpack.c.l.b16 %v677
        %v2213 = vunpack.c.h.b16 %v677
        %v2214 = vunpack.c.l.b16 %v678
        %v2215 = vunpack.c.h.b16 %v678
        %v2216 = vunpack.c.l.b16 %v679
        %v2217 = vunpack.c.h.b16 %v679
        %v2218 = vunpack.c.l.b16 %v680
        %v2219 = vunpack.c.h.b16 %v680
        %v2220 = vunpack.c.l.b16 %v681
        %v2221 = vunpack.c.h.b16 %v681
        %v2222 = vunpack.c.l.b16 %v682
        %v2223 = vunpack.c.h.b16 %v682
        %v2224 = vunpack.c.l.b16 %v683
        %v2225 = vunpack.c.h.b16 %v683
        %v2226 = vunpack.c.l.b16 %v684
        %v2227 = vunpack.c.h.b16 %v684
        %v2228 = vunpack.c.l.b16 %v685
        %v2229 = vunpack.c.h.b16 %v685
        %v2230 = vunpack.c.l.b16 %v686
        %v2231 = vunpack.c.h.b16 %v686
        %v2232 = vunpack.c.l.b16 %v687
        %v2233 = vunpack.c.h.b16 %v687
        %v2234 = vunpack.c.l.b16 %v688
        %v2235 = vunpack.c.h.b16 %v688
        %v2236 = vunpack.c.l.b16 %v689
        %v2237 = vunpack.c.h.b16 %v689
        %v2238 = vunpack.c.l.b16 %v690
        %v2239 = vunpack.c.h.b16 %v690
        %v2240 = vunpack.c.l.b16 %v691
        %v2241 = vunpack.c.h.b16 %v691
        %v2242 = vunpack.c.l.b16 %v692
        %v2243 = vunpack.c.h.b16 %v692
        %v2244 = vunpack.c.l.b16 %v693
        %v2245 = vunpack.c.h.b16 %v693
        %v2246 = vunpack.c.l.b16 %v694
        %v2247 = vunpack.c.h.b16 %v694
        %v2248 = vunpack.c.l.b16 %v695
        %v2249 = vunpack.c.h.b16 %v695
        %v2250 = vunpack.c.l.b16 %v696
        %v2251 = vunpack.c.h.b16 %v696
        %v2252 = vunpack.c.l.b16 %v697
        %v2253 = vunpack.c.h.b16 %v697
        %v2254 = vunpack.c.l.b16 %v698
        %v2255 = vunpack.c.h.b16 %v698
        %v2256 = vunpack.c.l.b16 %v699
        %v2257 = vunpack.c.h.b16 %v699
        %v2258 = vunpack.c.l.b16 %v700
        %v2259 = vunpack.c.h.b16 %v700
        %v2260 = vunpack.c.l.b16 %v701
        %v2261 = vunpack.c.h.b16 %v701
        %v2262 = vunpack.c.l.b16 %v702
        %v2263 = vunpack.c.h.b16 %v702
        %v2264 = vunpack.c.l.b16 %v703
        %v2265 = vunpack.c.h.b16 %v703
        %v2266 = vunpack.c.l.b16 %v704
        %v2267 = vunpack.c.h.b16 %v704
        %v2268 = vunpack.c.l.b16 %v705
        %v2269 = vunpack.c.h.b16 %v705
        %v2270 = vunpack.c.l.b16 %v706
        %v2271 = vunpack.c.h.b16 %v706
        %v2272 = vunpack.c.l.b16 %v707
        %v2273 = vunpack.c.h.b16 %v707
        %v2274 = vunpack.c.l.b16 %v708
        %v2275 = vunpack.c.h.b16 %v708
        %v2276 = vunpack.c.l.b16 %v709
        %v2277 = vunpack.c.h.b16 %v709
        %v2278 = vunpack.c.l.b16 %v710
        %v2279 = vunpack.c.h.b16 %v710
        %v2280 = vunpack.c.l.b16 %v711
        %v2281 = vunpack.c.h.b16 %v711
        %v2282 = vunpack.c.l.b16 %v712
        %v2283 = vunpack.c.h.b16 %v712
        %v2284 = vunpack.c.l.b16 %v713
        %v2285 = vunpack.c.h.b16 %v713
        %v2286 = vunpack.c.l.b16 %v714
        %v2287 = vunpack.c.h.b16 %v714
        %v2288 = vunpack.c.l.b16 %v715
        %v2289 = vunpack.c.h.b16 %v715
        %v2290 = vunpack.c.l.b16 %v716
        %v2291 = vunpack.c.h.b16 %v716
        %v2292 = vunpack.c.l.b16 %v717
        %v2293 = vunpack.c.h.b16 %v717
        %v2294 = vunpack.c.l.b16 %v718
        %v2295 = vunpack.c.h.b16 %v718
        %v2296 = vunpack.c.l.b16 %v719
        %v2297 = vunpack.c.h.b16 %v719
        %v2298 = vunpack.c.l.b16 %v720
        %v2299 = vunpack.c.h.b16 %v720
        %v2300 = vunpack.c.l.b16 %v721
        %v2301 = vunpack.c.h.b16 %v721
        %v2302 = vunpack.c.l.b16 %v722
        %v2303 = vunpack.c.h.b16 %v722
        %v2304 = vunpack.c.l.b16 %v723
        %v2305 = vunpack.c.h.b16 %v723
        %v2306 = vunpack.c.l.b16 %v724
        %v2307 = vunpack.c.h.b16 %v724
        %v2308 = vunpack.c.l.b16 %v725
        %v2309 = vunpack.c.h.b16 %v725
        %v2310 = vunpack.c.l.b16 %v726
        %v2311 = vunpack.c.h.b16 %v726
        %v2312 = vunpack.c.l.b16 %v727
        %v2313 = vunpack.c.h.b16 %v727
        %v2314 = vunpack.c.l.b16 %v728
        %v2315 = vunpack.c.h.b16 %v728
        %v2316 = vunpack.c.l.b16 %v729
        %v2317 = vunpack.c.h.b16 %v729
        %v2318 = vunpack.c.l.b16 %v730
        %v2319 = vunpack.c.h.b16 %v730
        %v2320 = vunpack.c.l.b16 %v731
        %v2321 = vunpack.c.h.b16 %v731
        %v2322 = vunpack.c.l.b16 %v732
        %v2323 = vunpack.c.h.b16 %v732
        %v2324 = vunpack.c.l.b16 %v733
        %v2325 = vunpack.c.h.b16 %v733
        %v2326 = vunpack.c.l.b16 %v734
        %v2327 = vunpack.c.h.b16 %v734
        %v2328 = vunpack.c.l.b16 %v735
        %v2329 = vunpack.c.h.b16 %v735
        %v2330 = vunpack.c.l.b16 %v736
        %v2331 = vunpack.c.h.b16 %v736
        %v2332 = vunpack.c.l.b16 %v737
        %v2333 = vunpack.c.h.b16 %v737
        %v2334 = vunpack.c.l.b16 %v738
        %v2335 = vunpack.c.h.b16 %v738
        %v2336 = vunpack.c.l.b16 %v739
        %v2337 = vunpack.c.h.b16 %v739
        %v2338 = vunpack.c.l.b16 %v740
        %v2339 = vunpack.c.h.b16 %v740
        %v2340 = vunpack.c.l.b16 %v741
        %v2341 = vunpack.c.h.b16 %v741
        %v2342 = vunpack.c.l.b16 %v742
        %v2343 = vunpack.c.h.b16 %v742
        %v2344 = vunpack.c.l.b16 %v743
        %v2345 = vunpack.c.h.b16 %v743
        %v2346 = vunpack.c.l.b16 %v744
        %v2347 = vunpack.c.h.b16 %v744
        %v2348 = vunpack.c.l.b16 %v745
        %v2349 = vunpack.c.h.b16 %v745
        %v2350 = vunpack.c.l.b16 %v746
        %v2351 = vunpack.c.h.b16 %v746
        %v2352 = vunpack.c.l.b16 %v747
        %v2353 = vunpack.c.h.b16 %v747
        %v2354 = vunpack.c.l.b16 %v748
        %v2355 = vunpack.c.h.b16 %v748
        %v2356 = vunpack.c.l.b16 %v749
        %v2357 = vunpack.c.h.b16 %v749
        %v2358 = vunpack.c.l.b16 %v750
        %v2359 = vunpack.c.h.b16 %v750
        %v2360 = vunpack.c.l.b16 %v751
        %v2361 = vunpack.c.h.b16 %v751
        %v2362 = vunpack.c.l.b16 %v752
        %v2363 = vunpack.c.h.b16 %v752
        %v2364 = vunpack.c.l.b16 %v753
        %v2365 = vunpack.c.h.b16 %v753
        %v2366 = vunpack.c.l.b16 %v754
        %v2367 = vunpack.c.h.b16 %v754
        %v2368 = vunpack.c.l.b16 %v755
        %v2369 = vunpack.c.h.b16 %v755
        %v2370 = vunpack.c.l.b16 %v756
        %v2371 = vunpack.c.h.b16 %v756
        %v2372 = vunpack.c.l.b16 %v757
        %v2373 = vunpack.c.h.b16 %v757
        %v2374 = vunpack.c.l.b16 %v758
        %v2375 = vunpack.c.h.b16 %v758
        %v2376 = vunpack.c.l.b16 %v759
        %v2377 = vunpack.c.h.b16 %v759
        %v2378 = vunpack.c.l.b16 %v760
        %v2379 = vunpack.c.h.b16 %v760
        %v2380 = vunpack.c.l.b16 %v761
        %v2381 = vunpack.c.h.b16 %v761
        %v2382 = vunpack.c.l.b16 %v762
        %v2383 = vunpack.c.h.b16 %v762
        %v2384 = vunpack.c.l.b16 %v763
        %v2385 = vunpack.c.h.b16 %v763
        %v2386 = vunpack.c.l.b16 %v764
        %v2387 = vunpack.c.h.b16 %v764
        %v2388 = vunpack.c.l.b16 %v765
        %v2389 = vunpack.c.h.b16 %v765
        %v2390 = vunpack.c.l.b16 %v766
        %v2391 = vunpack.c.h.b16 %v766
        %v2392 = vunpack.c.l.b16 %v767
        %v2393 = vunpack.c.h.b16 %v767
        %v2394 = vunpack.c.l.b16 %v768
        %v2395 = vunpack.c.h.b16 %v768
        %v2396 = vunpack.c.l.b16 %v769
        %v2397 = vunpack.c.h.b16 %v769
        %v2398 = vunpack.c.l.b16 %v770
        %v2399 = vunpack.c.h.b16 %v770
        %v2400 = vunpack.c.l.b16 %v771
        %v2401 = vunpack.c.h.b16 %v771
        %v2402 = vunpack.c.l.b16 %v772
        %v2403 = vunpack.c.h.b16 %v772
        %v2404 = vunpack.c.l.b16 %v773
        %v2405 = vunpack.c.h.b16 %v773
        %v2406 = vunpack.c.l.b16 %v774
        %v2407 = vunpack.c.h.b16 %v774
        %v2408 = vunpack.c.l.b16 %v775
        %v2409 = vunpack.c.h.b16 %v775
        %v2410 = vunpack.c.l.b16 %v776
        %v2411 = vunpack.c.h.b16 %v776
        %v2412 = vunpack.c.l.b16 %v777
        %v2413 = vunpack.c.h.b16 %v777
        %v2414 = vunpack.c.l.b16 %v778
        %v2415 = vunpack.c.h.b16 %v778
        %v2416 = vunpack.c.l.b16 %v779
        %v2417 = vunpack.c.h.b16 %v779
        %v2418 = vunpack.c.l.b16 %v780
        %v2419 = vunpack.c.h.b16 %v780
        %v2420 = vunpack.c.l.b16 %v781
        %v2421 = vunpack.c.h.b16 %v781
        %v2422 = vunpack.c.l.b16 %v782
        %v2423 = vunpack.c.h.b16 %v782
        %v2424 = vunpack.c.l.b16 %v783
        %v2425 = vunpack.c.h.b16 %v783
        %v2426 = vunpack.c.l.b16 %v784
        %v2427 = vunpack.c.h.b16 %v784
        %v2428 = vunpack.c.l.b16 %v785
        %v2429 = vunpack.c.h.b16 %v785
        %v2430 = vunpack.c.l.b16 %v786
        %v2431 = vunpack.c.h.b16 %v786
        %v2432 = vunpack.c.l.b16 %v787
        %v2433 = vunpack.c.h.b16 %v787
        %v2434 = vunpack.c.l.b16 %v788
        %v2435 = vunpack.c.h.b16 %v788
        %v2436 = vunpack.c.l.b16 %v789
        %v2437 = vunpack.c.h.b16 %v789
        %v2438 = vunpack.c.l.b16 %v790
        %v2439 = vunpack.c.h.b16 %v790
        %v2440 = vunpack.c.l.b16 %v791
        %v2441 = vunpack.c.h.b16 %v791
        %v2442 = vunpack.c.l.b16 %v792
        %v2443 = vunpack.c.h.b16 %v792
        %v2444 = vunpack.c.l.b16 %v793
        %v2445 = vunpack.c.h.b16 %v793
        %v2446 = vunpack.c.l.b16 %v794
        %v2447 = vunpack.c.h.b16 %v794
        %v2448 = vunpack.c.l.b16 %v795
        %v2449 = vunpack.c.h.b16 %v795
        %v2450 = vunpack.c.l.b16 %v796
        %v2451 = vunpack.c.h.b16 %v796
        %v2452 = vunpack.c.l.b16 %v797
        %v2453 = vunpack.c.h.b16 %v797
        %v2454 = vunpack.c.l.b16 %v798
        %v2455 = vunpack.c.h.b16 %v798
        %v2456 = vunpack.c.l.b16 %v799
        %v2457 = vunpack.c.h.b16 %v799
        %v2458 = vunpack.c.l.b16 %v800
        %v2459 = vunpack.c.h.b16 %v800
        %v2460 = vunpack.c.l.b16 %v801
        %v2461 = vunpack.c.h.b16 %v801
        %v2462 = vunpack.c.l.b16 %v802
        %v2463 = vunpack.c.h.b16 %v802
        %v2464 = vunpack.c.l.b16 %v803
        %v2465 = vunpack.c.h.b16 %v803
        %v2466 = vunpack.c.l.b16 %v804
        %v2467 = vunpack.c.h.b16 %v804
        %v2468 = vunpack.c.l.b16 %v805
        %v2469 = vunpack.c.h.b16 %v805
        %v2470 = vunpack.c.l.b16 %v806
        %v2471 = vunpack.c.h.b16 %v806
        %v2472 = vunpack.c.l.b16 %v807
        %v2473 = vunpack.c.h.b16 %v807
        %v2474 = vunpack.c.l.b16 %v808
        %v2475 = vunpack.c.h.b16 %v808
        %v2476 = vunpack.c.l.b16 %v809
        %v2477 = vunpack.c.h.b16 %v809
        %v2478 = vunpack.c.l.b16 %v810
        %v2479 = vunpack.c.h.b16 %v810
        %v2480 = vunpack.c.l.b16 %v811
        %v2481 = vunpack.c.h.b16 %v811
        %v2482 = vunpack.c.l.b16 %v812
        %v2483 = vunpack.c.h.b16 %v812
        %v2484 = vunpack.c.l.b16 %v813
        %v2485 = vunpack.c.h.b16 %v813
        %v2486 = vunpack.c.l.b16 %v814
        %v2487 = vunpack.c.h.b16 %v814
        %v2488 = vunpack.c.l.b16 %v815
        %v2489 = vunpack.c.h.b16 %v815
        %v2490 = vunpack.c.l.b16 %v816
        %v2491 = vunpack.c.h.b16 %v816
        %v2492 = vunpack.c.l.b16 %v817
        %v2493 = vunpack.c.h.b16 %v817
        %v2494 = vunpack.c.l.b16 %v818
        %v2495 = vunpack.c.h.b16 %v818
        %v2496 = vunpack.c.l.b16 %v819
        %v2497 = vunpack.c.h.b16 %v819
        %v2498 = vunpack.c.l.b16 %v820
        %v2499 = vunpack.c.h.b16 %v820
        %v2500 = vunpack.c.l.b16 %v821
        %v2501 = vunpack.c.h.b16 %v821
        %v2502 = vunpack.c.l.b16 %v822
        %v2503 = vunpack.c.h.b16 %v822
        %v2504 = vunpack.c.l.b16 %v823
        %v2505 = vunpack.c.h.b16 %v823
        %v2506 = vunpack.c.l.b16 %v824
        %v2507 = vunpack.c.h.b16 %v824
        %v2508 = vunpack.c.l.b16 %v825
        %v2509 = vunpack.c.h.b16 %v825
        %v2510 = vunpack.c.l.b16 %v826
        %v2511 = vunpack.c.h.b16 %v826
        %v2512 = vunpack.c.l.b16 %v827
        %v2513 = vunpack.c.h.b16 %v827
        %v2514 = vunpack.c.l.b16 %v828
        %v2515 = vunpack.c.h.b16 %v828
        %v2516 = vunpack.c.l.b16 %v829
        %v2517 = vunpack.c.h.b16 %v829
        %v2518 = vunpack.c.l.b16 %v830
        %v2519 = vunpack.c.h.b16 %v830
        %v2520 = vunpack.c.l.b16 %v831
        %v2521 = vunpack.c.h.b16 %v831
        %v2522 = vunpack.c.l.b16 %v832
        %v2523 = vunpack.c.h.b16 %v832
        %v2524 = vunpack.c.l.b16 %v833
        %v2525 = vunpack.c.h.b16 %v833
        %v2526 = vunpack.c.l.b16 %v834
        %v2527 = vunpack.c.h.b16 %v834
        %v2528 = vunpack.c.l.b16 %v835
        %v2529 = vunpack.c.h.b16 %v835
        %v2530 = vunpack.c.l.b16 %v836
        %v2531 = vunpack.c.h.b16 %v836
        %v2532 = vunpack.c.l.b16 %v837
        %v2533 = vunpack.c.h.b16 %v837
        %v2534 = vunpack.c.l.b16 %v838
        %v2535 = vunpack.c.h.b16 %v838
        %v2536 = vunpack.c.l.b16 %v839
        %v2537 = vunpack.c.h.b16 %v839
        %v2538 = vunpack.c.l.b16 %v840
        %v2539 = vunpack.c.h.b16 %v840
        %v2540 = vunpack.c.l.b16 %v841
        %v2541 = vunpack.c.h.b16 %v841
        %v2542 = vunpack.c.l.b16 %v842
        %v2543 = vunpack.c.h.b16 %v842
        %v2544 = vunpack.c.l.b16 %v843
        %v2545 = vunpack.c.h.b16 %v843
        %v2546 = vunpack.c.l.b16 %v844
        %v2547 = vunpack.c.h.b16 %v844
        %v2548 = vunpack.c.l.b16 %v845
        %v2549 = vunpack.c.h.b16 %v845
        %v2550 = vunpack.c.l.b16 %v846
        %v2551 = vunpack.c.h.b16 %v846
        %v2552 = vunpack.c.l.b16 %v847
        %v2553 = vunpack.c.h.b16 %v847
        %v2554 = vunpack.c.l.b16 %v848
        %v2555 = vunpack.c.h.b16 %v848
        %v2556 = vunpack.c.l.b16 %v849
        %v2557 = vunpack.c.h.b16 %v849
        %v2558 = vunpack.c.l.b16 %v850
        %v2559 = vunpack.c.h.b16 %v850
        %v2560 = vunpack.c.l.b16 %v851
        %v2561 = vunpack.c.h.b16 %v851
        %v2562 = vunpack.c.l.b16 %v852
        %v2563 = vunpack.c.h.b16 %v852
        %v2564 = vunpack.c.l.b16 %v853
        %v2565 = vunpack.c.h.b16 %v853
        %v2566 = vunpack.c.l.b16 %v854
        %v2567 = vunpack.c.h.b16 %v854
        %v2568 = vunpack.c.l.b16 %v855
        %v2569 = vunpack.c.h.b16 %v855
        %v2570 = vunpack.c.l.b16 %v856
        %v2571 = vunpack.c.h.b16 %v856
        %v2572 = vunpack.c.l.b16 %v857
        %v2573 = vunpack.c.h.b16 %v857
        %v2574 = vunpack.c.l.b16 %v858
        %v2575 = vunpack.c.h.b16 %v858
        %v2576 = vunpack.c.l.b16 %v859
        %v2577 = vunpack.c.h.b16 %v859
        %v2578 = vunpack.c.l.b16 %v860
        %v2579 = vunpack.c.h.b16 %v860
        %v2580 = vunpack.c.l.b16 %v861
        %v2581 = vunpack.c.h.b16 %v861
        %v2582 = vunpack.c.l.b16 %v862
        %v2583 = vunpack.c.h.b16 %v862
        %v2584 = vunpack.c.l.b16 %v863
        %v2585 = vunpack.c.h.b16 %v863
        %v2586 = vunpack.c.l.b16 %v864
        %v2587 = vunpack.c.h.b16 %v864
        %v2588 = vunpack.c.l.b16 %v865
        %v2589 = vunpack.c.h.b16 %v865
        %v2590 = vunpack.c.l.b16 %v866
        %v2591 = vunpack.c.h.b16 %v866
        %v2592 = vunpack.c.l.b16 %v867
        %v2593 = vunpack.c.h.b16 %v867
        %v2594 = vunpack.c.l.b16 %v868
        %v2595 = vunpack.c.h.b16 %v868
        %v2596 = vunpack.c.l.b16 %v869
        %v2597 = vunpack.c.h.b16 %v869
        %v2598 = vunpack.c.l.b16 %v870
        %v2599 = vunpack.c.h.b16 %v870
        %v2600 = vunpack.c.l.b16 %v871
        %v2601 = vunpack.c.h.b16 %v871
        %v2602 = vunpack.c.l.b16 %v872
        %v2603 = vunpack.c.h.b16 %v872
        %v2604 = vunpack.c.l.b16 %v873
        %v2605 = vunpack.c.h.b16 %v873
        %v2606 = vunpack.c.l.b16 %v874
        %v2607 = vunpack.c.h.b16 %v874
        %v2608 = vunpack.c.l.b16 %v875
        %v2609 = vunpack.c.h.b16 %v875
        %v2610 = vunpack.c.l.b16 %v876
        %v2611 = vunpack.c.h.b16 %v876
        %v2612 = vunpack.c.l.b16 %v877
        %v2613 = vunpack.c.h.b16 %v877
        %v2614 = vunpack.c.l.b16 %v878
        %v2615 = vunpack.c.h.b16 %v878
        %v2616 = vunpack.c.l.b16 %v879
        %v2617 = vunpack.c.h.b16 %v879
        %v2618 = vunpack.c.l.b16 %v880
        %v2619 = vunpack.c.h.b16 %v880
        %v2620 = vunpack.c.l.b16 %v881
        %v2621 = vunpack.c.h.b16 %v881
        %v2622 = vunpack.c.l.b16 %v882
        %v2623 = vunpack.c.h.b16 %v882
        %v2624 = vunpack.c.l.b16 %v883
        %v2625 = vunpack.c.h.b16 %v883
        %v2626 = vunpack.c.l.b16 %v884
        %v2627 = vunpack.c.h.b16 %v884
        %v2628 = vunpack.c.l.b16 %v885
        %v2629 = vunpack.c.h.b16 %v885
        %v2630 = vunpack.c.l.b16 %v886
        %v2631 = vunpack.c.h.b16 %v886
        %v2632 = vunpack.c.l.b16 %v887
        %v2633 = vunpack.c.h.b16 %v887
        %v2634 = vunpack.c.l.b16 %v888
        %v2635 = vunpack.c.h.b16 %v888
        %v2636 = vunpack.c.l.b16 %v889
        %v2637 = vunpack.c.h.b16 %v889
        %v2638 = vunpack.c.l.b16 %v890
        %v2639 = vunpack.c.h.b16 %v890
        %v2640 = vunpack.c.l.b16 %v891
        %v2641 = vunpack.c.h.b16 %v891
        %v2642 = vunpack.c.l.b16 %v892
        %v2643 = vunpack.c.h.b16 %v892
        %v2644 = vunpack.c.l.b16 %v893
        %v2645 = vunpack.c.h.b16 %v893
        %v2646 = vunpack.c.l.b16 %v894
        %v2647 = vunpack.c.h.b16 %v894
        %v2648 = vunpack.c.l.b16 %v895
        %v2649 = vunpack.c.h.b16 %v895
        %v2650 = vunpack.c.l.b16 %v896
        %v2651 = vunpack.c.h.b16 %v896
        %v2652 = vunpack.c.l.b16 %v897
        %v2653 = vunpack.c.h.b16 %v897
        %v2654 = vunpack.c.l.b16 %v898
        %v2655 = vunpack.c.h.b16 %v898
        %v2656 = vunpack.c.l.b16 %v899
        %v2657 = vunpack.c.h.b16 %v899
        %v2658 = vunpack.c.l.b16 %v900
        %v2659 = vunpack.c.h.b16 %v900
        %v2660 = vunpack.c.l.b16 %v901
        %v2661 = vunpack.c.h.b16 %v901
        %v2662 = vunpack.c.l.b16 %v902
        %v2663 = vunpack.c.h.b16 %v902
        %v2664 = vunpack.c.l.b16 %v903
        %v2665 = vunpack.c.h.b16 %v903
        %v2666 = vunpack.c.l.b16 %v904
        %v2667 = vunpack.c.h.b16 %v904
        %v2668 = vunpack.c.l.b16 %v905
        %v2669 = vunpack.c.h.b16 %v905
        %v2670 = vunpack.c.l.b16 %v906
        %v2671 = vunpack.c.h.b16 %v906
        %v2672 = vunpack.c.l.b16 %v907
        %v2673 = vunpack.c.h.b16 %v907
        %v2674 = vunpack.c.l.b16 %v908
        %v2675 = vunpack.c.h.b16 %v908
        %v2676 = vunpack.c.l.b16 %v909
        %v2677 = vunpack.c.h.b16 %v909
        %v2678 = vunpack.c.l.b16 %v910
        %v2679 = vunpack.c.h.b16 %v910
        %v2680 = vunpack.c.l.b16 %v911
        %v2681 = vunpack.c.h.b16 %v911
        %v2682 = vunpack.c.l.b16 %v912
        %v2683 = vunpack.c.h.b16 %v912
        %v2684 = vunpack.c.l.b16 %v913
        %v2685 = vunpack.c.h.b16 %v913
        %v2686 = vunpack.c.l.b16 %v914
        %v2687 = vunpack.c.h.b16 %v914
        %v2688 = vunpack.c.l.b16 %v915
        %v2689 = vunpack.c.h.b16 %v915
        %v2690 = vunpack.c.l.b16 %v916
        %v2691 = vunpack.c.h.b16 %v916
        %v2692 = vunpack.c.l.b16 %v917
        %v2693 = vunpack.c.h.b16 %v917
        %v2694 = vunpack.c.l.b16 %v918
        %v2695 = vunpack.c.h.b16 %v918
        %v2696 = vunpack.c.l.b16 %v919
        %v2697 = vunpack.c.h.b16 %v919
        %v2698 = vunpack.c.l.b16 %v920
        %v2699 = vunpack.c.h.b16 %v920
        %v2700 = vunpack.c.l.b16 %v921
        %v2701 = vunpack.c.h.b16 %v921
        %v2702 = vunpack.c.l.b16 %v922
        %v2703 = vunpack.c.h.b16 %v922
        %v2704 = vunpack.c.l.b16 %v923
        %v2705 = vunpack.c.h.b16 %v923
        %v2706 = vunpack.c.l.b16 %v924
        %v2707 = vunpack.c.h.b16 %v924
        %v2708 = vunpack.c.l.b16 %v925
        %v2709 = vunpack.c.h.b16 %v925
        %v2710 = vunpack.c.l.b16 %v926
        %v2711 = vunpack.c.h.b16 %v926
        %v2712 = vunpack.c.l.b16 %v927
        %v2713 = vunpack.c.h.b16 %v927
        %v2714 = vunpack.c.l.b16 %v928
        %v2715 = vunpack.c.h.b16 %v928
        %v2716 = vunpack.c.l.b16 %v929
        %v2717 = vunpack.c.h.b16 %v929
        %v2718 = vunpack.c.l.b16 %v930
        %v2719 = vunpack.c.h.b16 %v930
        %v2720 = vunpack.c.l.b16 %v931
        %v2721 = vunpack.c.h.b16 %v931
        %v2722 = vunpack.c.l.b16 %v932
        %v2723 = vunpack.c.h.b16 %v932
        %v2724 = vunpack.c.l.b16 %v933
        %v2725 = vunpack.c.h.b16 %v933
        %v2726 = vunpack.c.l.b16 %v934
        %v2727 = vunpack.c.h.b16 %v934
        %v2728 = vunpack.c.l.b16 %v935
        %v2729 = vunpack.c.h.b16 %v935
        %v2730 = vunpack.c.l.b16 %v936
        %v2731 = vunpack.c.h.b16 %v936
        %v2732 = vunpack.c.l.b16 %v937
        %v2733 = vunpack.c.h.b16 %v937
        %v2734 = vunpack.c.l.b16 %v938
        %v2735 = vunpack.c.h.b16 %v938
        %v2736 = vunpack.c.l.b16 %v939
        %v2737 = vunpack.c.h.b16 %v939
        %v2738 = vunpack.c.l.b16 %v940
        %v2739 = vunpack.c.h.b16 %v940
        %v2740 = vunpack.c.l.b16 %v941
        %v2741 = vunpack.c.h.b16 %v941
        %v2742 = vunpack.c.l.b16 %v942
        %v2743 = vunpack.c.h.b16 %v942
        %v2744 = vunpack.c.l.b16 %v943
        %v2745 = vunpack.c.h.b16 %v943
        %v2746 = vunpack.c.l.b16 %v944
        %v2747 = vunpack.c.h.b16 %v944
        %v2748 = vunpack.c.l.b16 %v945
        %v2749 = vunpack.c.h.b16 %v945
        %v2750 = vunpack.c.l.b16 %v946
        %v2751 = vunpack.c.h.b16 %v946
        %v2752 = vunpack.c.l.b16 %v947
        %v2753 = vunpack.c.h.b16 %v947
        %v2754 = vunpack.c.l.b16 %v948
        %v2755 = vunpack.c.h.b16 %v948
        %v2756 = vunpack.c.l.b16 %v949
        %v2757 = vunpack.c.h.b16 %v949
        %v2758 = vunpack.c.l.b16 %v950
        %v2759 = vunpack.c.h.b16 %v950
        %v2760 = vunpack.c.l.b16 %v951
        %v2761 = vunpack.c.h.b16 %v951
        %v2762 = vunpack.c.l.b16 %v952
        %v2763 = vunpack.c.h.b16 %v952
        %v2764 = vunpack.c.l.b16 %v953
        %v2765 = vunpack.c.h.b16 %v953
        %v2766 = vunpack.c.l.b16 %v954
        %v2767 = vunpack.c.h.b16 %v954
        %v2768 = vunpack.c.l.b16 %v955
        %v2769 = vunpack.c.h.b16 %v955
        %v2770 = vunpack.c.l.b16 %v956
        %v2771 = vunpack.c.h.b16 %v956
        %v2772 = vunpack.c.l.b16 %v957
        %v2773 = vunpack.c.h.b16 %v957
        %v2774 = vunpack.c.l.b16 %v958
        %v2775 = vunpack.c.h.b16 %v958
        %v2776 = vunpack.c.l.b16 %v959
        %v2777 = vunpack.c.h.b16 %v959
        %v2778 = vunpack.c.l.b16 %v960
        %v2779 = vunpack.c.h.b16 %v960
        %v2780 = vunpack.c.l.b16 %v961
        %v2781 = vunpack.c.h.b16 %v961
        %v2782 = vunpack.c.l.b16 %v962
        %v2783 = vunpack.c.h.b16 %v962
        %v2784 = vunpack.c.l.b16 %v963
        %v2785 = vunpack.c.h.b16 %v963
        %v2786 = vunpack.c.l.b16 %v964
        %v2787 = vunpack.c.h.b16 %v964
        %v2788 = vunpack.c.l.b16 %v965
        %v2789 = vunpack.c.h.b16 %v965
        %v2790 = vunpack.c.l.b16 %v966
        %v2791 = vunpack.c.h.b16 %v966
        %v2792 = vunpack.c.l.b16 %v967
        %v2793 = vunpack.c.h.b16 %v967
        %v2794 = vunpack.c.l.b16 %v968
        %v2795 = vunpack.c.h.b16 %v968
        %v2796 = vunpack.c.l.b16 %v969
        %v2797 = vunpack.c.h.b16 %v969
        %v2798 = vunpack.c.l.b16 %v970
        %v2799 = vunpack.c.h.b16 %v970
        %v2800 = vunpack.c.l.b16 %v971
        %v2801 = vunpack.c.h.b16 %v971
        %v2802 = vunpack.c.l.b16 %v972
        %v2803 = vunpack.c.h.b16 %v972
        %v2804 = vunpack.c.l.b16 %v973
        %v2805 = vunpack.c.h.b16 %v973
        %v2806 = vunpack.c.l.b16 %v974
        %v2807 = vunpack.c.h.b16 %v974
        %v2808 = vunpack.c.l.b16 %v975
        %v2809 = vunpack.c.h.b16 %v975
        %v2810 = vunpack.c.l.b16 %v976
        %v2811 = vunpack.c.h.b16 %v976
        %v2812 = vunpack.c.l.b16 %v977
        %v2813 = vunpack.c.h.b16 %v977
        %v2814 = vunpack.c.l.b16 %v978
        %v2815 = vunpack.c.h.b16 %v978
        %v2816 = vunpack.c.l.b16 %v979
        %v2817 = vunpack.c.h.b16 %v979
        %v2818 = vunpack.c.l.b16 %v980
        %v2819 = vunpack.c.h.b16 %v980
        %v2820 = vunpack.c.l.b16 %v981
        %v2821 = vunpack.c.h.b16 %v981
        %v2822 = vunpack.c.l.b16 %v982
        %v2823 = vunpack.c.h.b16 %v982
        %v2824 = vunpack.c.l.b16 %v983
        %v2825 = vunpack.c.h.b16 %v983
        %v2826 = vunpack.c.l.b16 %v984
        %v2827 = vunpack.c.h.b16 %v984
        %v2828 = vunpack.c.l.b16 %v985
        %v2829 = vunpack.c.h.b16 %v985
        %v2830 = vunpack.c.l.b16 %v986
        %v2831 = vunpack.c.h.b16 %v986
        %v2832 = vunpack.c.l.b16 %v987
        %v2833 = vunpack.c.h.b16 %v987
        %v2834 = vunpack.c.l.b16 %v988
        %v2835 = vunpack.c.h.b16 %v988
        %v2836 = vunpack.c.l.b16 %v989
        %v2837 = vunpack.c.h.b16 %v989
        %v2838 = vunpack.c.l.b16 %v990
        %v2839 = vunpack.c.h.b16 %v990
        %v2840 = vunpack.c.l.b16 %v991
        %v2841 = vunpack.c.h.b16 %v991
        %v2842 = vunpack.c.l.b16 %v992
        %v2843 = vunpack.c.h.b16 %v992
        %v2844 = vunpack.c.l.b16 %v993
        %v2845 = vunpack.c.h.b16 %v993
        %v2846 = vunpack.c.l.b16 %v994
        %v2847 = vunpack.c.h.b16 %v994
        %v2848 = vunpack.c.l.b16 %v995
        %v2849 = vunpack.c.h.b16 %v995
        %v2850 = vunpack.c.l.b16 %v996
        %v2851 = vunpack.c.h.b16 %v996
        %v2852 = vunpack.c.l.b16 %v997
        %v2853 = vunpack.c.h.b16 %v997
        %v2854 = vunpack.c.l.b16 %v998
        %v2855 = vunpack.c.h.b16 %v998
        %v2856 = vunpack.c.l.b16 %v999
        %v2857 = vunpack.c.h.b16 %v999
        %v2858 = vunpack.c.l.b16 %v1000
        %v2859 = vunpack.c.h.b16 %v1000
        %v2860 = vunpack.c.l.b16 %v1001
        %v2861 = vunpack.c.h.b16 %v1001
        %v2862 = vunpack.c.l.b16 %v1002
        %v2863 = vunpack.c.h.b16 %v1002
        %v2864 = vunpack.c.l.b16 %v1003
        %v2865 = vunpack.c.h.b16 %v1003
        %v2866 = vunpack.c.l.b16 %v1004
        %v2867 = vunpack.c.h.b16 %v1004
        %v2868 = vunpack.c.l.b16 %v1005
        %v2869 = vunpack.c.h.b16 %v1005
        %v2870 = vunpack.c.l.b16 %v1006
        %v2871 = vunpack.c.h.b16 %v1006
        %v2872 = vunpack.c.l.b16 %v1007
        %v2873 = vunpack.c.h.b16 %v1007
        %v2874 = vunpack.c.l.b16 %v1008
        %v2875 = vunpack.c.h.b16 %v1008
        %v2876 = vunpack.c.l.b16 %v1009
        %v2877 = vunpack.c.h.b16 %v1009
        %v2878 = vunpack.c.l.b16 %v1010
        %v2879 = vunpack.c.h.b16 %v1010
        %v2880 = vunpack.c.l.b16 %v1011
        %v2881 = vunpack.c.h.b16 %v1011
        %v2882 = vunpack.c.l.b16 %v1012
        %v2883 = vunpack.c.h.b16 %v1012
        %v2884 = vunpack.c.l.b16 %v1013
        %v2885 = vunpack.c.h.b16 %v1013
        %v2886 = vunpack.c.l.b16 %v1014
        %v2887 = vunpack.c.h.b16 %v1014
        %v2888 = vunpack.c.l.b16 %v1015
        %v2889 = vunpack.c.h.b16 %v1015
        %v2890 = vunpack.c.l.b16 %v1016
        %v2891 = vunpack.c.h.b16 %v1016
        %v2892 = vunpack.c.l.b16 %v1017
        %v2893 = vunpack.c.h.b16 %v1017
        %v2894 = vunpack.c.l.b16 %v1018
        %v2895 = vunpack.c.h.b16 %v1018
        %v2896 = vunpack.c.l.b16 %v1019
        %v2897 = vunpack.c.h.b16 %v1019
        %v2898 = vunpack.c.l.b16 %v1020
        %v2899 = vunpack.c.h.b16 %v1020
        %v2900 = vunpack.c.l.b16 %v1021
        %v2901 = vunpack.c.h.b16 %v1021
        %v2902 = vunpack.c.l.b16 %v1022
        %v2903 = vunpack.c.h.b16 %v1022
        %v2904 = vunpack.c.l.b16 %v1023
        %v2905 = vunpack.c.h.b16 %v1023
        %v2906 = vunpack.c.l.b16 %v1024
        %v2907 = vunpack.c.h.b16 %v1024
        %v2908 = vunpack.c.l.b16 %v1025
        %v2909 = vunpack.c.h.b16 %v1025
        %v2910 = vunpack.c.l.b16 %v1026
        %v2911 = vunpack.c.h.b16 %v1026
        %v2912 = vunpack.c.l.b16 %v1027
        %v2913 = vunpack.c.h.b16 %v1027
        %v2914 = vunpack.c.l.b16 %v1028
        %v2915 = vunpack.c.h.b16 %v1028
        %v2916 = vunpack.c.l.b16 %v1029
        %v2917 = vunpack.c.h.b16 %v1029
        %v2918 = vunpack.c.l.b16 %v1030
        %v2919 = vunpack.c.h.b16 %v1030
        %v2920 = vunpack.c.l.b16 %v1031
        %v2921 = vunpack.c.h.b16 %v1031
        %v2922 = vunpack.c.l.b16 %v1032
        %v2923 = vunpack.c.h.b16 %v1032
        %v2924 = vunpack.c.l.b16 %v1033
        %v2925 = vunpack.c.h.b16 %v1033
        %v2926 = vunpack.c.l.b16 %v1034
        %v2927 = vunpack.c.h.b16 %v1034
        %v2928 = vunpack.c.l.b16 %v1035
        %v2929 = vunpack.c.h.b16 %v1035
        %v2930 = vunpack.c.l.b16 %v1036
        %v2931 = vunpack.c.h.b16 %v1036
        %v2932 = vunpack.c.l.b16 %v1037
        %v2933 = vunpack.c.h.b16 %v1037
        %v2934 = vunpack.c.l.b16 %v1038
        %v2935 = vunpack.c.h.b16 %v1038
        %v2936 = vunpack.c.l.b16 %v1039
        %v2937 = vunpack.c.h.b16 %v1039
        %v2938 = vunpack.c.l.b16 %v1040
        %v2939 = vunpack.c.h.b16 %v1040
        %v2940 = vunpack.c.l.b16 %v1041
        %v2941 = vunpack.c.h.b16 %v1041
        %v2942 = vunpack.c.l.b16 %v1042
        %v2943 = vunpack.c.h.b16 %v1042
        %v2944 = vunpack.c.l.b16 %v1043
        %v2945 = vunpack.c.h.b16 %v1043
        %v2946 = vunpack.c.l.b16 %v1044
        %v2947 = vunpack.c.h.b16 %v1044
        %v2948 = vunpack.c.l.b16 %v1045
        %v2949 = vunpack.c.h.b16 %v1045
        %v2950 = vunpack.c.l.b16 %v1046
        %v2951 = vunpack.c.h.b16 %v1046
        %v2952 = vunpack.c.l.b16 %v1047
        %v2953 = vunpack.c.h.b16 %v1047
        %v2954 = vunpack.c.l.b16 %v1048
        %v2955 = vunpack.c.h.b16 %v1048
        %v2956 = vunpack.c.l.b16 %v1049
        %v2957 = vunpack.c.h.b16 %v1049
        %v2958 = vunpack.c.l.b16 %v1050
        %v2959 = vunpack.c.h.b16 %v1050
        %v2960 = vunpack.c.l.b16 %v1051
        %v2961 = vunpack.c.h.b16 %v1051
        %v2962 = vunpack.c.l.b16 %v1052
        %v2963 = vunpack.c.h.b16 %v1052
        %v2964 = vunpack.c.l.b16 %v1053
        %v2965 = vunpack.c.h.b16 %v1053
        %v2966 = vunpack.c.l.b16 %v1054
        %v2967 = vunpack.c.h.b16 %v1054
        %v2968 = vunpack.c.l.b16 %v1055
        %v2969 = vunpack.c.h.b16 %v1055
        %v2970 = vunpack.c.l.b16 %v1056
        %v2971 = vunpack.c.h.b16 %v1056
        %v2972 = vunpack.c.l.b16 %v1057
        %v2973 = vunpack.c.h.b16 %v1057
        %v2974 = vunpack.c.l.b16 %v1058
        %v2975 = vunpack.c.h.b16 %v1058
        %v2976 = vunpack.c.l.b16 %v1059
        %v2977 = vunpack.c.h.b16 %v1059
        %v2978 = vunpack.c.l.b16 %v1060
        %v2979 = vunpack.c.h.b16 %v1060
        %v2980 = vunpack.c.l.b16 %v1061
        %v2981 = vunpack.c.h.b16 %v1061
        %v2982 = vpack.c.b16 %v1722, %v1702
        %v2983 = vpack.c.b16 %v1723, %v1703
        %v2984 = vpack.c.b16 %v1724, %v1704
        %v2985 = vpack.c.b16 %v1725, %v1705
        %v2986 = vpack.c.b16 %v1726, %v1706
        %v2987 = vpack.c.b16 %v1727, %v1707
        %v2988 = vpack.c.b16 %v1728, %v1708
        %v2989 = vpack.c.b16 %v1729, %v1709
        %v2990 = vpack.c.b16 %v1730, %v1710
        %v2991 = vpack.c.b16 %v1731, %v1711
        %v2992 = vpack.c.b16 %v1732, %v1712
        %v2993 = vpack.c.b16 %v1733, %v1713
        %v2994 = vpack.c.b16 %v1734, %v1714
        %v2995 = vpack.c.b16 %v1735, %v1715
        %v2996 = vpack.c.b16 %v1736, %v1716
        %v2997 = vpack.c.b16 %v1737, %v1717
        %v2998 = vpack.c.b16 %v1738, %v1718
        %v2999 = vpack.c.b16 %v1739, %v1719
        %v3000 = vpack.c.b16 %v1740, %v1720
        %v3001 = vpack.c.b16 %v1741, %v1721
        %v3002 = vpack.c.b16 %v1762, %v1742
        %v3003 = vpack.c.b16 %v1763, %v1743
        %v3004 = vpack.c.b16 %v1764, %v1744
        %v3005 = vpack.c.b16 %v1765, %v1745
        %v3006 = vpack.c.b16 %v1766, %v1746
        %v3007 = vpack.c.b16 %v1767, %v1747
        %v3008 = vpack.c.b16 %v1768, %v1748
        %v3009 = vpack.c.b16 %v1769, %v1749
        %v3010 = vpack.c.b16 %v1770, %v1750
        %v3011 = vpack.c.b16 %v1771, %v1751
        %v3012 = vpack.c.b16 %v1772, %v1752
        %v3013 = vpack.c.b16 %v1773, %v1753
        %v3014 = vpack.c.b16 %v1774, %v1754
        %v3015 = vpack.c.b16 %v1775, %v1755
        %v3016 = vpack.c.b16 %v1776, %v1756
        %v3017 = vpack.c.b16 %v1777, %v1757
        %v3018 = vpack.c.b16 %v1778, %v1758
        %v3019 = vpack.c.b16 %v1779, %v1759
        %v3020 = vpack.c.b16 %v1780, %v1760
        %v3021 = vpack.c.b16 %v1781, %v1761
        %v3022 = vpack.c.b16 %v1802, %v1782
        %v3023 = vpack.c.b16 %v1803, %v1783
        %v3024 = vpack.c.b16 %v1804, %v1784
        %v3025 = vpack.c.b16 %v1805, %v1785
        %v3026 = vpack.c.b16 %v1806, %v1786
        %v3027 = vpack.c.b16 %v1807, %v1787
        %v3028 = vpack.c.b16 %v1808, %v1788
        %v3029 = vpack.c.b16 %v1809, %v1789
        %v3030 = vpack.c.b16 %v1810, %v1790
        %v3031 = vpack.c.b16 %v1811, %v1791
        %v3032 = vpack.c.b16 %v1812, %v1792
        %v3033 = vpack.c.b16 %v1813, %v1793
        %v3034 = vpack.c.b16 %v1814, %v1794
        %v3035 = vpack.c.b16 %v1815, %v1795
        %v3036 = vpack.c.b16 %v1816, %v1796
        %v3037 = vpack.c.b16 %v1817, %v1797
        %v3038 = vpack.c.b16 %v1818, %v1798
        %v3039 = vpack.c.b16 %v1819, %v1799
        %v3040 = vpack.c.b16 %v1820, %v1800
        %v3041 = vpack.c.b16 %v1821, %v1801
        %v3042 = vpack.c.b16 %v1842, %v1822
        %v3043 = vpack.c.b16 %v1843, %v1823
        %v3044 = vpack.c.b16 %v1844, %v1824
        %v3045 = vpack.c.b16 %v1845, %v1825
        %v3046 = vpack.c.b16 %v1846, %v1826
        %v3047 = vpack.c.b16 %v1847, %v1827
        %v3048 = vpack.c.b16 %v1848, %v1828
        %v3049 = vpack.c.b16 %v1849, %v1829
        %v3050 = vpack.c.b16 %v1850, %v1830
        %v3051 = vpack.c.b16 %v1851, %v1831
        %v3052 = vpack.c.b16 %v1852, %v1832
        %v3053 = vpack.c.b16 %v1853, %v1833
        %v3054 = vpack.c.b16 %v1854, %v1834
        %v3055 = vpack.c.b16 %v1855, %v1835
        %v3056 = vpack.c.b16 %v1856, %v1836
        %v3057 = vpack.c.b16 %v1857, %v1837
        %v3058 = vpack.c.b16 %v1858, %v1838
        %v3059 = vpack.c.b16 %v1859, %v1839
        %v3060 = vpack.c.b16 %v1860, %v1840
        %v3061 = vpack.c.b16 %v1861, %v1841
        %v3062 = vpack.c.b16 %v1882, %v1862
        %v3063 = vpack.c.b16 %v1883, %v1863
        %v3064 = vpack.c.b16 %v1884, %v1864
        %v3065 = vpack.c.b16 %v1885, %v1865
        %v3066 = vpack.c.b16 %v1886, %v1866
        %v3067 = vpack.c.b16 %v1887, %v1867
        %v3068 = vpack.c.b16 %v1888, %v1868
        %v3069 = vpack.c.b16 %v1889, %v1869
        %v3070 = vpack.c.b16 %v1890, %v1870
        %v3071 = vpack.c.b16 %v1891, %v1871
        %v3072 = vpack.c.b16 %v1892, %v1872
        %v3073 = vpack.c.b16 %v1893, %v1873
        %v3074 = vpack.c.b16 %v1894, %v1874
        %v3075 = vpack.c.b16 %v1895, %v1875
        %v3076 = vpack.c.b16 %v1896, %v1876
        %v3077 = vpack.c.b16 %v1897, %v1877
        %v3078 = vpack.c.b16 %v1898, %v1878
        %v3079 = vpack.c.b16 %v1899, %v1879
        %v3080 = vpack.c.b16 %v1900, %v1880
        %v3081 = vpack.c.b16 %v1901, %v1881
        %v3082 = vpack.c.b16 %v1922, %v1902
        %v3083 = vpack.c.b16 %v1923, %v1903
        %v3084 = vpack.c.b16 %v1924, %v1904
        %v3085 = vpack.c.b16 %v1925, %v1905
        %v3086 = vpack.c.b16 %v1926, %v1906
        %v3087 = vpack.c.b16 %v1927, %v1907
        %v3088 = vpack.c.b16 %v1928, %v1908
        %v3089 = vpack.c.b16 %v1929, %v1909
        %v3090 = vpack.c.b16 %v1930, %v1910
        %v3091 = vpack.c.b16 %v1931, %v1911
        %v3092 = vpack.c.b16 %v1932, %v1912
        %v3093 = vpack.c.b16 %v1933, %v1913
        %v3094 = vpack.c.b16 %v1934, %v1914
        %v3095 = vpack.c.b16 %v1935, %v1915
        %v3096 = vpack.c.b16 %v1936, %v1916
        %v3097 = vpack.c.b16 %v1937, %v1917
        %v3098 = vpack.c.b16 %v1938, %v1918
        %v3099 = vpack.c.b16 %v1939, %v1919
        %v3100 = vpack.c.b16 %v1940, %v1920
        %v3101 = vpack.c.b16 %v1941, %v1921
        %v3102 = vpack.c.b16 %v1962, %v1942
        %v3103 = vpack.c.b16 %v1963, %v1943
        %v3104 = vpack.c.b16 %v1964, %v1944
        %v3105 = vpack.c.b16 %v1965, %v1945
        %v3106 = vpack.c.b16 %v1966, %v1946
        %v3107 = vpack.c.b16 %v1967, %v1947
        %v3108 = vpack.c.b16 %v1968, %v1948
        %v3109 = vpack.c.b16 %v1969, %v1949
        %v3110 = vpack.c.b16 %v1970, %v1950
        %v3111 = vpack.c.b16 %v1971, %v1951
        %v3112 = vpack.c.b16 %v1972, %v1952
        %v3113 = vpack.c.b16 %v1973, %v1953
        %v3114 = vpack.c.b16 %v1974, %v1954
        %v3115 = vpack.c.b16 %v1975, %v1955
        %v3116 = vpack.c.b16 %v1976, %v1956
        %v3117 = vpack.c.b16 %v1977, %v1957
        %v3118 = vpack.c.b16 %v1978, %v1958
        %v3119 = vpack.c.b16 %v1979, %v1959
        %v3120 = vpack.c.b16 %v1980, %v1960
        %v3121 = vpack.c.b16 %v1981, %v1961
        %v3122 = vpack.c.b16 %v2002, %v1982
        %v3123 = vpack.c.b16 %v2003, %v1983
        %v3124 = vpack.c.b16 %v2004, %v1984
        %v3125 = vpack.c.b16 %v2005, %v1985
        %v3126 = vpack.c.b16 %v2006, %v1986
        %v3127 = vpack.c.b16 %v2007, %v1987
        %v3128 = vpack.c.b16 %v2008, %v1988
        %v3129 = vpack.c.b16 %v2009, %v1989
        %v3130 = vpack.c.b16 %v2010, %v1990
        %v3131 = vpack.c.b16 %v2011, %v1991
        %v3132 = vpack.c.b16 %v2012, %v1992
        %v3133 = vpack.c.b16 %v2013, %v1993
        %v3134 = vpack.c.b16 %v2014, %v1994
        %v3135 = vpack.c.b16 %v2015, %v1995
        %v3136 = vpack.c.b16 %v2016, %v1996
        %v3137 = vpack.c.b16 %v2017, %v1997
        %v3138 = vpack.c.b16 %v2018, %v1998
        %v3139 = vpack.c.b16 %v2019, %v1999
        %v3140 = vpack.c.b16 %v2020, %v2000
        %v3141 = vpack.c.b16 %v2021, %v2001
        %v3142 = vpack.c.b16 %v2042, %v2022
        %v3143 = vpack.c.b16 %v2043, %v2023
        %v3144 = vpack.c.b16 %v2044, %v2024
        %v3145 = vpack.c.b16 %v2045, %v2025
        %v3146 = vpack.c.b16 %v2046, %v2026
        %v3147 = vpack.c.b16 %v2047, %v2027
        %v3148 = vpack.c.b16 %v2048, %v2028
        %v3149 = vpack.c.b16 %v2049, %v2029
        %v3150 = vpack.c.b16 %v2050, %v2030
        %v3151 = vpack.c.b16 %v2051, %v2031
        %v3152 = vpack.c.b16 %v2052, %v2032
        %v3153 = vpack.c.b16 %v2053, %v2033
        %v3154 = vpack.c.b16 %v2054, %v2034
        %v3155 = vpack.c.b16 %v2055, %v2035
        %v3156 = vpack.c.b16 %v2056, %v2036
        %v3157 = vpack.c.b16 %v2057, %v2037
        %v3158 = vpack.c.b16 %v2058, %v2038
        %v3159 = vpack.c.b16 %v2059, %v2039
        %v3160 = vpack.c.b16 %v2060, %v2040
        %v3161 = vpack.c.b16 %v2061, %v2041
        %v3162 = vpack.c.b16 %v2082, %v2062
        %v3163 = vpack.c.b16 %v2083, %v2063
        %v3164 = vpack.c.b16 %v2084, %v2064
        %v3165 = vpack.c.b16 %v2085, %v2065
        %v3166 = vpack.c.b16 %v2086, %v2066
        %v3167 = vpack.c.b16 %v2087, %v2067
        %v3168 = vpack.c.b16 %v2088, %v2068
        %v3169 = vpack.c.b16 %v2089, %v2069
        %v3170 = vpack.c.b16 %v2090, %v2070
        %v3171 = vpack.c.b16 %v2091, %v2071
        %v3172 = vpack.c.b16 %v2092, %v2072
        %v3173 = vpack.c.b16 %v2093, %v2073
        %v3174 = vpack.c.b16 %v2094, %v2074
        %v3175 = vpack.c.b16 %v2095, %v2075
        %v3176 = vpack.c.b16 %v2096, %v2076
        %v3177 = vpack.c.b16 %v2097, %v2077
        %v3178 = vpack.c.b16 %v2098, %v2078
        %v3179 = vpack.c.b16 %v2099, %v2079
        %v3180 = vpack.c.b16 %v2100, %v2080
        %v3181 = vpack.c.b16 %v2101, %v2081
        %v3182 = vpack.c.b16 %v2122, %v2102
        %v3183 = vpack.c.b16 %v2123, %v2103
        %v3184 = vpack.c.b16 %v2124, %v2104
        %v3185 = vpack.c.b16 %v2125, %v2105
        %v3186 = vpack.c.b16 %v2126, %v2106
        %v3187 = vpack.c.b16 %v2127, %v2107
        %v3188 = vpack.c.b16 %v2128, %v2108
        %v3189 = vpack.c.b16 %v2129, %v2109
        %v3190 = vpack.c.b16 %v2130, %v2110
        %v3191 = vpack.c.b16 %v2131, %v2111
        %v3192 = vpack.c.b16 %v2132, %v2112
        %v3193 = vpack.c.b16 %v2133, %v2113
        %v3194 = vpack.c.b16 %v2134, %v2114
        %v3195 = vpack.c.b16 %v2135, %v2115
        %v3196 = vpack.c.b16 %v2136, %v2116
        %v3197 = vpack.c.b16 %v2137, %v2117
        %v3198 = vpack.c.b16 %v2138, %v2118
        %v3199 = vpack.c.b16 %v2139, %v2119
        %v3200 = vpack.c.b16 %v2140, %v2120
        %v3201 = vpack.c.b16 %v2141, %v2121
        %v3202 = vpack.c.b16 %v2162, %v2142
        %v3203 = vpack.c.b16 %v2163, %v2143
        %v3204 = vpack.c.b16 %v2164, %v2144
        %v3205 = vpack.c.b16 %v2165, %v2145
        %v3206 = vpack.c.b16 %v2166, %v2146
        %v3207 = vpack.c.b16 %v2167, %v2147
        %v3208 = vpack.c.b16 %v2168, %v2148
        %v3209 = vpack.c.b16 %v2169, %v2149
        %v3210 = vpack.c.b16 %v2170, %v2150
        %v3211 = vpack.c.b16 %v2171, %v2151
        %v3212 = vpack.c.b16 %v2172, %v2152
        %v3213 = vpack.c.b16 %v2173, %v2153
        %v3214 = vpack.c.b16 %v2174, %v2154
        %v3215 = vpack.c.b16 %v2175, %v2155
        %v3216 = vpack.c.b16 %v2176, %v2156
        %v3217 = vpack.c.b16 %v2177, %v2157
        %v3218 = vpack.c.b16 %v2178, %v2158
        %v3219 = vpack.c.b16 %v2179, %v2159
        %v3220 = vpack.c.b16 %v2180, %v2160
        %v3221 = vpack.c.b16 %v2181, %v2161
        %v3222 = vpack.c.b16 %v2202, %v2182
        %v3223 = vpack.c.b16 %v2203, %v2183
        %v3224 = vpack.c.b16 %v2204, %v2184
        %v3225 = vpack.c.b16 %v2205, %v2185
        %v3226 = vpack.c.b16 %v2206, %v2186
        %v3227 = vpack.c.b16 %v2207, %v2187
        %v3228 = vpack.c.b16 %v2208, %v2188
        %v3229 = vpack.c.b16 %v2209, %v2189
        %v3230 = vpack.c.b16 %v2210, %v2190
        %v3231 = vpack.c.b16 %v2211, %v2191
        %v3232 = vpack.c.b16 %v2212, %v2192
        %v3233 = vpack.c.b16 %v2213, %v2193
        %v3234 = vpack.c.b16 %v2214, %v2194
        %v3235 = vpack.c.b16 %v2215, %v2195
        %v3236 = vpack.c.b16 %v2216, %v2196
        %v3237 = vpack.c.b16 %v2217, %v2197
        %v3238 = vpack.c.b16 %v2218, %v2198
        %v3239 = vpack.c.b16 %v2219, %v2199
        %v3240 = vpack.c.b16 %v2220, %v2200
        %v3241 = vpack.c.b16 %v2221, %v2201
        %v3242 = vpack.c.b16 %v2242, %v2222
        %v3243 = vpack.c.b16 %v2243, %v2223
        %v3244 = vpack.c.b16 %v2244, %v2224
        %v3245 = vpack.c.b16 %v2245, %v2225
        %v3246 = vpack.c.b16 %v2246, %v2226
        %v3247 = vpack.c.b16 %v2247, %v2227
        %v3248 = vpack.c.b16 %v2248, %v2228
        %v3249 = vpack.c.b16 %v2249, %v2229
        %v3250 = vpack.c.b16 %v2250, %v2230
        %v3251 = vpack.c.b16 %v2251, %v2231
        %v3252 = vpack.c.b16 %v2252, %v2232
        %v3253 = vpack.c.b16 %v2253, %v2233
        %v3254 = vpack.c.b16 %v2254, %v2234
        %v3255 = vpack.c.b16 %v2255, %v2235
        %v3256 = vpack.c.b16 %v2256, %v2236
        %v3257 = vpack.c.b16 %v2257, %v2237
        %v3258 = vpack.c.b16 %v2258, %v2238
        %v3259 = vpack.c.b16 %v2259, %v2239
        %v3260 = vpack.c.b16 %v2260, %v2240
        %v3261 = vpack.c.b16 %v2261, %v2241
        %v3262 = vpack.c.b16 %v2282, %v2262
        %v3263 = vpack.c.b16 %v2283, %v2263
        %v3264 = vpack.c.b16 %v2284, %v2264
        %v3265 = vpack.c.b16 %v2285, %v2265
        %v3266 = vpack.c.b16 %v2286, %v2266
        %v3267 = vpack.c.b16 %v2287, %v2267
        %v3268 = vpack.c.b16 %v2288, %v2268
        %v3269 = vpack.c.b16 %v2289, %v2269
        %v3270 = vpack.c.b16 %v2290, %v2270
        %v3271 = vpack.c.b16 %v2291, %v2271
        %v3272 = vpack.c.b16 %v2292, %v2272
        %v3273 = vpack.c.b16 %v2293, %v2273
        %v3274 = vpack.c.b16 %v2294, %v2274
        %v3275 = vpack.c.b16 %v2295, %v2275
        %v3276 = vpack.c.b16 %v2296, %v2276
        %v3277 = vpack.c.b16 %v2297, %v2277
        %v3278 = vpack.c.b16 %v2298, %v2278
        %v3279 = vpack.c.b16 %v2299, %v2279
        %v3280 = vpack.c.b16 %v2300, %v2280
        %v3281 = vpack.c.b16 %v2301, %v2281
        %v3282 = vpack.c.b16 %v2322, %v2302
        %v3283 = vpack.c.b16 %v2323, %v2303
        %v3284 = vpack.c.b16 %v2324, %v2304
        %v3285 = vpack.c.b16 %v2325, %v2305
        %v3286 = vpack.c.b16 %v2326, %v2306
        %v3287 = vpack.c.b16 %v2327, %v2307
        %v3288 = vpack.c.b16 %v2328, %v2308
        %v3289 = vpack.c.b16 %v2329, %v2309
        %v3290 = vpack.c.b16 %v2330, %v2310
        %v3291 = vpack.c.b16 %v2331, %v2311
        %v3292 = vpack.c.b16 %v2332, %v2312
        %v3293 = vpack.c.b16 %v2333, %v2313
        %v3294 = vpack.c.b16 %v2334, %v2314
        %v3295 = vpack.c.b16 %v2335, %v2315
        %v3296 = vpack.c.b16 %v2336, %v2316
        %v3297 = vpack.c.b16 %v2337, %v2317
        %v3298 = vpack.c.b16 %v2338, %v2318
        %v3299 = vpack.c.b16 %v2339, %v2319
        %v3300 = vpack.c.b16 %v2340, %v2320
        %v3301 = vpack.c.b16 %v2341, %v2321
        %v3302 = vpack.c.b16 %v2362, %v2342
        %v3303 = vpack.c.b16 %v2363, %v2343
        %v3304 = vpack.c.b16 %v2364, %v2344
        %v3305 = vpack.c.b16 %v2365, %v2345
        %v3306 = vpack.c.b16 %v2366, %v2346
        %v3307 = vpack.c.b16 %v2367, %v2347
        %v3308 = vpack.c.b16 %v2368, %v2348
        %v3309 = vpack.c.b16 %v2369, %v2349
        %v3310 = vpack.c.b16 %v2370, %v2350
        %v3311 = vpack.c.b16 %v2371, %v2351
        %v3312 = vpack.c.b16 %v2372, %v2352
        %v3313 = vpack.c.b16 %v2373, %v2353
        %v3314 = vpack.c.b16 %v2374, %v2354
        %v3315 = vpack.c.b16 %v2375, %v2355
        %v3316 = vpack.c.b16 %v2376, %v2356
        %v3317 = vpack.c.b16 %v2377, %v2357
        %v3318 = vpack.c.b16 %v2378, %v2358
        %v3319 = vpack.c.b16 %v2379, %v2359
        %v3320 = vpack.c.b16 %v2380, %v2360
        %v3321 = vpack.c.b16 %v2381, %v2361
        %v3322 = vpack.c.b16 %v2402, %v2382
        %v3323 = vpack.c.b16 %v2403, %v2383
        %v3324 = vpack.c.b16 %v2404, %v2384
        %v3325 = vpack.c.b16 %v2405, %v2385
        %v3326 = vpack.c.b16 %v2406, %v2386
        %v3327 = vpack.c.b16 %v2407, %v2387
        %v3328 = vpack.c.b16 %v2408, %v2388
        %v3329 = vpack.c.b16 %v2409, %v2389
        %v3330 = vpack.c.b16 %v2410, %v2390
        %v3331 = vpack.c.b16 %v2411, %v2391
        %v3332 = vpack.c.b16 %v2412, %v2392
        %v3333 = vpack.c.b16 %v2413, %v2393
        %v3334 = vpack.c.b16 %v2414, %v2394
        %v3335 = vpack.c.b16 %v2415, %v2395
        %v3336 = vpack.c.b16 %v2416, %v2396
        %v3337 = vpack.c.b16 %v2417, %v2397
        %v3338 = vpack.c.b16 %v2418, %v2398
        %v3339 = vpack.c.b16 %v2419, %v2399
        %v3340 = vpack.c.b16 %v2420, %v2400
        %v3341 = vpack.c.b16 %v2421, %v2401
        %v3342 = vpack.c.b16 %v2442, %v2422
        %v3343 = vpack.c.b16 %v2443, %v2423
        %v3344 = vpack.c.b16 %v2444, %v2424
        %v3345 = vpack.c.b16 %v2445, %v2425
        %v3346 = vpack.c.b16 %v2446, %v2426
        %v3347 = vpack.c.b16 %v2447, %v2427
        %v3348 = vpack.c.b16 %v2448, %v2428
        %v3349 = vpack.c.b16 %v2449, %v2429
        %v3350 = vpack.c.b16 %v2450, %v2430
        %v3351 = vpack.c.b16 %v2451, %v2431
        %v3352 = vpack.c.b16 %v2452, %v2432
        %v3353 = vpack.c.b16 %v2453, %v2433
        %v3354 = vpack.c.b16 %v2454, %v2434
        %v3355 = vpack.c.b16 %v2455, %v2435
        %v3356 = vpack.c.b16 %v2456, %v2436
        %v3357 = vpack.c.b16 %v2457, %v2437
        %v3358 = vpack.c.b16 %v2458, %v2438
        %v3359 = vpack.c.b16 %v2459, %v2439
        %v3360 = vpack.c.b16 %v2460, %v2440
        %v3361 = vpack.c.b16 %v2461, %v2441
        %v3362 = vpack.c.b16 %v2482, %v2462
        %v3363 = vpack.c.b16 %v2483, %v2463
        %v3364 = vpack.c.b16 %v2484, %v2464
        %v3365 = vpack.c.b16 %v2485, %v2465
        %v3366 = vpack.c.b16 %v2486, %v2466
        %v3367 = vpack.c.b16 %v2487, %v2467
        %v3368 = vpack.c.b16 %v2488, %v2468
        %v3369 = vpack.c.b16 %v2489, %v2469
        %v3370 = vpack.c.b16 %v2490, %v2470
        %v3371 = vpack.c.b16 %v2491, %v2471
        %v3372 = vpack.c.b16 %v2492, %v2472
        %v3373 = vpack.c.b16 %v2493, %v2473
        %v3374 = vpack.c.b16 %v2494, %v2474
        %v3375 = vpack.c.b16 %v2495, %v2475
        %v3376 = vpack.c.b16 %v2496, %v2476
        %v3377 = vpack.c.b16 %v2497, %v2477
        %v3378 = vpack.c.b16 %v2498, %v2478
        %v3379 = vpack.c.b16 %v2499, %v2479
        %v3380 = vpack.c.b16 %v2500, %v2480
        %v3381 = vpack.c.b16 %v2501, %v2481
        %v3382 = vpack.c.b16 %v2522, %v2502
        %v3383 = vpack.c.b16 %v2523, %v2503
        %v3384 = vpack.c.b16 %v2524, %v2504
        %v3385 = vpack.c.b16 %v2525, %v2505
        %v3386 = vpack.c.b16 %v2526, %v2506
        %v3387 = vpack.c.b16 %v2527, %v2507
        %v3388 = vpack.c.b16 %v2528, %v2508
        %v3389 = vpack.c.b16 %v2529, %v2509
        %v3390 = vpack.c.b16 %v2530, %v2510
        %v3391 = vpack.c.b16 %v2531, %v2511
        %v3392 = vpack.c.b16 %v2532, %v2512
        %v3393 = vpack.c.b16 %v2533, %v2513
        %v3394 = vpack.c.b16 %v2534, %v2514
        %v3395 = vpack.c.b16 %v2535, %v2515
        %v3396 = vpack.c.b16 %v2536, %v2516
        %v3397 = vpack.c.b16 %v2537, %v2517
        %v3398 = vpack.c.b16 %v2538, %v2518
        %v3399 = vpack.c.b16 %v2539, %v2519
        %v3400 = vpack.c.b16 %v2540, %v2520
        %v3401 = vpack.c.b16 %v2541, %v2521
        %v3402 = vpack.c.b16 %v2562, %v2542
        %v3403 = vpack.c.b16 %v2563, %v2543
        %v3404 = vpack.c.b16 %v2564, %v2544
        %v3405 = vpack.c.b16 %v2565, %v2545
        %v3406 = vpack.c.b16 %v2566, %v2546
        %v3407 = vpack.c.b16 %v2567, %v2547
        %v3408 = vpack.c.b16 %v2568, %v2548
        %v3409 = vpack.c.b16 %v2569, %v2549
        %v3410 = vpack.c.b16 %v2570, %v2550
        %v3411 = vpack.c.b16 %v2571, %v2551
        %v3412 = vpack.c.b16 %v2572, %v2552
        %v3413 = vpack.c.b16 %v2573, %v2553
        %v3414 = vpack.c.b16 %v2574, %v2554
        %v3415 = vpack.c.b16 %v2575, %v2555
        %v3416 = vpack.c.b16 %v2576, %v2556
        %v3417 = vpack.c.b16 %v2577, %v2557
        %v3418 = vpack.c.b16 %v2578, %v2558
        %v3419 = vpack.c.b16 %v2579, %v2559
        %v3420 = vpack.c.b16 %v2580, %v2560
        %v3421 = vpack.c.b16 %v2581, %v2561
        %v3422 = vpack.c.b16 %v2602, %v2582
        %v3423 = vpack.c.b16 %v2603, %v2583
        %v3424 = vpack.c.b16 %v2604, %v2584
        %v3425 = vpack.c.b16 %v2605, %v2585
        %v3426 = vpack.c.b16 %v2606, %v2586
        %v3427 = vpack.c.b16 %v2607, %v2587
        %v3428 = vpack.c.b16 %v2608, %v2588
        %v3429 = vpack.c.b16 %v2609, %v2589
        %v3430 = vpack.c.b16 %v2610, %v2590
        %v3431 = vpack.c.b16 %v2611, %v2591
        %v3432 = vpack.c.b16 %v2612, %v2592
        %v3433 = vpack.c.b16 %v2613, %v2593
        %v3434 = vpack.c.b16 %v2614, %v2594
        %v3435 = vpack.c.b16 %v2615, %v2595
        %v3436 = vpack.c.b16 %v2616, %v2596
        %v3437 = vpack.c.b16 %v2617, %v2597
        %v3438 = vpack.c.b16 %v2618, %v2598
        %v3439 = vpack.c.b16 %v2619, %v2599
        %v3440 = vpack.c.b16 %v2620, %v2600
        %v3441 = vpack.c.b16 %v2621, %v2601
        %v3442 = vpack.c.b16 %v2642, %v2622
        %v3443 = vpack.c.b16 %v2643, %v2623
        %v3444 = vpack.c.b16 %v2644, %v2624
        %v3445 = vpack.c.b16 %v2645, %v2625
        %v3446 = vpack.c.b16 %v2646, %v2626
        %v3447 = vpack.c.b16 %v2647, %v2627
        %v3448 = vpack.c.b16 %v2648, %v2628
        %v3449 = vpack.c.b16 %v2649, %v2629
        %v3450 = vpack.c.b16 %v2650, %v2630
        %v3451 = vpack.c.b16 %v2651, %v2631
        %v3452 = vpack.c.b16 %v2652, %v2632
        %v3453 = vpack.c.b16 %v2653, %v2633
        %v3454 = vpack.c.b16 %v2654, %v2634
        %v3455 = vpack.c.b16 %v2655, %v2635
        %v3456 = vpack.c.b16 %v2656, %v2636
        %v3457 = vpack.c.b16 %v2657, %v2637
        %v3458 = vpack.c.b16 %v2658, %v2638
        %v3459 = vpack.c.b16 %v2659, %v2639
        %v3460 = vpack.c.b16 %v2660, %v2640
        %v3461 = vpack.c.b16 %v2661, %v2641
        %v3462 = vpack.c.b16 %v2682, %v2662
        %v3463 = vpack.c.b16 %v2683, %v2663
        %v3464 = vpack.c.b16 %v2684, %v2664
        %v3465 = vpack.c.b16 %v2685, %v2665
        %v3466 = vpack.c.b16 %v2686, %v2666
        %v3467 = vpack.c.b16 %v2687, %v2667
        %v3468 = vpack.c.b16 %v2688, %v2668
        %v3469 = vpack.c.b16 %v2689, %v2669
        %v3470 = vpack.c.b16 %v2690, %v2670
        %v3471 = vpack.c.b16 %v2691, %v2671
        %v3472 = vpack.c.b16 %v2692, %v2672
        %v3473 = vpack.c.b16 %v2693, %v2673
        %v3474 = vpack.c.b16 %v2694, %v2674
        %v3475 = vpack.c.b16 %v2695, %v2675
        %v3476 = vpack.c.b16 %v2696, %v2676
        %v3477 = vpack.c.b16 %v2697, %v2677
        %v3478 = vpack.c.b16 %v2698, %v2678
        %v3479 = vpack.c.b16 %v2699, %v2679
        %v3480 = vpack.c.b16 %v2700, %v2680
        %v3481 = vpack.c.b16 %v2701, %v2681
        %v3482 = vpack.c.b16 %v2722, %v2702
        %v3483 = vpack.c.b16 %v2723, %v2703
        %v3484 = vpack.c.b16 %v2724, %v2704
        %v3485 = vpack.c.b16 %v2725, %v2705
        %v3486 = vpack.c.b16 %v2726, %v2706
        %v3487 = vpack.c.b16 %v2727, %v2707
        %v3488 = vpack.c.b16 %v2728, %v2708
        %v3489 = vpack.c.b16 %v2729, %v2709
        %v3490 = vpack.c.b16 %v2730, %v2710
        %v3491 = vpack.c.b16 %v2731, %v2711
        %v3492 = vpack.c.b16 %v2732, %v2712
        %v3493 = vpack.c.b16 %v2733, %v2713
        %v3494 = vpack.c.b16 %v2734, %v2714
        %v3495 = vpack.c.b16 %v2735, %v2715
        %v3496 = vpack.c.b16 %v2736, %v2716
        %v3497 = vpack.c.b16 %v2737, %v2717
        %v3498 = vpack.c.b16 %v2738, %v2718
        %v3499 = vpack.c.b16 %v2739, %v2719
        %v3500 = vpack.c.b16 %v2740, %v2720
        %v3501 = vpack.c.b16 %v2741, %v2721
        %v3502 = vpack.c.b16 %v2762, %v2742
        %v3503 = vpack.c.b16 %v2763, %v2743
        %v3504 = vpack.c.b16 %v2764, %v2744
        %v3505 = vpack.c.b16 %v2765, %v2745
        %v3506 = vpack.c.b16 %v2766, %v2746
        %v3507 = vpack.c.b16 %v2767, %v2747
        %v3508 = vpack.c.b16 %v2768, %v2748
        %v3509 = vpack.c.b16 %v2769, %v2749
        %v3510 = vpack.c.b16 %v2770, %v2750
        %v3511 = vpack.c.b16 %v2771, %v2751
        %v3512 = vpack.c.b16 %v2772, %v2752
        %v3513 = vpack.c.b16 %v2773, %v2753
        %v3514 = vpack.c.b16 %v2774, %v2754
        %v3515 = vpack.c.b16 %v2775, %v2755
        %v3516 = vpack.c.b16 %v2776, %v2756
        %v3517 = vpack.c.b16 %v2777, %v2757
        %v3518 = vpack.c.b16 %v2778, %v2758
        %v3519 = vpack.c.b16 %v2779, %v2759
        %v3520 = vpack.c.b16 %v2780, %v2760
        %v3521 = vpack.c.b16 %v2781, %v2761
        %v3522 = vpack.c.b16 %v2802, %v2782
        %v3523 = vpack.c.b16 %v2803, %v2783
        %v3524 = vpack.c.b16 %v2804, %v2784
        %v3525 = vpack.c.b16 %v2805, %v2785
        %v3526 = vpack.c.b16 %v2806, %v2786
        %v3527 = vpack.c.b16 %v2807, %v2787
        %v3528 = vpack.c.b16 %v2808, %v2788
        %v3529 = vpack.c.b16 %v2809, %v2789
        %v3530 = vpack.c.b16 %v2810, %v2790
        %v3531 = vpack.c.b16 %v2811, %v2791
        %v3532 = vpack.c.b16 %v2812, %v2792
        %v3533 = vpack.c.b16 %v2813, %v2793
        %v3534 = vpack.c.b16 %v2814, %v2794
        %v3535 = vpack.c.b16 %v2815, %v2795
        %v3536 = vpack.c.b16 %v2816, %v2796
        %v3537 = vpack.c.b16 %v2817, %v2797
        %v3538 = vpack.c.b16 %v2818, %v2798
        %v3539 = vpack.c.b16 %v2819, %v2799
        %v3540 = vpack.c.b16 %v2820, %v2800
        %v3541 = vpack.c.b16 %v2821, %v2801
        %v3542 = vpack.c.b16 %v2842, %v2822
        %v3543 = vpack.c.b16 %v2843, %v2823
        %v3544 = vpack.c.b16 %v2844, %v2824
        %v3545 = vpack.c.b16 %v2845, %v2825
        %v3546 = vpack.c.b16 %v2846, %v2826
        %v3547 = vpack.c.b16 %v2847, %v2827
        %v3548 = vpack.c.b16 %v2848, %v2828
        %v3549 = vpack.c.b16 %v2849, %v2829
        %v3550 = vpack.c.b16 %v2850, %v2830
        %v3551 = vpack.c.b16 %v2851, %v2831
        %v3552 = vpack.c.b16 %v2852, %v2832
        %v3553 = vpack.c.b16 %v2853, %v2833
        %v3554 = vpack.c.b16 %v2854, %v2834
        %v3555 = vpack.c.b16 %v2855, %v2835
        %v3556 = vpack.c.b16 %v2856, %v2836
        %v3557 = vpack.c.b16 %v2857, %v2837
        %v3558 = vpack.c.b16 %v2858, %v2838
        %v3559 = vpack.c.b16 %v2859, %v2839
        %v3560 = vpack.c.b16 %v2860, %v2840
        %v3561 = vpack.c.b16 %v2861, %v2841
        %v3562 = vpack.c.b16 %v2882, %v2862
        %v3563 = vpack.c.b16 %v2883, %v2863
        %v3564 = vpack.c.b16 %v2884, %v2864
        %v3565 = vpack.c.b16 %v2885, %v2865
        %v3566 = vpack.c.b16 %v2886, %v2866
        %v3567 = vpack.c.b16 %v2887, %v2867
        %v3568 = vpack.c.b16 %v2888, %v2868
        %v3569 = vpack.c.b16 %v2889, %v2869
        %v3570 = vpack.c.b16 %v2890, %v2870
        %v3571 = vpack.c.b16 %v2891, %v2871
        %v3572 = vpack.c.b16 %v2892, %v2872
        %v3573 = vpack.c.b16 %v2893, %v2873
        %v3574 = vpack.c.b16 %v2894, %v2874
        %v3575 = vpack.c.b16 %v2895, %v2875
        %v3576 = vpack.c.b16 %v2896, %v2876
        %v3577 = vpack.c.b16 %v2897, %v2877
        %v3578 = vpack.c.b16 %v2898, %v2878
        %v3579 = vpack.c.b16 %v2899, %v2879
        %v3580 = vpack.c.b16 %v2900, %v2880
        %v3581 = vpack.c.b16 %v2901, %v2881
        %v3582 = vpack.c.b16 %v2922, %v2902
        %v3583 = vpack.c.b16 %v2923, %v2903
        %v3584 = vpack.c.b16 %v2924, %v2904
        %v3585 = vpack.c.b16 %v2925, %v2905
        %v3586 = vpack.c.b16 %v2926, %v2906
        %v3587 = vpack.c.b16 %v2927, %v2907
        %v3588 = vpack.c.b16 %v2928, %v2908
        %v3589 = vpack.c.b16 %v2929, %v2909
        %v3590 = vpack.c.b16 %v2930, %v2910
        %v3591 = vpack.c.b16 %v2931, %v2911
        %v3592 = vpack.c.b16 %v2932, %v2912
        %v3593 = vpack.c.b16 %v2933, %v2913
        %v3594 = vpack.c.b16 %v2934, %v2914
        %v3595 = vpack.c.b16 %v2935, %v2915
        %v3596 = vpack.c.b16 %v2936, %v2916
        %v3597 = vpack.c.b16 %v2937, %v2917
        %v3598 = vpack.c.b16 %v2938, %v2918
        %v3599 = vpack.c.b16 %v2939, %v2919
        %v3600 = vpack.c.b16 %v2940, %v2920
        %v3601 = vpack.c.b16 %v2941, %v2921
        %v3602 = vpack.c.b16 %v2962, %v2942
        %v3603 = vpack.c.b16 %v2963, %v2943
        %v3604 = vpack.c.b16 %v2964, %v2944
        %v3605 = vpack.c.b16 %v2965, %v2945
        %v3606 = vpack.c.b16 %v2966, %v2946
        %v3607 = vpack.c.b16 %v2967, %v2947
        %v3608 = vpack.c.b16 %v2968, %v2948
        %v3609 = vpack.c.b16 %v2969, %v2949
        %v3610 = vpack.c.b16 %v2970, %v2950
        %v3611 = vpack.c.b16 %v2971, %v2951
        %v3612 = vpack.c.b16 %v2972, %v2952
        %v3613 = vpack.c.b16 %v2973, %v2953
        %v3614 = vpack.c.b16 %v2974, %v2954
        %v3615 = vpack.c.b16 %v2975, %v2955
        %v3616 = vpack.c.b16 %v2976, %v2956
        %v3617 = vpack.c.b16 %v2977, %v2957
        %v3618 = vpack.c.b16 %v2978, %v2958
        %v3619 = vpack.c.b16 %v2979, %v2959
        %v3620 = vpack.c.b16 %v2980, %v2960
        %v3621 = vpack.c.b16 %v2981, %v2961
        %4262 = vmatprep.subr.bf16.mxu0 %v2983
        %4263 = vmatpush1.bf16.msra.mxu0 %v2982
        %4264 = vmatprep.subr.bf16.mxu0 %v3003
        %4265 = vmatpush1.bf16.msra.mxu0 %v3002
        %4266 = vmatprep.subr.bf16.mxu0 %v3023
        %4267 = vmatpush1.bf16.msra.mxu0 %v3022
        %4268 = vmatprep.subr.bf16.mxu0 %v3043
        %4269 = vmatpush1.bf16.msra.mxu0 %v3042
        %4270 = vmatprep.subr.bf16.mxu0 %v3063
        %4271 = vmatpush1.bf16.msra.mxu0 %v3062
        %4272 = vmatprep.subr.bf16.mxu0 %v3083
        %4273 = vmatpush1.bf16.msra.mxu0 %v3082
        %4274 = vmatprep.subr.bf16.mxu0 %v3103
        %4275 = vmatpush1.bf16.msra.mxu0 %v3102
        %4276 = vmatprep.subr.bf16.mxu0 %v3123
        %4277 = vmatpush1.bf16.msra.mxu0 %v3122
        %4278 = vmatprep.subr.bf16.mxu0 %v3143
        %4279 = vmatpush1.bf16.msra.mxu0 %v3142
        %4280 = vmatprep.subr.bf16.mxu0 %v3163
        %4281 = vmatpush1.bf16.msra.mxu0 %v3162
        %4282 = vmatprep.subr.bf16.mxu0 %v3183
        %4283 = vmatpush1.bf16.msra.mxu0 %v3182
        %4284 = vmatprep.subr.bf16.mxu0 %v3203
        %4285 = vmatpush1.bf16.msra.mxu0 %v3202
        %4286 = vmatprep.subr.bf16.mxu0 %v3223
        %4287 = vmatpush1.bf16.msra.mxu0 %v3222
        %4288 = vmatprep.subr.bf16.mxu0 %v3243
        %4289 = vmatpush1.bf16.msra.mxu0 %v3242
        %4290 = vmatprep.subr.bf16.mxu0 %v3263
        %4291 = vmatpush1.bf16.msra.mxu0 %v3262
        %4292 = vmatprep.subr.bf16.mxu0 %v3283
        %4293 = vmatpush1.bf16.msra.mxu0 %v3282
        %4294 = vmatprep.mubr.bf16.mxu0 %v407
        %4295 = vmatmul.mubr.bf16.gmra.mrb[0].mxu0 %v406
        %v4296 = vpop.f32.mrb[0].mxu0
        %v4297 = vadd.f32 0.0, %v4296
        %v4298 = vpop.f32.mrb[0].mxu0
        %v4299 = vadd.f32 0.0, %v4298
        %v4300 = vpop.f32.mrb[0].mxu0
        %v4301 = vadd.f32 0.0, %v4300
        %v4302 = vpop.f32.mrb[0].mxu0
        %v4303 = vadd.f32 0.0, %v4302
        %4304 = vmatprep.mubr.bf16.mxu0 %v411
        %4305 = vmatmul.mubr.bf16.gmra.mrb[0].mxu0 %v410
        %v4306 = vpop.f32.mrb[0].mxu0
        %v4307 = vadd.f32 0.0, %v4306
        %v4308 = vpop.f32.mrb[0].mxu0
        %v4309 = vadd.f32 0.0, %v4308
        %v4310 = vpop.f32.mrb[0].mxu0
        %v4311 = vadd.f32 0.0, %v4310
        %v4312 = vpop.f32.mrb[0].mxu0
        %v4313 = vadd.f32 0.0, %v4312
        %4314 = vmatprep.mubr.bf16.mxu0 %v415
        %4315 = vmatmul.mubr.bf16.gmra.mrb[0].mxu0 %v414
        %v4316 = vpop.f32.mrb[0].mxu0
        %v4317 = vadd.f32 0.0, %v4316
        %v4318 = vpop.f32.mrb[0].mxu0
        %v4319 = vadd.f32 0.0, %v4318
        %v4320 = vpop.f32.mrb[0].mxu0
        %v4321 = vadd.f32 0.0, %v4320
        %v4322 = vpop.f32.mrb[0].mxu0
        %v4323 = vadd.f32 0.0, %v4322
        %4324 = vmatprep.mubr.bf16.mxu0 %v419
        %4325 = vmatmul.mubr.bf16.gmra.mrb[0].mxu0 %v418
        %v4326 = vpop.f32.mrb[0].mxu0
        %v4327 = vadd.f32 0.0, %v4326
        %v4328 = vpop.f32.mrb[0].mxu0
        %v4329 = vadd.f32 0.0, %v4328
        %v4330 = vpop.f32.mrb[0].mxu0
        %v4331 = vadd.f32 0.0, %v4330
        %v4332 = vpop.f32.mrb[0].mxu0
        %v4333 = vadd.f32 0.0, %v4332
        %4334 = vdwg.mxu0
        %4335 = vmatprep.subr.bf16.mxu0 %v3303
        %4336 = vmatpush1.bf16.msra.mxu0 %v3302
        %4337 = vmatprep.subr.bf16.mxu0 %v3323
        %4338 = vmatpush1.bf16.msra.mxu0 %v3322
        %4339 = vmatprep.subr.bf16.mxu0 %v3343
        %4340 = vmatpush1.bf16.msra.mxu0 %v3342
        %4341 = vmatprep.subr.bf16.mxu0 %v3363
        %4342 = vmatpush1.bf16.msra.mxu0 %v3362
        %4343 = vmatprep.subr.bf16.mxu0 %v3383
        %4344 = vmatpush1.bf16.msra.mxu0 %v3382
        %4345 = vmatprep.subr.bf16.mxu0 %v3403
        %4346 = vmatpush1.bf16.msra.mxu0 %v3402
        %4347 = vmatprep.subr.bf16.mxu0 %v3423
        %4348 = vmatpush1.bf16.msra.mxu0 %v3422
        %4349 = vmatprep.subr.bf16.mxu0 %v3443
        %4350 = vmatpush1.bf16.msra.mxu0 %v3442
        %4351 = vmatprep.subr.bf16.mxu0 %v3463
        %4352 = vmatpush1.bf16.msra.mxu0 %v3462
        %4353 = vmatprep.subr.bf16.mxu0 %v3483
        %4354 = vmatpush1.bf16.msra.mxu0 %v3482
        %4355 = vmatprep.subr.bf16.mxu0 %v3503
        %4356 = vmatpush1.bf16.msra.mxu0 %v3502
        %4357 = vmatprep.subr.bf16.mxu0 %v3523
        %4358 = vmatpush1.bf16.msra.mxu0 %v3522
        %4359 = vmatprep.subr.bf16.mxu0 %v3543
        %4360 = vmatpush1.bf16.msra.mxu0 %v3542
        %4361 = vmatprep.subr.bf16.mxu0 %v3563
        %4362 = vmatpush1.bf16.msra.mxu0 %v3562
        %4363 = vmatprep.subr.bf16.mxu0 %v3583
        %4364 = vmatpush1.bf16.msra.mxu0 %v3582
        %4365 = vmatprep.subr.bf16.mxu0 %v3603
        %4366 = vmatpush1.bf16.msra.mxu0 %v3602
        %4367 = vmatprep.mubr.bf16.mxu0 %v409
        %4368 = vmatmul.mubr.bf16.gmra.mrb[0].mxu0 %v408
        %v4369 = vpop.f32.mrb[0].mxu0
        %v4370 = vadd.f32 %v4297, %v4369
        %v4371 = vpop.f32.mrb[0].mxu0
        %v4372 = vadd.f32 %v4299, %v4371
        %v4373 = vpop.f32.mrb[0].mxu0
        %v4374 = vadd.f32 %v4301, %v4373
        %v4375 = vpop.f32.mrb[0].mxu0
        %v4376 = vadd.f32 %v4303, %v4375
        %4377 = vmatprep.mubr.bf16.mxu0 %v413
        %4378 = vmatmul.mubr.bf16.gmra.mrb[0].mxu0 %v412
        %v4379 = vpop.f32.mrb[0].mxu0
        %v4380 = vadd.f32 %v4307, %v4379
        %v4381 = vpop.f32.mrb[0].mxu0
        %v4382 = vadd.f32 %v4309, %v4381
        %v4383 = vpop.f32.mrb[0].mxu0
        %v4384 = vadd.f32 %v4311, %v4383
        %v4385 = vpop.f32.mrb[0].mxu0
        %v4386 = vadd.f32 %v4313, %v4385
        %4387 = vmatprep.mubr.bf16.mxu0 %v417
        %4388 = vmatmul.mubr.bf16.gmra.mrb[0].mxu0 %v416
        %v4389 = vpop.f32.mrb[0].mxu0
        %v4390 = vadd.f32 %v4317, %v4389
        %v4391 = vpop.f32.mrb[0].mxu0
        %v4392 = vadd.f32 %v4319, %v4391
        %v4393 = vpop.f32.mrb[0].mxu0
        %v4394 = vadd.f32 %v4321, %v4393
        %v4395 = vpop.f32.mrb[0].mxu0
        %v4396 = vadd.f32 %v4323, %v4395
        %4397 = vmatprep.mubr.bf16.mxu0 %v421
        %4398 = vmatmul.mubr.bf16.gmra.mrb[0].mxu0 %v420
        %v4399 = vpop.f32.mrb[0].mxu0
        %v4400 = vadd.f32 %v4327, %v4399
        %v4401 = vpop.f32.mrb[0].mxu0
        %v4402 = vadd.f32 %v4329, %v4401
        %v4403 = vpop.f32.mrb[0].mxu0
        %v4404 = vadd.f32 %v4331, %v4403
        %v4405 = vpop.f32.mrb[0].mxu0
        %v4406 = vadd.f32 %v4333, %v4405
        %4407 = vdwg.mxu0
        %4408 = vmatprep.subr.bf16.mxu0 %v2985
        %4409 = vmatpush1.bf16.msra.mxu0 %v2984
        %4410 = vmatprep.subr.bf16.mxu0 %v3005
        %4411 = vmatpush1.bf16.msra.mxu0 %v3004
        %4412 = vmatprep.subr.bf16.mxu0 %v3025
        %4413 = vmatpush1.bf16.msra.mxu0 %v3024
        %4414 = vmatprep.subr.bf16.mxu0 %v3045
        %4415 = vmatpush1.bf16.msra.mxu0 %v3044
        %4416 = vmatprep.subr.bf16.mxu0 %v3065
        %4417 = vmatpush1.bf16.msra.mxu0 %v3064
        %4418 = vmatprep.subr.bf16.mxu0 %v3085
        %4419 = vmatpush1.bf16.msra.mxu0 %v3084
        %4420 = vmatprep.subr.bf16.mxu0 %v3105
        %4421 = vmatpush1.bf16.msra.mxu0 %v3104
        %4422 = vmatprep.subr.bf16.mxu0 %v3125
        %4423 = vmatpush1.bf16.msra.mxu0 %v3124
        %4424 = vmatprep.subr.bf16.mxu0 %v3145
        %4425 = vmatpush1.bf16.msra.mxu0 %v3144
        %4426 = vmatprep.subr.bf16.mxu0 %v3165
        %4427 = vmatpush1.bf16.msra.mxu0 %v3164
        %4428 = vmatprep.subr.bf16.mxu0 %v3185
        %4429 = vmatpush1.bf16.msra.mxu0 %v3184
        %4430 = vmatprep.subr.bf16.mxu0 %v3205
        %4431 = vmatpush1.bf16.msra.mxu0 %v3204
        %4432 = vmatprep.subr.bf16.mxu0 %v3225
        %4433 = vmatpush1.bf16.msra.mxu0 %v3224
        %4434 = vmatprep.subr.bf16.mxu0 %v3245
        %4435 = vmatpush1.bf16.msra.mxu0 %v3244
        %4436 = vmatprep.subr.bf16.mxu0 %v3265
        %4437 = vmatpush1.bf16.msra.mxu0 %v3264
        %4438 = vmatprep.subr.bf16.mxu0 %v3285
        %4439 = vmatpush1.bf16.msra.mxu0 %v3284
        %4440 = vmatprep.mubr.bf16.mxu0 %v407
        %4441 = vmatmul.mubr.bf16.gmra.mrb[0].mxu0 %v406
        %v4442 = vpop.f32.mrb[0].mxu0
        %v4443 = vadd.f32 0.0, %v4442
        %v4444 = vpop.f32.mrb[0].mxu0
        %v4445 = vadd.f32 0.0, %v4444
        %v4446 = vpop.f32.mrb[0].mxu0
        %v4447 = vadd.f32 0.0, %v4446
        %v4448 = vpop.f32.mrb[0].mxu0
        %v4449 = vadd.f32 0.0, %v4448
        %4450 = vmatprep.mubr.bf16.mxu0 %v411
        %4451 = vmatmul.mubr.bf16.gmra.mrb[0].mxu0 %v410
        %v4452 = vpop.f32.mrb[0].mxu0
        %v4453 = vadd.f32 0.0, %v4452
        %v4454 = vpop.f32.mrb[0].mxu0
        %v4455 = vadd.f32 0.0, %v4454
        %v4456 = vpop.f32.mrb[0].mxu0
        %v4457 = vadd.f32 0.0, %v4456
        %v4458 = vpop.f32.mrb[0].mxu0
        %v4459 = vadd.f32 0.0, %v4458
        %4460 = vmatprep.mubr.bf16.mxu0 %v415
        %4461 = vmatmul.mubr.bf16.gmra.mrb[0].mxu0 %v414
        %v4462 = vpop.f32.mrb[0].mxu0
        %v4463 = vadd.f32 0.0, %v4462
        %v4464 = vpop.f32.mrb[0].mxu0
        %v4465 = vadd.f32 0.0, %v4464
        %v4466 = vpop.f32.mrb[0].mxu0
        %v4467 = vadd.f32 0.0, %v4466
        %v4468 = vpop.f32.mrb[0].mxu0
        %v4469 = vadd.f32 0.0, %v4468
        %4470 = vmatprep.mubr.bf16.mxu0 %v419
        %4471 = vmatmul.mubr.bf16.gmra.mrb[0].mxu0 %v418
        %v4472 = vpop.f32.mrb[0].mxu0
        %v4473 = vadd.f32 0.0, %v4472
        %v4474 = vpop.f32.mrb[0].mxu0
        %v4475 = vadd.f32 0.0, %v4474
        %v4476 = vpop.f32.mrb[0].mxu0
        %v4477 = vadd.f32 0.0, %v4476
        %v4478 = vpop.f32.mrb[0].mxu0
        %v4479 = vadd.f32 0.0, %v4478
        %4480 = vdwg.mxu0
        %4481 = vmatprep.subr.bf16.mxu0 %v3305
        %4482 = vmatpush1.bf16.msra.mxu0 %v3304
        %4483 = vmatprep.subr.bf16.mxu0 %v3325
        %4484 = vmatpush1.bf16.msra.mxu0 %v3324
        %4485 = vmatprep.subr.bf16.mxu0 %v3345
        %4486 = vmatpush1.bf16.msra.mxu0 %v3344
        %4487 = vmatprep.subr.bf16.mxu0 %v3365
        %4488 = vmatpush1.bf16.msra.mxu0 %v3364
        %4489 = vmatprep.subr.bf16.mxu0 %v3385
        %4490 = vmatpush1.bf16.msra.mxu0 %v3384
        %4491 = vmatprep.subr.bf16.mxu0 %v3405
        %4492 = vmatpush1.bf16.msra.mxu0 %v3404
        %4493 = vmatprep.subr.bf16.mxu0 %v3425
        %4494 = vmatpush1.bf16.msra.mxu0 %v3424
        %4495 = vmatprep.subr.bf16.mxu0 %v3445
        %4496 = vmatpush1.bf16.msra.mxu0 %v3444
        %4497 = vmatprep.subr.bf16.mxu0 %v3465
        %4498 = vmatpush1.bf16.msra.mxu0 %v3464
        %4499 = vmatprep.subr.bf16.mxu0 %v3485
        %4500 = vmatpush1.bf16.msra.mxu0 %v3484
        %4501 = vmatprep.subr.bf16.mxu0 %v3505
        %4502 = vmatpush1.bf16.msra.mxu0 %v3504
        %4503 = vmatprep.subr.bf16.mxu0 %v3525
        %4504 = vmatpush1.bf16.msra.mxu0 %v3524
        %4505 = vmatprep.subr.bf16.mxu0 %v3545
        %4506 = vmatpush1.bf16.msra.mxu0 %v3544
        %4507 = vmatprep.subr.bf16.mxu0 %v3565
        %4508 = vmatpush1.bf16.msra.mxu0 %v3564
        %4509 = vmatprep.subr.bf16.mxu0 %v3585
        %4510 = vmatpush1.bf16.msra.mxu0 %v3584
        %4511 = vmatprep.subr.bf16.mxu0 %v3605
        %4512 = vmatpush1.bf16.msra.mxu0 %v3604
        %4513 = vmatprep.mubr.bf16.mxu0 %v409
        %4514 = vmatmul.mubr.bf16.gmra.mrb[0].mxu0 %v408
        %v4515 = vpop.f32.mrb[0].mxu0
        %v4516 = vadd.f32 %v4443, %v4515
        %v4517 = vpop.f32.mrb[0].mxu0
        %v4518 = vadd.f32 %v4445, %v4517
        %v4519 = vpop.f32.mrb[0].mxu0
        %v4520 = vadd.f32 %v4447, %v4519
        %v4521 = vpop.f32.mrb[0].mxu0
        %v4522 = vadd.f32 %v4449, %v4521
        %4523 = vmatprep.mubr.bf16.mxu0 %v413
        %4524 = vmatmul.mubr.bf16.gmra.mrb[0].mxu0 %v412
        %v4525 = vpop.f32.mrb[0].mxu0
        %v4526 = vadd.f32 %v4453, %v4525
        %v4527 = vpop.f32.mrb[0].mxu0
        %v4528 = vadd.f32 %v4455, %v4527
        %v4529 = vpop.f32.mrb[0].mxu0
        %v4530 = vadd.f32 %v4457, %v4529
        %v4531 = vpop.f32.mrb[0].mxu0
        %v4532 = vadd.f32 %v4459, %v4531
        %4533 = vmatprep.mubr.bf16.mxu0 %v417
        %4534 = vmatmul.mubr.bf16.gmra.mrb[0].mxu0 %v416
        %v4535 = vpop.f32.mrb[0].mxu0
        %v4536 = vadd.f32 %v4463, %v4535
        %v4537 = vpop.f32.mrb[0].mxu0
        %v4538 = vadd.f32 %v4465, %v4537
        %v4539 = vpop.f32.mrb[0].mxu0
        %v4540 = vadd.f32 %v4467, %v4539
        %v4541 = vpop.f32.mrb[0].mxu0
        %v4542 = vadd.f32 %v4469, %v4541
        %4543 = vmatprep.mubr.bf16.mxu0 %v421
        %4544 = vmatmul.mubr.bf16.gmra.mrb[0].mxu0 %v420
        %v4545 = vpop.f32.mrb[0].mxu0
        %v4546 = vadd.f32 %v4473, %v4545
        %v4547 = vpop.f32.mrb[0].mxu0
        %v4548 = vadd.f32 %v4475, %v4547
        %v4549 = vpop.f32.mrb[0].mxu0
        %v4550 = vadd.f32 %v4477, %v4549
        %v4551 = vpop.f32.mrb[0].mxu0
        %v4552 = vadd.f32 %v4479, %v4551
        %4553 = vdwg.mxu0
        %4554 = vmatprep.subr.bf16.mxu0 %v2987
        %4555 = vmatpush1.bf16.msra.mxu0 %v2986
        %4556 = vmatprep.subr.bf16.mxu0 %v3007
        %4557 = vmatpush1.bf16.msra.mxu0 %v3006
        %4558 = vmatprep.subr.bf16.mxu0 %v3027
        %4559 = vmatpush1.bf16.msra.mxu0 %v3026
        %4560 = vmatprep.subr.bf16.mxu0 %v3047
        %4561 = vmatpush1.bf16.msra.mxu0 %v3046
        %4562 = vmatprep.subr.bf16.mxu0 %v3067
        %4563 = vmatpush1.bf16.msra.mxu0 %v3066
        %4564 = vmatprep.subr.bf16.mxu0 %v3087
        %4565 = vmatpush1.bf16.msra.mxu0 %v3086
        %4566 = vmatprep.subr.bf16.mxu0 %v3107
        %4567 = vmatpush1.bf16.msra.mxu0 %v3106
        %4568 = vmatprep.subr.bf16.mxu0 %v3127
        %4569 = vmatpush1.bf16.msra.mxu0 %v3126
        %4570 = vmatprep.subr.bf16.mxu0 %v3147
        %4571 = vmatpush1.bf16.msra.mxu0 %v3146
        %4572 = vmatprep.subr.bf16.mxu0 %v3167
        %4573 = vmatpush1.bf16.msra.mxu0 %v3166
        %4574 = vmatprep.subr.bf16.mxu0 %v3187
        %4575 = vmatpush1.bf16.msra.mxu0 %v3186
        %4576 = vmatprep.subr.bf16.mxu0 %v3207
        %4577 = vmatpush1.bf16.msra.mxu0 %v3206
        %4578 = vmatprep.subr.bf16.mxu0 %v3227
        %4579 = vmatpush1.bf16.msra.mxu0 %v3226
        %4580 = vmatprep.subr.bf16.mxu0 %v3247
        %4581 = vmatpush1.bf16.msra.mxu0 %v3246
        %4582 = vmatprep.subr.bf16.mxu0 %v3267
        %4583 = vmatpush1.bf16.msra.mxu0 %v3266
        %4584 = vmatprep.subr.bf16.mxu0 %v3287
        %4585 = vmatpush1.bf16.msra.mxu0 %v3286
        %4586 = vmatprep.mubr.bf16.mxu0 %v407
        %4587 = vmatmul.mubr.bf16.gmra.mrb[0].mxu0 %v406
        %v4588 = vpop.f32.mrb[0].mxu0
        %v4589 = vadd.f32 0.0, %v4588
        %v4590 = vpop.f32.mrb[0].mxu0
        %v4591 = vadd.f32 0.0, %v4590
        %v4592 = vpop.f32.mrb[0].mxu0
        %v4593 = vadd.f32 0.0, %v4592
        %v4594 = vpop.f32.mrb[0].mxu0
        %v4595 = vadd.f32 0.0, %v4594
        %4596 = vmatprep.mubr.bf16.mxu0 %v411
        %4597 = vmatmul.mubr.bf16.gmra.mrb[0].mxu0 %v410
        %v4598 = vpop.f32.mrb[0].mxu0
        %v4599 = vadd.f32 0.0, %v4598
        %v4600 = vpop.f32.mrb[0].mxu0
        %v4601 = vadd.f32 0.0, %v4600
        %v4602 = vpop.f32.mrb[0].mxu0
        %v4603 = vadd.f32 0.0, %v4602
        %v4604 = vpop.f32.mrb[0].mxu0
        %v4605 = vadd.f32 0.0, %v4604
        %4606 = vmatprep.mubr.bf16.mxu0 %v415
        %4607 = vmatmul.mubr.bf16.gmra.mrb[0].mxu0 %v414
        %v4608 = vpop.f32.mrb[0].mxu0
        %v4609 = vadd.f32 0.0, %v4608
        %v4610 = vpop.f32.mrb[0].mxu0
        %v4611 = vadd.f32 0.0, %v4610
        %v4612 = vpop.f32.mrb[0].mxu0
        %v4613 = vadd.f32 0.0, %v4612
        %v4614 = vpop.f32.mrb[0].mxu0
        %v4615 = vadd.f32 0.0, %v4614
        %4616 = vmatprep.mubr.bf16.mxu0 %v419
        %4617 = vmatmul.mubr.bf16.gmra.mrb[0].mxu0 %v418
        %v4618 = vpop.f32.mrb[0].mxu0
        %v4619 = vadd.f32 0.0, %v4618
        %v4620 = vpop.f32.mrb[0].mxu0
        %v4621 = vadd.f32 0.0, %v4620
        %v4622 = vpop.f32.mrb[0].mxu0
        %v4623 = vadd.f32 0.0, %v4622
        %v4624 = vpop.f32.mrb[0].mxu0
        %v4625 = vadd.f32 0.0, %v4624
        %4626 = vdwg.mxu0
        %4627 = vmatprep.subr.bf16.mxu0 %v3307
        %4628 = vmatpush1.bf16.msra.mxu0 %v3306
        %4629 = vmatprep.subr.bf16.mxu0 %v3327
        %4630 = vmatpush1.bf16.msra.mxu0 %v3326
        %4631 = vmatprep.subr.bf16.mxu0 %v3347
        %4632 = vmatpush1.bf16.msra.mxu0 %v3346
        %4633 = vmatprep.subr.bf16.mxu0 %v3367
        %4634 = vmatpush1.bf16.msra.mxu0 %v3366
        %4635 = vmatprep.subr.bf16.mxu0 %v3387
        %4636 = vmatpush1.bf16.msra.mxu0 %v3386
        %4637 = vmatprep.subr.bf16.mxu0 %v3407
        %4638 = vmatpush1.bf16.msra.mxu0 %v3406
        %4639 = vmatprep.subr.bf16.mxu0 %v3427
        %4640 = vmatpush1.bf16.msra.mxu0 %v3426
        %4641 = vmatprep.subr.bf16.mxu0 %v3447
        %4642 = vmatpush1.bf16.msra.mxu0 %v3446
        %4643 = vmatprep.subr.bf16.mxu0 %v3467
        %4644 = vmatpush1.bf16.msra.mxu0 %v3466
        %4645 = vmatprep.subr.bf16.mxu0 %v3487
        %4646 = vmatpush1.bf16.msra.mxu0 %v3486
        %4647 = vmatprep.subr.bf16.mxu0 %v3507
        %4648 = vmatpush1.bf16.msra.mxu0 %v3506
        %4649 = vmatprep.subr.bf16.mxu0 %v3527
        %4650 = vmatpush1.bf16.msra.mxu0 %v3526
        %4651 = vmatprep.subr.bf16.mxu0 %v3547
        %4652 = vmatpush1.bf16.msra.mxu0 %v3546
        %4653 = vmatprep.subr.bf16.mxu0 %v3567
        %4654 = vmatpush1.bf16.msra.mxu0 %v3566
        %4655 = vmatprep.subr.bf16.mxu0 %v3587
        %4656 = vmatpush1.bf16.msra.mxu0 %v3586
        %4657 = vmatprep.subr.bf16.mxu0 %v3607
        %4658 = vmatpush1.bf16.msra.mxu0 %v3606
        %4659 = vmatprep.mubr.bf16.mxu0 %v409
        %4660 = vmatmul.mubr.bf16.gmra.mrb[0].mxu0 %v408
        %v4661 = vpop.f32.mrb[0].mxu0
        %v4662 = vadd.f32 %v4589, %v4661
        %v4663 = vpop.f32.mrb[0].mxu0
        %v4664 = vadd.f32 %v4591, %v4663
        %v4665 = vpop.f32.mrb[0].mxu0
        %v4666 = vadd.f32 %v4593, %v4665
        %v4667 = vpop.f32.mrb[0].mxu0
        %v4668 = vadd.f32 %v4595, %v4667
        %4669 = vmatprep.mubr.bf16.mxu0 %v413
        %4670 = vmatmul.mubr.bf16.gmra.mrb[0].mxu0 %v412
        %v4671 = vpop.f32.mrb[0].mxu0
        %v4672 = vadd.f32 %v4599, %v4671
        %v4673 = vpop.f32.mrb[0].mxu0
        %v4674 = vadd.f32 %v4601, %v4673
        %v4675 = vpop.f32.mrb[0].mxu0
        %v4676 = vadd.f32 %v4603, %v4675
        %v4677 = vpop.f32.mrb[0].mxu0
        %v4678 = vadd.f32 %v4605, %v4677
        %4679 = vmatprep.mubr.bf16.mxu0 %v417
        %4680 = vmatmul.mubr.bf16.gmra.mrb[0].mxu0 %v416
        %v4681 = vpop.f32.mrb[0].mxu0
        %v4682 = vadd.f32 %v4609, %v4681
        %v4683 = vpop.f32.mrb[0].mxu0
        %v4684 = vadd.f32 %v4611, %v4683
        %v4685 = vpop.f32.mrb[0].mxu0
        %v4686 = vadd.f32 %v4613, %v4685
        %v4687 = vpop.f32.mrb[0].mxu0
        %v4688 = vadd.f32 %v4615, %v4687
        %4689 = vmatprep.mubr.bf16.mxu0 %v421
        %4690 = vmatmul.mubr.bf16.gmra.mrb[0].mxu0 %v420
        %v4691 = vpop.f32.mrb[0].mxu0
        %v4692 = vadd.f32 %v4619, %v4691
        %v4693 = vpop.f32.mrb[0].mxu0
        %v4694 = vadd.f32 %v4621, %v4693
        %v4695 = vpop.f32.mrb[0].mxu0
        %v4696 = vadd.f32 %v4623, %v4695
        %v4697 = vpop.f32.mrb[0].mxu0
        %v4698 = vadd.f32 %v4625, %v4697
        %4699 = vdwg.mxu0
        %4700 = vmatprep.subr.bf16.mxu0 %v2989
        %4701 = vmatpush1.bf16.msra.mxu0 %v2988
        %4702 = vmatprep.subr.bf16.mxu0 %v3009
        %4703 = vmatpush1.bf16.msra.mxu0 %v3008
        %4704 = vmatprep.subr.bf16.mxu0 %v3029
        %4705 = vmatpush1.bf16.msra.mxu0 %v3028
        %4706 = vmatprep.subr.bf16.mxu0 %v3049
        %4707 = vmatpush1.bf16.msra.mxu0 %v3048
        %4708 = vmatprep.subr.bf16.mxu0 %v3069
        %4709 = vmatpush1.bf16.msra.mxu0 %v3068
        %4710 = vmatprep.subr.bf16.mxu0 %v3089
        %4711 = vmatpush1.bf16.msra.mxu0 %v3088
        %4712 = vmatprep.subr.bf16.mxu0 %v3109
        %4713 = vmatpush1.bf16.msra.mxu0 %v3108
        %4714 = vmatprep.subr.bf16.mxu0 %v3129
        %4715 = vmatpush1.bf16.msra.mxu0 %v3128
        %4716 = vmatprep.subr.bf16.mxu0 %v3149
        %4717 = vmatpush1.bf16.msra.mxu0 %v3148
        %4718 = vmatprep.subr.bf16.mxu0 %v3169
        %4719 = vmatpush1.bf16.msra.mxu0 %v3168
        %4720 = vmatprep.subr.bf16.mxu0 %v3189
        %4721 = vmatpush1.bf16.msra.mxu0 %v3188
        %4722 = vmatprep.subr.bf16.mxu0 %v3209
        %4723 = vmatpush1.bf16.msra.mxu0 %v3208
        %4724 = vmatprep.subr.bf16.mxu0 %v3229
        %4725 = vmatpush1.bf16.msra.mxu0 %v3228
        %4726 = vmatprep.subr.bf16.mxu0 %v3249
        %4727 = vmatpush1.bf16.msra.mxu0 %v3248
        %4728 = vmatprep.subr.bf16.mxu0 %v3269
        %4729 = vmatpush1.bf16.msra.mxu0 %v3268
        %4730 = vmatprep.subr.bf16.mxu0 %v3289
        %4731 = vmatpush1.bf16.msra.mxu0 %v3288
        %4732 = vmatprep.mubr.bf16.mxu0 %v407
        %4733 = vmatmul.mubr.bf16.gmra.mrb[0].mxu0 %v406
        %v4734 = vpop.f32.mrb[0].mxu0
        %v4735 = vadd.f32 0.0, %v4734
        %v4736 = vpop.f32.mrb[0].mxu0
        %v4737 = vadd.f32 0.0, %v4736
        %v4738 = vpop.f32.mrb[0].mxu0
        %v4739 = vadd.f32 0.0, %v4738
        %v4740 = vpop.f32.mrb[0].mxu0
        %v4741 = vadd.f32 0.0, %v4740
        %4742 = vmatprep.mubr.bf16.mxu0 %v411
        %4743 = vmatmul.mubr.bf16.gmra.mrb[0].mxu0 %v410
        %v4744 = vpop.f32.mrb[0].mxu0
        %v4745 = vadd.f32 0.0, %v4744
        %v4746 = vpop.f32.mrb[0].mxu0
        %v4747 = vadd.f32 0.0, %v4746
        %v4748 = vpop.f32.mrb[0].mxu0
        %v4749 = vadd.f32 0.0, %v4748
        %v4750 = vpop.f32.mrb[0].mxu0
        %v4751 = vadd.f32 0.0, %v4750
        %4752 = vmatprep.mubr.bf16.mxu0 %v415
        %4753 = vmatmul.mubr.bf16.gmra.mrb[0].mxu0 %v414
        %v4754 = vpop.f32.mrb[0].mxu0
        %v4755 = vadd.f32 0.0, %v4754
        %v4756 = vpop.f32.mrb[0].mxu0
        %v4757 = vadd.f32 0.0, %v4756
        %v4758 = vpop.f32.mrb[0].mxu0
        %v4759 = vadd.f32 0.0, %v4758
        %v4760 = vpop.f32.mrb[0].mxu0
        %v4761 = vadd.f32 0.0, %v4760
        %4762 = vmatprep.mubr.bf16.mxu0 %v419
        %4763 = vmatmul.mubr.bf16.gmra.mrb[0].mxu0 %v418
        %v4764 = vpop.f32.mrb[0].mxu0
        %v4765 = vadd.f32 0.0, %v4764
        %v4766 = vpop.f32.mrb[0].mxu0
        %v4767 = vadd.f32 0.0, %v4766
        %v4768 = vpop.f32.mrb[0].mxu0
        %v4769 = vadd.f32 0.0, %v4768
        %v4770 = vpop.f32.mrb[0].mxu0
        %v4771 = vadd.f32 0.0, %v4770
        %4772 = vdwg.mxu0
        %4773 = vmatprep.subr.bf16.mxu0 %v3309
        %4774 = vmatpush1.bf16.msra.mxu0 %v3308
        %4775 = vmatprep.subr.bf16.mxu0 %v3329
        %4776 = vmatpush1.bf16.msra.mxu0 %v3328
        %4777 = vmatprep.subr.bf16.mxu0 %v3349
        %4778 = vmatpush1.bf16.msra.mxu0 %v3348
        %4779 = vmatprep.subr.bf16.mxu0 %v3369
        %4780 = vmatpush1.bf16.msra.mxu0 %v3368
        %4781 = vmatprep.subr.bf16.mxu0 %v3389
        %4782 = vmatpush1.bf16.msra.mxu0 %v3388
        %4783 = vmatprep.subr.bf16.mxu0 %v3409
        %4784 = vmatpush1.bf16.msra.mxu0 %v3408
        %4785 = vmatprep.subr.bf16.mxu0 %v3429
        %4786 = vmatpush1.bf16.msra.mxu0 %v3428
        %4787 = vmatprep.subr.bf16.mxu0 %v3449
        %4788 = vmatpush1.bf16.msra.mxu0 %v3448
        %4789 = vmatprep.subr.bf16.mxu0 %v3469
        %4790 = vmatpush1.bf16.msra.mxu0 %v3468
        %4791 = vmatprep.subr.bf16.mxu0 %v3489
        %4792 = vmatpush1.bf16.msra.mxu0 %v3488
        %4793 = vmatprep.subr.bf16.mxu0 %v3509
        %4794 = vmatpush1.bf16.msra.mxu0 %v3508
        %4795 = vmatprep.subr.bf16.mxu0 %v3529
        %4796 = vmatpush1.bf16.msra.mxu0 %v3528
        %4797 = vmatprep.subr.bf16.mxu0 %v3549
        %4798 = vmatpush1.bf16.msra.mxu0 %v3548
        %4799 = vmatprep.subr.bf16.mxu0 %v3569
        %4800 = vmatpush1.bf16.msra.mxu0 %v3568
        %4801 = vmatprep.subr.bf16.mxu0 %v3589
        %4802 = vmatpush1.bf16.msra.mxu0 %v3588
        %4803 = vmatprep.subr.bf16.mxu0 %v3609
        %4804 = vmatpush1.bf16.msra.mxu0 %v3608
        %4805 = vmatprep.mubr.bf16.mxu0 %v409
        %4806 = vmatmul.mubr.bf16.gmra.mrb[0].mxu0 %v408
        %v4807 = vpop.f32.mrb[0].mxu0
        %v4808 = vadd.f32 %v4735, %v4807
        %v4809 = vpop.f32.mrb[0].mxu0
        %v4810 = vadd.f32 %v4737, %v4809
        %v4811 = vpop.f32.mrb[0].mxu0
        %v4812 = vadd.f32 %v4739, %v4811
        %v4813 = vpop.f32.mrb[0].mxu0
        %v4814 = vadd.f32 %v4741, %v4813
        %4815 = vmatprep.mubr.bf16.mxu0 %v413
        %4816 = vmatmul.mubr.bf16.gmra.mrb[0].mxu0 %v412
        %v4817 = vpop.f32.mrb[0].mxu0
        %v4818 = vadd.f32 %v4745, %v4817
        %v4819 = vpop.f32.mrb[0].mxu0
        %v4820 = vadd.f32 %v4747, %v4819
        %v4821 = vpop.f32.mrb[0].mxu0
        %v4822 = vadd.f32 %v4749, %v4821
        %v4823 = vpop.f32.mrb[0].mxu0
        %v4824 = vadd.f32 %v4751, %v4823
        %4825 = vmatprep.mubr.bf16.mxu0 %v417
        %4826 = vmatmul.mubr.bf16.gmra.mrb[0].mxu0 %v416
        %v4827 = vpop.f32.mrb[0].mxu0
        %v4828 = vadd.f32 %v4755, %v4827
        %v4829 = vpop.f32.mrb[0].mxu0
        %v4830 = vadd.f32 %v4757, %v4829
        %v4831 = vpop.f32.mrb[0].mxu0
        %v4832 = vadd.f32 %v4759, %v4831
        %v4833 = vpop.f32.mrb[0].mxu0
        %v4834 = vadd.f32 %v4761, %v4833
        %4835 = vmatprep.mubr.bf16.mxu0 %v421
        %4836 = vmatmul.mubr.bf16.gmra.mrb[0].mxu0 %v420
        %v4837 = vpop.f32.mrb[0].mxu0
        %v4838 = vadd.f32 %v4765, %v4837
        %v4839 = vpop.f32.mrb[0].mxu0
        %v4840 = vadd.f32 %v4767, %v4839
        %v4841 = vpop.f32.mrb[0].mxu0
        %v4842 = vadd.f32 %v4769, %v4841
        %v4843 = vpop.f32.mrb[0].mxu0
        %v4844 = vadd.f32 %v4771, %v4843
        %4845 = vdwg.mxu0
        %4846 = vmatprep.subr.bf16.mxu0 %v2991
        %4847 = vmatpush1.bf16.msra.mxu0 %v2990
        %4848 = vmatprep.subr.bf16.mxu0 %v3011
        %4849 = vmatpush1.bf16.msra.mxu0 %v3010
        %4850 = vmatprep.subr.bf16.mxu0 %v3031
        %4851 = vmatpush1.bf16.msra.mxu0 %v3030
        %4852 = vmatprep.subr.bf16.mxu0 %v3051
        %4853 = vmatpush1.bf16.msra.mxu0 %v3050
        %4854 = vmatprep.subr.bf16.mxu0 %v3071
        %4855 = vmatpush1.bf16.msra.mxu0 %v3070
        %4856 = vmatprep.subr.bf16.mxu0 %v3091
        %4857 = vmatpush1.bf16.msra.mxu0 %v3090
        %4858 = vmatprep.subr.bf16.mxu0 %v3111
        %4859 = vmatpush1.bf16.msra.mxu0 %v3110
        %4860 = vmatprep.subr.bf16.mxu0 %v3131
        %4861 = vmatpush1.bf16.msra.mxu0 %v3130
        %4862 = vmatprep.subr.bf16.mxu0 %v3151
        %4863 = vmatpush1.bf16.msra.mxu0 %v3150
        %4864 = vmatprep.subr.bf16.mxu0 %v3171
        %4865 = vmatpush1.bf16.msra.mxu0 %v3170
        %4866 = vmatprep.subr.bf16.mxu0 %v3191
        %4867 = vmatpush1.bf16.msra.mxu0 %v3190
        %4868 = vmatprep.subr.bf16.mxu0 %v3211
        %4869 = vmatpush1.bf16.msra.mxu0 %v3210
        %4870 = vmatprep.subr.bf16.mxu0 %v3231
        %4871 = vmatpush1.bf16.msra.mxu0 %v3230
        %4872 = vmatprep.subr.bf16.mxu0 %v3251
        %4873 = vmatpush1.bf16.msra.mxu0 %v3250
        %4874 = vmatprep.subr.bf16.mxu0 %v3271
        %4875 = vmatpush1.bf16.msra.mxu0 %v3270
        %4876 = vmatprep.subr.bf16.mxu0 %v3291
        %4877 = vmatpush1.bf16.msra.mxu0 %v3290
        %4878 = vmatprep.mubr.bf16.mxu0 %v407
        %4879 = vmatmul.mubr.bf16.gmra.mrb[0].mxu0 %v406
        %v4880 = vpop.f32.mrb[0].mxu0
        %v4881 = vadd.f32 0.0, %v4880
        %v4882 = vpop.f32.mrb[0].mxu0
        %v4883 = vadd.f32 0.0, %v4882
        %v4884 = vpop.f32.mrb[0].mxu0
        %v4885 = vadd.f32 0.0, %v4884
        %v4886 = vpop.f32.mrb[0].mxu0
        %v4887 = vadd.f32 0.0, %v4886
        %4888 = vmatprep.mubr.bf16.mxu0 %v411
        %4889 = vmatmul.mubr.bf16.gmra.mrb[0].mxu0 %v410
        %v4890 = vpop.f32.mrb[0].mxu0
        %v4891 = vadd.f32 0.0, %v4890
        %v4892 = vpop.f32.mrb[0].mxu0
        %v4893 = vadd.f32 0.0, %v4892
        %v4894 = vpop.f32.mrb[0].mxu0
        %v4895 = vadd.f32 0.0, %v4894
        %v4896 = vpop.f32.mrb[0].mxu0
        %v4897 = vadd.f32 0.0, %v4896
        %4898 = vmatprep.mubr.bf16.mxu0 %v415
        %4899 = vmatmul.mubr.bf16.gmra.mrb[0].mxu0 %v414
        %v4900 = vpop.f32.mrb[0].mxu0
        %v4901 = vadd.f32 0.0, %v4900
        %v4902 = vpop.f32.mrb[0].mxu0
        %v4903 = vadd.f32 0.0, %v4902
        %v4904 = vpop.f32.mrb[0].mxu0
        %v4905 = vadd.f32 0.0, %v4904
        %v4906 = vpop.f32.mrb[0].mxu0
        %v4907 = vadd.f32 0.0, %v4906
        %4908 = vmatprep.mubr.bf16.mxu0 %v419
        %4909 = vmatmul.mubr.bf16.gmra.mrb[0].mxu0 %v418
        %v4910 = vpop.f32.mrb[0].mxu0
        %v4911 = vadd.f32 0.0, %v4910
        %v4912 = vpop.f32.mrb[0].mxu0
        %v4913 = vadd.f32 0.0, %v4912
        %v4914 = vpop.f32.mrb[0].mxu0
        %v4915 = vadd.f32 0.0, %v4914
        %v4916 = vpop.f32.mrb[0].mxu0
        %v4917 = vadd.f32 0.0, %v4916
        %4918 = vdwg.mxu0
        %4919 = vmatprep.subr.bf16.mxu0 %v3311
        %4920 = vmatpush1.bf16.msra.mxu0 %v3310
        %4921 = vmatprep.subr.bf16.mxu0 %v3331
        %4922 = vmatpush1.bf16.msra.mxu0 %v3330
        %4923 = vmatprep.subr.bf16.mxu0 %v3351
        %4924 = vmatpush1.bf16.msra.mxu0 %v3350
        %4925 = vmatprep.subr.bf16.mxu0 %v3371
        %4926 = vmatpush1.bf16.msra.mxu0 %v3370
        %4927 = vmatprep.subr.bf16.mxu0 %v3391
        %4928 = vmatpush1.bf16.msra.mxu0 %v3390
        %4929 = vmatprep.subr.bf16.mxu0 %v3411
        %4930 = vmatpush1.bf16.msra.mxu0 %v3410
        %4931 = vmatprep.subr.bf16.mxu0 %v3431
        %4932 = vmatpush1.bf16.msra.mxu0 %v3430
        %4933 = vmatprep.subr.bf16.mxu0 %v3451
        %4934 = vmatpush1.bf16.msra.mxu0 %v3450
        %4935 = vmatprep.subr.bf16.mxu0 %v3471
        %4936 = vmatpush1.bf16.msra.mxu0 %v3470
        %4937 = vmatprep.subr.bf16.mxu0 %v3491
        %4938 = vmatpush1.bf16.msra.mxu0 %v3490
        %4939 = vmatprep.subr.bf16.mxu0 %v3511
        %4940 = vmatpush1.bf16.msra.mxu0 %v3510
        %4941 = vmatprep.subr.bf16.mxu0 %v3531
        %4942 = vmatpush1.bf16.msra.mxu0 %v3530
        %4943 = vmatprep.subr.bf16.mxu0 %v3551
        %4944 = vmatpush1.bf16.msra.mxu0 %v3550
        %4945 = vmatprep.subr.bf16.mxu0 %v3571
        %4946 = vmatpush1.bf16.msra.mxu0 %v3570
        %4947 = vmatprep.subr.bf16.mxu0 %v3591
        %4948 = vmatpush1.bf16.msra.mxu0 %v3590
        %4949 = vmatprep.subr.bf16.mxu0 %v3611
        %4950 = vmatpush1.bf16.msra.mxu0 %v3610
        %4951 = vmatprep.mubr.bf16.mxu0 %v409
        %4952 = vmatmul.mubr.bf16.gmra.mrb[0].mxu0 %v408
        %v4953 = vpop.f32.mrb[0].mxu0
        %v4954 = vadd.f32 %v4881, %v4953
        %v4955 = vpop.f32.mrb[0].mxu0
        %v4956 = vadd.f32 %v4883, %v4955
        %v4957 = vpop.f32.mrb[0].mxu0
        %v4958 = vadd.f32 %v4885, %v4957
        %v4959 = vpop.f32.mrb[0].mxu0
        %v4960 = vadd.f32 %v4887, %v4959
        %4961 = vmatprep.mubr.bf16.mxu0 %v413
        %4962 = vmatmul.mubr.bf16.gmra.mrb[0].mxu0 %v412
        %v4963 = vpop.f32.mrb[0].mxu0
        %v4964 = vadd.f32 %v4891, %v4963
        %v4965 = vpop.f32.mrb[0].mxu0
        %v4966 = vadd.f32 %v4893, %v4965
        %v4967 = vpop.f32.mrb[0].mxu0
        %v4968 = vadd.f32 %v4895, %v4967
        %v4969 = vpop.f32.mrb[0].mxu0
        %v4970 = vadd.f32 %v4897, %v4969
        %4971 = vmatprep.mubr.bf16.mxu0 %v417
        %4972 = vmatmul.mubr.bf16.gmra.mrb[0].mxu0 %v416
        %v4973 = vpop.f32.mrb[0].mxu0
        %v4974 = vadd.f32 %v4901, %v4973
        %v4975 = vpop.f32.mrb[0].mxu0
        %v4976 = vadd.f32 %v4903, %v4975
        %v4977 = vpop.f32.mrb[0].mxu0
        %v4978 = vadd.f32 %v4905, %v4977
        %v4979 = vpop.f32.mrb[0].mxu0
        %v4980 = vadd.f32 %v4907, %v4979
        %4981 = vmatprep.mubr.bf16.mxu0 %v421
        %4982 = vmatmul.mubr.bf16.gmra.mrb[0].mxu0 %v420
        %v4983 = vpop.f32.mrb[0].mxu0
        %v4984 = vadd.f32 %v4911, %v4983
        %v4985 = vpop.f32.mrb[0].mxu0
        %v4986 = vadd.f32 %v4913, %v4985
        %v4987 = vpop.f32.mrb[0].mxu0
        %v4988 = vadd.f32 %v4915, %v4987
        %v4989 = vpop.f32.mrb[0].mxu0
        %v4990 = vadd.f32 %v4917, %v4989
        %4991 = vdwg.mxu0
        %4992 = vmatprep.subr.bf16.mxu0 %v2993
        %4993 = vmatpush1.bf16.msra.mxu0 %v2992
        %4994 = vmatprep.subr.bf16.mxu0 %v3013
        %4995 = vmatpush1.bf16.msra.mxu0 %v3012
        %4996 = vmatprep.subr.bf16.mxu0 %v3033
        %4997 = vmatpush1.bf16.msra.mxu0 %v3032
        %4998 = vmatprep.subr.bf16.mxu0 %v3053
        %4999 = vmatpush1.bf16.msra.mxu0 %v3052
        %5000 = vmatprep.subr.bf16.mxu0 %v3073
        %5001 = vmatpush1.bf16.msra.mxu0 %v3072
        %5002 = vmatprep.subr.bf16.mxu0 %v3093
        %5003 = vmatpush1.bf16.msra.mxu0 %v3092
        %5004 = vmatprep.subr.bf16.mxu0 %v3113
        %5005 = vmatpush1.bf16.msra.mxu0 %v3112
        %5006 = vmatprep.subr.bf16.mxu0 %v3133
        %5007 = vmatpush1.bf16.msra.mxu0 %v3132
        %5008 = vmatprep.subr.bf16.mxu0 %v3153
        %5009 = vmatpush1.bf16.msra.mxu0 %v3152
        %5010 = vmatprep.subr.bf16.mxu0 %v3173
        %5011 = vmatpush1.bf16.msra.mxu0 %v3172
        %5012 = vmatprep.subr.bf16.mxu0 %v3193
        %5013 = vmatpush1.bf16.msra.mxu0 %v3192
        %5014 = vmatprep.subr.bf16.mxu0 %v3213
        %5015 = vmatpush1.bf16.msra.mxu0 %v3212
        %5016 = vmatprep.subr.bf16.mxu0 %v3233
        %5017 = vmatpush1.bf16.msra.mxu0 %v3232
        %5018 = vmatprep.subr.bf16.mxu0 %v3253
        %5019 = vmatpush1.bf16.msra.mxu0 %v3252
        %5020 = vmatprep.subr.bf16.mxu0 %v3273
        %5021 = vmatpush1.bf16.msra.mxu0 %v3272
        %5022 = vmatprep.subr.bf16.mxu0 %v3293
        %5023 = vmatpush1.bf16.msra.mxu0 %v3292
        %5024 = vmatprep.mubr.bf16.mxu0 %v407
        %5025 = vmatmul.mubr.bf16.gmra.mrb[0].mxu0 %v406
        %v5026 = vpop.f32.mrb[0].mxu0
        %v5027 = vadd.f32 0.0, %v5026
        %v5028 = vpop.f32.mrb[0].mxu0
        %v5029 = vadd.f32 0.0, %v5028
        %v5030 = vpop.f32.mrb[0].mxu0
        %v5031 = vadd.f32 0.0, %v5030
        %v5032 = vpop.f32.mrb[0].mxu0
        %v5033 = vadd.f32 0.0, %v5032
        %5034 = vmatprep.mubr.bf16.mxu0 %v411
        %5035 = vmatmul.mubr.bf16.gmra.mrb[0].mxu0 %v410
        %v5036 = vpop.f32.mrb[0].mxu0
        %v5037 = vadd.f32 0.0, %v5036
        %v5038 = vpop.f32.mrb[0].mxu0
        %v5039 = vadd.f32 0.0, %v5038
        %v5040 = vpop.f32.mrb[0].mxu0
        %v5041 = vadd.f32 0.0, %v5040
        %v5042 = vpop.f32.mrb[0].mxu0
        %v5043 = vadd.f32 0.0, %v5042
        %5044 = vmatprep.mubr.bf16.mxu0 %v415
        %5045 = vmatmul.mubr.bf16.gmra.mrb[0].mxu0 %v414
        %v5046 = vpop.f32.mrb[0].mxu0
        %v5047 = vadd.f32 0.0, %v5046
        %v5048 = vpop.f32.mrb[0].mxu0
        %v5049 = vadd.f32 0.0, %v5048
        %v5050 = vpop.f32.mrb[0].mxu0
        %v5051 = vadd.f32 0.0, %v5050
        %v5052 = vpop.f32.mrb[0].mxu0
        %v5053 = vadd.f32 0.0, %v5052
        %5054 = vmatprep.mubr.bf16.mxu0 %v419
        %5055 = vmatmul.mubr.bf16.gmra.mrb[0].mxu0 %v418
        %v5056 = vpop.f32.mrb[0].mxu0
        %v5057 = vadd.f32 0.0, %v5056
        %v5058 = vpop.f32.mrb[0].mxu0
        %v5059 = vadd.f32 0.0, %v5058
        %v5060 = vpop.f32.mrb[0].mxu0
        %v5061 = vadd.f32 0.0, %v5060
        %v5062 = vpop.f32.mrb[0].mxu0
        %v5063 = vadd.f32 0.0, %v5062
        %5064 = vdwg.mxu0
        %5065 = vmatprep.subr.bf16.mxu0 %v3313
        %5066 = vmatpush1.bf16.msra.mxu0 %v3312
        %5067 = vmatprep.subr.bf16.mxu0 %v3333
        %5068 = vmatpush1.bf16.msra.mxu0 %v3332
        %5069 = vmatprep.subr.bf16.mxu0 %v3353
        %5070 = vmatpush1.bf16.msra.mxu0 %v3352
        %5071 = vmatprep.subr.bf16.mxu0 %v3373
        %5072 = vmatpush1.bf16.msra.mxu0 %v3372
        %5073 = vmatprep.subr.bf16.mxu0 %v3393
        %5074 = vmatpush1.bf16.msra.mxu0 %v3392
        %5075 = vmatprep.subr.bf16.mxu0 %v3413
        %5076 = vmatpush1.bf16.msra.mxu0 %v3412
        %5077 = vmatprep.subr.bf16.mxu0 %v3433
        %5078 = vmatpush1.bf16.msra.mxu0 %v3432
        %5079 = vmatprep.subr.bf16.mxu0 %v3453
        %5080 = vmatpush1.bf16.msra.mxu0 %v3452
        %5081 = vmatprep.subr.bf16.mxu0 %v3473
        %5082 = vmatpush1.bf16.msra.mxu0 %v3472
        %5083 = vmatprep.subr.bf16.mxu0 %v3493
        %5084 = vmatpush1.bf16.msra.mxu0 %v3492
        %5085 = vmatprep.subr.bf16.mxu0 %v3513
        %5086 = vmatpush1.bf16.msra.mxu0 %v3512
        %5087 = vmatprep.subr.bf16.mxu0 %v3533
        %5088 = vmatpush1.bf16.msra.mxu0 %v3532
        %5089 = vmatprep.subr.bf16.mxu0 %v3553
        %5090 = vmatpush1.bf16.msra.mxu0 %v3552
        %5091 = vmatprep.subr.bf16.mxu0 %v3573
        %5092 = vmatpush1.bf16.msra.mxu0 %v3572
        %5093 = vmatprep.subr.bf16.mxu0 %v3593
        %5094 = vmatpush1.bf16.msra.mxu0 %v3592
        %5095 = vmatprep.subr.bf16.mxu0 %v3613
        %5096 = vmatpush1.bf16.msra.mxu0 %v3612
        %5097 = vmatprep.mubr.bf16.mxu0 %v409
        %5098 = vmatmul.mubr.bf16.gmra.mrb[0].mxu0 %v408
        %v5099 = vpop.f32.mrb[0].mxu0
        %v5100 = vadd.f32 %v5027, %v5099
        %v5101 = vpop.f32.mrb[0].mxu0
        %v5102 = vadd.f32 %v5029, %v5101
        %v5103 = vpop.f32.mrb[0].mxu0
        %v5104 = vadd.f32 %v5031, %v5103
        %v5105 = vpop.f32.mrb[0].mxu0
        %v5106 = vadd.f32 %v5033, %v5105
        %5107 = vmatprep.mubr.bf16.mxu0 %v413
        %5108 = vmatmul.mubr.bf16.gmra.mrb[0].mxu0 %v412
        %v5109 = vpop.f32.mrb[0].mxu0
        %v5110 = vadd.f32 %v5037, %v5109
        %v5111 = vpop.f32.mrb[0].mxu0
        %v5112 = vadd.f32 %v5039, %v5111
        %v5113 = vpop.f32.mrb[0].mxu0
        %v5114 = vadd.f32 %v5041, %v5113
        %v5115 = vpop.f32.mrb[0].mxu0
        %v5116 = vadd.f32 %v5043, %v5115
        %5117 = vmatprep.mubr.bf16.mxu0 %v417
        %5118 = vmatmul.mubr.bf16.gmra.mrb[0].mxu0 %v416
        %v5119 = vpop.f32.mrb[0].mxu0
        %v5120 = vadd.f32 %v5047, %v5119
        %v5121 = vpop.f32.mrb[0].mxu0
        %v5122 = vadd.f32 %v5049, %v5121
        %v5123 = vpop.f32.mrb[0].mxu0
        %v5124 = vadd.f32 %v5051, %v5123
        %v5125 = vpop.f32.mrb[0].mxu0
        %v5126 = vadd.f32 %v5053, %v5125
        %5127 = vmatprep.mubr.bf16.mxu0 %v421
        %5128 = vmatmul.mubr.bf16.gmra.mrb[0].mxu0 %v420
        %v5129 = vpop.f32.mrb[0].mxu0
        %v5130 = vadd.f32 %v5057, %v5129
        %v5131 = vpop.f32.mrb[0].mxu0
        %v5132 = vadd.f32 %v5059, %v5131
        %v5133 = vpop.f32.mrb[0].mxu0
        %v5134 = vadd.f32 %v5061, %v5133
        %v5135 = vpop.f32.mrb[0].mxu0
        %v5136 = vadd.f32 %v5063, %v5135
        %5137 = vdwg.mxu0
        %5138 = vmatprep.subr.bf16.mxu0 %v2995
        %5139 = vmatpush1.bf16.msra.mxu0 %v2994
        %5140 = vmatprep.subr.bf16.mxu0 %v3015
        %5141 = vmatpush1.bf16.msra.mxu0 %v3014
        %5142 = vmatprep.subr.bf16.mxu0 %v3035
        %5143 = vmatpush1.bf16.msra.mxu0 %v3034
        %5144 = vmatprep.subr.bf16.mxu0 %v3055
        %5145 = vmatpush1.bf16.msra.mxu0 %v3054
        %5146 = vmatprep.subr.bf16.mxu0 %v3075
        %5147 = vmatpush1.bf16.msra.mxu0 %v3074
        %5148 = vmatprep.subr.bf16.mxu0 %v3095
        %5149 = vmatpush1.bf16.msra.mxu0 %v3094
        %5150 = vmatprep.subr.bf16.mxu0 %v3115
        %5151 = vmatpush1.bf16.msra.mxu0 %v3114
        %5152 = vmatprep.subr.bf16.mxu0 %v3135
        %5153 = vmatpush1.bf16.msra.mxu0 %v3134
        %5154 = vmatprep.subr.bf16.mxu0 %v3155
        %5155 = vmatpush1.bf16.msra.mxu0 %v3154
        %5156 = vmatprep.subr.bf16.mxu0 %v3175
        %5157 = vmatpush1.bf16.msra.mxu0 %v3174
        %5158 = vmatprep.subr.bf16.mxu0 %v3195
        %5159 = vmatpush1.bf16.msra.mxu0 %v3194
        %5160 = vmatprep.subr.bf16.mxu0 %v3215
        %5161 = vmatpush1.bf16.msra.mxu0 %v3214
        %5162 = vmatprep.subr.bf16.mxu0 %v3235
        %5163 = vmatpush1.bf16.msra.mxu0 %v3234
        %5164 = vmatprep.subr.bf16.mxu0 %v3255
        %5165 = vmatpush1.bf16.msra.mxu0 %v3254
        %5166 = vmatprep.subr.bf16.mxu0 %v3275
        %5167 = vmatpush1.bf16.msra.mxu0 %v3274
        %5168 = vmatprep.subr.bf16.mxu0 %v3295
        %5169 = vmatpush1.bf16.msra.mxu0 %v3294
        %5170 = vmatprep.mubr.bf16.mxu0 %v407
        %5171 = vmatmul.mubr.bf16.gmra.mrb[0].mxu0 %v406
        %v5172 = vpop.f32.mrb[0].mxu0
        %v5173 = vadd.f32 0.0, %v5172
        %v5174 = vpop.f32.mrb[0].mxu0
        %v5175 = vadd.f32 0.0, %v5174
        %v5176 = vpop.f32.mrb[0].mxu0
        %v5177 = vadd.f32 0.0, %v5176
        %v5178 = vpop.f32.mrb[0].mxu0
        %v5179 = vadd.f32 0.0, %v5178
        %5180 = vmatprep.mubr.bf16.mxu0 %v411
        %5181 = vmatmul.mubr.bf16.gmra.mrb[0].mxu0 %v410
        %v5182 = vpop.f32.mrb[0].mxu0
        %v5183 = vadd.f32 0.0, %v5182
        %v5184 = vpop.f32.mrb[0].mxu0
        %v5185 = vadd.f32 0.0, %v5184
        %v5186 = vpop.f32.mrb[0].mxu0
        %v5187 = vadd.f32 0.0, %v5186
        %v5188 = vpop.f32.mrb[0].mxu0
        %v5189 = vadd.f32 0.0, %v5188
        %5190 = vmatprep.mubr.bf16.mxu0 %v415
        %5191 = vmatmul.mubr.bf16.gmra.mrb[0].mxu0 %v414
        %v5192 = vpop.f32.mrb[0].mxu0
        %v5193 = vadd.f32 0.0, %v5192
        %v5194 = vpop.f32.mrb[0].mxu0
        %v5195 = vadd.f32 0.0, %v5194
        %v5196 = vpop.f32.mrb[0].mxu0
        %v5197 = vadd.f32 0.0, %v5196
        %v5198 = vpop.f32.mrb[0].mxu0
        %v5199 = vadd.f32 0.0, %v5198
        %5200 = vmatprep.mubr.bf16.mxu0 %v419
        %5201 = vmatmul.mubr.bf16.gmra.mrb[0].mxu0 %v418
        %v5202 = vpop.f32.mrb[0].mxu0
        %v5203 = vadd.f32 0.0, %v5202
        %v5204 = vpop.f32.mrb[0].mxu0
        %v5205 = vadd.f32 0.0, %v5204
        %v5206 = vpop.f32.mrb[0].mxu0
        %v5207 = vadd.f32 0.0, %v5206
        %v5208 = vpop.f32.mrb[0].mxu0
        %v5209 = vadd.f32 0.0, %v5208
        %5210 = vdwg.mxu0
        %5211 = vmatprep.subr.bf16.mxu0 %v3315
        %5212 = vmatpush1.bf16.msra.mxu0 %v3314
        %5213 = vmatprep.subr.bf16.mxu0 %v3335
        %5214 = vmatpush1.bf16.msra.mxu0 %v3334
        %5215 = vmatprep.subr.bf16.mxu0 %v3355
        %5216 = vmatpush1.bf16.msra.mxu0 %v3354
        %5217 = vmatprep.subr.bf16.mxu0 %v3375
        %5218 = vmatpush1.bf16.msra.mxu0 %v3374
        %5219 = vmatprep.subr.bf16.mxu0 %v3395
        %5220 = vmatpush1.bf16.msra.mxu0 %v3394
        %5221 = vmatprep.subr.bf16.mxu0 %v3415
        %5222 = vmatpush1.bf16.msra.mxu0 %v3414
        %5223 = vmatprep.subr.bf16.mxu0 %v3435
        %5224 = vmatpush1.bf16.msra.mxu0 %v3434
        %5225 = vmatprep.subr.bf16.mxu0 %v3455
        %5226 = vmatpush1.bf16.msra.mxu0 %v3454
        %5227 = vmatprep.subr.bf16.mxu0 %v3475
        %5228 = vmatpush1.bf16.msra.mxu0 %v3474
        %5229 = vmatprep.subr.bf16.mxu0 %v3495
        %5230 = vmatpush1.bf16.msra.mxu0 %v3494
        %5231 = vmatprep.subr.bf16.mxu0 %v3515
        %5232 = vmatpush1.bf16.msra.mxu0 %v3514
        %5233 = vmatprep.subr.bf16.mxu0 %v3535
        %5234 = vmatpush1.bf16.msra.mxu0 %v3534
        %5235 = vmatprep.subr.bf16.mxu0 %v3555
        %5236 = vmatpush1.bf16.msra.mxu0 %v3554
        %5237 = vmatprep.subr.bf16.mxu0 %v3575
        %5238 = vmatpush1.bf16.msra.mxu0 %v3574
        %5239 = vmatprep.subr.bf16.mxu0 %v3595
        %5240 = vmatpush1.bf16.msra.mxu0 %v3594
        %5241 = vmatprep.subr.bf16.mxu0 %v3615
        %5242 = vmatpush1.bf16.msra.mxu0 %v3614
        %5243 = vmatprep.mubr.bf16.mxu0 %v409
        %5244 = vmatmul.mubr.bf16.gmra.mrb[0].mxu0 %v408
        %v5245 = vpop.f32.mrb[0].mxu0
        %v5246 = vadd.f32 %v5173, %v5245
        %v5247 = vpop.f32.mrb[0].mxu0
        %v5248 = vadd.f32 %v5175, %v5247
        %v5249 = vpop.f32.mrb[0].mxu0
        %v5250 = vadd.f32 %v5177, %v5249
        %v5251 = vpop.f32.mrb[0].mxu0
        %v5252 = vadd.f32 %v5179, %v5251
        %5253 = vmatprep.mubr.bf16.mxu0 %v413
        %5254 = vmatmul.mubr.bf16.gmra.mrb[0].mxu0 %v412
        %v5255 = vpop.f32.mrb[0].mxu0
        %v5256 = vadd.f32 %v5183, %v5255
        %v5257 = vpop.f32.mrb[0].mxu0
        %v5258 = vadd.f32 %v5185, %v5257
        %v5259 = vpop.f32.mrb[0].mxu0
        %v5260 = vadd.f32 %v5187, %v5259
        %v5261 = vpop.f32.mrb[0].mxu0
        %v5262 = vadd.f32 %v5189, %v5261
        %5263 = vmatprep.mubr.bf16.mxu0 %v417
        %5264 = vmatmul.mubr.bf16.gmra.mrb[0].mxu0 %v416
        %v5265 = vpop.f32.mrb[0].mxu0
        %v5266 = vadd.f32 %v5193, %v5265
        %v5267 = vpop.f32.mrb[0].mxu0
        %v5268 = vadd.f32 %v5195, %v5267
        %v5269 = vpop.f32.mrb[0].mxu0
        %v5270 = vadd.f32 %v5197, %v5269
        %v5271 = vpop.f32.mrb[0].mxu0
        %v5272 = vadd.f32 %v5199, %v5271
        %5273 = vmatprep.mubr.bf16.mxu0 %v421
        %5274 = vmatmul.mubr.bf16.gmra.mrb[0].mxu0 %v420
        %v5275 = vpop.f32.mrb[0].mxu0
        %v5276 = vadd.f32 %v5203, %v5275
        %v5277 = vpop.f32.mrb[0].mxu0
        %v5278 = vadd.f32 %v5205, %v5277
        %v5279 = vpop.f32.mrb[0].mxu0
        %v5280 = vadd.f32 %v5207, %v5279
        %v5281 = vpop.f32.mrb[0].mxu0
        %v5282 = vadd.f32 %v5209, %v5281
        %5283 = vdwg.mxu0
        %5284 = vmatprep.subr.bf16.mxu0 %v2997
        %5285 = vmatpush1.bf16.msra.mxu0 %v2996
        %5286 = vmatprep.subr.bf16.mxu0 %v3017
        %5287 = vmatpush1.bf16.msra.mxu0 %v3016
        %5288 = vmatprep.subr.bf16.mxu0 %v3037
        %5289 = vmatpush1.bf16.msra.mxu0 %v3036
        %5290 = vmatprep.subr.bf16.mxu0 %v3057
        %5291 = vmatpush1.bf16.msra.mxu0 %v3056
        %5292 = vmatprep.subr.bf16.mxu0 %v3077
        %5293 = vmatpush1.bf16.msra.mxu0 %v3076
        %5294 = vmatprep.subr.bf16.mxu0 %v3097
        %5295 = vmatpush1.bf16.msra.mxu0 %v3096
        %5296 = vmatprep.subr.bf16.mxu0 %v3117
        %5297 = vmatpush1.bf16.msra.mxu0 %v3116
        %5298 = vmatprep.subr.bf16.mxu0 %v3137
        %5299 = vmatpush1.bf16.msra.mxu0 %v3136
        %5300 = vmatprep.subr.bf16.mxu0 %v3157
        %5301 = vmatpush1.bf16.msra.mxu0 %v3156
        %5302 = vmatprep.subr.bf16.mxu0 %v3177
        %5303 = vmatpush1.bf16.msra.mxu0 %v3176
        %5304 = vmatprep.subr.bf16.mxu0 %v3197
        %5305 = vmatpush1.bf16.msra.mxu0 %v3196
        %5306 = vmatprep.subr.bf16.mxu0 %v3217
        %5307 = vmatpush1.bf16.msra.mxu0 %v3216
        %5308 = vmatprep.subr.bf16.mxu0 %v3237
        %5309 = vmatpush1.bf16.msra.mxu0 %v3236
        %5310 = vmatprep.subr.bf16.mxu0 %v3257
        %5311 = vmatpush1.bf16.msra.mxu0 %v3256
        %5312 = vmatprep.subr.bf16.mxu0 %v3277
        %5313 = vmatpush1.bf16.msra.mxu0 %v3276
        %5314 = vmatprep.subr.bf16.mxu0 %v3297
        %5315 = vmatpush1.bf16.msra.mxu0 %v3296
        %5316 = vmatprep.mubr.bf16.mxu0 %v407
        %5317 = vmatmul.mubr.bf16.gmra.mrb[0].mxu0 %v406
        %v5318 = vpop.f32.mrb[0].mxu0
        %v5319 = vadd.f32 0.0, %v5318
        %v5320 = vpop.f32.mrb[0].mxu0
        %v5321 = vadd.f32 0.0, %v5320
        %v5322 = vpop.f32.mrb[0].mxu0
        %v5323 = vadd.f32 0.0, %v5322
        %v5324 = vpop.f32.mrb[0].mxu0
        %v5325 = vadd.f32 0.0, %v5324
        %5326 = vmatprep.mubr.bf16.mxu0 %v411
        %5327 = vmatmul.mubr.bf16.gmra.mrb[0].mxu0 %v410
        %v5328 = vpop.f32.mrb[0].mxu0
        %v5329 = vadd.f32 0.0, %v5328
        %v5330 = vpop.f32.mrb[0].mxu0
        %v5331 = vadd.f32 0.0, %v5330
        %v5332 = vpop.f32.mrb[0].mxu0
        %v5333 = vadd.f32 0.0, %v5332
        %v5334 = vpop.f32.mrb[0].mxu0
        %v5335 = vadd.f32 0.0, %v5334
        %5336 = vmatprep.mubr.bf16.mxu0 %v415
        %5337 = vmatmul.mubr.bf16.gmra.mrb[0].mxu0 %v414
        %v5338 = vpop.f32.mrb[0].mxu0
        %v5339 = vadd.f32 0.0, %v5338
        %v5340 = vpop.f32.mrb[0].mxu0
        %v5341 = vadd.f32 0.0, %v5340
        %v5342 = vpop.f32.mrb[0].mxu0
        %v5343 = vadd.f32 0.0, %v5342
        %v5344 = vpop.f32.mrb[0].mxu0
        %v5345 = vadd.f32 0.0, %v5344
        %5346 = vmatprep.mubr.bf16.mxu0 %v419
        %5347 = vmatmul.mubr.bf16.gmra.mrb[0].mxu0 %v418
        %v5348 = vpop.f32.mrb[0].mxu0
        %v5349 = vadd.f32 0.0, %v5348
        %v5350 = vpop.f32.mrb[0].mxu0
        %v5351 = vadd.f32 0.0, %v5350
        %v5352 = vpop.f32.mrb[0].mxu0
        %v5353 = vadd.f32 0.0, %v5352
        %v5354 = vpop.f32.mrb[0].mxu0
        %v5355 = vadd.f32 0.0, %v5354
        %5356 = vdwg.mxu0
        %5357 = vmatprep.subr.bf16.mxu0 %v3317
        %5358 = vmatpush1.bf16.msra.mxu0 %v3316
        %5359 = vmatprep.subr.bf16.mxu0 %v3337
        %5360 = vmatpush1.bf16.msra.mxu0 %v3336
        %5361 = vmatprep.subr.bf16.mxu0 %v3357
        %5362 = vmatpush1.bf16.msra.mxu0 %v3356
        %5363 = vmatprep.subr.bf16.mxu0 %v3377
        %5364 = vmatpush1.bf16.msra.mxu0 %v3376
        %5365 = vmatprep.subr.bf16.mxu0 %v3397
        %5366 = vmatpush1.bf16.msra.mxu0 %v3396
        %5367 = vmatprep.subr.bf16.mxu0 %v3417
        %5368 = vmatpush1.bf16.msra.mxu0 %v3416
        %5369 = vmatprep.subr.bf16.mxu0 %v3437
        %5370 = vmatpush1.bf16.msra.mxu0 %v3436
        %5371 = vmatprep.subr.bf16.mxu0 %v3457
        %5372 = vmatpush1.bf16.msra.mxu0 %v3456
        %5373 = vmatprep.subr.bf16.mxu0 %v3477
        %5374 = vmatpush1.bf16.msra.mxu0 %v3476
        %5375 = vmatprep.subr.bf16.mxu0 %v3497
        %5376 = vmatpush1.bf16.msra.mxu0 %v3496
        %5377 = vmatprep.subr.bf16.mxu0 %v3517
        %5378 = vmatpush1.bf16.msra.mxu0 %v3516
        %5379 = vmatprep.subr.bf16.mxu0 %v3537
        %5380 = vmatpush1.bf16.msra.mxu0 %v3536
        %5381 = vmatprep.subr.bf16.mxu0 %v3557
        %5382 = vmatpush1.bf16.msra.mxu0 %v3556
        %5383 = vmatprep.subr.bf16.mxu0 %v3577
        %5384 = vmatpush1.bf16.msra.mxu0 %v3576
        %5385 = vmatprep.subr.bf16.mxu0 %v3597
        %5386 = vmatpush1.bf16.msra.mxu0 %v3596
        %5387 = vmatprep.subr.bf16.mxu0 %v3617
        %5388 = vmatpush1.bf16.msra.mxu0 %v3616
        %5389 = vmatprep.mubr.bf16.mxu0 %v409
        %5390 = vmatmul.mubr.bf16.gmra.mrb[0].mxu0 %v408
        %v5391 = vpop.f32.mrb[0].mxu0
        %v5392 = vadd.f32 %v5319, %v5391
        %v5393 = vpop.f32.mrb[0].mxu0
        %v5394 = vadd.f32 %v5321, %v5393
        %v5395 = vpop.f32.mrb[0].mxu0
        %v5396 = vadd.f32 %v5323, %v5395
        %v5397 = vpop.f32.mrb[0].mxu0
        %v5398 = vadd.f32 %v5325, %v5397
        %5399 = vmatprep.mubr.bf16.mxu0 %v413
        %5400 = vmatmul.mubr.bf16.gmra.mrb[0].mxu0 %v412
        %v5401 = vpop.f32.mrb[0].mxu0
        %v5402 = vadd.f32 %v5329, %v5401
        %v5403 = vpop.f32.mrb[0].mxu0
        %v5404 = vadd.f32 %v5331, %v5403
        %v5405 = vpop.f32.mrb[0].mxu0
        %v5406 = vadd.f32 %v5333, %v5405
        %v5407 = vpop.f32.mrb[0].mxu0
        %v5408 = vadd.f32 %v5335, %v5407
        %5409 = vmatprep.mubr.bf16.mxu0 %v417
        %5410 = vmatmul.mubr.bf16.gmra.mrb[0].mxu0 %v416
        %v5411 = vpop.f32.mrb[0].mxu0
        %v5412 = vadd.f32 %v5339, %v5411
        %v5413 = vpop.f32.mrb[0].mxu0
        %v5414 = vadd.f32 %v5341, %v5413
        %v5415 = vpop.f32.mrb[0].mxu0
        %v5416 = vadd.f32 %v5343, %v5415
        %v5417 = vpop.f32.mrb[0].mxu0
        %v5418 = vadd.f32 %v5345, %v5417
        %5419 = vmatprep.mubr.bf16.mxu0 %v421
        %5420 = vmatmul.mubr.bf16.gmra.mrb[0].mxu0 %v420
        %v5421 = vpop.f32.mrb[0].mxu0
        %v5422 = vadd.f32 %v5349, %v5421
        %v5423 = vpop.f32.mrb[0].mxu0
        %v5424 = vadd.f32 %v5351, %v5423
        %v5425 = vpop.f32.mrb[0].mxu0
        %v5426 = vadd.f32 %v5353, %v5425
        %v5427 = vpop.f32.mrb[0].mxu0
        %v5428 = vadd.f32 %v5355, %v5427
        %5429 = vdwg.mxu0
        %5430 = vmatprep.subr.bf16.mxu0 %v2999
        %5431 = vmatpush1.bf16.msra.mxu0 %v2998
        %5432 = vmatprep.subr.bf16.mxu0 %v3019
        %5433 = vmatpush1.bf16.msra.mxu0 %v3018
        %5434 = vmatprep.subr.bf16.mxu0 %v3039
        %5435 = vmatpush1.bf16.msra.mxu0 %v3038
        %5436 = vmatprep.subr.bf16.mxu0 %v3059
        %5437 = vmatpush1.bf16.msra.mxu0 %v3058
        %5438 = vmatprep.subr.bf16.mxu0 %v3079
        %5439 = vmatpush1.bf16.msra.mxu0 %v3078
        %5440 = vmatprep.subr.bf16.mxu0 %v3099
        %5441 = vmatpush1.bf16.msra.mxu0 %v3098
        %5442 = vmatprep.subr.bf16.mxu0 %v3119
        %5443 = vmatpush1.bf16.msra.mxu0 %v3118
        %5444 = vmatprep.subr.bf16.mxu0 %v3139
        %5445 = vmatpush1.bf16.msra.mxu0 %v3138
        %5446 = vmatprep.subr.bf16.mxu0 %v3159
        %5447 = vmatpush1.bf16.msra.mxu0 %v3158
        %5448 = vmatprep.subr.bf16.mxu0 %v3179
        %5449 = vmatpush1.bf16.msra.mxu0 %v3178
        %5450 = vmatprep.subr.bf16.mxu0 %v3199
        %5451 = vmatpush1.bf16.msra.mxu0 %v3198
        %5452 = vmatprep.subr.bf16.mxu0 %v3219
        %5453 = vmatpush1.bf16.msra.mxu0 %v3218
        %5454 = vmatprep.subr.bf16.mxu0 %v3239
        %5455 = vmatpush1.bf16.msra.mxu0 %v3238
        %5456 = vmatprep.subr.bf16.mxu0 %v3259
        %5457 = vmatpush1.bf16.msra.mxu0 %v3258
        %5458 = vmatprep.subr.bf16.mxu0 %v3279
        %5459 = vmatpush1.bf16.msra.mxu0 %v3278
        %5460 = vmatprep.subr.bf16.mxu0 %v3299
        %5461 = vmatpush1.bf16.msra.mxu0 %v3298
        %5462 = vmatprep.mubr.bf16.mxu0 %v407
        %5463 = vmatmul.mubr.bf16.gmra.mrb[0].mxu0 %v406
        %v5464 = vpop.f32.mrb[0].mxu0
        %v5465 = vadd.f32 0.0, %v5464
        %v5466 = vpop.f32.mrb[0].mxu0
        %v5467 = vadd.f32 0.0, %v5466
        %v5468 = vpop.f32.mrb[0].mxu0
        %v5469 = vadd.f32 0.0, %v5468
        %v5470 = vpop.f32.mrb[0].mxu0
        %v5471 = vadd.f32 0.0, %v5470
        %5472 = vmatprep.mubr.bf16.mxu0 %v411
        %5473 = vmatmul.mubr.bf16.gmra.mrb[0].mxu0 %v410
        %v5474 = vpop.f32.mrb[0].mxu0
        %v5475 = vadd.f32 0.0, %v5474
        %v5476 = vpop.f32.mrb[0].mxu0
        %v5477 = vadd.f32 0.0, %v5476
        %v5478 = vpop.f32.mrb[0].mxu0
        %v5479 = vadd.f32 0.0, %v5478
        %v5480 = vpop.f32.mrb[0].mxu0
        %v5481 = vadd.f32 0.0, %v5480
        %5482 = vmatprep.mubr.bf16.mxu0 %v415
        %5483 = vmatmul.mubr.bf16.gmra.mrb[0].mxu0 %v414
        %v5484 = vpop.f32.mrb[0].mxu0
        %v5485 = vadd.f32 0.0, %v5484
        %v5486 = vpop.f32.mrb[0].mxu0
        %v5487 = vadd.f32 0.0, %v5486
        %v5488 = vpop.f32.mrb[0].mxu0
        %v5489 = vadd.f32 0.0, %v5488
        %v5490 = vpop.f32.mrb[0].mxu0
        %v5491 = vadd.f32 0.0, %v5490
        %5492 = vmatprep.mubr.bf16.mxu0 %v419
        %5493 = vmatmul.mubr.bf16.gmra.mrb[0].mxu0 %v418
        %v5494 = vpop.f32.mrb[0].mxu0
        %v5495 = vadd.f32 0.0, %v5494
        %v5496 = vpop.f32.mrb[0].mxu0
        %v5497 = vadd.f32 0.0, %v5496
        %v5498 = vpop.f32.mrb[0].mxu0
        %v5499 = vadd.f32 0.0, %v5498
        %v5500 = vpop.f32.mrb[0].mxu0
        %v5501 = vadd.f32 0.0, %v5500
        %5502 = vdwg.mxu0
        %5503 = vmatprep.subr.bf16.mxu0 %v3319
        %5504 = vmatpush1.bf16.msra.mxu0 %v3318
        %5505 = vmatprep.subr.bf16.mxu0 %v3339
        %5506 = vmatpush1.bf16.msra.mxu0 %v3338
        %5507 = vmatprep.subr.bf16.mxu0 %v3359
        %5508 = vmatpush1.bf16.msra.mxu0 %v3358
        %5509 = vmatprep.subr.bf16.mxu0 %v3379
        %5510 = vmatpush1.bf16.msra.mxu0 %v3378
        %5511 = vmatprep.subr.bf16.mxu0 %v3399
        %5512 = vmatpush1.bf16.msra.mxu0 %v3398
        %5513 = vmatprep.subr.bf16.mxu0 %v3419
        %5514 = vmatpush1.bf16.msra.mxu0 %v3418
        %5515 = vmatprep.subr.bf16.mxu0 %v3439
        %5516 = vmatpush1.bf16.msra.mxu0 %v3438
        %5517 = vmatprep.subr.bf16.mxu0 %v3459
        %5518 = vmatpush1.bf16.msra.mxu0 %v3458
        %5519 = vmatprep.subr.bf16.mxu0 %v3479
        %5520 = vmatpush1.bf16.msra.mxu0 %v3478
        %5521 = vmatprep.subr.bf16.mxu0 %v3499
        %5522 = vmatpush1.bf16.msra.mxu0 %v3498
        %5523 = vmatprep.subr.bf16.mxu0 %v3519
        %5524 = vmatpush1.bf16.msra.mxu0 %v3518
        %5525 = vmatprep.subr.bf16.mxu0 %v3539
        %5526 = vmatpush1.bf16.msra.mxu0 %v3538
        %5527 = vmatprep.subr.bf16.mxu0 %v3559
        %5528 = vmatpush1.bf16.msra.mxu0 %v3558
        %5529 = vmatprep.subr.bf16.mxu0 %v3579
        %5530 = vmatpush1.bf16.msra.mxu0 %v3578
        %5531 = vmatprep.subr.bf16.mxu0 %v3599
        %5532 = vmatpush1.bf16.msra.mxu0 %v3598
        %5533 = vmatprep.subr.bf16.mxu0 %v3619
        %5534 = vmatpush1.bf16.msra.mxu0 %v3618
        %5535 = vmatprep.mubr.bf16.mxu0 %v409
        %5536 = vmatmul.mubr.bf16.gmra.mrb[0].mxu0 %v408
        %v5537 = vpop.f32.mrb[0].mxu0
        %v5538 = vadd.f32 %v5465, %v5537
        %v5539 = vpop.f32.mrb[0].mxu0
        %v5540 = vadd.f32 %v5467, %v5539
        %v5541 = vpop.f32.mrb[0].mxu0
        %v5542 = vadd.f32 %v5469, %v5541
        %v5543 = vpop.f32.mrb[0].mxu0
        %v5544 = vadd.f32 %v5471, %v5543
        %5545 = vmatprep.mubr.bf16.mxu0 %v413
        %5546 = vmatmul.mubr.bf16.gmra.mrb[0].mxu0 %v412
        %v5547 = vpop.f32.mrb[0].mxu0
        %v5548 = vadd.f32 %v5475, %v5547
        %v5549 = vpop.f32.mrb[0].mxu0
        %v5550 = vadd.f32 %v5477, %v5549
        %v5551 = vpop.f32.mrb[0].mxu0
        %v5552 = vadd.f32 %v5479, %v5551
        %v5553 = vpop.f32.mrb[0].mxu0
        %v5554 = vadd.f32 %v5481, %v5553
        %5555 = vmatprep.mubr.bf16.mxu0 %v417
        %5556 = vmatmul.mubr.bf16.gmra.mrb[0].mxu0 %v416
        %v5557 = vpop.f32.mrb[0].mxu0
        %v5558 = vadd.f32 %v5485, %v5557
        %v5559 = vpop.f32.mrb[0].mxu0
        %v5560 = vadd.f32 %v5487, %v5559
        %v5561 = vpop.f32.mrb[0].mxu0
        %v5562 = vadd.f32 %v5489, %v5561
        %v5563 = vpop.f32.mrb[0].mxu0
        %v5564 = vadd.f32 %v5491, %v5563
        %5565 = vmatprep.mubr.bf16.mxu0 %v421
        %5566 = vmatmul.mubr.bf16.gmra.mrb[0].mxu0 %v420
        %v5567 = vpop.f32.mrb[0].mxu0
        %v5568 = vadd.f32 %v5495, %v5567
        %v5569 = vpop.f32.mrb[0].mxu0
        %v5570 = vadd.f32 %v5497, %v5569
        %v5571 = vpop.f32.mrb[0].mxu0
        %v5572 = vadd.f32 %v5499, %v5571
        %v5573 = vpop.f32.mrb[0].mxu0
        %v5574 = vadd.f32 %v5501, %v5573
        %5575 = vdwg.mxu0
        %5576 = vmatprep.subr.bf16.mxu0 %v3001
        %5577 = vmatpush1.bf16.msra.mxu0 %v3000
        %5578 = vmatprep.subr.bf16.mxu0 %v3021
        %5579 = vmatpush1.bf16.msra.mxu0 %v3020
        %5580 = vmatprep.subr.bf16.mxu0 %v3041
        %5581 = vmatpush1.bf16.msra.mxu0 %v3040
        %5582 = vmatprep.subr.bf16.mxu0 %v3061
        %5583 = vmatpush1.bf16.msra.mxu0 %v3060
        %5584 = vmatprep.subr.bf16.mxu0 %v3081
        %5585 = vmatpush1.bf16.msra.mxu0 %v3080
        %5586 = vmatprep.subr.bf16.mxu0 %v3101
        %5587 = vmatpush1.bf16.msra.mxu0 %v3100
        %5588 = vmatprep.subr.bf16.mxu0 %v3121
        %5589 = vmatpush1.bf16.msra.mxu0 %v3120
        %5590 = vmatprep.subr.bf16.mxu0 %v3141
        %5591 = vmatpush1.bf16.msra.mxu0 %v3140
        %5592 = vmatprep.subr.bf16.mxu0 %v3161
        %5593 = vmatpush1.bf16.msra.mxu0 %v3160
        %5594 = vmatprep.subr.bf16.mxu0 %v3181
        %5595 = vmatpush1.bf16.msra.mxu0 %v3180
        %5596 = vmatprep.subr.bf16.mxu0 %v3201
        %5597 = vmatpush1.bf16.msra.mxu0 %v3200
        %5598 = vmatprep.subr.bf16.mxu0 %v3221
        %5599 = vmatpush1.bf16.msra.mxu0 %v3220
        %5600 = vmatprep.subr.bf16.mxu0 %v3241
        %5601 = vmatpush1.bf16.msra.mxu0 %v3240
        %5602 = vmatprep.subr.bf16.mxu0 %v3261
        %5603 = vmatpush1.bf16.msra.mxu0 %v3260
        %5604 = vmatprep.subr.bf16.mxu0 %v3281
        %5605 = vmatpush1.bf16.msra.mxu0 %v3280
        %5606 = vmatprep.subr.bf16.mxu0 %v3301
        %5607 = vmatpush1.bf16.msra.mxu0 %v3300
        %5608 = vmatprep.mubr.bf16.mxu0 %v407
        %5609 = vmatmul.mubr.bf16.gmra.mrb[0].mxu0 %v406
        %v5610 = vpop.f32.mrb[0].mxu0
        %v5611 = vadd.f32 0.0, %v5610
        %v5612 = vpop.f32.mrb[0].mxu0
        %v5613 = vadd.f32 0.0, %v5612
        %v5614 = vpop.f32.mrb[0].mxu0
        %v5615 = vadd.f32 0.0, %v5614
        %v5616 = vpop.f32.mrb[0].mxu0
        %v5617 = vadd.f32 0.0, %v5616
        %5618 = vmatprep.mubr.bf16.mxu0 %v411
        %5619 = vmatmul.mubr.bf16.gmra.mrb[0].mxu0 %v410
        %v5620 = vpop.f32.mrb[0].mxu0
        %v5621 = vadd.f32 0.0, %v5620
        %v5622 = vpop.f32.mrb[0].mxu0
        %v5623 = vadd.f32 0.0, %v5622
        %v5624 = vpop.f32.mrb[0].mxu0
        %v5625 = vadd.f32 0.0, %v5624
        %v5626 = vpop.f32.mrb[0].mxu0
        %v5627 = vadd.f32 0.0, %v5626
        %5628 = vmatprep.mubr.bf16.mxu0 %v415
        %5629 = vmatmul.mubr.bf16.gmra.mrb[0].mxu0 %v414
        %v5630 = vpop.f32.mrb[0].mxu0
        %v5631 = vadd.f32 0.0, %v5630
        %v5632 = vpop.f32.mrb[0].mxu0
        %v5633 = vadd.f32 0.0, %v5632
        %v5634 = vpop.f32.mrb[0].mxu0
        %v5635 = vadd.f32 0.0, %v5634
        %v5636 = vpop.f32.mrb[0].mxu0
        %v5637 = vadd.f32 0.0, %v5636
        %5638 = vmatprep.mubr.bf16.mxu0 %v419
        %5639 = vmatmul.mubr.bf16.gmra.mrb[0].mxu0 %v418
        %v5640 = vpop.f32.mrb[0].mxu0
        %v5641 = vadd.f32 0.0, %v5640
        %v5642 = vpop.f32.mrb[0].mxu0
        %v5643 = vadd.f32 0.0, %v5642
        %v5644 = vpop.f32.mrb[0].mxu0
        %v5645 = vadd.f32 0.0, %v5644
        %v5646 = vpop.f32.mrb[0].mxu0
        %v5647 = vadd.f32 0.0, %v5646
        %5648 = vdwg.mxu0
        %5649 = vmatprep.subr.bf16.mxu0 %v3321
        %5650 = vmatpush1.bf16.msra.mxu0 %v3320
        %5651 = vmatprep.subr.bf16.mxu0 %v3341
        %5652 = vmatpush1.bf16.msra.mxu0 %v3340
        %5653 = vmatprep.subr.bf16.mxu0 %v3361
        %5654 = vmatpush1.bf16.msra.mxu0 %v3360
        %5655 = vmatprep.subr.bf16.mxu0 %v3381
        %5656 = vmatpush1.bf16.msra.mxu0 %v3380
        %5657 = vmatprep.subr.bf16.mxu0 %v3401
        %5658 = vmatpush1.bf16.msra.mxu0 %v3400
        %5659 = vmatprep.subr.bf16.mxu0 %v3421
        %5660 = vmatpush1.bf16.msra.mxu0 %v3420
        %5661 = vmatprep.subr.bf16.mxu0 %v3441
        %5662 = vmatpush1.bf16.msra.mxu0 %v3440
        %5663 = vmatprep.subr.bf16.mxu0 %v3461
        %5664 = vmatpush1.bf16.msra.mxu0 %v3460
        %5665 = vmatprep.subr.bf16.mxu0 %v3481
        %5666 = vmatpush1.bf16.msra.mxu0 %v3480
        %5667 = vmatprep.subr.bf16.mxu0 %v3501
        %5668 = vmatpush1.bf16.msra.mxu0 %v3500
        %5669 = vmatprep.subr.bf16.mxu0 %v3521
        %5670 = vmatpush1.bf16.msra.mxu0 %v3520
        %5671 = vmatprep.subr.bf16.mxu0 %v3541
        %5672 = vmatpush1.bf16.msra.mxu0 %v3540
        %5673 = vmatprep.subr.bf16.mxu0 %v3561
        %5674 = vmatpush1.bf16.msra.mxu0 %v3560
        %5675 = vmatprep.subr.bf16.mxu0 %v3581
        %5676 = vmatpush1.bf16.msra.mxu0 %v3580
        %5677 = vmatprep.subr.bf16.mxu0 %v3601
        %5678 = vmatpush1.bf16.msra.mxu0 %v3600
        %5679 = vmatprep.subr.bf16.mxu0 %v3621
        %5680 = vmatpush1.bf16.msra.mxu0 %v3620
        %5681 = vmatprep.mubr.bf16.mxu0 %v409
        %5682 = vmatmul.mubr.bf16.gmra.mrb[0].mxu0 %v408
        %v5683 = vpop.f32.mrb[0].mxu0
        %v5684 = vadd.f32 %v5611, %v5683
        %v5685 = vpop.f32.mrb[0].mxu0
        %v5686 = vadd.f32 %v5613, %v5685
        %v5687 = vpop.f32.mrb[0].mxu0
        %v5688 = vadd.f32 %v5615, %v5687
        %v5689 = vpop.f32.mrb[0].mxu0
        %v5690 = vadd.f32 %v5617, %v5689
        %5691 = vmatprep.mubr.bf16.mxu0 %v413
        %5692 = vmatmul.mubr.bf16.gmra.mrb[0].mxu0 %v412
        %v5693 = vpop.f32.mrb[0].mxu0
        %v5694 = vadd.f32 %v5621, %v5693
        %v5695 = vpop.f32.mrb[0].mxu0
        %v5696 = vadd.f32 %v5623, %v5695
        %v5697 = vpop.f32.mrb[0].mxu0
        %v5698 = vadd.f32 %v5625, %v5697
        %v5699 = vpop.f32.mrb[0].mxu0
        %v5700 = vadd.f32 %v5627, %v5699
        %5701 = vmatprep.mubr.bf16.mxu0 %v417
        %5702 = vmatmul.mubr.bf16.gmra.mrb[0].mxu0 %v416
        %v5703 = vpop.f32.mrb[0].mxu0
        %v5704 = vadd.f32 %v5631, %v5703
        %v5705 = vpop.f32.mrb[0].mxu0
        %v5706 = vadd.f32 %v5633, %v5705
        %v5707 = vpop.f32.mrb[0].mxu0
        %v5708 = vadd.f32 %v5635, %v5707
        %v5709 = vpop.f32.mrb[0].mxu0
        %v5710 = vadd.f32 %v5637, %v5709
        %5711 = vmatprep.mubr.bf16.mxu0 %v421
        %5712 = vmatmul.mubr.bf16.gmra.mrb[0].mxu0 %v420
        %v5713 = vpop.f32.mrb[0].mxu0
        %v5714 = vadd.f32 %v5641, %v5713
        %v5715 = vpop.f32.mrb[0].mxu0
        %v5716 = vadd.f32 %v5643, %v5715
        %v5717 = vpop.f32.mrb[0].mxu0
        %v5718 = vadd.f32 %v5645, %v5717
        %v5719 = vpop.f32.mrb[0].mxu0
        %v5720 = vadd.f32 %v5647, %v5719
        %5721 = vdwg.mxu0
        %v5722 = vld [vmem:[#allocation8] sm:$0xff]
        %v5723 = vld [vmem:[#allocation8 + $0x8] sm:$0xff]
        %v5724 = vld [vmem:[#allocation8 + $0x10] sm:$0xff]
        %v5725 = vld [vmem:[#allocation8 + $0x18] sm:$0xff]
        %v5726 = vld [vmem:[#allocation8 + $0x20] sm:$0xff]
        %v5727 = vld [vmem:[#allocation8 + $0x28] sm:$0xff]
        %v5728 = vld [vmem:[#allocation8 + $0x30] sm:$0xff]
        %v5729 = vld [vmem:[#allocation8 + $0x38] sm:$0xff]
        %v5730 = vld [vmem:[#allocation8 + $0x40] sm:$0xff]
        %v5731 = vld [vmem:[#allocation8 + $0x48] sm:$0xff]
        %v5732 = vld [vmem:[#allocation8 + $0x50] sm:$0xff]
        %v5733 = vld [vmem:[#allocation8 + $0x58] sm:$0xff]
        %v5734 = vld [vmem:[#allocation8 + $0x60] sm:$0xff]
        %v5735 = vld [vmem:[#allocation8 + $0x68] sm:$0xff]
        %v5736 = vld [vmem:[#allocation8 + $0x70] sm:$0xff]
        %v5737 = vld [vmem:[#allocation8 + $0x78] sm:$0xff]
        %v5738 = vld [vmem:[#allocation8 + $0x80] sm:$0xff]
        %v5739 = vld [vmem:[#allocation8 + $0x88] sm:$0xff]
        %v5740 = vld [vmem:[#allocation8 + $0x90] sm:$0xff]
        %v5741 = vld [vmem:[#allocation8 + $0x98] sm:$0xff]
        %v5742 = vld [vmem:[#allocation8 + $0xa0] sm:$0xff]
        %v5743 = vld [vmem:[#allocation8 + $0xa8] sm:$0xff]
        %v5744 = vld [vmem:[#allocation8 + $0xb0] sm:$0xff]
        %v5745 = vld [vmem:[#allocation8 + $0xb8] sm:$0xff]
        %v5746 = vld [vmem:[#allocation8 + $0xc0] sm:$0xff]
        %v5747 = vld [vmem:[#allocation8 + $0xc8] sm:$0xff]
        %v5748 = vld [vmem:[#allocation8 + $0xd0] sm:$0xff]
        %v5749 = vld [vmem:[#allocation8 + $0xd8] sm:$0xff]
        %v5750 = vld [vmem:[#allocation8 + $0xe0] sm:$0xff]
        %v5751 = vld [vmem:[#allocation8 + $0xe8] sm:$0xff]
        %v5752 = vld [vmem:[#allocation8 + $0xf0] sm:$0xff]
        %v5753 = vld [vmem:[#allocation8 + $0xf8] sm:$0xff]
        %v5754 = vld [vmem:[#allocation10] sm:$0xff]
        %v5755 = vld [vmem:[#allocation10 + $0x8] sm:$0xff]
        %v5756 = vld [vmem:[#allocation10 + $0x10] sm:$0xff]
        %v5757 = vld [vmem:[#allocation10 + $0x18] sm:$0xff]
        %v5758 = vld [vmem:[#allocation10 + $0x20] sm:$0xff]
        %v5759 = vld [vmem:[#allocation10 + $0x28] sm:$0xff]
        %v5760 = vld [vmem:[#allocation10 + $0x30] sm:$0xff]
        %v5761 = vld [vmem:[#allocation10 + $0x38] sm:$0xff]
        %v5762 = vld [vmem:[#allocation10 + $0x40] sm:$0xff]
        %v5763 = vld [vmem:[#allocation10 + $0x48] sm:$0xff]
        %v5764 = vld [vmem:[#allocation10 + $0x50] sm:$0xff]
        %v5765 = vld [vmem:[#allocation10 + $0x58] sm:$0xff]
        %v5766 = vld [vmem:[#allocation10 + $0x60] sm:$0xff]
        %v5767 = vld [vmem:[#allocation10 + $0x68] sm:$0xff]
        %v5768 = vld [vmem:[#allocation10 + $0x70] sm:$0xff]
        %v5769 = vld [vmem:[#allocation10 + $0x78] sm:$0xff]
        %v5770 = vld [vmem:[#allocation10 + $0x80] sm:$0xff]
        %v5771 = vld [vmem:[#allocation10 + $0x88] sm:$0xff]
        %v5772 = vld [vmem:[#allocation10 + $0x90] sm:$0xff]
        %v5773 = vld [vmem:[#allocation10 + $0x98] sm:$0xff]
        %v5774 = vld [vmem:[#allocation10 + $0xa0] sm:$0xff]
        %v5775 = vld [vmem:[#allocation10 + $0xa8] sm:$0xff]
        %v5776 = vld [vmem:[#allocation10 + $0xb0] sm:$0xff]
        %v5777 = vld [vmem:[#allocation10 + $0xb8] sm:$0xff]
        %v5778 = vld [vmem:[#allocation10 + $0xc0] sm:$0xff]
        %v5779 = vld [vmem:[#allocation10 + $0xc8] sm:$0xff]
        %v5780 = vld [vmem:[#allocation10 + $0xd0] sm:$0xff]
        %v5781 = vld [vmem:[#allocation10 + $0xd8] sm:$0xff]
        %v5782 = vld [vmem:[#allocation10 + $0xe0] sm:$0xff]
        %v5783 = vld [vmem:[#allocation10 + $0xe8] sm:$0xff]
        %v5784 = vld [vmem:[#allocation10 + $0xf0] sm:$0xff]
        %v5785 = vld [vmem:[#allocation10 + $0xf8] sm:$0xff]
        %v5786 = vmul.f32 %v4370, %v5722
        %v5787 = vmul.f32 %v4372, %v5723
        %v5788 = vmul.f32 %v4516, %v5724
        %v5789 = vmul.f32 %v4518, %v5725
        %v5790 = vmul.f32 %v4374, %v5726
        %v5791 = vmul.f32 %v4376, %v5727
        %v5792 = vmul.f32 %v4520, %v5728
        %v5793 = vmul.f32 %v4522, %v5729
        %v5794 = vmul.f32 %v4380, %v5730
        %v5795 = vmul.f32 %v4382, %v5731
        %v5796 = vmul.f32 %v4526, %v5732
        %v5797 = vmul.f32 %v4528, %v5733
        %v5798 = vmul.f32 %v4384, %v5734
        %v5799 = vmul.f32 %v4386, %v5735
        %v5800 = vmul.f32 %v4530, %v5736
        %v5801 = vmul.f32 %v4532, %v5737
        %v5802 = vmul.f32 %v4390, %v5738
        %v5803 = vmul.f32 %v4392, %v5739
        %v5804 = vmul.f32 %v4536, %v5740
        %v5805 = vmul.f32 %v4538, %v5741
        %v5806 = vmul.f32 %v4394, %v5742
        %v5807 = vmul.f32 %v4396, %v5743
        %v5808 = vmul.f32 %v4540, %v5744
        %v5809 = vmul.f32 %v4542, %v5745
        %v5810 = vmul.f32 %v4400, %v5746
        %v5811 = vmul.f32 %v4402, %v5747
        %v5812 = vmul.f32 %v4546, %v5748
        %v5813 = vmul.f32 %v4548, %v5749
        %v5814 = vmul.f32 %v4404, %v5750
        %v5815 = vmul.f32 %v4406, %v5751
        %v5816 = vmul.f32 %v4550, %v5752
        %v5817 = vmul.f32 %v4552, %v5753
        %v5818 = vmul.f32 %v5246, %v5754
        %v5819 = vmul.f32 %v5248, %v5755
        %v5820 = vmul.f32 %v5392, %v5756
        %v5821 = vmul.f32 %v5394, %v5757
        %v5822 = vmul.f32 %v5250, %v5758
        %v5823 = vmul.f32 %v5252, %v5759
        %v5824 = vmul.f32 %v5396, %v5760
        %v5825 = vmul.f32 %v5398, %v5761
        %v5826 = vmul.f32 %v5256, %v5762
        %v5827 = vmul.f32 %v5258, %v5763
        %v5828 = vmul.f32 %v5402, %v5764
        %v5829 = vmul.f32 %v5404, %v5765
        %v5830 = vmul.f32 %v5260, %v5766
        %v5831 = vmul.f32 %v5262, %v5767
        %v5832 = vmul.f32 %v5406, %v5768
        %v5833 = vmul.f32 %v5408, %v5769
        %v5834 = vmul.f32 %v5266, %v5770
        %v5835 = vmul.f32 %v5268, %v5771
        %v5836 = vmul.f32 %v5412, %v5772
        %v5837 = vmul.f32 %v5414, %v5773
        %v5838 = vmul.f32 %v5270, %v5774
        %v5839 = vmul.f32 %v5272, %v5775
        %v5840 = vmul.f32 %v5416, %v5776
        %v5841 = vmul.f32 %v5418, %v5777
        %v5842 = vmul.f32 %v5276, %v5778
        %v5843 = vmul.f32 %v5278, %v5779
        %v5844 = vmul.f32 %v5422, %v5780
        %v5845 = vmul.f32 %v5424, %v5781
        %v5846 = vmul.f32 %v5280, %v5782
        %v5847 = vmul.f32 %v5282, %v5783
        %v5848 = vmul.f32 %v5426, %v5784
        %v5849 = vmul.f32 %v5428, %v5785
        %v5850 = vadd.f32 %v5786, %v5818
        %v5851 = vadd.f32 %v5787, %v5819
        %v5852 = vadd.f32 %v5788, %v5820
        %v5853 = vadd.f32 %v5789, %v5821
        %v5854 = vadd.f32 %v5790, %v5822
        %v5855 = vadd.f32 %v5791, %v5823
        %v5856 = vadd.f32 %v5792, %v5824
        %v5857 = vadd.f32 %v5793, %v5825
        %v5858 = vadd.f32 %v5794, %v5826
        %v5859 = vadd.f32 %v5795, %v5827
        %v5860 = vadd.f32 %v5796, %v5828
        %v5861 = vadd.f32 %v5797, %v5829
        %v5862 = vadd.f32 %v5798, %v5830
        %v5863 = vadd.f32 %v5799, %v5831
        %v5864 = vadd.f32 %v5800, %v5832
        %v5865 = vadd.f32 %v5801, %v5833
        %v5866 = vadd.f32 %v5802, %v5834
        %v5867 = vadd.f32 %v5803, %v5835
        %v5868 = vadd.f32 %v5804, %v5836
        %v5869 = vadd.f32 %v5805, %v5837
        %v5870 = vadd.f32 %v5806, %v5838
        %v5871 = vadd.f32 %v5807, %v5839
        %v5872 = vadd.f32 %v5808, %v5840
        %v5873 = vadd.f32 %v5809, %v5841
        %v5874 = vadd.f32 %v5810, %v5842
        %v5875 = vadd.f32 %v5811, %v5843
        %v5876 = vadd.f32 %v5812, %v5844
        %v5877 = vadd.f32 %v5813, %v5845
        %v5878 = vadd.f32 %v5814, %v5846
        %v5879 = vadd.f32 %v5815, %v5847
        %v5880 = vadd.f32 %v5816, %v5848
        %v5881 = vadd.f32 %v5817, %v5849
        %v5882 = vmul.f32 %v4662, %v5722
        %v5883 = vmul.f32 %v4664, %v5723
        %v5884 = vmul.f32 %v4808, %v5724
        %v5885 = vmul.f32 %v4810, %v5725
        %v5886 = vmul.f32 %v4666, %v5726
        %v5887 = vmul.f32 %v4668, %v5727
        %v5888 = vmul.f32 %v4812, %v5728
        %v5889 = vmul.f32 %v4814, %v5729
        %v5890 = vmul.f32 %v4672, %v5730
        %v5891 = vmul.f32 %v4674, %v5731
        %v5892 = vmul.f32 %v4818, %v5732
        %v5893 = vmul.f32 %v4820, %v5733
        %v5894 = vmul.f32 %v4676, %v5734
        %v5895 = vmul.f32 %v4678, %v5735
        %v5896 = vmul.f32 %v4822, %v5736
        %v5897 = vmul.f32 %v4824, %v5737
        %v5898 = vmul.f32 %v4682, %v5738
        %v5899 = vmul.f32 %v4684, %v5739
        %v5900 = vmul.f32 %v4828, %v5740
        %v5901 = vmul.f32 %v4830, %v5741
        %v5902 = vmul.f32 %v4686, %v5742
        %v5903 = vmul.f32 %v4688, %v5743
        %v5904 = vmul.f32 %v4832, %v5744
        %v5905 = vmul.f32 %v4834, %v5745
        %v5906 = vmul.f32 %v4692, %v5746
        %v5907 = vmul.f32 %v4694, %v5747
        %v5908 = vmul.f32 %v4838, %v5748
        %v5909 = vmul.f32 %v4840, %v5749
        %v5910 = vmul.f32 %v4696, %v5750
        %v5911 = vmul.f32 %v4698, %v5751
        %v5912 = vmul.f32 %v4842, %v5752
        %v5913 = vmul.f32 %v4844, %v5753
        %v5914 = vmul.f32 %v5538, %v5754
        %v5915 = vmul.f32 %v5540, %v5755
        %v5916 = vmul.f32 %v5684, %v5756
        %v5917 = vmul.f32 %v5686, %v5757
        %v5918 = vmul.f32 %v5542, %v5758
        %v5919 = vmul.f32 %v5544, %v5759
        %v5920 = vmul.f32 %v5688, %v5760
        %v5921 = vmul.f32 %v5690, %v5761
        %v5922 = vmul.f32 %v5548, %v5762
        %v5923 = vmul.f32 %v5550, %v5763
        %v5924 = vmul.f32 %v5694, %v5764
        %v5925 = vmul.f32 %v5696, %v5765
        %v5926 = vmul.f32 %v5552, %v5766
        %v5927 = vmul.f32 %v5554, %v5767
        %v5928 = vmul.f32 %v5698, %v5768
        %v5929 = vmul.f32 %v5700, %v5769
        %v5930 = vmul.f32 %v5558, %v5770
        %v5931 = vmul.f32 %v5560, %v5771
        %v5932 = vmul.f32 %v5704, %v5772
        %v5933 = vmul.f32 %v5706, %v5773
        %v5934 = vmul.f32 %v5562, %v5774
        %v5935 = vmul.f32 %v5564, %v5775
        %v5936 = vmul.f32 %v5708, %v5776
        %v5937 = vmul.f32 %v5710, %v5777
        %v5938 = vmul.f32 %v5568, %v5778
        %v5939 = vmul.f32 %v5570, %v5779
        %v5940 = vmul.f32 %v5714, %v5780
        %v5941 = vmul.f32 %v5716, %v5781
        %v5942 = vmul.f32 %v5572, %v5782
        %v5943 = vmul.f32 %v5574, %v5783
        %v5944 = vmul.f32 %v5718, %v5784
        %v5945 = vmul.f32 %v5720, %v5785
        %v5946 = vadd.f32 %v5882, %v5914
        %v5947 = vadd.f32 %v5883, %v5915
        %v5948 = vadd.f32 %v5884, %v5916
        %v5949 = vadd.f32 %v5885, %v5917
        %v5950 = vadd.f32 %v5886, %v5918
        %v5951 = vadd.f32 %v5887, %v5919
        %v5952 = vadd.f32 %v5888, %v5920
        %v5953 = vadd.f32 %v5889, %v5921
        %v5954 = vadd.f32 %v5890, %v5922
        %v5955 = vadd.f32 %v5891, %v5923
        %v5956 = vadd.f32 %v5892, %v5924
        %v5957 = vadd.f32 %v5893, %v5925
        %v5958 = vadd.f32 %v5894, %v5926
        %v5959 = vadd.f32 %v5895, %v5927
        %v5960 = vadd.f32 %v5896, %v5928
        %v5961 = vadd.f32 %v5897, %v5929
        %v5962 = vadd.f32 %v5898, %v5930
        %v5963 = vadd.f32 %v5899, %v5931
        %v5964 = vadd.f32 %v5900, %v5932
        %v5965 = vadd.f32 %v5901, %v5933
        %v5966 = vadd.f32 %v5902, %v5934
        %v5967 = vadd.f32 %v5903, %v5935
        %v5968 = vadd.f32 %v5904, %v5936
        %v5969 = vadd.f32 %v5905, %v5937
        %v5970 = vadd.f32 %v5906, %v5938
        %v5971 = vadd.f32 %v5907, %v5939
        %v5972 = vadd.f32 %v5908, %v5940
        %v5973 = vadd.f32 %v5909, %v5941
        %v5974 = vadd.f32 %v5910, %v5942
        %v5975 = vadd.f32 %v5911, %v5943
        %v5976 = vadd.f32 %v5912, %v5944
        %v5977 = vadd.f32 %v5913, %v5945
        %v5978 = vpack.c.bf16 %v5854, %v5850
        %v5979 = vpack.c.bf16 %v5855, %v5851
        %v5980 = vpack.c.bf16 %v5856, %v5852
        %v5981 = vpack.c.bf16 %v5857, %v5853
        %v5982 = vpack.c.bf16 %v5862, %v5858
        %v5983 = vpack.c.bf16 %v5863, %v5859
        %v5984 = vpack.c.bf16 %v5864, %v5860
        %v5985 = vpack.c.bf16 %v5865, %v5861
        %v5986 = vpack.c.bf16 %v5870, %v5866
        %v5987 = vpack.c.bf16 %v5871, %v5867
        %v5988 = vpack.c.bf16 %v5872, %v5868
        %v5989 = vpack.c.bf16 %v5873, %v5869
        %v5990 = vpack.c.bf16 %v5878, %v5874
        %v5991 = vpack.c.bf16 %v5879, %v5875
        %v5992 = vpack.c.bf16 %v5880, %v5876
        %v5993 = vpack.c.bf16 %v5881, %v5877
        %v5994 = vpack.c.bf16 %v5950, %v5946
        %v5995 = vpack.c.bf16 %v5951, %v5947
        %v5996 = vpack.c.bf16 %v5952, %v5948
        %v5997 = vpack.c.bf16 %v5953, %v5949
        %v5998 = vpack.c.bf16 %v5958, %v5954
        %v5999 = vpack.c.bf16 %v5959, %v5955
        %v6000 = vpack.c.bf16 %v5960, %v5956
        %v6001 = vpack.c.bf16 %v5961, %v5957
        %v6002 = vpack.c.bf16 %v5966, %v5962
        %v6003 = vpack.c.bf16 %v5967, %v5963
        %v6004 = vpack.c.bf16 %v5968, %v5964
        %v6005 = vpack.c.bf16 %v5969, %v5965
        %v6006 = vpack.c.bf16 %v5974, %v5970
        %v6007 = vpack.c.bf16 %v5975, %v5971
        %v6008 = vpack.c.bf16 %v5976, %v5972
        %v6009 = vpack.c.bf16 %v5977, %v5973
        %v6010 = vpack.c.bf16 %v4958, %v4954
        %v6011 = vpack.c.bf16 %v4960, %v4956
        %v6012 = vpack.c.bf16 %v5104, %v5100
        %v6013 = vpack.c.bf16 %v5106, %v5102
        %v6014 = vpack.c.bf16 %v4968, %v4964
        %v6015 = vpack.c.bf16 %v4970, %v4966
        %v6016 = vpack.c.bf16 %v5114, %v5110
        %v6017 = vpack.c.bf16 %v5116, %v5112
        %v6018 = vpack.c.bf16 %v4978, %v4974
        %v6019 = vpack.c.bf16 %v4980, %v4976
        %v6020 = vpack.c.bf16 %v5124, %v5120
        %v6021 = vpack.c.bf16 %v5126, %v5122
        %v6022 = vpack.c.bf16 %v4988, %v4984
        %v6023 = vpack.c.bf16 %v4990, %v4986
        %v6024 = vpack.c.bf16 %v5134, %v5130
        %v6025 = vpack.c.bf16 %v5136, %v5132
        %v6026 = vlaneseq
        %v6027 = vshrl.u32 %v6026, 7
        %v6028 = vadd.s32 %v6027, 8
        %v6029 = vadd.s32 %v6027, 16
        %v6030 = vadd.s32 %v6027, 24
        %v6031 = vadd.s32 %v6027, 32
        %v6032 = vadd.s32 %v6027, 40
        %v6033 = vadd.s32 %v6027, 48
        %v6034 = vadd.s32 %v6027, 56
        %v6035 = vlaneseq
        %v6036 = vand.u32 %v6035, 127
        %vm6037 = vcmp.gt.s32.totalorder %v6036, %v6027
        %vm6038 = vcmp.gt.s32.totalorder %v6036, %v6028
        %vm6039 = vcmp.gt.s32.totalorder %v6036, %v6029
        %vm6040 = vcmp.gt.s32.totalorder %v6036, %v6030
        %vm6041 = vcmp.gt.s32.totalorder %v6036, %v6031
        %vm6042 = vcmp.gt.s32.totalorder %v6036, %v6032
        %vm6043 = vcmp.gt.s32.totalorder %v6036, %v6033
        %vm6044 = vcmp.gt.s32.totalorder %v6036, %v6034
        %v6045 = vsel %vm6037, -1e+30, 0.0
        %v6046 = vsel %vm6038, -1e+30, 0.0
        %v6047 = vsel %vm6039, -1e+30, 0.0
        %v6048 = vsel %vm6040, -1e+30, 0.0
        %v6049 = vsel %vm6041, -1e+30, 0.0
        %v6050 = vsel %vm6042, -1e+30, 0.0
        %v6051 = vsel %vm6043, -1e+30, 0.0
        %v6052 = vsel %vm6044, -1e+30, 0.0
        %6053 = vmatprep.subr.bf16.mxu0 0
        %6054 = vmatpush1.bf16.xpose.msra.mxu0 %v5994
        %6055 = vmatprep.subr.bf16.mxu0 0
        %6056 = vmatpush1.bf16.xpose.msra.mxu0 %v5998
        %6057 = vmatprep.subr.bf16.mxu0 0
        %6058 = vmatpush1.bf16.xpose.msra.mxu0 %v6002
        %6059 = vmatprep.subr.bf16.mxu0 0
        %6060 = vmatpush1.bf16.xpose.msra.mxu0 %v6006
        %6061 = vmatprep.subr.bf16.mxu0 0
        %6062 = vmatpush1.bf16.xpose.msra.mxu0 0
        %6063 = vmatprep.subr.bf16.mxu0 0
        %6064 = vmatpush1.bf16.xpose.msra.mxu0 0
        %6065 = vmatprep.subr.bf16.mxu0 0
        %6066 = vmatpush1.bf16.xpose.msra.mxu0 0
        %6067 = vmatprep.subr.bf16.mxu0 0
        %6068 = vmatpush1.bf16.xpose.msra.mxu0 0
        %6069 = vmatprep.subr.bf16.mxu0 0
        %6070 = vmatpush1.bf16.xpose.msra.mxu0 0
        %6071 = vmatprep.subr.bf16.mxu0 0
        %6072 = vmatpush1.bf16.xpose.msra.mxu0 0
        %6073 = vmatprep.subr.bf16.mxu0 0
        %6074 = vmatpush1.bf16.xpose.msra.mxu0 0
        %6075 = vmatprep.subr.bf16.mxu0 0
        %6076 = vmatpush1.bf16.xpose.msra.mxu0 0
        %6077 = vmatprep.subr.bf16.mxu0 0
        %6078 = vmatpush1.bf16.xpose.msra.mxu0 0
        %6079 = vmatprep.subr.bf16.mxu0 0
        %6080 = vmatpush1.bf16.xpose.msra.mxu0 0
        %6081 = vmatprep.subr.bf16.mxu0 0
        %6082 = vmatpush1.bf16.xpose.msra.mxu0 0
        %6083 = vmatprep.subr.bf16.mxu0 0
        %6084 = vmatpush1.bf16.xpose.msra.mxu0 0
        %6085 = vmatprep.mubr.bf16.mxu0 0
        %6086 = vmatmul.mubr.bf16.gmra.mrb[0].mxu0 %v5978
        %v6087 = vpop.f32.mrb[0].mxu0
        %v6088 = vadd.f32 %v6045, %v6087
        %v6089 = vpop.f32.mrb[0].mxu0
        %v6090 = vpop.f32.mrb[0].mxu0
        %v6091 = vadd.f32 %v6046, %v6090
        %v6092 = vpop.f32.mrb[0].mxu0
        %6093 = vmatprep.mubr.bf16.mxu0 0
        %6094 = vmatmul.mubr.bf16.gmra.mrb[0].mxu0 %v5982
        %v6095 = vpop.f32.mrb[0].mxu0
        %v6096 = vadd.f32 %v6047, %v6095
        %v6097 = vpop.f32.mrb[0].mxu0
        %v6098 = vpop.f32.mrb[0].mxu0
        %v6099 = vadd.f32 %v6048, %v6098
        %v6100 = vpop.f32.mrb[0].mxu0
        %6101 = vmatprep.mubr.bf16.mxu0 0
        %6102 = vmatmul.mubr.bf16.gmra.mrb[0].mxu0 %v5986
        %v6103 = vpop.f32.mrb[0].mxu0
        %v6104 = vadd.f32 %v6049, %v6103
        %v6105 = vpop.f32.mrb[0].mxu0
        %v6106 = vpop.f32.mrb[0].mxu0
        %v6107 = vadd.f32 %v6050, %v6106
        %v6108 = vpop.f32.mrb[0].mxu0
        %6109 = vmatprep.mubr.bf16.mxu0 0
        %6110 = vmatmul.mubr.bf16.gmra.mrb[0].mxu0 %v5990
        %v6111 = vpop.f32.mrb[0].mxu0
        %v6112 = vadd.f32 %v6051, %v6111
        %v6113 = vpop.f32.mrb[0].mxu0
        %v6114 = vpop.f32.mrb[0].mxu0
        %v6115 = vadd.f32 %v6052, %v6114
        %v6116 = vpop.f32.mrb[0].mxu0
        %6117 = vdwg.mxu0
        %vm6118 = vcmask 523264
        %v6119 = vsel %vm6118, %v6088, -inf
        %6120 = vmax.xlane.f32.xlu0 %v6119
        %v6121 = vpop.xlane.xlu0 %6120
        %v6122 = vsel %vm6118, %v6091, -inf
        %6123 = vmax.xlane.f32.xlu0 %v6122
        %v6124 = vpop.xlane.xlu0 %6123
        %v6125 = vsel %vm6118, %v6096, -inf
        %6126 = vmax.xlane.f32.xlu0 %v6125
        %v6127 = vpop.xlane.xlu0 %6126
        %v6128 = vsel %vm6118, %v6099, -inf
        %6129 = vmax.xlane.f32.xlu0 %v6128
        %v6130 = vpop.xlane.xlu0 %6129
        %v6131 = vsel %vm6118, %v6104, -inf
        %6132 = vmax.xlane.f32.xlu0 %v6131
        %v6133 = vpop.xlane.xlu0 %6132
        %v6134 = vsel %vm6118, %v6107, -inf
        %6135 = vmax.xlane.f32.xlu0 %v6134
        %v6136 = vpop.xlane.xlu0 %6135
        %v6137 = vsel %vm6118, %v6112, -inf
        %6138 = vmax.xlane.f32.xlu0 %v6137
        %v6139 = vpop.xlane.xlu0 %6138
        %v6140 = vsel %vm6118, %v6115, -inf
        %6141 = vmax.xlane.f32.xlu0 %v6140
        %v6142 = vpop.xlane.xlu0 %6141
        %v6143 = vsub.f32 %v6088, %v6121
        %v6144 = vsub.f32 %v6091, %v6124
        %v6145 = vsub.f32 %v6096, %v6127
        %v6146 = vsub.f32 %v6099, %v6130
        %v6147 = vsub.f32 %v6104, %v6133
        %v6148 = vsub.f32 %v6107, %v6136
        %v6149 = vsub.f32 %v6112, %v6139
        %v6150 = vsub.f32 %v6115, %v6142
        %v6151 = vmul.f32 %v6143, 1.442695
        %v6152 = vpow.pop %v6151
        %v6153 = vmul.f32 %v6144, 1.442695
        %v6154 = vpow.pop %v6153
        %v6155 = vmul.f32 %v6145, 1.442695
        %v6156 = vpow.pop %v6155
        %v6157 = vmul.f32 %v6146, 1.442695
        %v6158 = vpow.pop %v6157
        %v6159 = vmul.f32 %v6147, 1.442695
        %v6160 = vpow.pop %v6159
        %v6161 = vmul.f32 %v6148, 1.442695
        %v6162 = vpow.pop %v6161
        %v6163 = vmul.f32 %v6149, 1.442695
        %v6164 = vpow.pop %v6163
        %v6165 = vmul.f32 %v6150, 1.442695
        %v6166 = vpow.pop %v6165
        %v6167 = vsel %vm6118, %v6152, 0.0
        %6168 = vadd.xlane.f32.xlu0 %v6167
        %v6169 = vpop.xlane.xlu0 %6168
        %v6170 = vsel %vm6118, %v6154, 0.0
        %6171 = vadd.xlane.f32.xlu0 %v6170
        %v6172 = vpop.xlane.xlu0 %6171
        %v6173 = vsel %vm6118, %v6156, 0.0
        %6174 = vadd.xlane.f32.xlu0 %v6173
        %v6175 = vpop.xlane.xlu0 %6174
        %v6176 = vsel %vm6118, %v6158, 0.0
        %6177 = vadd.xlane.f32.xlu0 %v6176
        %v6178 = vpop.xlane.xlu0 %6177
        %v6179 = vsel %vm6118, %v6160, 0.0
        %6180 = vadd.xlane.f32.xlu0 %v6179
        %v6181 = vpop.xlane.xlu0 %6180
        %v6182 = vsel %vm6118, %v6162, 0.0
        %6183 = vadd.xlane.f32.xlu0 %v6182
        %v6184 = vpop.xlane.xlu0 %6183
        %v6185 = vsel %vm6118, %v6164, 0.0
        %6186 = vadd.xlane.f32.xlu0 %v6185
        %v6187 = vpop.xlane.xlu0 %6186
        %v6188 = vsel %vm6118, %v6166, 0.0
        %6189 = vadd.xlane.f32.xlu0 %v6188
        %v6190 = vpop.xlane.xlu0 %6189
        %v6191 = vrcp.pop %v6169
        %v6192 = vrcp.pop %v6172
        %v6193 = vrcp.pop %v6175
        %v6194 = vrcp.pop %v6178
        %v6195 = vrcp.pop %v6181
        %v6196 = vrcp.pop %v6184
        %v6197 = vrcp.pop %v6187
        %v6198 = vrcp.pop %v6190
        %v6199 = vmul.f32 %v6152, %v6191
        %v6200 = vmul.f32 %v6154, %v6192
        %v6201 = vmul.f32 %v6156, %v6193
        %v6202 = vmul.f32 %v6158, %v6194
        %v6203 = vmul.f32 %v6160, %v6195
        %v6204 = vmul.f32 %v6162, %v6196
        %v6205 = vmul.f32 %v6164, %v6197
        %v6206 = vmul.f32 %v6166, %v6198
        %v6207 = vpack.c.bf16 %v6200, %v6199
        %v6208 = vpack.c.bf16 %v6202, %v6201
        %v6209 = vpack.c.bf16 %v6204, %v6203
        %v6210 = vpack.c.bf16 %v6206, %v6205
        %v6212 = vsel %vm6118, %v6207, 0
        %v6215 = vsel %vm6118, %v6208, 0
        %v6218 = vsel %vm6118, %v6209, 0
        %v6221 = vsel %vm6118, %v6210, 0
        %6223 = vmatprep.subr.bf16.mxu0 0
        %6224 = vmatpush1.bf16.msra.mxu0 %v6010
        %6225 = vmatprep.subr.bf16.mxu0 0
        %6226 = vmatpush1.bf16.msra.mxu0 %v6014
        %6227 = vmatprep.subr.bf16.mxu0 0
        %6228 = vmatpush1.bf16.msra.mxu0 %v6018
        %6229 = vmatprep.subr.bf16.mxu0 0
        %6230 = vmatpush1.bf16.msra.mxu0 %v6022
        %6231 = vmatprep.subr.bf16.mxu0 0
        %6232 = vmatpush1.bf16.msra.mxu0 0
        %6233 = vmatprep.subr.bf16.mxu0 0
        %6234 = vmatpush1.bf16.msra.mxu0 0
        %6235 = vmatprep.subr.bf16.mxu0 0
        %6236 = vmatpush1.bf16.msra.mxu0 0
        %6237 = vmatprep.subr.bf16.mxu0 0
        %6238 = vmatpush1.bf16.msra.mxu0 0
        %6239 = vmatprep.subr.bf16.mxu0 0
        %6240 = vmatpush1.bf16.msra.mxu0 0
        %6241 = vmatprep.subr.bf16.mxu0 0
        %6242 = vmatpush1.bf16.msra.mxu0 0
        %6243 = vmatprep.subr.bf16.mxu0 0
        %6244 = vmatpush1.bf16.msra.mxu0 0
        %6245 = vmatprep.subr.bf16.mxu0 0
        %6246 = vmatpush1.bf16.msra.mxu0 0
        %6247 = vmatprep.subr.bf16.mxu0 0
        %6248 = vmatpush1.bf16.msra.mxu0 0
        %6249 = vmatprep.subr.bf16.mxu0 0
        %6250 = vmatpush1.bf16.msra.mxu0 0
        %6251 = vmatprep.subr.bf16.mxu0 0
        %6252 = vmatpush1.bf16.msra.mxu0 0
        %6253 = vmatprep.subr.bf16.mxu0 0
        %6254 = vmatpush1.bf16.msra.mxu0 0
        %6255 = vmatprep.mubr.bf16.mxu0 0
        %6256 = vmatmul.mubr.bf16.gmra.mrb[0].mxu0 %v6212
        %v6257 = vpop.f32.mrb[0].mxu0
        %v6258 = vadd.f32 0.0, %v6257
        %v6259 = vpop.f32.mrb[0].mxu0
        %v6260 = vpop.f32.mrb[0].mxu0
        %v6261 = vadd.f32 0.0, %v6260
        %v6262 = vpop.f32.mrb[0].mxu0
        %6263 = vmatprep.mubr.bf16.mxu0 0
        %6264 = vmatmul.mubr.bf16.gmra.mrb[0].mxu0 %v6215
        %v6265 = vpop.f32.mrb[0].mxu0
        %v6266 = vadd.f32 0.0, %v6265
        %v6267 = vpop.f32.mrb[0].mxu0
        %v6268 = vpop.f32.mrb[0].mxu0
        %v6269 = vadd.f32 0.0, %v6268
        %v6270 = vpop.f32.mrb[0].mxu0
        %6271 = vmatprep.mubr.bf16.mxu0 0
        %6272 = vmatmul.mubr.bf16.gmra.mrb[0].mxu0 %v6218
        %v6273 = vpop.f32.mrb[0].mxu0
        %v6274 = vadd.f32 0.0, %v6273
        %v6275 = vpop.f32.mrb[0].mxu0
        %v6276 = vpop.f32.mrb[0].mxu0
        %v6277 = vadd.f32 0.0, %v6276
        %v6278 = vpop.f32.mrb[0].mxu0
        %6279 = vmatprep.mubr.bf16.mxu0 0
        %6280 = vmatmul.mubr.bf16.gmra.mrb[0].mxu0 %v6221
        %v6281 = vpop.f32.mrb[0].mxu0
        %v6282 = vadd.f32 0.0, %v6281
        %v6283 = vpop.f32.mrb[0].mxu0
        %v6284 = vpop.f32.mrb[0].mxu0
        %v6285 = vadd.f32 0.0, %v6284
        %v6286 = vpop.f32.mrb[0].mxu0
        %6287 = vdwg.mxu0
        %6288 = vmatprep.subr.bf16.mxu0 0
        %6289 = vmatpush1.bf16.xpose.msra.mxu0 %v5995
        %6290 = vmatprep.subr.bf16.mxu0 0
        %6291 = vmatpush1.bf16.xpose.msra.mxu0 %v5999
        %6292 = vmatprep.subr.bf16.mxu0 0
        %6293 = vmatpush1.bf16.xpose.msra.mxu0 %v6003
        %6294 = vmatprep.subr.bf16.mxu0 0
        %6295 = vmatpush1.bf16.xpose.msra.mxu0 %v6007
        %6296 = vmatprep.subr.bf16.mxu0 0
        %6297 = vmatpush1.bf16.xpose.msra.mxu0 0
        %6298 = vmatprep.subr.bf16.mxu0 0
        %6299 = vmatpush1.bf16.xpose.msra.mxu0 0
        %6300 = vmatprep.subr.bf16.mxu0 0
        %6301 = vmatpush1.bf16.xpose.msra.mxu0 0
        %6302 = vmatprep.subr.bf16.mxu0 0
        %6303 = vmatpush1.bf16.xpose.msra.mxu0 0
        %6304 = vmatprep.subr.bf16.mxu0 0
        %6305 = vmatpush1.bf16.xpose.msra.mxu0 0
        %6306 = vmatprep.subr.bf16.mxu0 0
        %6307 = vmatpush1.bf16.xpose.msra.mxu0 0
        %6308 = vmatprep.subr.bf16.mxu0 0
        %6309 = vmatpush1.bf16.xpose.msra.mxu0 0
        %6310 = vmatprep.subr.bf16.mxu0 0
        %6311 = vmatpush1.bf16.xpose.msra.mxu0 0
        %6312 = vmatprep.subr.bf16.mxu0 0
        %6313 = vmatpush1.bf16.xpose.msra.mxu0 0
        %6314 = vmatprep.subr.bf16.mxu0 0
        %6315 = vmatpush1.bf16.xpose.msra.mxu0 0
        %6316 = vmatprep.subr.bf16.mxu0 0
        %6317 = vmatpush1.bf16.xpose.msra.mxu0 0
        %6318 = vmatprep.subr.bf16.mxu0 0
        %6319 = vmatpush1.bf16.xpose.msra.mxu0 0
        %6320 = vmatprep.mubr.bf16.mxu0 0
        %6321 = vmatmul.mubr.bf16.gmra.mrb[0].mxu0 %v5979
        %v6322 = vpop.f32.mrb[0].mxu0
        %v6323 = vadd.f32 %v6045, %v6322
        %v6324 = vpop.f32.mrb[0].mxu0
        %v6325 = vpop.f32.mrb[0].mxu0
        %v6326 = vadd.f32 %v6046, %v6325
        %v6327 = vpop.f32.mrb[0].mxu0
        %6328 = vmatprep.mubr.bf16.mxu0 0
        %6329 = vmatmul.mubr.bf16.gmra.mrb[0].mxu0 %v5983
        %v6330 = vpop.f32.mrb[0].mxu0
        %v6331 = vadd.f32 %v6047, %v6330
        %v6332 = vpop.f32.mrb[0].mxu0
        %v6333 = vpop.f32.mrb[0].mxu0
        %v6334 = vadd.f32 %v6048, %v6333
        %v6335 = vpop.f32.mrb[0].mxu0
        %6336 = vmatprep.mubr.bf16.mxu0 0
        %6337 = vmatmul.mubr.bf16.gmra.mrb[0].mxu0 %v5987
        %v6338 = vpop.f32.mrb[0].mxu0
        %v6339 = vadd.f32 %v6049, %v6338
        %v6340 = vpop.f32.mrb[0].mxu0
        %v6341 = vpop.f32.mrb[0].mxu0
        %v6342 = vadd.f32 %v6050, %v6341
        %v6343 = vpop.f32.mrb[0].mxu0
        %6344 = vmatprep.mubr.bf16.mxu0 0
        %6345 = vmatmul.mubr.bf16.gmra.mrb[0].mxu0 %v5991
        %v6346 = vpop.f32.mrb[0].mxu0
        %v6347 = vadd.f32 %v6051, %v6346
        %v6348 = vpop.f32.mrb[0].mxu0
        %v6349 = vpop.f32.mrb[0].mxu0
        %v6350 = vadd.f32 %v6052, %v6349
        %v6351 = vpop.f32.mrb[0].mxu0
        %6352 = vdwg.mxu0
        %v6353 = vsel %vm6118, %v6323, -inf
        %6354 = vmax.xlane.f32.xlu0 %v6353
        %v6355 = vpop.xlane.xlu0 %6354
        %v6356 = vsel %vm6118, %v6326, -inf
        %6357 = vmax.xlane.f32.xlu0 %v6356
        %v6358 = vpop.xlane.xlu0 %6357
        %v6359 = vsel %vm6118, %v6331, -inf
        %6360 = vmax.xlane.f32.xlu0 %v6359
        %v6361 = vpop.xlane.xlu0 %6360
        %v6362 = vsel %vm6118, %v6334, -inf
        %6363 = vmax.xlane.f32.xlu0 %v6362
        %v6364 = vpop.xlane.xlu0 %6363
        %v6365 = vsel %vm6118, %v6339, -inf
        %6366 = vmax.xlane.f32.xlu0 %v6365
        %v6367 = vpop.xlane.xlu0 %6366
        %v6368 = vsel %vm6118, %v6342, -inf
        %6369 = vmax.xlane.f32.xlu0 %v6368
        %v6370 = vpop.xlane.xlu0 %6369
        %v6371 = vsel %vm6118, %v6347, -inf
        %6372 = vmax.xlane.f32.xlu0 %v6371
        %v6373 = vpop.xlane.xlu0 %6372
        %v6374 = vsel %vm6118, %v6350, -inf
        %6375 = vmax.xlane.f32.xlu0 %v6374
        %v6376 = vpop.xlane.xlu0 %6375
        %v6377 = vsub.f32 %v6323, %v6355
        %v6378 = vsub.f32 %v6326, %v6358
        %v6379 = vsub.f32 %v6331, %v6361
        %v6380 = vsub.f32 %v6334, %v6364
        %v6381 = vsub.f32 %v6339, %v6367
        %v6382 = vsub.f32 %v6342, %v6370
        %v6383 = vsub.f32 %v6347, %v6373
        %v6384 = vsub.f32 %v6350, %v6376
        %v6385 = vmul.f32 %v6377, 1.442695
        %v6386 = vpow.pop %v6385
        %v6387 = vmul.f32 %v6378, 1.442695
        %v6388 = vpow.pop %v6387
        %v6389 = vmul.f32 %v6379, 1.442695
        %v6390 = vpow.pop %v6389
        %v6391 = vmul.f32 %v6380, 1.442695
        %v6392 = vpow.pop %v6391
        %v6393 = vmul.f32 %v6381, 1.442695
        %v6394 = vpow.pop %v6393
        %v6395 = vmul.f32 %v6382, 1.442695
        %v6396 = vpow.pop %v6395
        %v6397 = vmul.f32 %v6383, 1.442695
        %v6398 = vpow.pop %v6397
        %v6399 = vmul.f32 %v6384, 1.442695
        %v6400 = vpow.pop %v6399
        %v6401 = vsel %vm6118, %v6386, 0.0
        %6402 = vadd.xlane.f32.xlu0 %v6401
        %v6403 = vpop.xlane.xlu0 %6402
        %v6404 = vsel %vm6118, %v6388, 0.0
        %6405 = vadd.xlane.f32.xlu0 %v6404
        %v6406 = vpop.xlane.xlu0 %6405
        %v6407 = vsel %vm6118, %v6390, 0.0
        %6408 = vadd.xlane.f32.xlu0 %v6407
        %v6409 = vpop.xlane.xlu0 %6408
        %v6410 = vsel %vm6118, %v6392, 0.0
        %6411 = vadd.xlane.f32.xlu0 %v6410
        %v6412 = vpop.xlane.xlu0 %6411
        %v6413 = vsel %vm6118, %v6394, 0.0
        %6414 = vadd.xlane.f32.xlu0 %v6413
        %v6415 = vpop.xlane.xlu0 %6414
        %v6416 = vsel %vm6118, %v6396, 0.0
        %6417 = vadd.xlane.f32.xlu0 %v6416
        %v6418 = vpop.xlane.xlu0 %6417
        %v6419 = vsel %vm6118, %v6398, 0.0
        %6420 = vadd.xlane.f32.xlu0 %v6419
        %v6421 = vpop.xlane.xlu0 %6420
        %v6422 = vsel %vm6118, %v6400, 0.0
        %6423 = vadd.xlane.f32.xlu0 %v6422
        %v6424 = vpop.xlane.xlu0 %6423
        %v6425 = vrcp.pop %v6403
        %v6426 = vrcp.pop %v6406
        %v6427 = vrcp.pop %v6409
        %v6428 = vrcp.pop %v6412
        %v6429 = vrcp.pop %v6415
        %v6430 = vrcp.pop %v6418
        %v6431 = vrcp.pop %v6421
        %v6432 = vrcp.pop %v6424
        %v6433 = vmul.f32 %v6386, %v6425
        %v6434 = vmul.f32 %v6388, %v6426
        %v6435 = vmul.f32 %v6390, %v6427
        %v6436 = vmul.f32 %v6392, %v6428
        %v6437 = vmul.f32 %v6394, %v6429
        %v6438 = vmul.f32 %v6396, %v6430
        %v6439 = vmul.f32 %v6398, %v6431
        %v6440 = vmul.f32 %v6400, %v6432
        %v6441 = vpack.c.bf16 %v6434, %v6433
        %v6442 = vpack.c.bf16 %v6436, %v6435
        %v6443 = vpack.c.bf16 %v6438, %v6437
        %v6444 = vpack.c.bf16 %v6440, %v6439
        %v6446 = vsel %vm6118, %v6441, 0
        %v6449 = vsel %vm6118, %v6442, 0
        %v6452 = vsel %vm6118, %v6443, 0
        %v6455 = vsel %vm6118, %v6444, 0
        %6457 = vmatprep.subr.bf16.mxu0 0
        %6458 = vmatpush1.bf16.msra.mxu0 %v6011
        %6459 = vmatprep.subr.bf16.mxu0 0
        %6460 = vmatpush1.bf16.msra.mxu0 %v6015
        %6461 = vmatprep.subr.bf16.mxu0 0
        %6462 = vmatpush1.bf16.msra.mxu0 %v6019
        %6463 = vmatprep.subr.bf16.mxu0 0
        %6464 = vmatpush1.bf16.msra.mxu0 %v6023
        %6465 = vmatprep.subr.bf16.mxu0 0
        %6466 = vmatpush1.bf16.msra.mxu0 0
        %6467 = vmatprep.subr.bf16.mxu0 0
        %6468 = vmatpush1.bf16.msra.mxu0 0
        %6469 = vmatprep.subr.bf16.mxu0 0
        %6470 = vmatpush1.bf16.msra.mxu0 0
        %6471 = vmatprep.subr.bf16.mxu0 0
        %6472 = vmatpush1.bf16.msra.mxu0 0
        %6473 = vmatprep.subr.bf16.mxu0 0
        %6474 = vmatpush1.bf16.msra.mxu0 0
        %6475 = vmatprep.subr.bf16.mxu0 0
        %6476 = vmatpush1.bf16.msra.mxu0 0
        %6477 = vmatprep.subr.bf16.mxu0 0
        %6478 = vmatpush1.bf16.msra.mxu0 0
        %6479 = vmatprep.subr.bf16.mxu0 0
        %6480 = vmatpush1.bf16.msra.mxu0 0
        %6481 = vmatprep.subr.bf16.mxu0 0
        %6482 = vmatpush1.bf16.msra.mxu0 0
        %6483 = vmatprep.subr.bf16.mxu0 0
        %6484 = vmatpush1.bf16.msra.mxu0 0
        %6485 = vmatprep.subr.bf16.mxu0 0
        %6486 = vmatpush1.bf16.msra.mxu0 0
        %6487 = vmatprep.subr.bf16.mxu0 0
        %6488 = vmatpush1.bf16.msra.mxu0 0
        %6489 = vmatprep.mubr.bf16.mxu0 0
        %6490 = vmatmul.mubr.bf16.gmra.mrb[0].mxu0 %v6446
        %v6491 = vpop.f32.mrb[0].mxu0
        %v6492 = vadd.f32 0.0, %v6491
        %v6493 = vpop.f32.mrb[0].mxu0
        %v6494 = vpop.f32.mrb[0].mxu0
        %v6495 = vadd.f32 0.0, %v6494
        %v6496 = vpop.f32.mrb[0].mxu0
        %6497 = vmatprep.mubr.bf16.mxu0 0
        %6498 = vmatmul.mubr.bf16.gmra.mrb[0].mxu0 %v6449
        %v6499 = vpop.f32.mrb[0].mxu0
        %v6500 = vadd.f32 0.0, %v6499
        %v6501 = vpop.f32.mrb[0].mxu0
        %v6502 = vpop.f32.mrb[0].mxu0
        %v6503 = vadd.f32 0.0, %v6502
        %v6504 = vpop.f32.mrb[0].mxu0
        %6505 = vmatprep.mubr.bf16.mxu0 0
        %6506 = vmatmul.mubr.bf16.gmra.mrb[0].mxu0 %v6452
        %v6507 = vpop.f32.mrb[0].mxu0
        %v6508 = vadd.f32 0.0, %v6507
        %v6509 = vpop.f32.mrb[0].mxu0
        %v6510 = vpop.f32.mrb[0].mxu0
        %v6511 = vadd.f32 0.0, %v6510
        %v6512 = vpop.f32.mrb[0].mxu0
        %6513 = vmatprep.mubr.bf16.mxu0 0
        %6514 = vmatmul.mubr.bf16.gmra.mrb[0].mxu0 %v6455
        %v6515 = vpop.f32.mrb[0].mxu0
        %v6516 = vadd.f32 0.0, %v6515
        %v6517 = vpop.f32.mrb[0].mxu0
        %v6518 = vpop.f32.mrb[0].mxu0
        %v6519 = vadd.f32 0.0, %v6518
        %v6520 = vpop.f32.mrb[0].mxu0
        %6521 = vdwg.mxu0
        %6522 = vmatprep.subr.bf16.mxu0 0
        %6523 = vmatpush1.bf16.xpose.msra.mxu0 %v5996
        %6524 = vmatprep.subr.bf16.mxu0 0
        %6525 = vmatpush1.bf16.xpose.msra.mxu0 %v6000
        %6526 = vmatprep.subr.bf16.mxu0 0
        %6527 = vmatpush1.bf16.xpose.msra.mxu0 %v6004
        %6528 = vmatprep.subr.bf16.mxu0 0
        %6529 = vmatpush1.bf16.xpose.msra.mxu0 %v6008
        %6530 = vmatprep.subr.bf16.mxu0 0
        %6531 = vmatpush1.bf16.xpose.msra.mxu0 0
        %6532 = vmatprep.subr.bf16.mxu0 0
        %6533 = vmatpush1.bf16.xpose.msra.mxu0 0
        %6534 = vmatprep.subr.bf16.mxu0 0
        %6535 = vmatpush1.bf16.xpose.msra.mxu0 0
        %6536 = vmatprep.subr.bf16.mxu0 0
        %6537 = vmatpush1.bf16.xpose.msra.mxu0 0
        %6538 = vmatprep.subr.bf16.mxu0 0
        %6539 = vmatpush1.bf16.xpose.msra.mxu0 0
        %6540 = vmatprep.subr.bf16.mxu0 0
        %6541 = vmatpush1.bf16.xpose.msra.mxu0 0
        %6542 = vmatprep.subr.bf16.mxu0 0
        %6543 = vmatpush1.bf16.xpose.msra.mxu0 0
        %6544 = vmatprep.subr.bf16.mxu0 0
        %6545 = vmatpush1.bf16.xpose.msra.mxu0 0
        %6546 = vmatprep.subr.bf16.mxu0 0
        %6547 = vmatpush1.bf16.xpose.msra.mxu0 0
        %6548 = vmatprep.subr.bf16.mxu0 0
        %6549 = vmatpush1.bf16.xpose.msra.mxu0 0
        %6550 = vmatprep.subr.bf16.mxu0 0
        %6551 = vmatpush1.bf16.xpose.msra.mxu0 0
        %6552 = vmatprep.subr.bf16.mxu0 0
        %6553 = vmatpush1.bf16.xpose.msra.mxu0 0
        %6554 = vmatprep.mubr.bf16.mxu0 0
        %6555 = vmatmul.mubr.bf16.gmra.mrb[0].mxu0 %v5980
        %v6556 = vpop.f32.mrb[0].mxu0
        %v6557 = vadd.f32 %v6045, %v6556
        %v6558 = vpop.f32.mrb[0].mxu0
        %v6559 = vpop.f32.mrb[0].mxu0
        %v6560 = vadd.f32 %v6046, %v6559
        %v6561 = vpop.f32.mrb[0].mxu0
        %6562 = vmatprep.mubr.bf16.mxu0 0
        %6563 = vmatmul.mubr.bf16.gmra.mrb[0].mxu0 %v5984
        %v6564 = vpop.f32.mrb[0].mxu0
        %v6565 = vadd.f32 %v6047, %v6564
        %v6566 = vpop.f32.mrb[0].mxu0
        %v6567 = vpop.f32.mrb[0].mxu0
        %v6568 = vadd.f32 %v6048, %v6567
        %v6569 = vpop.f32.mrb[0].mxu0
        %6570 = vmatprep.mubr.bf16.mxu0 0
        %6571 = vmatmul.mubr.bf16.gmra.mrb[0].mxu0 %v5988
        %v6572 = vpop.f32.mrb[0].mxu0
        %v6573 = vadd.f32 %v6049, %v6572
        %v6574 = vpop.f32.mrb[0].mxu0
        %v6575 = vpop.f32.mrb[0].mxu0
        %v6576 = vadd.f32 %v6050, %v6575
        %v6577 = vpop.f32.mrb[0].mxu0
        %6578 = vmatprep.mubr.bf16.mxu0 0
        %6579 = vmatmul.mubr.bf16.gmra.mrb[0].mxu0 %v5992
        %v6580 = vpop.f32.mrb[0].mxu0
        %v6581 = vadd.f32 %v6051, %v6580
        %v6582 = vpop.f32.mrb[0].mxu0
        %v6583 = vpop.f32.mrb[0].mxu0
        %v6584 = vadd.f32 %v6052, %v6583
        %v6585 = vpop.f32.mrb[0].mxu0
        %6586 = vdwg.mxu0
        %v6587 = vsel %vm6118, %v6557, -inf
        %6588 = vmax.xlane.f32.xlu0 %v6587
        %v6589 = vpop.xlane.xlu0 %6588
        %v6590 = vsel %vm6118, %v6560, -inf
        %6591 = vmax.xlane.f32.xlu0 %v6590
        %v6592 = vpop.xlane.xlu0 %6591
        %v6593 = vsel %vm6118, %v6565, -inf
        %6594 = vmax.xlane.f32.xlu0 %v6593
        %v6595 = vpop.xlane.xlu0 %6594
        %v6596 = vsel %vm6118, %v6568, -inf
        %6597 = vmax.xlane.f32.xlu0 %v6596
        %v6598 = vpop.xlane.xlu0 %6597
        %v6599 = vsel %vm6118, %v6573, -inf
        %6600 = vmax.xlane.f32.xlu0 %v6599
        %v6601 = vpop.xlane.xlu0 %6600
        %v6602 = vsel %vm6118, %v6576, -inf
        %6603 = vmax.xlane.f32.xlu0 %v6602
        %v6604 = vpop.xlane.xlu0 %6603
        %v6605 = vsel %vm6118, %v6581, -inf
        %6606 = vmax.xlane.f32.xlu0 %v6605
        %v6607 = vpop.xlane.xlu0 %6606
        %v6608 = vsel %vm6118, %v6584, -inf
        %6609 = vmax.xlane.f32.xlu0 %v6608
        %v6610 = vpop.xlane.xlu0 %6609
        %v6611 = vsub.f32 %v6557, %v6589
        %v6612 = vsub.f32 %v6560, %v6592
        %v6613 = vsub.f32 %v6565, %v6595
        %v6614 = vsub.f32 %v6568, %v6598
        %v6615 = vsub.f32 %v6573, %v6601
        %v6616 = vsub.f32 %v6576, %v6604
        %v6617 = vsub.f32 %v6581, %v6607
        %v6618 = vsub.f32 %v6584, %v6610
        %v6619 = vmul.f32 %v6611, 1.442695
        %v6620 = vpow.pop %v6619
        %v6621 = vmul.f32 %v6612, 1.442695
        %v6622 = vpow.pop %v6621
        %v6623 = vmul.f32 %v6613, 1.442695
        %v6624 = vpow.pop %v6623
        %v6625 = vmul.f32 %v6614, 1.442695
        %v6626 = vpow.pop %v6625
        %v6627 = vmul.f32 %v6615, 1.442695
        %v6628 = vpow.pop %v6627
        %v6629 = vmul.f32 %v6616, 1.442695
        %v6630 = vpow.pop %v6629
        %v6631 = vmul.f32 %v6617, 1.442695
        %v6632 = vpow.pop %v6631
        %v6633 = vmul.f32 %v6618, 1.442695
        %v6634 = vpow.pop %v6633
        %v6635 = vsel %vm6118, %v6620, 0.0
        %6636 = vadd.xlane.f32.xlu0 %v6635
        %v6637 = vpop.xlane.xlu0 %6636
        %v6638 = vsel %vm6118, %v6622, 0.0
        %6639 = vadd.xlane.f32.xlu0 %v6638
        %v6640 = vpop.xlane.xlu0 %6639
        %v6641 = vsel %vm6118, %v6624, 0.0
        %6642 = vadd.xlane.f32.xlu0 %v6641
        %v6643 = vpop.xlane.xlu0 %6642
        %v6644 = vsel %vm6118, %v6626, 0.0
        %6645 = vadd.xlane.f32.xlu0 %v6644
        %v6646 = vpop.xlane.xlu0 %6645
        %v6647 = vsel %vm6118, %v6628, 0.0
        %6648 = vadd.xlane.f32.xlu0 %v6647
        %v6649 = vpop.xlane.xlu0 %6648
        %v6650 = vsel %vm6118, %v6630, 0.0
        %6651 = vadd.xlane.f32.xlu0 %v6650
        %v6652 = vpop.xlane.xlu0 %6651
        %v6653 = vsel %vm6118, %v6632, 0.0
        %6654 = vadd.xlane.f32.xlu0 %v6653
        %v6655 = vpop.xlane.xlu0 %6654
        %v6656 = vsel %vm6118, %v6634, 0.0
        %6657 = vadd.xlane.f32.xlu0 %v6656
        %v6658 = vpop.xlane.xlu0 %6657
        %v6659 = vrcp.pop %v6637
        %v6660 = vrcp.pop %v6640
        %v6661 = vrcp.pop %v6643
        %v6662 = vrcp.pop %v6646
        %v6663 = vrcp.pop %v6649
        %v6664 = vrcp.pop %v6652
        %v6665 = vrcp.pop %v6655
        %v6666 = vrcp.pop %v6658
        %v6667 = vmul.f32 %v6620, %v6659
        %v6668 = vmul.f32 %v6622, %v6660
        %v6669 = vmul.f32 %v6624, %v6661
        %v6670 = vmul.f32 %v6626, %v6662
        %v6671 = vmul.f32 %v6628, %v6663
        %v6672 = vmul.f32 %v6630, %v6664
        %v6673 = vmul.f32 %v6632, %v6665
        %v6674 = vmul.f32 %v6634, %v6666
        %v6675 = vpack.c.bf16 %v6668, %v6667
        %v6676 = vpack.c.bf16 %v6670, %v6669
        %v6677 = vpack.c.bf16 %v6672, %v6671
        %v6678 = vpack.c.bf16 %v6674, %v6673
        %v6680 = vsel %vm6118, %v6675, 0
        %v6683 = vsel %vm6118, %v6676, 0
        %v6686 = vsel %vm6118, %v6677, 0
        %v6689 = vsel %vm6118, %v6678, 0
        %6691 = vmatprep.subr.bf16.mxu0 0
        %6692 = vmatpush1.bf16.msra.mxu0 %v6012
        %6693 = vmatprep.subr.bf16.mxu0 0
        %6694 = vmatpush1.bf16.msra.mxu0 %v6016
        %6695 = vmatprep.subr.bf16.mxu0 0
        %6696 = vmatpush1.bf16.msra.mxu0 %v6020
        %6697 = vmatprep.subr.bf16.mxu0 0
        %6698 = vmatpush1.bf16.msra.mxu0 %v6024
        %6699 = vmatprep.subr.bf16.mxu0 0
        %6700 = vmatpush1.bf16.msra.mxu0 0
        %6701 = vmatprep.subr.bf16.mxu0 0
        %6702 = vmatpush1.bf16.msra.mxu0 0
        %6703 = vmatprep.subr.bf16.mxu0 0
        %6704 = vmatpush1.bf16.msra.mxu0 0
        %6705 = vmatprep.subr.bf16.mxu0 0
        %6706 = vmatpush1.bf16.msra.mxu0 0
        %6707 = vmatprep.subr.bf16.mxu0 0
        %6708 = vmatpush1.bf16.msra.mxu0 0
        %6709 = vmatprep.subr.bf16.mxu0 0
        %6710 = vmatpush1.bf16.msra.mxu0 0
        %6711 = vmatprep.subr.bf16.mxu0 0
        %6712 = vmatpush1.bf16.msra.mxu0 0
        %6713 = vmatprep.subr.bf16.mxu0 0
        %6714 = vmatpush1.bf16.msra.mxu0 0
        %6715 = vmatprep.subr.bf16.mxu0 0
        %6716 = vmatpush1.bf16.msra.mxu0 0
        %6717 = vmatprep.subr.bf16.mxu0 0
        %6718 = vmatpush1.bf16.msra.mxu0 0
        %6719 = vmatprep.subr.bf16.mxu0 0
        %6720 = vmatpush1.bf16.msra.mxu0 0
        %6721 = vmatprep.subr.bf16.mxu0 0
        %6722 = vmatpush1.bf16.msra.mxu0 0
        %6723 = vmatprep.mubr.bf16.mxu0 0
        %6724 = vmatmul.mubr.bf16.gmra.mrb[0].mxu0 %v6680
        %v6725 = vpop.f32.mrb[0].mxu0
        %v6726 = vadd.f32 0.0, %v6725
        %v6727 = vpop.f32.mrb[0].mxu0
        %v6728 = vpop.f32.mrb[0].mxu0
        %v6729 = vadd.f32 0.0, %v6728
        %v6730 = vpop.f32.mrb[0].mxu0
        %6731 = vmatprep.mubr.bf16.mxu0 0
        %6732 = vmatmul.mubr.bf16.gmra.mrb[0].mxu0 %v6683
        %v6733 = vpop.f32.mrb[0].mxu0
        %v6734 = vadd.f32 0.0, %v6733
        %v6735 = vpop.f32.mrb[0].mxu0
        %v6736 = vpop.f32.mrb[0].mxu0
        %v6737 = vadd.f32 0.0, %v6736
        %v6738 = vpop.f32.mrb[0].mxu0
        %6739 = vmatprep.mubr.bf16.mxu0 0
        %6740 = vmatmul.mubr.bf16.gmra.mrb[0].mxu0 %v6686
        %v6741 = vpop.f32.mrb[0].mxu0
        %v6742 = vadd.f32 0.0, %v6741
        %v6743 = vpop.f32.mrb[0].mxu0
        %v6744 = vpop.f32.mrb[0].mxu0
        %v6745 = vadd.f32 0.0, %v6744
        %v6746 = vpop.f32.mrb[0].mxu0
        %6747 = vmatprep.mubr.bf16.mxu0 0
        %6748 = vmatmul.mubr.bf16.gmra.mrb[0].mxu0 %v6689
        %v6749 = vpop.f32.mrb[0].mxu0
        %v6750 = vadd.f32 0.0, %v6749
        %v6751 = vpop.f32.mrb[0].mxu0
        %v6752 = vpop.f32.mrb[0].mxu0
        %v6753 = vadd.f32 0.0, %v6752
        %v6754 = vpop.f32.mrb[0].mxu0
        %6755 = vdwg.mxu0
        %6756 = vmatprep.subr.bf16.mxu0 0
        %6757 = vmatpush1.bf16.xpose.msra.mxu0 %v5997
        %6758 = vmatprep.subr.bf16.mxu0 0
        %6759 = vmatpush1.bf16.xpose.msra.mxu0 %v6001
        %6760 = vmatprep.subr.bf16.mxu0 0
        %6761 = vmatpush1.bf16.xpose.msra.mxu0 %v6005
        %6762 = vmatprep.subr.bf16.mxu0 0
        %6763 = vmatpush1.bf16.xpose.msra.mxu0 %v6009
        %6764 = vmatprep.subr.bf16.mxu0 0
        %6765 = vmatpush1.bf16.xpose.msra.mxu0 0
        %6766 = vmatprep.subr.bf16.mxu0 0
        %6767 = vmatpush1.bf16.xpose.msra.mxu0 0
        %6768 = vmatprep.subr.bf16.mxu0 0
        %6769 = vmatpush1.bf16.xpose.msra.mxu0 0
        %6770 = vmatprep.subr.bf16.mxu0 0
        %6771 = vmatpush1.bf16.xpose.msra.mxu0 0
        %6772 = vmatprep.subr.bf16.mxu0 0
        %6773 = vmatpush1.bf16.xpose.msra.mxu0 0
        %6774 = vmatprep.subr.bf16.mxu0 0
        %6775 = vmatpush1.bf16.xpose.msra.mxu0 0
        %6776 = vmatprep.subr.bf16.mxu0 0
        %6777 = vmatpush1.bf16.xpose.msra.mxu0 0
        %6778 = vmatprep.subr.bf16.mxu0 0
        %6779 = vmatpush1.bf16.xpose.msra.mxu0 0
        %6780 = vmatprep.subr.bf16.mxu0 0
        %6781 = vmatpush1.bf16.xpose.msra.mxu0 0
        %6782 = vmatprep.subr.bf16.mxu0 0
        %6783 = vmatpush1.bf16.xpose.msra.mxu0 0
        %6784 = vmatprep.subr.bf16.mxu0 0
        %6785 = vmatpush1.bf16.xpose.msra.mxu0 0
        %6786 = vmatprep.subr.bf16.mxu0 0
        %6787 = vmatpush1.bf16.xpose.msra.mxu0 0
        %6788 = vmatprep.mubr.bf16.mxu0 0
        %6789 = vmatmul.mubr.bf16.gmra.mrb[0].mxu0 %v5981
        %v6790 = vpop.f32.mrb[0].mxu0
        %v6791 = vadd.f32 %v6045, %v6790
        %v6792 = vpop.f32.mrb[0].mxu0
        %v6793 = vpop.f32.mrb[0].mxu0
        %v6794 = vadd.f32 %v6046, %v6793
        %v6795 = vpop.f32.mrb[0].mxu0
        %6796 = vmatprep.mubr.bf16.mxu0 0
        %6797 = vmatmul.mubr.bf16.gmra.mrb[0].mxu0 %v5985
        %v6798 = vpop.f32.mrb[0].mxu0
        %v6799 = vadd.f32 %v6047, %v6798
        %v6800 = vpop.f32.mrb[0].mxu0
        %v6801 = vpop.f32.mrb[0].mxu0
        %v6802 = vadd.f32 %v6048, %v6801
        %v6803 = vpop.f32.mrb[0].mxu0
        %6804 = vmatprep.mubr.bf16.mxu0 0
        %6805 = vmatmul.mubr.bf16.gmra.mrb[0].mxu0 %v5989
        %v6806 = vpop.f32.mrb[0].mxu0
        %v6807 = vadd.f32 %v6049, %v6806
        %v6808 = vpop.f32.mrb[0].mxu0
        %v6809 = vpop.f32.mrb[0].mxu0
        %v6810 = vadd.f32 %v6050, %v6809
        %v6811 = vpop.f32.mrb[0].mxu0
        %6812 = vmatprep.mubr.bf16.mxu0 0
        %6813 = vmatmul.mubr.bf16.gmra.mrb[0].mxu0 %v5993
        %v6814 = vpop.f32.mrb[0].mxu0
        %v6815 = vadd.f32 %v6051, %v6814
        %v6816 = vpop.f32.mrb[0].mxu0
        %v6817 = vpop.f32.mrb[0].mxu0
        %v6818 = vadd.f32 %v6052, %v6817
        %v6819 = vpop.f32.mrb[0].mxu0
        %6820 = vdwg.mxu0
        %v6821 = vsel %vm6118, %v6791, -inf
        %6822 = vmax.xlane.f32.xlu0 %v6821
        %v6823 = vpop.xlane.xlu0 %6822
        %v6824 = vsel %vm6118, %v6794, -inf
        %6825 = vmax.xlane.f32.xlu0 %v6824
        %v6826 = vpop.xlane.xlu0 %6825
        %v6827 = vsel %vm6118, %v6799, -inf
        %6828 = vmax.xlane.f32.xlu0 %v6827
        %v6829 = vpop.xlane.xlu0 %6828
        %v6830 = vsel %vm6118, %v6802, -inf
        %6831 = vmax.xlane.f32.xlu0 %v6830
        %v6832 = vpop.xlane.xlu0 %6831
        %v6833 = vsel %vm6118, %v6807, -inf
        %6834 = vmax.xlane.f32.xlu0 %v6833
        %v6835 = vpop.xlane.xlu0 %6834
        %v6836 = vsel %vm6118, %v6810, -inf
        %6837 = vmax.xlane.f32.xlu0 %v6836
        %v6838 = vpop.xlane.xlu0 %6837
        %v6839 = vsel %vm6118, %v6815, -inf
        %6840 = vmax.xlane.f32.xlu0 %v6839
        %v6841 = vpop.xlane.xlu0 %6840
        %v6842 = vsel %vm6118, %v6818, -inf
        %6843 = vmax.xlane.f32.xlu0 %v6842
        %v6844 = vpop.xlane.xlu0 %6843
        %v6845 = vsub.f32 %v6791, %v6823
        %v6846 = vsub.f32 %v6794, %v6826
        %v6847 = vsub.f32 %v6799, %v6829
        %v6848 = vsub.f32 %v6802, %v6832
        %v6849 = vsub.f32 %v6807, %v6835
        %v6850 = vsub.f32 %v6810, %v6838
        %v6851 = vsub.f32 %v6815, %v6841
        %v6852 = vsub.f32 %v6818, %v6844
        %v6853 = vmul.f32 %v6845, 1.442695
        %v6854 = vpow.pop %v6853
        %v6855 = vmul.f32 %v6846, 1.442695
        %v6856 = vpow.pop %v6855
        %v6857 = vmul.f32 %v6847, 1.442695
        %v6858 = vpow.pop %v6857
        %v6859 = vmul.f32 %v6848, 1.442695
        %v6860 = vpow.pop %v6859
        %v6861 = vmul.f32 %v6849, 1.442695
        %v6862 = vpow.pop %v6861
        %v6863 = vmul.f32 %v6850, 1.442695
        %v6864 = vpow.pop %v6863
        %v6865 = vmul.f32 %v6851, 1.442695
        %v6866 = vpow.pop %v6865
        %v6867 = vmul.f32 %v6852, 1.442695
        %v6868 = vpow.pop %v6867
        %v6869 = vsel %vm6118, %v6854, 0.0
        %6870 = vadd.xlane.f32.xlu0 %v6869
        %v6871 = vpop.xlane.xlu0 %6870
        %v6872 = vsel %vm6118, %v6856, 0.0
        %6873 = vadd.xlane.f32.xlu0 %v6872
        %v6874 = vpop.xlane.xlu0 %6873
        %v6875 = vsel %vm6118, %v6858, 0.0
        %6876 = vadd.xlane.f32.xlu0 %v6875
        %v6877 = vpop.xlane.xlu0 %6876
        %v6878 = vsel %vm6118, %v6860, 0.0
        %6879 = vadd.xlane.f32.xlu0 %v6878
        %v6880 = vpop.xlane.xlu0 %6879
        %v6881 = vsel %vm6118, %v6862, 0.0
        %6882 = vadd.xlane.f32.xlu0 %v6881
        %v6883 = vpop.xlane.xlu0 %6882
        %v6884 = vsel %vm6118, %v6864, 0.0
        %6885 = vadd.xlane.f32.xlu0 %v6884
        %v6886 = vpop.xlane.xlu0 %6885
        %v6887 = vsel %vm6118, %v6866, 0.0
        %6888 = vadd.xlane.f32.xlu0 %v6887
        %v6889 = vpop.xlane.xlu0 %6888
        %v6890 = vsel %vm6118, %v6868, 0.0
        %6891 = vadd.xlane.f32.xlu0 %v6890
        %v6892 = vpop.xlane.xlu0 %6891
        %v6893 = vrcp.pop %v6871
        %v6894 = vrcp.pop %v6874
        %v6895 = vrcp.pop %v6877
        %v6896 = vrcp.pop %v6880
        %v6897 = vrcp.pop %v6883
        %v6898 = vrcp.pop %v6886
        %v6899 = vrcp.pop %v6889
        %v6900 = vrcp.pop %v6892
        %v6901 = vmul.f32 %v6854, %v6893
        %v6902 = vmul.f32 %v6856, %v6894
        %v6903 = vmul.f32 %v6858, %v6895
        %v6904 = vmul.f32 %v6860, %v6896
        %v6905 = vmul.f32 %v6862, %v6897
        %v6906 = vmul.f32 %v6864, %v6898
        %v6907 = vmul.f32 %v6866, %v6899
        %v6908 = vmul.f32 %v6868, %v6900
        %v6909 = vpack.c.bf16 %v6902, %v6901
        %v6910 = vpack.c.bf16 %v6904, %v6903
        %v6911 = vpack.c.bf16 %v6906, %v6905
        %v6912 = vpack.c.bf16 %v6908, %v6907
        %v6914 = vsel %vm6118, %v6909, 0
        %v6917 = vsel %vm6118, %v6910, 0
        %v6920 = vsel %vm6118, %v6911, 0
        %v6923 = vsel %vm6118, %v6912, 0
        %6925 = vmatprep.subr.bf16.mxu0 0
        %6926 = vmatpush1.bf16.msra.mxu0 %v6013
        %6927 = vmatprep.subr.bf16.mxu0 0
        %6928 = vmatpush1.bf16.msra.mxu0 %v6017
        %6929 = vmatprep.subr.bf16.mxu0 0
        %6930 = vmatpush1.bf16.msra.mxu0 %v6021
        %6931 = vmatprep.subr.bf16.mxu0 0
        %6932 = vmatpush1.bf16.msra.mxu0 %v6025
        %6933 = vmatprep.subr.bf16.mxu0 0
        %6934 = vmatpush1.bf16.msra.mxu0 0
        %6935 = vmatprep.subr.bf16.mxu0 0
        %6936 = vmatpush1.bf16.msra.mxu0 0
        %6937 = vmatprep.subr.bf16.mxu0 0
        %6938 = vmatpush1.bf16.msra.mxu0 0
        %6939 = vmatprep.subr.bf16.mxu0 0
        %6940 = vmatpush1.bf16.msra.mxu0 0
        %6941 = vmatprep.subr.bf16.mxu0 0
        %6942 = vmatpush1.bf16.msra.mxu0 0
        %6943 = vmatprep.subr.bf16.mxu0 0
        %6944 = vmatpush1.bf16.msra.mxu0 0
        %6945 = vmatprep.subr.bf16.mxu0 0
        %6946 = vmatpush1.bf16.msra.mxu0 0
        %6947 = vmatprep.subr.bf16.mxu0 0
        %6948 = vmatpush1.bf16.msra.mxu0 0
        %6949 = vmatprep.subr.bf16.mxu0 0
        %6950 = vmatpush1.bf16.msra.mxu0 0
        %6951 = vmatprep.subr.bf16.mxu0 0
        %6952 = vmatpush1.bf16.msra.mxu0 0
        %6953 = vmatprep.subr.bf16.mxu0 0
        %6954 = vmatpush1.bf16.msra.mxu0 0
        %6955 = vmatprep.subr.bf16.mxu0 0
        %6956 = vmatpush1.bf16.msra.mxu0 0
        %6957 = vmatprep.mubr.bf16.mxu0 0
        %6958 = vmatmul.mubr.bf16.gmra.mrb[0].mxu0 %v6914
        %v6959 = vpop.f32.mrb[0].mxu0
        %v6960 = vadd.f32 0.0, %v6959
        %v6961 = vpop.f32.mrb[0].mxu0
        %v6962 = vpop.f32.mrb[0].mxu0
        %v6963 = vadd.f32 0.0, %v6962
        %v6964 = vpop.f32.mrb[0].mxu0
        %6965 = vmatprep.mubr.bf16.mxu0 0
        %6966 = vmatmul.mubr.bf16.gmra.mrb[0].mxu0 %v6917
        %v6967 = vpop.f32.mrb[0].mxu0
        %v6968 = vadd.f32 0.0, %v6967
        %v6969 = vpop.f32.mrb[0].mxu0
        %v6970 = vpop.f32.mrb[0].mxu0
        %v6971 = vadd.f32 0.0, %v6970
        %v6972 = vpop.f32.mrb[0].mxu0
        %6973 = vmatprep.mubr.bf16.mxu0 0
        %6974 = vmatmul.mubr.bf16.gmra.mrb[0].mxu0 %v6920
        %v6975 = vpop.f32.mrb[0].mxu0
        %v6976 = vadd.f32 0.0, %v6975
        %v6977 = vpop.f32.mrb[0].mxu0
        %v6978 = vpop.f32.mrb[0].mxu0
        %v6979 = vadd.f32 0.0, %v6978
        %v6980 = vpop.f32.mrb[0].mxu0
        %6981 = vmatprep.mubr.bf16.mxu0 0
        %6982 = vmatmul.mubr.bf16.gmra.mrb[0].mxu0 %v6923
        %v6983 = vpop.f32.mrb[0].mxu0
        %v6984 = vadd.f32 0.0, %v6983
        %v6985 = vpop.f32.mrb[0].mxu0
        %v6986 = vpop.f32.mrb[0].mxu0
        %v6987 = vadd.f32 0.0, %v6986
        %v6988 = vpop.f32.mrb[0].mxu0
        %6989 = vdwg.mxu0
        %v6990 = vpack.c.bf16 %v6261, %v6258
        %v6991 = vpack.c.bf16 %v6495, %v6492
        %v6992 = vpack.c.bf16 %v6729, %v6726
        %v6993 = vpack.c.bf16 %v6963, %v6960
        %v6994 = vpack.c.bf16 %v6269, %v6266
        %v6995 = vpack.c.bf16 %v6503, %v6500
        %v6996 = vpack.c.bf16 %v6737, %v6734
        %v6997 = vpack.c.bf16 %v6971, %v6968
        %v6998 = vpack.c.bf16 %v6277, %v6274
        %v6999 = vpack.c.bf16 %v6511, %v6508
        %v7000 = vpack.c.bf16 %v6745, %v6742
        %v7001 = vpack.c.bf16 %v6979, %v6976
        %v7002 = vpack.c.bf16 %v6285, %v6282
        %v7003 = vpack.c.bf16 %v6519, %v6516
        %v7004 = vpack.c.bf16 %v6753, %v6750
        %v7005 = vpack.c.bf16 %v6987, %v6984
        %v7006 = vld [vmem:[#allocation7] sm:$0xff]
        %v7007 = vld [vmem:[#allocation7 + $0x8] sm:$0xff]
        %v7008 = vld [vmem:[#allocation7 + $0x10] sm:$0xff]
        %v7009 = vld [vmem:[#allocation7 + $0x18] sm:$0xff]
        %v7010 = vld [vmem:[#allocation7 + $0x20] sm:$0xff]
        %v7011 = vld [vmem:[#allocation7 + $0x28] sm:$0xff]
        %v7012 = vld [vmem:[#allocation7 + $0x30] sm:$0xff]
        %v7013 = vld [vmem:[#allocation7 + $0x38] sm:$0xff]
        %v7014 = vld [vmem:[#allocation7 + $0x40] sm:$0xff]
        %v7015 = vld [vmem:[#allocation7 + $0x48] sm:$0xff]
        %v7016 = vld [vmem:[#allocation7 + $0x50] sm:$0xff]
        %v7017 = vld [vmem:[#allocation7 + $0x58] sm:$0xff]
        %v7018 = vld [vmem:[#allocation7 + $0x60] sm:$0xff]
        %v7019 = vld [vmem:[#allocation7 + $0x68] sm:$0xff]
        %v7020 = vld [vmem:[#allocation7 + $0x70] sm:$0xff]
        %v7021 = vld [vmem:[#allocation7 + $0x78] sm:$0xff]
        %v7022 = vld [vmem:[#allocation7 + $0x80] sm:$0xff]
        %v7023 = vld [vmem:[#allocation7 + $0x88] sm:$0xff]
        %v7024 = vld [vmem:[#allocation7 + $0x90] sm:$0xff]
        %v7025 = vld [vmem:[#allocation7 + $0x98] sm:$0xff]
        %v7026 = vld [vmem:[#allocation7 + $0xa0] sm:$0xff]
        %v7027 = vld [vmem:[#allocation7 + $0xa8] sm:$0xff]
        %v7028 = vld [vmem:[#allocation7 + $0xb0] sm:$0xff]
        %v7029 = vld [vmem:[#allocation7 + $0xb8] sm:$0xff]
        %v7030 = vld [vmem:[#allocation7 + $0xc0] sm:$0xff]
        %v7031 = vld [vmem:[#allocation7 + $0xc8] sm:$0xff]
        %v7032 = vld [vmem:[#allocation7 + $0xd0] sm:$0xff]
        %v7033 = vld [vmem:[#allocation7 + $0xd8] sm:$0xff]
        %v7034 = vld [vmem:[#allocation7 + $0xe0] sm:$0xff]
        %v7035 = vld [vmem:[#allocation7 + $0xe8] sm:$0xff]
        %v7036 = vld [vmem:[#allocation7 + $0xf0] sm:$0xff]
        %v7037 = vld [vmem:[#allocation7 + $0xf8] sm:$0xff]
        %v7038 = vld [vmem:[#allocation7 + $0x100] sm:$0xff]
        %v7039 = vld [vmem:[#allocation7 + $0x108] sm:$0xff]
        %v7040 = vld [vmem:[#allocation7 + $0x110] sm:$0xff]
        %v7041 = vld [vmem:[#allocation7 + $0x118] sm:$0xff]
        %v7042 = vld [vmem:[#allocation7 + $0x120] sm:$0xff]
        %v7043 = vld [vmem:[#allocation7 + $0x128] sm:$0xff]
        %v7044 = vld [vmem:[#allocation7 + $0x130] sm:$0xff]
        %v7045 = vld [vmem:[#allocation7 + $0x138] sm:$0xff]
        %v7046 = vld [vmem:[#allocation7 + $0x140] sm:$0xff]
        %v7047 = vld [vmem:[#allocation7 + $0x148] sm:$0xff]
        %v7048 = vld [vmem:[#allocation7 + $0x150] sm:$0xff]
        %v7049 = vld [vmem:[#allocation7 + $0x158] sm:$0xff]
        %v7050 = vld [vmem:[#allocation7 + $0x160] sm:$0xff]
        %v7051 = vld [vmem:[#allocation7 + $0x168] sm:$0xff]
        %v7052 = vld [vmem:[#allocation7 + $0x170] sm:$0xff]
        %v7053 = vld [vmem:[#allocation7 + $0x178] sm:$0xff]
        %v7054 = vld [vmem:[#allocation7 + $0x180] sm:$0xff]
        %v7055 = vld [vmem:[#allocation7 + $0x188] sm:$0xff]
        %v7056 = vld [vmem:[#allocation7 + $0x190] sm:$0xff]
        %v7057 = vld [vmem:[#allocation7 + $0x198] sm:$0xff]
        %v7058 = vld [vmem:[#allocation7 + $0x1a0] sm:$0xff]
        %v7059 = vld [vmem:[#allocation7 + $0x1a8] sm:$0xff]
        %v7060 = vld [vmem:[#allocation7 + $0x1b0] sm:$0xff]
        %v7061 = vld [vmem:[#allocation7 + $0x1b8] sm:$0xff]
        %v7062 = vld [vmem:[#allocation7 + $0x1c0] sm:$0xff]
        %v7063 = vld [vmem:[#allocation7 + $0x1c8] sm:$0xff]
        %v7064 = vld [vmem:[#allocation7 + $0x1d0] sm:$0xff]
        %v7065 = vld [vmem:[#allocation7 + $0x1d8] sm:$0xff]
        %v7066 = vld [vmem:[#allocation7 + $0x1e0] sm:$0xff]
        %v7067 = vld [vmem:[#allocation7 + $0x1e8] sm:$0xff]
        %v7068 = vld [vmem:[#allocation7 + $0x1f0] sm:$0xff]
        %v7069 = vld [vmem:[#allocation7 + $0x1f8] sm:$0xff]
        %v7070 = vld [vmem:[#allocation7 + $0x200] sm:$0xff]
        %v7071 = vld [vmem:[#allocation7 + $0x208] sm:$0xff]
        %v7072 = vld [vmem:[#allocation7 + $0x210] sm:$0xff]
        %v7073 = vld [vmem:[#allocation7 + $0x218] sm:$0xff]
        %v7074 = vld [vmem:[#allocation7 + $0x220] sm:$0xff]
        %v7075 = vld [vmem:[#allocation7 + $0x228] sm:$0xff]
        %v7076 = vld [vmem:[#allocation7 + $0x230] sm:$0xff]
        %v7077 = vld [vmem:[#allocation7 + $0x238] sm:$0xff]
        %v7078 = vld [vmem:[#allocation7 + $0x240] sm:$0xff]
        %v7079 = vld [vmem:[#allocation7 + $0x248] sm:$0xff]
        %v7080 = vld [vmem:[#allocation7 + $0x250] sm:$0xff]
        %v7081 = vld [vmem:[#allocation7 + $0x258] sm:$0xff]
        %v7082 = vld [vmem:[#allocation7 + $0x260] sm:$0xff]
        %v7083 = vld [vmem:[#allocation7 + $0x268] sm:$0xff]
        %v7084 = vld [vmem:[#allocation7 + $0x270] sm:$0xff]
        %v7085 = vld [vmem:[#allocation7 + $0x278] sm:$0xff]
        %v7086 = vld [vmem:[#allocation7 + $0x280] sm:$0xff]
        %v7087 = vld [vmem:[#allocation7 + $0x288] sm:$0xff]
        %v7088 = vld [vmem:[#allocation7 + $0x290] sm:$0xff]
        %v7089 = vld [vmem:[#allocation7 + $0x298] sm:$0xff]
        %v7090 = vld [vmem:[#allocation7 + $0x2a0] sm:$0xff]
        %v7091 = vld [vmem:[#allocation7 + $0x2a8] sm:$0xff]
        %v7092 = vld [vmem:[#allocation7 + $0x2b0] sm:$0xff]
        %v7093 = vld [vmem:[#allocation7 + $0x2b8] sm:$0xff]
        %v7094 = vld [vmem:[#allocation7 + $0x2c0] sm:$0xff]
        %v7095 = vld [vmem:[#allocation7 + $0x2c8] sm:$0xff]
        %v7096 = vld [vmem:[#allocation7 + $0x2d0] sm:$0xff]
        %v7097 = vld [vmem:[#allocation7 + $0x2d8] sm:$0xff]
        %v7098 = vld [vmem:[#allocation7 + $0x2e0] sm:$0xff]
        %v7099 = vld [vmem:[#allocation7 + $0x2e8] sm:$0xff]
        %v7100 = vld [vmem:[#allocation7 + $0x2f0] sm:$0xff]
        %v7101 = vld [vmem:[#allocation7 + $0x2f8] sm:$0xff]
        %v7102 = vld [vmem:[#allocation7 + $0x300] sm:$0xff]
        %v7103 = vld [vmem:[#allocation7 + $0x308] sm:$0xff]
        %v7104 = vld [vmem:[#allocation7 + $0x310] sm:$0xff]
        %v7105 = vld [vmem:[#allocation7 + $0x318] sm:$0xff]
        %v7106 = vld [vmem:[#allocation7 + $0x320] sm:$0xff]
        %v7107 = vld [vmem:[#allocation7 + $0x328] sm:$0xff]
        %v7108 = vld [vmem:[#allocation7 + $0x330] sm:$0xff]
        %v7109 = vld [vmem:[#allocation7 + $0x338] sm:$0xff]
        %v7110 = vld [vmem:[#allocation7 + $0x340] sm:$0xff]
        %v7111 = vld [vmem:[#allocation7 + $0x348] sm:$0xff]
        %v7112 = vld [vmem:[#allocation7 + $0x350] sm:$0xff]
        %v7113 = vld [vmem:[#allocation7 + $0x358] sm:$0xff]
        %v7114 = vld [vmem:[#allocation7 + $0x360] sm:$0xff]
        %v7115 = vld [vmem:[#allocation7 + $0x368] sm:$0xff]
        %v7116 = vld [vmem:[#allocation7 + $0x370] sm:$0xff]
        %v7117 = vld [vmem:[#allocation7 + $0x378] sm:$0xff]
        %v7118 = vld [vmem:[#allocation7 + $0x380] sm:$0xff]
        %v7119 = vld [vmem:[#allocation7 + $0x388] sm:$0xff]
        %v7120 = vld [vmem:[#allocation7 + $0x390] sm:$0xff]
        %v7121 = vld [vmem:[#allocation7 + $0x398] sm:$0xff]
        %v7122 = vld [vmem:[#allocation7 + $0x3a0] sm:$0xff]
        %v7123 = vld [vmem:[#allocation7 + $0x3a8] sm:$0xff]
        %v7124 = vld [vmem:[#allocation7 + $0x3b0] sm:$0xff]
        %v7125 = vld [vmem:[#allocation7 + $0x3b8] sm:$0xff]
        %v7126 = vld [vmem:[#allocation7 + $0x3c0] sm:$0xff]
        %v7127 = vld [vmem:[#allocation7 + $0x3c8] sm:$0xff]
        %v7128 = vld [vmem:[#allocation7 + $0x3d0] sm:$0xff]
        %v7129 = vld [vmem:[#allocation7 + $0x3d8] sm:$0xff]
        %v7130 = vld [vmem:[#allocation7 + $0x3e0] sm:$0xff]
        %v7131 = vld [vmem:[#allocation7 + $0x3e8] sm:$0xff]
        %v7132 = vld [vmem:[#allocation7 + $0x3f0] sm:$0xff]
        %v7133 = vld [vmem:[#allocation7 + $0x3f8] sm:$0xff]
        %v7262 = vunpack.c.l.b16 %v7006
        %v7263 = vunpack.c.h.b16 %v7006
        %v7264 = vunpack.c.l.b16 %v7007
        %v7265 = vunpack.c.h.b16 %v7007
        %v7266 = vunpack.c.l.b16 %v7008
        %v7267 = vunpack.c.h.b16 %v7008
        %v7268 = vunpack.c.l.b16 %v7009
        %v7269 = vunpack.c.h.b16 %v7009
        %v7270 = vunpack.c.l.b16 %v7010
        %v7271 = vunpack.c.h.b16 %v7010
        %v7272 = vunpack.c.l.b16 %v7011
        %v7273 = vunpack.c.h.b16 %v7011
        %v7274 = vunpack.c.l.b16 %v7012
        %v7275 = vunpack.c.h.b16 %v7012
        %v7276 = vunpack.c.l.b16 %v7013
        %v7277 = vunpack.c.h.b16 %v7013
        %v7278 = vunpack.c.l.b16 %v7014
        %v7279 = vunpack.c.h.b16 %v7014
        %v7280 = vunpack.c.l.b16 %v7015
        %v7281 = vunpack.c.h.b16 %v7015
        %v7282 = vunpack.c.l.b16 %v7016
        %v7283 = vunpack.c.h.b16 %v7016
        %v7284 = vunpack.c.l.b16 %v7017
        %v7285 = vunpack.c.h.b16 %v7017
        %v7286 = vunpack.c.l.b16 %v7018
        %v7287 = vunpack.c.h.b16 %v7018
        %v7288 = vunpack.c.l.b16 %v7019
        %v7289 = vunpack.c.h.b16 %v7019
        %v7290 = vunpack.c.l.b16 %v7020
        %v7291 = vunpack.c.h.b16 %v7020
        %v7292 = vunpack.c.l.b16 %v7021
        %v7293 = vunpack.c.h.b16 %v7021
        %v7294 = vunpack.c.l.b16 %v7022
        %v7295 = vunpack.c.h.b16 %v7022
        %v7296 = vunpack.c.l.b16 %v7023
        %v7297 = vunpack.c.h.b16 %v7023
        %v7298 = vunpack.c.l.b16 %v7024
        %v7299 = vunpack.c.h.b16 %v7024
        %v7300 = vunpack.c.l.b16 %v7025
        %v7301 = vunpack.c.h.b16 %v7025
        %v7302 = vunpack.c.l.b16 %v7026
        %v7303 = vunpack.c.h.b16 %v7026
        %v7304 = vunpack.c.l.b16 %v7027
        %v7305 = vunpack.c.h.b16 %v7027
        %v7306 = vunpack.c.l.b16 %v7028
        %v7307 = vunpack.c.h.b16 %v7028
        %v7308 = vunpack.c.l.b16 %v7029
        %v7309 = vunpack.c.h.b16 %v7029
        %v7310 = vunpack.c.l.b16 %v7030
        %v7311 = vunpack.c.h.b16 %v7030
        %v7312 = vunpack.c.l.b16 %v7031
        %v7313 = vunpack.c.h.b16 %v7031
        %v7314 = vunpack.c.l.b16 %v7032
        %v7315 = vunpack.c.h.b16 %v7032
        %v7316 = vunpack.c.l.b16 %v7033
        %v7317 = vunpack.c.h.b16 %v7033
        %v7318 = vunpack.c.l.b16 %v7034
        %v7319 = vunpack.c.h.b16 %v7034
        %v7320 = vunpack.c.l.b16 %v7035
        %v7321 = vunpack.c.h.b16 %v7035
        %v7322 = vunpack.c.l.b16 %v7036
        %v7323 = vunpack.c.h.b16 %v7036
        %v7324 = vunpack.c.l.b16 %v7037
        %v7325 = vunpack.c.h.b16 %v7037
        %v7326 = vunpack.c.l.b16 %v7038
        %v7327 = vunpack.c.h.b16 %v7038
        %v7328 = vunpack.c.l.b16 %v7039
        %v7329 = vunpack.c.h.b16 %v7039
        %v7330 = vunpack.c.l.b16 %v7040
        %v7331 = vunpack.c.h.b16 %v7040
        %v7332 = vunpack.c.l.b16 %v7041
        %v7333 = vunpack.c.h.b16 %v7041
        %v7334 = vunpack.c.l.b16 %v7042
        %v7335 = vunpack.c.h.b16 %v7042
        %v7336 = vunpack.c.l.b16 %v7043
        %v7337 = vunpack.c.h.b16 %v7043
        %v7338 = vunpack.c.l.b16 %v7044
        %v7339 = vunpack.c.h.b16 %v7044
        %v7340 = vunpack.c.l.b16 %v7045
        %v7341 = vunpack.c.h.b16 %v7045
        %v7342 = vunpack.c.l.b16 %v7046
        %v7343 = vunpack.c.h.b16 %v7046
        %v7344 = vunpack.c.l.b16 %v7047
        %v7345 = vunpack.c.h.b16 %v7047
        %v7346 = vunpack.c.l.b16 %v7048
        %v7347 = vunpack.c.h.b16 %v7048
        %v7348 = vunpack.c.l.b16 %v7049
        %v7349 = vunpack.c.h.b16 %v7049
        %v7350 = vunpack.c.l.b16 %v7050
        %v7351 = vunpack.c.h.b16 %v7050
        %v7352 = vunpack.c.l.b16 %v7051
        %v7353 = vunpack.c.h.b16 %v7051
        %v7354 = vunpack.c.l.b16 %v7052
        %v7355 = vunpack.c.h.b16 %v7052
        %v7356 = vunpack.c.l.b16 %v7053
        %v7357 = vunpack.c.h.b16 %v7053
        %v7358 = vunpack.c.l.b16 %v7054
        %v7359 = vunpack.c.h.b16 %v7054
        %v7360 = vunpack.c.l.b16 %v7055
        %v7361 = vunpack.c.h.b16 %v7055
        %v7362 = vunpack.c.l.b16 %v7056
        %v7363 = vunpack.c.h.b16 %v7056
        %v7364 = vunpack.c.l.b16 %v7057
        %v7365 = vunpack.c.h.b16 %v7057
        %v7366 = vunpack.c.l.b16 %v7058
        %v7367 = vunpack.c.h.b16 %v7058
        %v7368 = vunpack.c.l.b16 %v7059
        %v7369 = vunpack.c.h.b16 %v7059
        %v7370 = vunpack.c.l.b16 %v7060
        %v7371 = vunpack.c.h.b16 %v7060
        %v7372 = vunpack.c.l.b16 %v7061
        %v7373 = vunpack.c.h.b16 %v7061
        %v7374 = vunpack.c.l.b16 %v7062
        %v7375 = vunpack.c.h.b16 %v7062
        %v7376 = vunpack.c.l.b16 %v7063
        %v7377 = vunpack.c.h.b16 %v7063
        %v7378 = vunpack.c.l.b16 %v7064
        %v7379 = vunpack.c.h.b16 %v7064
        %v7380 = vunpack.c.l.b16 %v7065
        %v7381 = vunpack.c.h.b16 %v7065
        %v7382 = vunpack.c.l.b16 %v7066
        %v7383 = vunpack.c.h.b16 %v7066
        %v7384 = vunpack.c.l.b16 %v7067
        %v7385 = vunpack.c.h.b16 %v7067
        %v7386 = vunpack.c.l.b16 %v7068
        %v7387 = vunpack.c.h.b16 %v7068
        %v7388 = vunpack.c.l.b16 %v7069
        %v7389 = vunpack.c.h.b16 %v7069
        %v7390 = vunpack.c.l.b16 %v7070
        %v7391 = vunpack.c.h.b16 %v7070
        %v7392 = vunpack.c.l.b16 %v7071
        %v7393 = vunpack.c.h.b16 %v7071
        %v7394 = vunpack.c.l.b16 %v7072
        %v7395 = vunpack.c.h.b16 %v7072
        %v7396 = vunpack.c.l.b16 %v7073
        %v7397 = vunpack.c.h.b16 %v7073
        %v7398 = vunpack.c.l.b16 %v7074
        %v7399 = vunpack.c.h.b16 %v7074
        %v7400 = vunpack.c.l.b16 %v7075
        %v7401 = vunpack.c.h.b16 %v7075
        %v7402 = vunpack.c.l.b16 %v7076
        %v7403 = vunpack.c.h.b16 %v7076
        %v7404 = vunpack.c.l.b16 %v7077
        %v7405 = vunpack.c.h.b16 %v7077
        %v7406 = vunpack.c.l.b16 %v7078
        %v7407 = vunpack.c.h.b16 %v7078
        %v7408 = vunpack.c.l.b16 %v7079
        %v7409 = vunpack.c.h.b16 %v7079
        %v7410 = vunpack.c.l.b16 %v7080
        %v7411 = vunpack.c.h.b16 %v7080
        %v7412 = vunpack.c.l.b16 %v7081
        %v7413 = vunpack.c.h.b16 %v7081
        %v7414 = vunpack.c.l.b16 %v7082
        %v7415 = vunpack.c.h.b16 %v7082
        %v7416 = vunpack.c.l.b16 %v7083
        %v7417 = vunpack.c.h.b16 %v7083
        %v7418 = vunpack.c.l.b16 %v7084
        %v7419 = vunpack.c.h.b16 %v7084
        %v7420 = vunpack.c.l.b16 %v7085
        %v7421 = vunpack.c.h.b16 %v7085
        %v7422 = vunpack.c.l.b16 %v7086
        %v7423 = vunpack.c.h.b16 %v7086
        %v7424 = vunpack.c.l.b16 %v7087
        %v7425 = vunpack.c.h.b16 %v7087
        %v7426 = vunpack.c.l.b16 %v7088
        %v7427 = vunpack.c.h.b16 %v7088
        %v7428 = vunpack.c.l.b16 %v7089
        %v7429 = vunpack.c.h.b16 %v7089
        %v7430 = vunpack.c.l.b16 %v7090
        %v7431 = vunpack.c.h.b16 %v7090
        %v7432 = vunpack.c.l.b16 %v7091
        %v7433 = vunpack.c.h.b16 %v7091
        %v7434 = vunpack.c.l.b16 %v7092
        %v7435 = vunpack.c.h.b16 %v7092
        %v7436 = vunpack.c.l.b16 %v7093
        %v7437 = vunpack.c.h.b16 %v7093
        %v7438 = vunpack.c.l.b16 %v7094
        %v7439 = vunpack.c.h.b16 %v7094
        %v7440 = vunpack.c.l.b16 %v7095
        %v7441 = vunpack.c.h.b16 %v7095
        %v7442 = vunpack.c.l.b16 %v7096
        %v7443 = vunpack.c.h.b16 %v7096
        %v7444 = vunpack.c.l.b16 %v7097
        %v7445 = vunpack.c.h.b16 %v7097
        %v7446 = vunpack.c.l.b16 %v7098
        %v7447 = vunpack.c.h.b16 %v7098
        %v7448 = vunpack.c.l.b16 %v7099
        %v7449 = vunpack.c.h.b16 %v7099
        %v7450 = vunpack.c.l.b16 %v7100
        %v7451 = vunpack.c.h.b16 %v7100
        %v7452 = vunpack.c.l.b16 %v7101
        %v7453 = vunpack.c.h.b16 %v7101
        %v7454 = vunpack.c.l.b16 %v7102
        %v7455 = vunpack.c.h.b16 %v7102
        %v7456 = vunpack.c.l.b16 %v7103
        %v7457 = vunpack.c.h.b16 %v7103
        %v7458 = vunpack.c.l.b16 %v7104
        %v7459 = vunpack.c.h.b16 %v7104
        %v7460 = vunpack.c.l.b16 %v7105
        %v7461 = vunpack.c.h.b16 %v7105
        %v7462 = vunpack.c.l.b16 %v7106
        %v7463 = vunpack.c.h.b16 %v7106
        %v7464 = vunpack.c.l.b16 %v7107
        %v7465 = vunpack.c.h.b16 %v7107
        %v7466 = vunpack.c.l.b16 %v7108
        %v7467 = vunpack.c.h.b16 %v7108
        %v7468 = vunpack.c.l.b16 %v7109
        %v7469 = vunpack.c.h.b16 %v7109
        %v7470 = vunpack.c.l.b16 %v7110
        %v7471 = vunpack.c.h.b16 %v7110
        %v7472 = vunpack.c.l.b16 %v7111
        %v7473 = vunpack.c.h.b16 %v7111
        %v7474 = vunpack.c.l.b16 %v7112
        %v7475 = vunpack.c.h.b16 %v7112
        %v7476 = vunpack.c.l.b16 %v7113
        %v7477 = vunpack.c.h.b16 %v7113
        %v7478 = vunpack.c.l.b16 %v7114
        %v7479 = vunpack.c.h.b16 %v7114
        %v7480 = vunpack.c.l.b16 %v7115
        %v7481 = vunpack.c.h.b16 %v7115
        %v7482 = vunpack.c.l.b16 %v7116
        %v7483 = vunpack.c.h.b16 %v7116
        %v7484 = vunpack.c.l.b16 %v7117
        %v7485 = vunpack.c.h.b16 %v7117
        %v7486 = vunpack.c.l.b16 %v7118
        %v7487 = vunpack.c.h.b16 %v7118
        %v7488 = vunpack.c.l.b16 %v7119
        %v7489 = vunpack.c.h.b16 %v7119
        %v7490 = vunpack.c.l.b16 %v7120
        %v7491 = vunpack.c.h.b16 %v7120
        %v7492 = vunpack.c.l.b16 %v7121
        %v7493 = vunpack.c.h.b16 %v7121
        %v7494 = vunpack.c.l.b16 %v7122
        %v7495 = vunpack.c.h.b16 %v7122
        %v7496 = vunpack.c.l.b16 %v7123
        %v7497 = vunpack.c.h.b16 %v7123
        %v7498 = vunpack.c.l.b16 %v7124
        %v7499 = vunpack.c.h.b16 %v7124
        %v7500 = vunpack.c.l.b16 %v7125
        %v7501 = vunpack.c.h.b16 %v7125
        %v7502 = vunpack.c.l.b16 %v7126
        %v7503 = vunpack.c.h.b16 %v7126
        %v7504 = vunpack.c.l.b16 %v7127
        %v7505 = vunpack.c.h.b16 %v7127
        %v7506 = vunpack.c.l.b16 %v7128
        %v7507 = vunpack.c.h.b16 %v7128
        %v7508 = vunpack.c.l.b16 %v7129
        %v7509 = vunpack.c.h.b16 %v7129
        %v7510 = vunpack.c.l.b16 %v7130
        %v7511 = vunpack.c.h.b16 %v7130
        %v7512 = vunpack.c.l.b16 %v7131
        %v7513 = vunpack.c.h.b16 %v7131
        %v7514 = vunpack.c.l.b16 %v7132
        %v7515 = vunpack.c.h.b16 %v7132
        %v7516 = vunpack.c.l.b16 %v7133
        %v7517 = vunpack.c.h.b16 %v7133
        %v7518 = vpack.c.b16 %v7266, %v7262
        %v7519 = vpack.c.b16 %v7267, %v7263
        %v7520 = vpack.c.b16 %v7268, %v7264
        %v7521 = vpack.c.b16 %v7269, %v7265
        %v7522 = vpack.c.b16 %v7274, %v7270
        %v7523 = vpack.c.b16 %v7275, %v7271
        %v7524 = vpack.c.b16 %v7276, %v7272
        %v7525 = vpack.c.b16 %v7277, %v7273
        %v7526 = vpack.c.b16 %v7282, %v7278
        %v7527 = vpack.c.b16 %v7283, %v7279
        %v7528 = vpack.c.b16 %v7284, %v7280
        %v7529 = vpack.c.b16 %v7285, %v7281
        %v7530 = vpack.c.b16 %v7290, %v7286
        %v7531 = vpack.c.b16 %v7291, %v7287
        %v7532 = vpack.c.b16 %v7292, %v7288
        %v7533 = vpack.c.b16 %v7293, %v7289
        %v7534 = vpack.c.b16 %v7298, %v7294
        %v7535 = vpack.c.b16 %v7299, %v7295
        %v7536 = vpack.c.b16 %v7300, %v7296
        %v7537 = vpack.c.b16 %v7301, %v7297
        %v7538 = vpack.c.b16 %v7306, %v7302
        %v7539 = vpack.c.b16 %v7307, %v7303
        %v7540 = vpack.c.b16 %v7308, %v7304
        %v7541 = vpack.c.b16 %v7309, %v7305
        %v7542 = vpack.c.b16 %v7314, %v7310
        %v7543 = vpack.c.b16 %v7315, %v7311
        %v7544 = vpack.c.b16 %v7316, %v7312
        %v7545 = vpack.c.b16 %v7317, %v7313
        %v7546 = vpack.c.b16 %v7322, %v7318
        %v7547 = vpack.c.b16 %v7323, %v7319
        %v7548 = vpack.c.b16 %v7324, %v7320
        %v7549 = vpack.c.b16 %v7325, %v7321
        %v7550 = vpack.c.b16 %v7330, %v7326
        %v7551 = vpack.c.b16 %v7331, %v7327
        %v7552 = vpack.c.b16 %v7332, %v7328
        %v7553 = vpack.c.b16 %v7333, %v7329
        %v7554 = vpack.c.b16 %v7338, %v7334
        %v7555 = vpack.c.b16 %v7339, %v7335
        %v7556 = vpack.c.b16 %v7340, %v7336
        %v7557 = vpack.c.b16 %v7341, %v7337
        %v7558 = vpack.c.b16 %v7346, %v7342
        %v7559 = vpack.c.b16 %v7347, %v7343
        %v7560 = vpack.c.b16 %v7348, %v7344
        %v7561 = vpack.c.b16 %v7349, %v7345
        %v7562 = vpack.c.b16 %v7354, %v7350
        %v7563 = vpack.c.b16 %v7355, %v7351
        %v7564 = vpack.c.b16 %v7356, %v7352
        %v7565 = vpack.c.b16 %v7357, %v7353
        %v7566 = vpack.c.b16 %v7362, %v7358
        %v7567 = vpack.c.b16 %v7363, %v7359
        %v7568 = vpack.c.b16 %v7364, %v7360
        %v7569 = vpack.c.b16 %v7365, %v7361
        %v7570 = vpack.c.b16 %v7370, %v7366
        %v7571 = vpack.c.b16 %v7371, %v7367
        %v7572 = vpack.c.b16 %v7372, %v7368
        %v7573 = vpack.c.b16 %v7373, %v7369
        %v7574 = vpack.c.b16 %v7378, %v7374
        %v7575 = vpack.c.b16 %v7379, %v7375
        %v7576 = vpack.c.b16 %v7380, %v7376
        %v7577 = vpack.c.b16 %v7381, %v7377
        %v7578 = vpack.c.b16 %v7386, %v7382
        %v7579 = vpack.c.b16 %v7387, %v7383
        %v7580 = vpack.c.b16 %v7388, %v7384
        %v7581 = vpack.c.b16 %v7389, %v7385
        %v7582 = vpack.c.b16 %v7394, %v7390
        %v7583 = vpack.c.b16 %v7395, %v7391
        %v7584 = vpack.c.b16 %v7396, %v7392
        %v7585 = vpack.c.b16 %v7397, %v7393
        %v7586 = vpack.c.b16 %v7402, %v7398
        %v7587 = vpack.c.b16 %v7403, %v7399
        %v7588 = vpack.c.b16 %v7404, %v7400
        %v7589 = vpack.c.b16 %v7405, %v7401
        %v7590 = vpack.c.b16 %v7410, %v7406
        %v7591 = vpack.c.b16 %v7411, %v7407
        %v7592 = vpack.c.b16 %v7412, %v7408
        %v7593 = vpack.c.b16 %v7413, %v7409
        %v7594 = vpack.c.b16 %v7418, %v7414
        %v7595 = vpack.c.b16 %v7419, %v7415
        %v7596 = vpack.c.b16 %v7420, %v7416
        %v7597 = vpack.c.b16 %v7421, %v7417
        %v7598 = vpack.c.b16 %v7426, %v7422
        %v7599 = vpack.c.b16 %v7427, %v7423
        %v7600 = vpack.c.b16 %v7428, %v7424
        %v7601 = vpack.c.b16 %v7429, %v7425
        %v7602 = vpack.c.b16 %v7434, %v7430
        %v7603 = vpack.c.b16 %v7435, %v7431
        %v7604 = vpack.c.b16 %v7436, %v7432
        %v7605 = vpack.c.b16 %v7437, %v7433
        %v7606 = vpack.c.b16 %v7442, %v7438
        %v7607 = vpack.c.b16 %v7443, %v7439
        %v7608 = vpack.c.b16 %v7444, %v7440
        %v7609 = vpack.c.b16 %v7445, %v7441
        %v7610 = vpack.c.b16 %v7450, %v7446
        %v7611 = vpack.c.b16 %v7451, %v7447
        %v7612 = vpack.c.b16 %v7452, %v7448
        %v7613 = vpack.c.b16 %v7453, %v7449
        %v7614 = vpack.c.b16 %v7458, %v7454
        %v7615 = vpack.c.b16 %v7459, %v7455
        %v7616 = vpack.c.b16 %v7460, %v7456
        %v7617 = vpack.c.b16 %v7461, %v7457
        %v7618 = vpack.c.b16 %v7466, %v7462
        %v7619 = vpack.c.b16 %v7467, %v7463
        %v7620 = vpack.c.b16 %v7468, %v7464
        %v7621 = vpack.c.b16 %v7469, %v7465
        %v7622 = vpack.c.b16 %v7474, %v7470
        %v7623 = vpack.c.b16 %v7475, %v7471
        %v7624 = vpack.c.b16 %v7476, %v7472
        %v7625 = vpack.c.b16 %v7477, %v7473
        %v7626 = vpack.c.b16 %v7482, %v7478
        %v7627 = vpack.c.b16 %v7483, %v7479
        %v7628 = vpack.c.b16 %v7484, %v7480
        %v7629 = vpack.c.b16 %v7485, %v7481
        %v7630 = vpack.c.b16 %v7490, %v7486
        %v7631 = vpack.c.b16 %v7491, %v7487
        %v7632 = vpack.c.b16 %v7492, %v7488
        %v7633 = vpack.c.b16 %v7493, %v7489
        %v7634 = vpack.c.b16 %v7498, %v7494
        %v7635 = vpack.c.b16 %v7499, %v7495
        %v7636 = vpack.c.b16 %v7500, %v7496
        %v7637 = vpack.c.b16 %v7501, %v7497
        %v7638 = vpack.c.b16 %v7506, %v7502
        %v7639 = vpack.c.b16 %v7507, %v7503
        %v7640 = vpack.c.b16 %v7508, %v7504
        %v7641 = vpack.c.b16 %v7509, %v7505
        %v7642 = vpack.c.b16 %v7514, %v7510
        %v7643 = vpack.c.b16 %v7515, %v7511
        %v7644 = vpack.c.b16 %v7516, %v7512
        %v7645 = vpack.c.b16 %v7517, %v7513
        %7774 = vmatprep.subr.bf16.mxu0 %v7519
        %7775 = vmatpush1.bf16.msra.mxu0 %v7518
        %7776 = vmatprep.subr.bf16.mxu0 %v7523
        %7777 = vmatpush1.bf16.msra.mxu0 %v7522
        %7778 = vmatprep.subr.bf16.mxu0 %v7527
        %7779 = vmatpush1.bf16.msra.mxu0 %v7526
        %7780 = vmatprep.subr.bf16.mxu0 %v7531
        %7781 = vmatpush1.bf16.msra.mxu0 %v7530
        %7782 = vmatprep.subr.bf16.mxu0 %v7535
        %7783 = vmatpush1.bf16.msra.mxu0 %v7534
        %7784 = vmatprep.subr.bf16.mxu0 %v7539
        %7785 = vmatpush1.bf16.msra.mxu0 %v7538
        %7786 = vmatprep.subr.bf16.mxu0 %v7543
        %7787 = vmatpush1.bf16.msra.mxu0 %v7542
        %7788 = vmatprep.subr.bf16.mxu0 %v7547
        %7789 = vmatpush1.bf16.msra.mxu0 %v7546
        %7790 = vmatprep.subr.bf16.mxu0 %v7551
        %7791 = vmatpush1.bf16.msra.mxu0 %v7550
        %7792 = vmatprep.subr.bf16.mxu0 %v7555
        %7793 = vmatpush1.bf16.msra.mxu0 %v7554
        %7794 = vmatprep.subr.bf16.mxu0 %v7559
        %7795 = vmatpush1.bf16.msra.mxu0 %v7558
        %7796 = vmatprep.subr.bf16.mxu0 %v7563
        %7797 = vmatpush1.bf16.msra.mxu0 %v7562
        %7798 = vmatprep.subr.bf16.mxu0 %v7567
        %7799 = vmatpush1.bf16.msra.mxu0 %v7566
        %7800 = vmatprep.subr.bf16.mxu0 %v7571
        %7801 = vmatpush1.bf16.msra.mxu0 %v7570
        %7802 = vmatprep.subr.bf16.mxu0 %v7575
        %7803 = vmatpush1.bf16.msra.mxu0 %v7574
        %7804 = vmatprep.subr.bf16.mxu0 %v7579
        %7805 = vmatpush1.bf16.msra.mxu0 %v7578
        %7806 = vmatprep.mubr.bf16.mxu0 %v6991
        %7807 = vmatmul.mubr.bf16.gmra.mrb[0].mxu0 %v6990
        %v7808 = vpop.f32.mrb[0].mxu0
        %v7809 = vadd.f32 0.0, %v7808
        %v7810 = vpop.f32.mrb[0].mxu0
        %v7811 = vadd.f32 0.0, %v7810
        %v7812 = vpop.f32.mrb[0].mxu0
        %v7813 = vadd.f32 0.0, %v7812
        %v7814 = vpop.f32.mrb[0].mxu0
        %v7815 = vadd.f32 0.0, %v7814
        %7816 = vmatprep.mubr.bf16.mxu0 %v6995
        %7817 = vmatmul.mubr.bf16.gmra.mrb[0].mxu0 %v6994
        %v7818 = vpop.f32.mrb[0].mxu0
        %v7819 = vadd.f32 0.0, %v7818
        %v7820 = vpop.f32.mrb[0].mxu0
        %v7821 = vadd.f32 0.0, %v7820
        %v7822 = vpop.f32.mrb[0].mxu0
        %v7823 = vadd.f32 0.0, %v7822
        %v7824 = vpop.f32.mrb[0].mxu0
        %v7825 = vadd.f32 0.0, %v7824
        %7826 = vmatprep.mubr.bf16.mxu0 %v6999
        %7827 = vmatmul.mubr.bf16.gmra.mrb[0].mxu0 %v6998
        %v7828 = vpop.f32.mrb[0].mxu0
        %v7829 = vadd.f32 0.0, %v7828
        %v7830 = vpop.f32.mrb[0].mxu0
        %v7831 = vadd.f32 0.0, %v7830
        %v7832 = vpop.f32.mrb[0].mxu0
        %v7833 = vadd.f32 0.0, %v7832
        %v7834 = vpop.f32.mrb[0].mxu0
        %v7835 = vadd.f32 0.0, %v7834
        %7836 = vmatprep.mubr.bf16.mxu0 %v7003
        %7837 = vmatmul.mubr.bf16.gmra.mrb[0].mxu0 %v7002
        %v7838 = vpop.f32.mrb[0].mxu0
        %v7839 = vadd.f32 0.0, %v7838
        %v7840 = vpop.f32.mrb[0].mxu0
        %v7841 = vadd.f32 0.0, %v7840
        %v7842 = vpop.f32.mrb[0].mxu0
        %v7843 = vadd.f32 0.0, %v7842
        %v7844 = vpop.f32.mrb[0].mxu0
        %v7845 = vadd.f32 0.0, %v7844
        %7846 = vdwg.mxu0
        %7847 = vmatprep.subr.bf16.mxu0 %v7583
        %7848 = vmatpush1.bf16.msra.mxu0 %v7582
        %7849 = vmatprep.subr.bf16.mxu0 %v7587
        %7850 = vmatpush1.bf16.msra.mxu0 %v7586
        %7851 = vmatprep.subr.bf16.mxu0 %v7591
        %7852 = vmatpush1.bf16.msra.mxu0 %v7590
        %7853 = vmatprep.subr.bf16.mxu0 %v7595
        %7854 = vmatpush1.bf16.msra.mxu0 %v7594
        %7855 = vmatprep.subr.bf16.mxu0 %v7599
        %7856 = vmatpush1.bf16.msra.mxu0 %v7598
        %7857 = vmatprep.subr.bf16.mxu0 %v7603
        %7858 = vmatpush1.bf16.msra.mxu0 %v7602
        %7859 = vmatprep.subr.bf16.mxu0 %v7607
        %7860 = vmatpush1.bf16.msra.mxu0 %v7606
        %7861 = vmatprep.subr.bf16.mxu0 %v7611
        %7862 = vmatpush1.bf16.msra.mxu0 %v7610
        %7863 = vmatprep.subr.bf16.mxu0 %v7615
        %7864 = vmatpush1.bf16.msra.mxu0 %v7614
        %7865 = vmatprep.subr.bf16.mxu0 %v7619
        %7866 = vmatpush1.bf16.msra.mxu0 %v7618
        %7867 = vmatprep.subr.bf16.mxu0 %v7623
        %7868 = vmatpush1.bf16.msra.mxu0 %v7622
        %7869 = vmatprep.subr.bf16.mxu0 %v7627
        %7870 = vmatpush1.bf16.msra.mxu0 %v7626
        %7871 = vmatprep.subr.bf16.mxu0 %v7631
        %7872 = vmatpush1.bf16.msra.mxu0 %v7630
        %7873 = vmatprep.subr.bf16.mxu0 %v7635
        %7874 = vmatpush1.bf16.msra.mxu0 %v7634
        %7875 = vmatprep.subr.bf16.mxu0 %v7639
        %7876 = vmatpush1.bf16.msra.mxu0 %v7638
        %7877 = vmatprep.subr.bf16.mxu0 %v7643
        %7878 = vmatpush1.bf16.msra.mxu0 %v7642
        %7879 = vmatprep.mubr.bf16.mxu0 %v6993
        %7880 = vmatmul.mubr.bf16.gmra.mrb[0].mxu0 %v6992
        %v7881 = vpop.f32.mrb[0].mxu0
        %v7882 = vadd.f32 %v7809, %v7881
        %v7883 = vpop.f32.mrb[0].mxu0
        %v7884 = vadd.f32 %v7811, %v7883
        %v7885 = vpop.f32.mrb[0].mxu0
        %v7886 = vadd.f32 %v7813, %v7885
        %v7887 = vpop.f32.mrb[0].mxu0
        %v7888 = vadd.f32 %v7815, %v7887
        %7889 = vmatprep.mubr.bf16.mxu0 %v6997
        %7890 = vmatmul.mubr.bf16.gmra.mrb[0].mxu0 %v6996
        %v7891 = vpop.f32.mrb[0].mxu0
        %v7892 = vadd.f32 %v7819, %v7891
        %v7893 = vpop.f32.mrb[0].mxu0
        %v7894 = vadd.f32 %v7821, %v7893
        %v7895 = vpop.f32.mrb[0].mxu0
        %v7896 = vadd.f32 %v7823, %v7895
        %v7897 = vpop.f32.mrb[0].mxu0
        %v7898 = vadd.f32 %v7825, %v7897
        %7899 = vmatprep.mubr.bf16.mxu0 %v7001
        %7900 = vmatmul.mubr.bf16.gmra.mrb[0].mxu0 %v7000
        %v7901 = vpop.f32.mrb[0].mxu0
        %v7902 = vadd.f32 %v7829, %v7901
        %v7903 = vpop.f32.mrb[0].mxu0
        %v7904 = vadd.f32 %v7831, %v7903
        %v7905 = vpop.f32.mrb[0].mxu0
        %v7906 = vadd.f32 %v7833, %v7905
        %v7907 = vpop.f32.mrb[0].mxu0
        %v7908 = vadd.f32 %v7835, %v7907
        %7909 = vmatprep.mubr.bf16.mxu0 %v7005
        %7910 = vmatmul.mubr.bf16.gmra.mrb[0].mxu0 %v7004
        %v7911 = vpop.f32.mrb[0].mxu0
        %v7912 = vadd.f32 %v7839, %v7911
        %v7913 = vpop.f32.mrb[0].mxu0
        %v7914 = vadd.f32 %v7841, %v7913
        %v7915 = vpop.f32.mrb[0].mxu0
        %v7916 = vadd.f32 %v7843, %v7915
        %v7917 = vpop.f32.mrb[0].mxu0
        %v7918 = vadd.f32 %v7845, %v7917
        %7919 = vdwg.mxu0
        %7920 = vmatprep.subr.bf16.mxu0 %v7521
        %7921 = vmatpush1.bf16.msra.mxu0 %v7520
        %7922 = vmatprep.subr.bf16.mxu0 %v7525
        %7923 = vmatpush1.bf16.msra.mxu0 %v7524
        %7924 = vmatprep.subr.bf16.mxu0 %v7529
        %7925 = vmatpush1.bf16.msra.mxu0 %v7528
        %7926 = vmatprep.subr.bf16.mxu0 %v7533
        %7927 = vmatpush1.bf16.msra.mxu0 %v7532
        %7928 = vmatprep.subr.bf16.mxu0 %v7537
        %7929 = vmatpush1.bf16.msra.mxu0 %v7536
        %7930 = vmatprep.subr.bf16.mxu0 %v7541
        %7931 = vmatpush1.bf16.msra.mxu0 %v7540
        %7932 = vmatprep.subr.bf16.mxu0 %v7545
        %7933 = vmatpush1.bf16.msra.mxu0 %v7544
        %7934 = vmatprep.subr.bf16.mxu0 %v7549
        %7935 = vmatpush1.bf16.msra.mxu0 %v7548
        %7936 = vmatprep.subr.bf16.mxu0 %v7553
        %7937 = vmatpush1.bf16.msra.mxu0 %v7552
        %7938 = vmatprep.subr.bf16.mxu0 %v7557
        %7939 = vmatpush1.bf16.msra.mxu0 %v7556
        %7940 = vmatprep.subr.bf16.mxu0 %v7561
        %7941 = vmatpush1.bf16.msra.mxu0 %v7560
        %7942 = vmatprep.subr.bf16.mxu0 %v7565
        %7943 = vmatpush1.bf16.msra.mxu0 %v7564
        %7944 = vmatprep.subr.bf16.mxu0 %v7569
        %7945 = vmatpush1.bf16.msra.mxu0 %v7568
        %7946 = vmatprep.subr.bf16.mxu0 %v7573
        %7947 = vmatpush1.bf16.msra.mxu0 %v7572
        %7948 = vmatprep.subr.bf16.mxu0 %v7577
        %7949 = vmatpush1.bf16.msra.mxu0 %v7576
        %7950 = vmatprep.subr.bf16.mxu0 %v7581
        %7951 = vmatpush1.bf16.msra.mxu0 %v7580
        %7952 = vmatprep.mubr.bf16.mxu0 %v6991
        %7953 = vmatmul.mubr.bf16.gmra.mrb[0].mxu0 %v6990
        %v7954 = vpop.f32.mrb[0].mxu0
        %v7955 = vadd.f32 0.0, %v7954
        %v7956 = vpop.f32.mrb[0].mxu0
        %v7957 = vadd.f32 0.0, %v7956
        %v7958 = vpop.f32.mrb[0].mxu0
        %v7959 = vadd.f32 0.0, %v7958
        %v7960 = vpop.f32.mrb[0].mxu0
        %v7961 = vadd.f32 0.0, %v7960
        %7962 = vmatprep.mubr.bf16.mxu0 %v6995
        %7963 = vmatmul.mubr.bf16.gmra.mrb[0].mxu0 %v6994
        %v7964 = vpop.f32.mrb[0].mxu0
        %v7965 = vadd.f32 0.0, %v7964
        %v7966 = vpop.f32.mrb[0].mxu0
        %v7967 = vadd.f32 0.0, %v7966
        %v7968 = vpop.f32.mrb[0].mxu0
        %v7969 = vadd.f32 0.0, %v7968
        %v7970 = vpop.f32.mrb[0].mxu0
        %v7971 = vadd.f32 0.0, %v7970
        %7972 = vmatprep.mubr.bf16.mxu0 %v6999
        %7973 = vmatmul.mubr.bf16.gmra.mrb[0].mxu0 %v6998
        %v7974 = vpop.f32.mrb[0].mxu0
        %v7975 = vadd.f32 0.0, %v7974
        %v7976 = vpop.f32.mrb[0].mxu0
        %v7977 = vadd.f32 0.0, %v7976
        %v7978 = vpop.f32.mrb[0].mxu0
        %v7979 = vadd.f32 0.0, %v7978
        %v7980 = vpop.f32.mrb[0].mxu0
        %v7981 = vadd.f32 0.0, %v7980
        %7982 = vmatprep.mubr.bf16.mxu0 %v7003
        %7983 = vmatmul.mubr.bf16.gmra.mrb[0].mxu0 %v7002
        %v7984 = vpop.f32.mrb[0].mxu0
        %v7985 = vadd.f32 0.0, %v7984
        %v7986 = vpop.f32.mrb[0].mxu0
        %v7987 = vadd.f32 0.0, %v7986
        %v7988 = vpop.f32.mrb[0].mxu0
        %v7989 = vadd.f32 0.0, %v7988
        %v7990 = vpop.f32.mrb[0].mxu0
        %v7991 = vadd.f32 0.0, %v7990
        %7992 = vdwg.mxu0
        %7993 = vmatprep.subr.bf16.mxu0 %v7585
        %7994 = vmatpush1.bf16.msra.mxu0 %v7584
        %7995 = vmatprep.subr.bf16.mxu0 %v7589
        %7996 = vmatpush1.bf16.msra.mxu0 %v7588
        %7997 = vmatprep.subr.bf16.mxu0 %v7593
        %7998 = vmatpush1.bf16.msra.mxu0 %v7592
        %7999 = vmatprep.subr.bf16.mxu0 %v7597
        %8000 = vmatpush1.bf16.msra.mxu0 %v7596
        %8001 = vmatprep.subr.bf16.mxu0 %v7601
        %8002 = vmatpush1.bf16.msra.mxu0 %v7600
        %8003 = vmatprep.subr.bf16.mxu0 %v7605
        %8004 = vmatpush1.bf16.msra.mxu0 %v7604
        %8005 = vmatprep.subr.bf16.mxu0 %v7609
        %8006 = vmatpush1.bf16.msra.mxu0 %v7608
        %8007 = vmatprep.subr.bf16.mxu0 %v7613
        %8008 = vmatpush1.bf16.msra.mxu0 %v7612
        %8009 = vmatprep.subr.bf16.mxu0 %v7617
        %8010 = vmatpush1.bf16.msra.mxu0 %v7616
        %8011 = vmatprep.subr.bf16.mxu0 %v7621
        %8012 = vmatpush1.bf16.msra.mxu0 %v7620
        %8013 = vmatprep.subr.bf16.mxu0 %v7625
        %8014 = vmatpush1.bf16.msra.mxu0 %v7624
        %8015 = vmatprep.subr.bf16.mxu0 %v7629
        %8016 = vmatpush1.bf16.msra.mxu0 %v7628
        %8017 = vmatprep.subr.bf16.mxu0 %v7633
        %8018 = vmatpush1.bf16.msra.mxu0 %v7632
        %8019 = vmatprep.subr.bf16.mxu0 %v7637
        %8020 = vmatpush1.bf16.msra.mxu0 %v7636
        %8021 = vmatprep.subr.bf16.mxu0 %v7641
        %8022 = vmatpush1.bf16.msra.mxu0 %v7640
        %8023 = vmatprep.subr.bf16.mxu0 %v7645
        %8024 = vmatpush1.bf16.msra.mxu0 %v7644
        %8025 = vmatprep.mubr.bf16.mxu0 %v6993
        %8026 = vmatmul.mubr.bf16.gmra.mrb[0].mxu0 %v6992
        %v8027 = vpop.f32.mrb[0].mxu0
        %v8028 = vadd.f32 %v7955, %v8027
        %v8029 = vpop.f32.mrb[0].mxu0
        %v8030 = vadd.f32 %v7957, %v8029
        %v8031 = vpop.f32.mrb[0].mxu0
        %v8032 = vadd.f32 %v7959, %v8031
        %v8033 = vpop.f32.mrb[0].mxu0
        %v8034 = vadd.f32 %v7961, %v8033
        %8035 = vmatprep.mubr.bf16.mxu0 %v6997
        %8036 = vmatmul.mubr.bf16.gmra.mrb[0].mxu0 %v6996
        %v8037 = vpop.f32.mrb[0].mxu0
        %v8038 = vadd.f32 %v7965, %v8037
        %v8039 = vpop.f32.mrb[0].mxu0
        %v8040 = vadd.f32 %v7967, %v8039
        %v8041 = vpop.f32.mrb[0].mxu0
        %v8042 = vadd.f32 %v7969, %v8041
        %v8043 = vpop.f32.mrb[0].mxu0
        %v8044 = vadd.f32 %v7971, %v8043
        %8045 = vmatprep.mubr.bf16.mxu0 %v7001
        %8046 = vmatmul.mubr.bf16.gmra.mrb[0].mxu0 %v7000
        %v8047 = vpop.f32.mrb[0].mxu0
        %v8048 = vadd.f32 %v7975, %v8047
        %v8049 = vpop.f32.mrb[0].mxu0
        %v8050 = vadd.f32 %v7977, %v8049
        %v8051 = vpop.f32.mrb[0].mxu0
        %v8052 = vadd.f32 %v7979, %v8051
        %v8053 = vpop.f32.mrb[0].mxu0
        %v8054 = vadd.f32 %v7981, %v8053
        %8055 = vmatprep.mubr.bf16.mxu0 %v7005
        %8056 = vmatmul.mubr.bf16.gmra.mrb[0].mxu0 %v7004
        %v8057 = vpop.f32.mrb[0].mxu0
        %v8058 = vadd.f32 %v7985, %v8057
        %v8059 = vpop.f32.mrb[0].mxu0
        %v8060 = vadd.f32 %v7987, %v8059
        %v8061 = vpop.f32.mrb[0].mxu0
        %v8062 = vadd.f32 %v7989, %v8061
        %v8063 = vpop.f32.mrb[0].mxu0
        %v8064 = vadd.f32 %v7991, %v8063
        %8065 = vdwg.mxu0
        %v8066 = vpack.c.bf16 %v7886, %v7882
        %v8067 = vpack.c.bf16 %v7888, %v7884
        %v8068 = vpack.c.bf16 %v8032, %v8028
        %v8069 = vpack.c.bf16 %v8034, %v8030
        %v8070 = vpack.c.bf16 %v7896, %v7892
        %v8071 = vpack.c.bf16 %v7898, %v7894
        %v8072 = vpack.c.bf16 %v8042, %v8038
        %v8073 = vpack.c.bf16 %v8044, %v8040
        %v8074 = vpack.c.bf16 %v7906, %v7902
        %v8075 = vpack.c.bf16 %v7908, %v7904
        %v8076 = vpack.c.bf16 %v8052, %v8048
        %v8077 = vpack.c.bf16 %v8054, %v8050
        %v8078 = vpack.c.bf16 %v7916, %v7912
        %v8079 = vpack.c.bf16 %v7918, %v7914
        %v8080 = vpack.c.bf16 %v8062, %v8058
        %v8081 = vpack.c.bf16 %v8064, %v8060
        %v8098 = vunpack.c.l.b16 %v8066
        %v8099 = vunpack.c.l.b16 %v8067
        %v8100 = vunpack.c.l.b16 %v8068
        %v8101 = vunpack.c.l.b16 %v8069
        %v8102 = vunpack.c.h.b16 %v8066
        %v8103 = vunpack.c.h.b16 %v8067
        %v8104 = vunpack.c.h.b16 %v8068
        %v8105 = vunpack.c.h.b16 %v8069
        %v8106 = vunpack.c.l.b16 %v8070
        %v8107 = vunpack.c.l.b16 %v8071
        %v8108 = vunpack.c.l.b16 %v8072
        %v8109 = vunpack.c.l.b16 %v8073
        %v8110 = vunpack.c.h.b16 %v8070
        %v8111 = vunpack.c.h.b16 %v8071
        %v8112 = vunpack.c.h.b16 %v8072
        %v8113 = vunpack.c.h.b16 %v8073
        %v8114 = vunpack.c.l.b16 %v8074
        %v8115 = vunpack.c.l.b16 %v8075
        %v8116 = vunpack.c.l.b16 %v8076
        %v8117 = vunpack.c.l.b16 %v8077
        %v8118 = vunpack.c.h.b16 %v8074
        %v8119 = vunpack.c.h.b16 %v8075
        %v8120 = vunpack.c.h.b16 %v8076
        %v8121 = vunpack.c.h.b16 %v8077
        %v8122 = vunpack.c.l.b16 %v8078
        %v8123 = vunpack.c.l.b16 %v8079
        %v8124 = vunpack.c.l.b16 %v8080
        %v8125 = vunpack.c.l.b16 %v8081
        %v8126 = vunpack.c.h.b16 %v8078
        %v8127 = vunpack.c.h.b16 %v8079
        %v8128 = vunpack.c.h.b16 %v8080
        %v8129 = vunpack.c.h.b16 %v8081
        %v8130 = vpack.c.b16 %v8099, %v8098
        %v8131 = vpack.c.b16 %v8101, %v8100
        %v8132 = vpack.c.b16 %v8103, %v8102
        %v8133 = vpack.c.b16 %v8105, %v8104
        %v8134 = vpack.c.b16 %v8107, %v8106
        %v8135 = vpack.c.b16 %v8109, %v8108
        %v8136 = vpack.c.b16 %v8111, %v8110
        %v8137 = vpack.c.b16 %v8113, %v8112
        %v8138 = vpack.c.b16 %v8115, %v8114
        %v8139 = vpack.c.b16 %v8117, %v8116
        %v8140 = vpack.c.b16 %v8119, %v8118
        %v8141 = vpack.c.b16 %v8121, %v8120
        %v8142 = vpack.c.b16 %v8123, %v8122
        %v8143 = vpack.c.b16 %v8125, %v8124
        %v8144 = vpack.c.b16 %v8127, %v8126
        %v8145 = vpack.c.b16 %v8129, %v8128
        %8162 = vst [vmem:[%s358] sm:$0xff] %v8130
        %8163 = vst [vmem:[%s358 + $0x8] sm:$0xff] %v8131
        %8164 = vst [vmem:[%s358 + $0x10] sm:$0xff] %v8132
        %8165 = vst [vmem:[%s358 + $0x18] sm:$0xff] %v8133
        %8166 = vst [vmem:[%s358 + $0x20] sm:$0xff] %v8134
        %8167 = vst [vmem:[%s358 + $0x28] sm:$0xff] %v8135
        %8168 = vst [vmem:[%s358 + $0x30] sm:$0xff] %v8136
        %8169 = vst [vmem:[%s358 + $0x38] sm:$0xff] %v8137
        %8170 = vst [vmem:[%s358 + $0x40] sm:$0xff] %v8138
        %8171 = vst [vmem:[%s358 + $0x48] sm:$0xff] %v8139
        %8172 = vst [vmem:[%s358 + $0x50] sm:$0xff] %v8140
        %8173 = vst [vmem:[%s358 + $0x58] sm:$0xff] %v8141
        %8174 = vst [vmem:[%s358 + $0x60] sm:$0xff] %v8142
        %8175 = vst [vmem:[%s358 + $0x68] sm:$0xff] %v8143
        %8176 = vst [vmem:[%s358 + $0x70] sm:$0xff] %v8144
        %8177 = vst [vmem:[%s358 + $0x78] sm:$0xff] %v8145
        %v8194 = vunpack.c.l.b16 %v5994
        %v8195 = vunpack.c.l.b16 %v5995
        %v8196 = vunpack.c.l.b16 %v5996
        %v8197 = vunpack.c.l.b16 %v5997
        %v8198 = vunpack.c.h.b16 %v5994
        %v8199 = vunpack.c.h.b16 %v5995
        %v8200 = vunpack.c.h.b16 %v5996
        %v8201 = vunpack.c.h.b16 %v5997
        %v8202 = vunpack.c.l.b16 %v5998
        %v8203 = vunpack.c.l.b16 %v5999
        %v8204 = vunpack.c.l.b16 %v6000
        %v8205 = vunpack.c.l.b16 %v6001
        %v8206 = vunpack.c.h.b16 %v5998
        %v8207 = vunpack.c.h.b16 %v5999
        %v8208 = vunpack.c.h.b16 %v6000
        %v8209 = vunpack.c.h.b16 %v6001
        %v8210 = vunpack.c.l.b16 %v6002
        %v8211 = vunpack.c.l.b16 %v6003
        %v8212 = vunpack.c.l.b16 %v6004
        %v8213 = vunpack.c.l.b16 %v6005
        %v8214 = vunpack.c.h.b16 %v6002
        %v8215 = vunpack.c.h.b16 %v6003
        %v8216 = vunpack.c.h.b16 %v6004
        %v8217 = vunpack.c.h.b16 %v6005
        %v8218 = vunpack.c.l.b16 %v6006
        %v8219 = vunpack.c.l.b16 %v6007
        %v8220 = vunpack.c.l.b16 %v6008
        %v8221 = vunpack.c.l.b16 %v6009
        %v8222 = vunpack.c.h.b16 %v6006
        %v8223 = vunpack.c.h.b16 %v6007
        %v8224 = vunpack.c.h.b16 %v6008
        %v8225 = vunpack.c.h.b16 %v6009
        %v8226 = vpack.c.b16 %v8195, %v8194
        %v8227 = vpack.c.b16 %v8197, %v8196
        %v8228 = vpack.c.b16 %v8199, %v8198
        %v8229 = vpack.c.b16 %v8201, %v8200
        %v8230 = vpack.c.b16 %v8203, %v8202
        %v8231 = vpack.c.b16 %v8205, %v8204
        %v8232 = vpack.c.b16 %v8207, %v8206
        %v8233 = vpack.c.b16 %v8209, %v8208
        %v8234 = vpack.c.b16 %v8211, %v8210
        %v8235 = vpack.c.b16 %v8213, %v8212
        %v8236 = vpack.c.b16 %v8215, %v8214
        %v8237 = vpack.c.b16 %v8217, %v8216
        %v8238 = vpack.c.b16 %v8219, %v8218
        %v8239 = vpack.c.b16 %v8221, %v8220
        %v8240 = vpack.c.b16 %v8223, %v8222
        %v8241 = vpack.c.b16 %v8225, %v8224
        %8258 = vst [vmem:[%s365] sm:$0xff] %v8226
        %8259 = vst [vmem:[%s365 + $0x8] sm:$0xff] %v8227
        %8260 = vst [vmem:[%s365 + $0x10] sm:$0xff] %v8228
        %8261 = vst [vmem:[%s365 + $0x18] sm:$0xff] %v8229
        %8262 = vst [vmem:[%s365 + $0x20] sm:$0xff] %v8230
        %8263 = vst [vmem:[%s365 + $0x28] sm:$0xff] %v8231
        %8264 = vst [vmem:[%s365 + $0x30] sm:$0xff] %v8232
        %8265 = vst [vmem:[%s365 + $0x38] sm:$0xff] %v8233
        %8266 = vst [vmem:[%s365 + $0x40] sm:$0xff] %v8234
        %8267 = vst [vmem:[%s365 + $0x48] sm:$0xff] %v8235
        %8268 = vst [vmem:[%s365 + $0x50] sm:$0xff] %v8236
        %8269 = vst [vmem:[%s365 + $0x58] sm:$0xff] %v8237
        %8270 = vst [vmem:[%s365 + $0x60] sm:$0xff] %v8238
        %8271 = vst [vmem:[%s365 + $0x68] sm:$0xff] %v8239
        %8272 = vst [vmem:[%s365 + $0x70] sm:$0xff] %v8240
        %8273 = vst [vmem:[%s365 + $0x78] sm:$0xff] %v8241
        %v8290 = vunpack.c.l.b16 %v6010
        %v8291 = vunpack.c.l.b16 %v6011
        %v8292 = vunpack.c.l.b16 %v6012
        %v8293 = vunpack.c.l.b16 %v6013
        %v8294 = vunpack.c.h.b16 %v6010
        %v8295 = vunpack.c.h.b16 %v6011
        %v8296 = vunpack.c.h.b16 %v6012
        %v8297 = vunpack.c.h.b16 %v6013
        %v8298 = vunpack.c.l.b16 %v6014
        %v8299 = vunpack.c.l.b16 %v6015
        %v8300 = vunpack.c.l.b16 %v6016
        %v8301 = vunpack.c.l.b16 %v6017
        %v8302 = vunpack.c.h.b16 %v6014
        %v8303 = vunpack.c.h.b16 %v6015
        %v8304 = vunpack.c.h.b16 %v6016
        %v8305 = vunpack.c.h.b16 %v6017
        %v8306 = vunpack.c.l.b16 %v6018
        %v8307 = vunpack.c.l.b16 %v6019
        %v8308 = vunpack.c.l.b16 %v6020
        %v8309 = vunpack.c.l.b16 %v6021
        %v8310 = vunpack.c.h.b16 %v6018
        %v8311 = vunpack.c.h.b16 %v6019
        %v8312 = vunpack.c.h.b16 %v6020
        %v8313 = vunpack.c.h.b16 %v6021
        %v8314 = vunpack.c.l.b16 %v6022
        %v8315 = vunpack.c.l.b16 %v6023
        %v8316 = vunpack.c.l.b16 %v6024
        %v8317 = vunpack.c.l.b16 %v6025
        %v8318 = vunpack.c.h.b16 %v6022
        %v8319 = vunpack.c.h.b16 %v6023
        %v8320 = vunpack.c.h.b16 %v6024
        %v8321 = vunpack.c.h.b16 %v6025
        %v8322 = vpack.c.b16 %v8291, %v8290
        %v8323 = vpack.c.b16 %v8293, %v8292
        %v8324 = vpack.c.b16 %v8295, %v8294
        %v8325 = vpack.c.b16 %v8297, %v8296
        %v8326 = vpack.c.b16 %v8299, %v8298
        %v8327 = vpack.c.b16 %v8301, %v8300
        %v8328 = vpack.c.b16 %v8303, %v8302
        %v8329 = vpack.c.b16 %v8305, %v8304
        %v8330 = vpack.c.b16 %v8307, %v8306
        %v8331 = vpack.c.b16 %v8309, %v8308
        %v8332 = vpack.c.b16 %v8311, %v8310
        %v8333 = vpack.c.b16 %v8313, %v8312
        %v8334 = vpack.c.b16 %v8315, %v8314
        %v8335 = vpack.c.b16 %v8317, %v8316
        %v8336 = vpack.c.b16 %v8319, %v8318
        %v8337 = vpack.c.b16 %v8321, %v8320
        %8354 = vst [vmem:[%s372] sm:$0xff] %v8322
        %8355 = vst [vmem:[%s372 + $0x8] sm:$0xff] %v8323
        %8356 = vst [vmem:[%s372 + $0x10] sm:$0xff] %v8324
        %8357 = vst [vmem:[%s372 + $0x18] sm:$0xff] %v8325
        %8358 = vst [vmem:[%s372 + $0x20] sm:$0xff] %v8326
        %8359 = vst [vmem:[%s372 + $0x28] sm:$0xff] %v8327
        %8360 = vst [vmem:[%s372 + $0x30] sm:$0xff] %v8328
        %8361 = vst [vmem:[%s372 + $0x38] sm:$0xff] %v8329
        %8362 = vst [vmem:[%s372 + $0x40] sm:$0xff] %v8330
        %8363 = vst [vmem:[%s372 + $0x48] sm:$0xff] %v8331
        %8364 = vst [vmem:[%s372 + $0x50] sm:$0xff] %v8332
        %8365 = vst [vmem:[%s372 + $0x58] sm:$0xff] %v8333
        %8366 = vst [vmem:[%s372 + $0x60] sm:$0xff] %v8334
        %8367 = vst [vmem:[%s372 + $0x68] sm:$0xff] %v8335
        %8368 = vst [vmem:[%s372 + $0x70] sm:$0xff] %v8336
        %8369 = vst [vmem:[%s372 + $0x78] sm:$0xff] %v8337
        %s8370 = sand.u32 %s148, 1
        %s8371 = scalar_lea.sflag [#allocation4], %s8370
        %s8372 = sand.u32 %s148, 1
        %s8373 = smul.addr %s8372, 128
        %s8374 = scalar_lea.vmem [#allocation11], %s8373
        %s8375 = sand.u32 %s30, 1
        %s8376 = scalar_lea.sflag [#allocation13], %s8375
        %s8377 = sand.u32 %s174, 1
        %s8378 = smul.addr %s8377, 128
        %s8379 = scalar_lea.vmem [#allocation12], %s8378
        %s8380 = sand.u32 %s30, 1
        %s8381 = scalar_lea.sflag [#allocation13], %s8380
        %s8382 = sand.u32 %s200, 1
        %s8383 = smul.addr %s8382, 128
        %s8384 = scalar_lea.vmem [#allocation14], %s8383
        // Predicated region
        $region61: #{tpu_custom_call.1} parent=39 // pred_check
          %p8385 = pneg %p158
        $region62: #{tpu_custom_call.1} parent=39 // pred_check_branch
          %8387 = sbr.rel (%p8385) target = $region64
        $region63: #{tpu_custom_call.1} parent=39 // pred_region
          %s8389 = ssub.s32 2048, 2048
          %8390 = vsyncadd %s8371, %s8389
          %s8391 = smul.addr %s30, 32
          %s8392 = smul.addr %s8391, 64
          %s8393 = scalar_lea.hbm %s5, %s8392
          %s8394 = sshll.u32 %s8374, 4
          %s8395 = int_to_ptr.vmem [resolvable:$true] %s8394
          %8400 = dma.vmem_to_hbm [thread:$0]  %s8395, 2048, %s8393, %s8371, 256, 256, 16
        $region64: #{tpu_custom_call.1} parent=39 // pred_fallthru
          _
        // Predicated region
        $region65: #{tpu_custom_call.1} parent=39 // pred_check
          %p8401 = pneg %p184
        $region66: #{tpu_custom_call.1} parent=39 // pred_check_branch
          %8403 = sbr.rel (%p8401) target = $region68
        $region67: #{tpu_custom_call.1} parent=39 // pred_region
          %s8405 = ssub.s32 2048, 2048
          %8406 = vsyncadd %s8376, %s8405
          %s8407 = smul.addr %s30, 32
          %s8408 = smul.addr %s8407, 64
          %s8409 = scalar_lea.hbm %s6, %s8408
          %s8410 = sshll.u32 %s8379, 4
          %s8411 = int_to_ptr.vmem [resolvable:$true] %s8410
          %8416 = dma.vmem_to_hbm [thread:$0]  %s8411, 2048, %s8409, %s8376, 256, 256, 16
        $region68: #{tpu_custom_call.1} parent=39 // pred_fallthru
          _
        // Predicated region
        $region69: #{tpu_custom_call.1} parent=39 // pred_check
          %p8417 = pneg %p210
        $region70: #{tpu_custom_call.1} parent=39 // pred_check_branch
          %8419 = sbr.rel (%p8417) target = $region72
        $region71: #{tpu_custom_call.1} parent=39 // pred_region
          %s8421 = ssub.s32 2048, 2048
          %8422 = vsyncadd %s8381, %s8421
          %s8423 = smul.addr %s30, 32
          %s8424 = smul.addr %s8423, 64
          %s8425 = scalar_lea.hbm %s7, %s8424
          %s8426 = sshll.u32 %s8384, 4
          %s8427 = int_to_ptr.vmem [resolvable:$true] %s8426
          %8432 = dma.vmem_to_hbm [thread:$0]  %s8427, 2048, %s8425, %s8381, 256, 256, 16
        $region72: #{tpu_custom_call.1} parent=39 // pred_fallthru
          _
      $region40: #{tpu_custom_call.1} parent=5 // pred_fallthru
        _
      %p8433 = scmp.le.s32.totalorder 2, %s25
      // Predicated region
      $region73: #{tpu_custom_call.1} parent=5 // pred_check
        %p8434 = pneg %p8433
      $region74: #{tpu_custom_call.1} parent=5 // pred_check_branch
        %8436 = sbr.rel (%p8434) target = $region76
      $region75: #{tpu_custom_call.1} parent=5 // pred_region
        %s8437 = ssub.s32 %s25, 2
        // Predicated region
        $region77: #{tpu_custom_call.1} parent=75 // pred_check
          %p8438 = pneg %p164
        $region78: #{tpu_custom_call.1} parent=75 // pred_check_branch
          %8440 = sbr.rel (%p8438) target = $region80
        $region79: #{tpu_custom_call.1} parent=75 // pred_region
          %s8441 = sand.u32 %s149, 1
          %s8442 = scalar_lea.sflag [#allocation4], %s8441
          %s8443 = sand.u32 %s149, 1
          %s8444 = smul.addr %s8443, 128
          %s8445 = scalar_lea.vmem [#allocation11], %s8444
          %8446 = dma.done %s8442, 2048
        $region80: #{tpu_custom_call.1} parent=75 // pred_fallthru
          _
        // Predicated region
        $region81: #{tpu_custom_call.1} parent=75 // pred_check
          %p8447 = pneg %p190
        $region82: #{tpu_custom_call.1} parent=75 // pred_check_branch
          %8449 = sbr.rel (%p8447) target = $region84
        $region83: #{tpu_custom_call.1} parent=75 // pred_region
          %s8450 = sand.u32 %s31, 1
          %s8451 = scalar_lea.sflag [#allocation13], %s8450
          %s8452 = sand.u32 %s175, 1
          %s8453 = smul.addr %s8452, 128
          %s8454 = scalar_lea.vmem [#allocation12], %s8453
          %8455 = dma.done %s8451, 2048
        $region84: #{tpu_custom_call.1} parent=75 // pred_fallthru
          _
        // Predicated region
        $region85: #{tpu_custom_call.1} parent=75 // pred_check
          %p8456 = pneg %p216
        $region86: #{tpu_custom_call.1} parent=75 // pred_check_branch
          %8458 = sbr.rel (%p8456) target = $region88
        $region87: #{tpu_custom_call.1} parent=75 // pred_region
          %s8459 = sand.u32 %s31, 1
          %s8460 = scalar_lea.sflag [#allocation13], %s8459
          %s8461 = sand.u32 %s201, 1
          %s8462 = smul.addr %s8461, 128
          %s8463 = scalar_lea.vmem [#allocation14], %s8462
          %8464 = dma.done %s8460, 2048
        $region88: #{tpu_custom_call.1} parent=75 // pred_fallthru
          _
      $region76: #{tpu_custom_call.1} parent=5 // pred_fallthru
        _
    $region6: #{tpu_custom_call.1} parent=1 // loop_footer
      %s29 = sadd.s32 1, %s25
    $region7: #{tpu_custom_call.1} parent=1 // loop_footer_branch
      %24 = sbr.rel target = $region3
    $region8: #{tpu_custom_call.1} parent=1 // loop_exit
      _
    %8465 = vsyncpa [#allocation3], 1
    %s8466 = scalar_lea.sflag [#allocation3], 1
    %8467 = vsyncpa %s8466, 1
    %8468 = vsyncpa [#allocation6], 1
    %8469 = vsyncpa [#allocation9], 1
    %8470 = vsyncpa [#allocation4], 1
    %s8471 = scalar_lea.sflag [#allocation4], 1
    %8472 = vsyncpa %s8471, 1
    %8473 = vsyncpa [#allocation13], 1
    %s8474 = scalar_lea.sflag [#allocation13], 1
    %8475 = vsyncpa %s8474, 1

</llo_original>
